<compile_context>
chip_gen: v7x
topology: tpu7x:2x2x1
jax: 0.10.0
libtpu: 0.0.40
codegen_flags: <defaults>
</compile_context>

<pallas_src>
import functools

import jax
import jax.numpy as jnp
from jax.experimental import pallas as pl
from jax.experimental.pallas import tpu as pltpu

LOG_EPS = 1e-7


# ----------------------------- small helpers -------------------------------

def _round_up(n, m):
    return ((n + m - 1) // m) * m


def _pick_lane_tile(n):
    # lane (last-dim) tile: multiple of 128 if possible, else full extent
    for t in (1024, 512, 256, 128):
        if n >= t and n % t == 0:
            return t
    return n


def _pad_rows(r):
    # row (sublane) tiling for the STFT-distance kernel
    if r >= 128:
        return _round_up(r, 128), 128
    rp = _round_up(max(r, 8), 8)
    return rp, rp


# ------------------------- fused auto-encoder kernel ------------------------
# Transposed layout: activations are (features, rows) with rows on the lanes.

def _ae_kernel(xT_ref, AT_ref, WeT_ref, beT_ref, WdT_ref, bdT_ref, ST_ref,
               xsubT_ref, zT_ref, ysubT_ref, yT_ref):
    xT = xT_ref[...]                                                   # (nb, TR)
    xsub = jnp.dot(AT_ref[...], xT, preferred_element_type=jnp.float32)
    z = jnp.tanh(jnp.dot(WeT_ref[...], xsub,
                         preferred_element_type=jnp.float32) + beT_ref[...])
    ysub = jnp.tanh(jnp.dot(WdT_ref[...], z,
                            preferred_element_type=jnp.float32) + bdT_ref[...])
    y = jnp.dot(ST_ref[...], ysub, preferred_element_type=jnp.float32)
    xsubT_ref[...] = xsub
    zT_ref[...] = z
    ysubT_ref[...] = ysub
    yT_ref[...] = y


def pallas_fused_ae(xT, AT, WeT, beT, WdT, bdT, ST):
    nb, R = xT.shape
    lat = WeT.shape[0]
    TR = _pick_lane_tile(R)
    grid = (R // TR,)
    return pl.pallas_call(
        _ae_kernel,
        grid=grid,
        out_shape=(jax.ShapeDtypeStruct((nb, R), jnp.float32),
                   jax.ShapeDtypeStruct((lat, R), jnp.float32),
                   jax.ShapeDtypeStruct((nb, R), jnp.float32),
                   jax.ShapeDtypeStruct((nb, R), jnp.float32)),
        in_specs=[pl.BlockSpec((nb, TR), lambda i: (0, i)),
                  pl.BlockSpec((nb, nb), lambda i: (0, 0)),
                  pl.BlockSpec((lat, nb), lambda i: (0, 0)),
                  pl.BlockSpec((lat, 1), lambda i: (0, 0)),
                  pl.BlockSpec((nb, lat), lambda i: (0, 0)),
                  pl.BlockSpec((nb, 1), lambda i: (0, 0)),
                  pl.BlockSpec((nb, nb), lambda i: (0, 0))],
        out_specs=(pl.BlockSpec((nb, TR), lambda i: (0, i)),
                   pl.BlockSpec((lat, TR), lambda i: (0, i)),
                   pl.BlockSpec((nb, TR), lambda i: (0, i)),
                   pl.BlockSpec((nb, TR), lambda i: (0, i))),
        compiler_params=pltpu.CompilerParams(dimension_semantics=("parallel",)),
    )(xT, AT, WeT, beT, WdT, bdT, ST)


# ------------- fused STFT + mel + spectral-distance reduction ---------------

def _stft_dist_kernel(fx_ref, fy_ref, win_ref, cos_ref, sin_ref, mel_ref, o_ref,
                      *, n_valid, tile_rows):
    i = pl.program_id(0)

    @pl.when(i == 0)
    def _():
        o_ref[0] = jnp.float32(0.0)
        o_ref[1] = jnp.float32(0.0)
        o_ref[2] = jnp.float32(0.0)

    w = win_ref[...]                                               # (1, W)
    fx = fx_ref[...] * w                                           # (TR, W)
    fy = fy_ref[...] * w
    rex = jnp.dot(fx, cos_ref[...], preferred_element_type=jnp.float32)
    imx = jnp.dot(fx, sin_ref[...], preferred_element_type=jnp.float32)
    rey = jnp.dot(fy, cos_ref[...], preferred_element_type=jnp.float32)
    imy = jnp.dot(fy, sin_ref[...], preferred_element_type=jnp.float32)
    magx = jnp.sqrt(rex * rex + imx * imx + 1e-12)
    magy = jnp.sqrt(rey * rey + imy * imy + 1e-12)
    sx = jnp.dot(magx, mel_ref[...], preferred_element_type=jnp.float32)
    sy = jnp.dot(magy, mel_ref[...], preferred_element_type=jnp.float32)

    # mask padded frame rows so they contribute exactly zero
    row = jax.lax.broadcasted_iota(jnp.int32, sx.shape, 0) + i * tile_rows
    valid = (row < n_valid).astype(jnp.float32)
    sx = sx * valid
    sy = sy * valid

    d = sx - sy
    o_ref[0] = o_ref[0] + jnp.sum(d * d)                 # relative-L2 numerator
    o_ref[1] = o_ref[1] + jnp.sum(sx * sx)               # relative-L2 denominator
    o_ref[2] = o_ref[2] + jnp.sum(
        jnp.abs(jnp.log(sx + LOG_EPS) - jnp.log(sy + LOG_EPS)))  # L1 on log-spec


def pallas_spec_distance_terms(fx, fy, win, cosm, sinm, mel, n_valid, tile_rows):
    Rp, W = fx.shape
    F = cosm.shape[1]
    NM = mel.shape[1]
    kern = functools.partial(_stft_dist_kernel, n_valid=n_valid,
                             tile_rows=tile_rows)
    out = pl.pallas_call(
        kern,
        grid=(Rp // tile_rows,),
        out_shape=jax.ShapeDtypeStruct((3,), jnp.float32),
        in_specs=[pl.BlockSpec((tile_rows, W), lambda i: (i, 0)),
                  pl.BlockSpec((tile_rows, W), lambda i: (i, 0)),
                  pl.BlockSpec((1, W), lambda i: (0, 0)),
                  pl.BlockSpec((W, F), lambda i: (0, 0)),
                  pl.BlockSpec((W, F), lambda i: (0, 0)),
                  pl.BlockSpec((F, NM), lambda i: (0, 0))],
        out_specs=pl.BlockSpec(memory_space=pltpu.MemorySpace.SMEM),
        compiler_params=pltpu.CompilerParams(dimension_semantics=("arbitrary",)),
    )(fx, fy, win, cosm, sinm, mel)
    return out[0], out[1], out[2]


# --------------------------- slicer helper kernels --------------------------

def _proj_kernel(abT_ref, projT_ref, o_ref):
    o_ref[...] = jnp.dot(projT_ref[...], abT_ref[...],
                         preferred_element_type=jnp.float32)


def pallas_project_T(abT, projT):
    lat, N = abT.shape
    npj = projT.shape[0]
    TN = _pick_lane_tile(N)
    return pl.pallas_call(
        _proj_kernel,
        grid=(N // TN,),
        out_shape=jax.ShapeDtypeStruct((npj, N), jnp.float32),
        in_specs=[pl.BlockSpec((lat, TN), lambda i: (0, i)),
                  pl.BlockSpec((npj, lat), lambda i: (0, 0))],
        out_specs=pl.BlockSpec((npj, TN), lambda i: (0, i)),
        compiler_params=pltpu.CompilerParams(dimension_semantics=("parallel",)),
    )(abT, projT)


def _sumsq_diff_kernel(a_ref, b_ref, o_ref):
    d = a_ref[...] - b_ref[...]
    o_ref[0] = jnp.sum(d * d)


def pallas_sumsq_diff(a, b):
    M, N = a.shape
    out = pl.pallas_call(
        _sumsq_diff_kernel,
        grid=(1,),
        out_shape=jax.ShapeDtypeStruct((1,), jnp.float32),
        in_specs=[pl.BlockSpec((M, N), lambda i: (0, 0)),
                  pl.BlockSpec((M, N), lambda i: (0, 0))],
        out_specs=pl.BlockSpec(memory_space=pltpu.MemorySpace.SMEM),
    )(a, b)
    return out[0]


# ---------------------- gather-free STFT frame building ---------------------

def _frame_signal(sig, sc, hop):
    """sig: (NS, T) -> zero-padded frames (R_pad, sc), valid count R, row tile."""
    NS, T = sig.shape
    nfr = (T - sc) // hop + 1
    nph = max(sc // hop, 1)
    chunks = []
    for p in range(nph):                 # hop-phase decomposition: contiguous slices only
        n_p = len(range(p, nfr, nph))
        if n_p == 0:
            continue
        seg = sig[:, p * hop: p * hop + n_p * sc]
        chunks.append(seg.reshape(NS, n_p, sc))
    frames = jnp.concatenate(chunks, axis=1).reshape(NS * nfr, sc)
    R = NS * nfr
    R_pad, tile = _pad_rows(R)
    if R_pad != R:
        frames = jnp.pad(frames, ((0, R_pad - R), (0, 0)))
    return frames, R, tile


# ----------------------------- TrainerAE model ------------------------------

class TrainerAEPallas:
    def __init__(self, key, n_bands=16, latent_dim=8,
                 scales=(32, 16), num_mels=(8, 4)):
        self.n_bands = n_bands
        self.latent = latent_dim
        self.scales = scales
        self.num_mels = num_mels
        self.n_proj = 16

        ks = jax.random.split(key, 9)
        s = 1.0 / jnp.sqrt(jnp.float32(n_bands))
        # backbone parameters (deterministic synthetic init), stored transposed
        A = jax.random.normal(ks[0], (n_bands, n_bands), jnp.float32) * s      # decompose
        S = jax.random.normal(ks[1], (n_bands, n_bands), jnp.float32) * s      # recompose
        W_enc = jax.random.normal(ks[2], (n_bands, latent_dim), jnp.float32) * s
        b_enc = jax.random.normal(ks[3], (1, latent_dim), jnp.float32) * 0.1
        W_dec = (jax.random.normal(ks[4], (latent_dim, n_bands), jnp.float32)
                 / jnp.sqrt(jnp.float32(latent_dim)))
        b_dec = jax.random.normal(ks[5], (1, n_bands), jnp.float32) * 0.1
        self.AT = A.T
        self.ST = S.T
        self.WeT = W_enc.T
        self.beT = b_enc.T          # (latent, 1)
        self.WdT = W_dec.T
        self.bdT = b_dec.T          # (n_bands, 1)

        # multi-scale STFT (windowed DFT bases + nonnegative "mel"-like projection)
        mel_keys = jax.random.split(ks[6], len(scales))
        self.stft_params = []
        for i, (sc, nm) in enumerate(zip(scales, num_mels)):
            n = jnp.arange(sc, dtype=jnp.float32)
            k = jnp.arange(sc // 2 + 1, dtype=jnp.float32)
            ang = 2.0 * jnp.pi * n[:, None] * k[None, :] / sc
            cosm = jnp.cos(ang)
            sinm = -jnp.sin(ang)
            win = (0.5 - 0.5 * jnp.cos(2.0 * jnp.pi * n / sc)).reshape(1, sc)
            mel = (jnp.abs(jax.random.normal(mel_keys[i], (sc // 2 + 1, nm),
                                             jnp.float32))
                   / jnp.float32(sc // 2 + 1))
            self.stft_params.append((sc, sc // 4, win, cosm, sinm, mel))

        # slicer projection directions (unit-norm), stored transposed (n_proj, latent)
        proj = jax.random.normal(ks[7], (latent_dim, self.n_proj), jnp.float32)
        proj = proj / jnp.linalg.norm(proj, axis=0, keepdims=True)
        self.projT = proj.T
        self.prior_key = ks[8]

    # ---- closs.MultiScaleSTFT + AudioDistanceV1 (fused per scale) ----
    def distance(self, x, y):
        # AudioDistanceV1: sum over scales of relative-L2 + L1-on-log distances.
        # Relative-L2 is normalized by the FIRST argument's spectrum (matches the
        # torch mean_difference(target=spec(x), ...) convention); a tiny epsilon
        # guards the denominator against an all-zero spectrum.
        B, C, T = x.shape
        sx = x.reshape(B * C, T)
        sy = y.reshape(B * C, T)
        total = jnp.float32(0.0)
        for sc, hop, win, cosm, sinm, mel in self.stft_params:
            fx, R, tile = _frame_signal(sx, sc, hop)
            fy, _, _ = _frame_signal(sy, sc, hop)
            ssd, ssx, sald = pallas_spec_distance_terms(
                fx, fy, win, cosm, sinm, mel, R, tile)
            lin = ssd / (ssx + 1e-12)
            logd = sald / jnp.float32(R * mel.shape[1])
            total = total + lin + logd
        return total

    # ---- prior / slicer ----
    def prior_sampleT(self, n):
        # deterministic Gaussian samples, already transposed (latent, n)
        return jax.random.normal(self.prior_key, (self.latent, n), jnp.float32)

    def slicer_fgw_dist(self, aT, bT):
        # TODO(synk): fused Gromov-Wasserstein structure term has no clean Pallas
        # equivalent; sliced-Wasserstein-2 surrogate (sort stays in plain JAX).
        N = aT.shape[1]
        abT = jnp.concatenate([aT, bT], axis=1)          # (latent, 2N), lane-dense
        pT = pallas_project_T(abT, self.projT)           # (n_proj, 2N)
        paT = jnp.sort(pT[:, :N], axis=1)
        pbT = jnp.sort(pT[:, N:], axis=1)
        return pallas_sumsq_diff(paT, pbT) / jnp.float32(paT.size)

    # ---- TrainerAE.forward ----
    def forward(self, x):
        B, C, T = x.shape                                # C == 1
        nb, lat = self.n_bands, self.latent
        Tf = T // nb
        R = B * Tf

        # frame the signal and transpose so the big B*Tf axis is lane-dense
        xT = x.reshape(B * Tf, nb).T                     # (nb, R)

        # fused decompose -> encode(tanh) -> decode(tanh) -> recompose
        xsubT, zT, ysubT, yT = pallas_fused_ae(
            xT, self.AT, self.WeT, self.beT, self.WdT, self.bdT, self.ST)

        # layout plumbing back to (B, nb, Tf) / (B, 1, T) for the spectral distances
        x_sub = xsubT.reshape(nb, B, Tf).transpose(1, 0, 2)
        y_sub = ysubT.reshape(nb, B, Tf).transpose(1, 0, 2)
        y = yT.reshape(nb, B, Tf).transpose(1, 2, 0).reshape(B, 1, T)

        mb_dist = self.distance(y_sub, x_sub)
        fb_dist = self.distance(y, x)

        # prior / slicer on latents: zT is already z.transpose(1,2).reshape(-1, latent)^T
        z_samplesT = self.prior_sampleT(R)
        d_loss = self.slicer_fgw_dist(zT, z_samplesT)

        # F.mse_loss(y, x): the transposed slabs are element-wise permutations of y/x
        f_loss = pallas_sumsq_diff(yT, xT) / jnp.float32(yT.size)
        f_loss = jax.lax.stop_gradient(f_loss)           # mirrors torch.no_grad()

        return mb_dist, fb_dist, d_loss, f_loss


if __name__ == "__main__":
    key = jax.random.PRNGKey(0)
    k_param, k_x = jax.random.split(key)
    model = TrainerAEPallas(k_param)

    B, C, T = 2, 1, 512
    x = jax.random.normal(k_x, (B, C, T), jnp.float32)

    fwd = jax.jit(model.forward)
    mb, fb, d_loss, f_loss = fwd(x)
    jax.block_until_ready((mb, fb, d_loss, f_loss))

    for v in (mb, fb, d_loss, f_loss):
        assert jnp.isfinite(v), "non-finite output"
    print("KERNEL_OK")
</pallas_src>

<mosaic_0001>
module attributes {stable_mosaic.version = 11 : i64} {
  func.func @_ae_kernel(%arg0: i32, %arg1: memref<16x64xf32, #tpu.memory_space<vmem>>, %arg2: memref<16x16xf32, #tpu.memory_space<vmem>>, %arg3: memref<8x16xf32, #tpu.memory_space<vmem>>, %arg4: memref<8x1xf32, #tpu.memory_space<vmem>>, %arg5: memref<16x8xf32, #tpu.memory_space<vmem>>, %arg6: memref<16x1xf32, #tpu.memory_space<vmem>>, %arg7: memref<16x16xf32, #tpu.memory_space<vmem>>, %arg8: memref<16x64xf32, #tpu.memory_space<vmem>>, %arg9: memref<8x64xf32, #tpu.memory_space<vmem>>, %arg10: memref<16x64xf32, #tpu.memory_space<vmem>>, %arg11: memref<16x64xf32, #tpu.memory_space<vmem>>) attributes {dimension_semantics = [#tpu.dimension_semantics<parallel>], iteration_bounds = array<i64: 1>, scalar_prefetch = 0 : i64, scratch_operands = 0 : i64, tpu.core_type = #tpu.core_type<tc>, window_params = [{transform_indices = @transform_0, window_bounds = array<i64: 16, 64>}, {pipeline_mode = #tpu.pipeline_mode<synchronous>, transform_indices = @transform_1, window_bounds = array<i64: 16, 16>}, {pipeline_mode = #tpu.pipeline_mode<synchronous>, transform_indices = @transform_2, window_bounds = array<i64: 8, 16>}, {pipeline_mode = #tpu.pipeline_mode<synchronous>, transform_indices = @transform_3, window_bounds = array<i64: 8, 1>}, {pipeline_mode = #tpu.pipeline_mode<synchronous>, transform_indices = @transform_4, window_bounds = array<i64: 16, 8>}, {pipeline_mode = #tpu.pipeline_mode<synchronous>, transform_indices = @transform_5, window_bounds = array<i64: 16, 1>}, {pipeline_mode = #tpu.pipeline_mode<synchronous>, transform_indices = @transform_6, window_bounds = array<i64: 16, 16>}, {transform_indices = @transform_7, window_bounds = array<i64: 16, 64>}, {transform_indices = @transform_8, window_bounds = array<i64: 8, 64>}, {transform_indices = @transform_9, window_bounds = array<i64: 16, 64>}, {transform_indices = @transform_10, window_bounds = array<i64: 16, 64>}]} {
    %c0 = arith.constant 0 : index
    %c0_0 = arith.constant 0 : index
    %0 = vector.load %arg1[%c0, %c0_0] : memref<16x64xf32, #tpu.memory_space<vmem>>, vector<16x64xf32>
    %c0_1 = arith.constant 0 : index
    %c0_2 = arith.constant 0 : index
    %1 = vector.load %arg2[%c0_1, %c0_2] : memref<16x16xf32, #tpu.memory_space<vmem>>, vector<16x16xf32>
    %cst = arith.constant dense<0.000000e+00> : vector<16x64xf32>
    %2 = tpu.matmul %1, %0, %cst {dimension_numbers = #tpu.dot_dimension_numbers<[1], [0], [0], [1], [0, 0, 1, 1], [], []>} : vector<16x16xf32>, vector<16x64xf32>, vector<16x64xf32> -> vector<16x64xf32>
    %c0_3 = arith.constant 0 : index
    %c0_4 = arith.constant 0 : index
    %3 = vector.load %arg3[%c0_3, %c0_4] : memref<8x16xf32, #tpu.memory_space<vmem>>, vector<8x16xf32>
    %cst_5 = arith.constant dense<0.000000e+00> : vector<8x64xf32>
    %4 = tpu.matmul %3, %2, %cst_5 {dimension_numbers = #tpu.dot_dimension_numbers<[1], [0], [0], [1], [0, 0, 1, 1], [], []>} : vector<8x16xf32>, vector<16x64xf32>, vector<8x64xf32> -> vector<8x64xf32>
    %c0_6 = arith.constant 0 : index
    %c0_7 = arith.constant 0 : index
    %5 = vector.load %arg4[%c0_6, %c0_7] : memref<8x1xf32, #tpu.memory_space<vmem>>, vector<8x1xf32>
    %6 = vector.broadcast %5 : vector<8x1xf32> to vector<8x64xf32>
    %7 = arith.addf %4, %6 : vector<8x64xf32>
    %8 = math.tanh %7 : vector<8x64xf32>
    %c0_8 = arith.constant 0 : index
    %c0_9 = arith.constant 0 : index
    %9 = vector.load %arg5[%c0_8, %c0_9] : memref<16x8xf32, #tpu.memory_space<vmem>>, vector<16x8xf32>
    %cst_10 = arith.constant dense<0.000000e+00> : vector<16x64xf32>
    %10 = tpu.matmul %9, %8, %cst_10 {dimension_numbers = #tpu.dot_dimension_numbers<[1], [0], [0], [1], [0, 0, 1, 1], [], []>} : vector<16x8xf32>, vector<8x64xf32>, vector<16x64xf32> -> vector<16x64xf32>
    %c0_11 = arith.constant 0 : index
    %c0_12 = arith.constant 0 : index
    %11 = vector.load %arg6[%c0_11, %c0_12] : memref<16x1xf32, #tpu.memory_space<vmem>>, vector<16x1xf32>
    %12 = vector.broadcast %11 : vector<16x1xf32> to vector<16x64xf32>
    %13 = arith.addf %10, %12 : vector<16x64xf32>
    %14 = math.tanh %13 : vector<16x64xf32>
    %c0_13 = arith.constant 0 : index
    %c0_14 = arith.constant 0 : index
    %15 = vector.load %arg7[%c0_13, %c0_14] : memref<16x16xf32, #tpu.memory_space<vmem>>, vector<16x16xf32>
    %cst_15 = arith.constant dense<0.000000e+00> : vector<16x64xf32>
    %16 = tpu.matmul %15, %14, %cst_15 {dimension_numbers = #tpu.dot_dimension_numbers<[1], [0], [0], [1], [0, 0, 1, 1], [], []>} : vector<16x16xf32>, vector<16x64xf32>, vector<16x64xf32> -> vector<16x64xf32>
    %c0_16 = arith.constant 0 : index
    %c0_17 = arith.constant 0 : index
    %17 = vector.load %arg8[%c0_16, %c0_17] : memref<16x64xf32, #tpu.memory_space<vmem>>, vector<16x64xf32>
    tpu.vector_store %arg8[%c0_16, %c0_17], %2 {strides = array<i32>} : memref<16x64xf32, #tpu.memory_space<vmem>>, vector<16x64xf32>,
    %c0_18 = arith.constant 0 : index
    %c0_19 = arith.constant 0 : index
    %18 = vector.load %arg9[%c0_18, %c0_19] : memref<8x64xf32, #tpu.memory_space<vmem>>, vector<8x64xf32>
    tpu.vector_store %arg9[%c0_18, %c0_19], %8 {strides = array<i32>} : memref<8x64xf32, #tpu.memory_space<vmem>>, vector<8x64xf32>,
    %c0_20 = arith.constant 0 : index
    %c0_21 = arith.constant 0 : index
    %19 = vector.load %arg10[%c0_20, %c0_21] : memref<16x64xf32, #tpu.memory_space<vmem>>, vector<16x64xf32>
    tpu.vector_store %arg10[%c0_20, %c0_21], %14 {strides = array<i32>} : memref<16x64xf32, #tpu.memory_space<vmem>>, vector<16x64xf32>,
    %c0_22 = arith.constant 0 : index
    %c0_23 = arith.constant 0 : index
    %20 = vector.load %arg11[%c0_22, %c0_23] : memref<16x64xf32, #tpu.memory_space<vmem>>, vector<16x64xf32>
    tpu.vector_store %arg11[%c0_22, %c0_23], %16 {strides = array<i32>} : memref<16x64xf32, #tpu.memory_space<vmem>>, vector<16x64xf32>,
    return
  }
  func.func @transform_0(%arg0: i32) -> (i32, i32) {
    %c0_i32 = arith.constant 0 : i32
    %c0_i32_0 = arith.constant 0 : i32
    return %c0_i32, %arg0 : i32, i32
  }
  func.func @transform_1(%arg0: i32) -> (i32, i32) {
    %c0_i32 = arith.constant 0 : i32
    %c0_i32_0 = arith.constant 0 : i32
    %c0_i32_1 = arith.constant 0 : i32
    return %c0_i32, %c0_i32_0 : i32, i32
  }
  func.func @transform_2(%arg0: i32) -> (i32, i32) {
    %c0_i32 = arith.constant 0 : i32
    %c0_i32_0 = arith.constant 0 : i32
    %c0_i32_1 = arith.constant 0 : i32
    return %c0_i32, %c0_i32_0 : i32, i32
  }
  func.func @transform_3(%arg0: i32) -> (i32, i32) {
    %c0_i32 = arith.constant 0 : i32
    %c0_i32_0 = arith.constant 0 : i32
    %c0_i32_1 = arith.constant 0 : i32
    return %c0_i32, %c0_i32_0 : i32, i32
  }
  func.func @transform_4(%arg0: i32) -> (i32, i32) {
    %c0_i32 = arith.constant 0 : i32
    %c0_i32_0 = arith.constant 0 : i32
    %c0_i32_1 = arith.constant 0 : i32
    return %c0_i32, %c0_i32_0 : i32, i32
  }
  func.func @transform_5(%arg0: i32) -> (i32, i32) {
    %c0_i32 = arith.constant 0 : i32
    %c0_i32_0 = arith.constant 0 : i32
    %c0_i32_1 = arith.constant 0 : i32
    return %c0_i32, %c0_i32_0 : i32, i32
  }
  func.func @transform_6(%arg0: i32) -> (i32, i32) {
    %c0_i32 = arith.constant 0 : i32
    %c0_i32_0 = arith.constant 0 : i32
    %c0_i32_1 = arith.constant 0 : i32
    return %c0_i32, %c0_i32_0 : i32, i32
  }
  func.func @transform_7(%arg0: i32) -> (i32, i32) {
    %c0_i32 = arith.constant 0 : i32
    %c0_i32_0 = arith.constant 0 : i32
    return %c0_i32, %arg0 : i32, i32
  }
  func.func @transform_8(%arg0: i32) -> (i32, i32) {
    %c0_i32 = arith.constant 0 : i32
    %c0_i32_0 = arith.constant 0 : i32
    return %c0_i32, %arg0 : i32, i32
  }
  func.func @transform_9(%arg0: i32) -> (i32, i32) {
    %c0_i32 = arith.constant 0 : i32
    %c0_i32_0 = arith.constant 0 : i32
    return %c0_i32, %arg0 : i32, i32
  }
  func.func @transform_10(%arg0: i32) -> (i32, i32) {
    %c0_i32 = arith.constant 0 : i32
    %c0_i32_0 = arith.constant 0 : i32
    return %c0_i32, %arg0 : i32, i32
  }
}

module attributes {stable_mosaic.version = 11 : i64} {
  func.func @_stft_dist_kernel(%arg0: i32, %arg1: memref<32x32xf32, #tpu.memory_space<vmem>>, %arg2: memref<32x32xf32, #tpu.memory_space<vmem>>, %arg3: memref<1x32xf32, #tpu.memory_space<vmem>>, %arg4: memref<32x17xf32, #tpu.memory_space<vmem>>, %arg5: memref<32x17xf32, #tpu.memory_space<vmem>>, %arg6: memref<17x8xf32, #tpu.memory_space<vmem>>, %arg7: memref<3xf32, #tpu.memory_space<smem>>) attributes {dimension_semantics = [#tpu.dimension_semantics<arbitrary>], iteration_bounds = array<i64: 1>, scalar_prefetch = 0 : i64, scratch_operands = 0 : i64, tpu.core_type = #tpu.core_type<tc>, window_params = [{transform_indices = @transform_0, window_bounds = array<i64: 32, 32>}, {transform_indices = @transform_1, window_bounds = array<i64: 32, 32>}, {pipeline_mode = #tpu.pipeline_mode<synchronous>, transform_indices = @transform_2, window_bounds = array<i64: 1, 32>}, {pipeline_mode = #tpu.pipeline_mode<synchronous>, transform_indices = @transform_3, window_bounds = array<i64: 32, 17>}, {pipeline_mode = #tpu.pipeline_mode<synchronous>, transform_indices = @transform_4, window_bounds = array<i64: 32, 17>}, {pipeline_mode = #tpu.pipeline_mode<synchronous>, transform_indices = @transform_5, window_bounds = array<i64: 17, 8>}, {transform_indices = @transform_6, window_bounds = array<i64: 3>}]} {
    %c0_i32 = arith.constant 0 : i32
    %0 = arith.cmpi eq, %arg0, %c0_i32 : i32
    %1 = arith.extui %0 : i1 to i32
    %c0_i32_0 = arith.constant 0 : i32
    %2 = arith.cmpi ne, %1, %c0_i32_0 : i32
    scf.if %2 {
      %cst_35 = arith.constant 0.000000e+00 : f32
      %c0_36 = arith.constant 0 : index
      %76 = memref.load %arg7[%c0_36] : memref<3xf32, #tpu.memory_space<smem>>
      memref.store %cst_35, %arg7[%c0_36] : memref<3xf32, #tpu.memory_space<smem>>
      %cst_37 = arith.constant 0.000000e+00 : f32
      %c1_38 = arith.constant 1 : index
      %77 = memref.load %arg7[%c1_38] : memref<3xf32, #tpu.memory_space<smem>>
      memref.store %cst_37, %arg7[%c1_38] : memref<3xf32, #tpu.memory_space<smem>>
      %cst_39 = arith.constant 0.000000e+00 : f32
      %c2_40 = arith.constant 2 : index
      %78 = memref.load %arg7[%c2_40] : memref<3xf32, #tpu.memory_space<smem>>
      memref.store %cst_39, %arg7[%c2_40] : memref<3xf32, #tpu.memory_space<smem>>
    } else {
    }
    %c0 = arith.constant 0 : index
    %c0_1 = arith.constant 0 : index
    %3 = vector.load %arg3[%c0, %c0_1] : memref<1x32xf32, #tpu.memory_space<vmem>>, vector<1x32xf32>
    %c0_2 = arith.constant 0 : index
    %c0_3 = arith.constant 0 : index
    %4 = vector.load %arg1[%c0_2, %c0_3] : memref<32x32xf32, #tpu.memory_space<vmem>>, vector<32x32xf32>
    %5 = vector.broadcast %3 : vector<1x32xf32> to vector<32x32xf32>
    %6 = arith.mulf %4, %5 : vector<32x32xf32>
    %c0_4 = arith.constant 0 : index
    %c0_5 = arith.constant 0 : index
    %7 = vector.load %arg2[%c0_4, %c0_5] : memref<32x32xf32, #tpu.memory_space<vmem>>, vector<32x32xf32>
    %8 = vector.broadcast %3 : vector<1x32xf32> to vector<32x32xf32>
    %9 = arith.mulf %7, %8 : vector<32x32xf32>
    %c0_6 = arith.constant 0 : index
    %c0_7 = arith.constant 0 : index
    %10 = vector.load %arg4[%c0_6, %c0_7] : memref<32x17xf32, #tpu.memory_space<vmem>>, vector<32x17xf32>
    %cst = arith.constant dense<0.000000e+00> : vector<32x17xf32>
    %11 = tpu.matmul %6, %10, %cst {dimension_numbers = #tpu.dot_dimension_numbers<[1], [0], [0], [1], [0, 0, 1, 1], [], []>} : vector<32x32xf32>, vector<32x17xf32>, vector<32x17xf32> -> vector<32x17xf32>
    %c0_8 = arith.constant 0 : index
    %c0_9 = arith.constant 0 : index
    %12 = vector.load %arg5[%c0_8, %c0_9] : memref<32x17xf32, #tpu.memory_space<vmem>>, vector<32x17xf32>
    %cst_10 = arith.constant dense<0.000000e+00> : vector<32x17xf32>
    %13 = tpu.matmul %6, %12, %cst_10 {dimension_numbers = #tpu.dot_dimension_numbers<[1], [0], [0], [1], [0, 0, 1, 1], [], []>} : vector<32x32xf32>, vector<32x17xf32>, vector<32x17xf32> -> vector<32x17xf32>
    %c0_11 = arith.constant 0 : index
    %c0_12 = arith.constant 0 : index
    %14 = vector.load %arg4[%c0_11, %c0_12] : memref<32x17xf32, #tpu.memory_space<vmem>>, vector<32x17xf32>
    %cst_13 = arith.constant dense<0.000000e+00> : vector<32x17xf32>
    %15 = tpu.matmul %9, %14, %cst_13 {dimension_numbers = #tpu.dot_dimension_numbers<[1], [0], [0], [1], [0, 0, 1, 1], [], []>} : vector<32x32xf32>, vector<32x17xf32>, vector<32x17xf32> -> vector<32x17xf32>
    %c0_14 = arith.constant 0 : index
    %c0_15 = arith.constant 0 : index
    %16 = vector.load %arg5[%c0_14, %c0_15] : memref<32x17xf32, #tpu.memory_space<vmem>>, vector<32x17xf32>
    %cst_16 = arith.constant dense<0.000000e+00> : vector<32x17xf32>
    %17 = tpu.matmul %9, %16, %cst_16 {dimension_numbers = #tpu.dot_dimension_numbers<[1], [0], [0], [1], [0, 0, 1, 1], [], []>} : vector<32x32xf32>, vector<32x17xf32>, vector<32x17xf32> -> vector<32x17xf32>
    %18 = arith.mulf %11, %11 : vector<32x17xf32>
    %19 = arith.mulf %13, %13 : vector<32x17xf32>
    %20 = arith.addf %18, %19 : vector<32x17xf32>
    %cst_17 = arith.constant 9.99999996E-13 : f32
    %21 = vector.broadcast %cst_17 : f32 to vector<32x17xf32>
    %22 = arith.addf %20, %21 : vector<32x17xf32>
    %23 = math.sqrt %22 : vector<32x17xf32>
    %24 = arith.mulf %15, %15 : vector<32x17xf32>
    %25 = arith.mulf %17, %17 : vector<32x17xf32>
    %26 = arith.addf %24, %25 : vector<32x17xf32>
    %cst_18 = arith.constant 9.99999996E-13 : f32
    %27 = vector.broadcast %cst_18 : f32 to vector<32x17xf32>
    %28 = arith.addf %26, %27 : vector<32x17xf32>
    %29 = math.sqrt %28 : vector<32x17xf32>
    %c0_19 = arith.constant 0 : index
    %c0_20 = arith.constant 0 : index
    %30 = vector.load %arg6[%c0_19, %c0_20] : memref<17x8xf32, #tpu.memory_space<vmem>>, vector<17x8xf32>
    %cst_21 = arith.constant dense<0.000000e+00> : vector<32x8xf32>
    %31 = tpu.matmul %23, %30, %cst_21 {dimension_numbers = #tpu.dot_dimension_numbers<[1], [0], [0], [1], [0, 0, 1, 1], [], []>} : vector<32x17xf32>, vector<17x8xf32>, vector<32x8xf32> -> vector<32x8xf32>
    %c0_22 = arith.constant 0 : index
    %c0_23 = arith.constant 0 : index
    %32 = vector.load %arg6[%c0_22, %c0_23] : memref<17x8xf32, #tpu.memory_space<vmem>>, vector<17x8xf32>
    %cst_24 = arith.constant dense<0.000000e+00> : vector<32x8xf32>
    %33 = tpu.matmul %29, %32, %cst_24 {dimension_numbers = #tpu.dot_dimension_numbers<[1], [0], [0], [1], [0, 0, 1, 1], [], []>} : vector<32x17xf32>, vector<17x8xf32>, vector<32x8xf32> -> vector<32x8xf32>
    %34 = tpu.iota {dimensions = array<i32: 0>} : vector<32x8xi32>
    %c32_i32 = arith.constant 32 : i32
    %35 = arith.muli %arg0, %c32_i32 : i32
    %36 = vector.broadcast %35 : i32 to vector<32x8xi32>
    %37 = arith.addi %34, %36 : vector<32x8xi32>
    %c32_i32_25 = arith.constant 32 : i32
    %38 = vector.broadcast %c32_i32_25 : i32 to vector<32x8xi32>
    %39 = arith.cmpi slt, %37, %38 : vector<32x8xi32>
    %40 = arith.extui %39 : vector<32x8xi1> to vector<32x8xi32>
    %41 = arith.sitofp %40 : vector<32x8xi32> to vector<32x8xf32>
    %42 = arith.mulf %31, %41 : vector<32x8xf32>
    %43 = arith.mulf %33, %41 : vector<32x8xf32>
    %44 = arith.subf %42, %43 : vector<32x8xf32>
    %c0_26 = arith.constant 0 : index
    %45 = memref.load %arg7[%c0_26] : memref<3xf32, #tpu.memory_space<smem>>
    %46 = arith.mulf %44, %44 : vector<32x8xf32>
    %47 = vector.shape_cast %46 : vector<32x8xf32> to vector<1x32x8xf32>
    %cst_27 = arith.constant dense<0.000000e+00> : vector<1xf32>
    %48 = vector.multi_reduction <add>, %47, %cst_27 [1, 2] : vector<1x32x8xf32> to vector<1xf32>
    %49 = vector.shape_cast %48 : vector<1xf32> to vector<1x1x1xf32>
    %50 = vector.extract %49[0, 0, 0] : f32 from vector<1x1x1xf32>
    %51 = arith.addf %45, %50 : f32
    %c0_28 = arith.constant 0 : index
    %52 = memref.load %arg7[%c0_28] : memref<3xf32, #tpu.memory_space<smem>>
    memref.store %51, %arg7[%c0_28] : memref<3xf32, #tpu.memory_space<smem>>
    %c1 = arith.constant 1 : index
    %53 = memref.load %arg7[%c1] : memref<3xf32, #tpu.memory_space<smem>>
    %54 = arith.mulf %42, %42 : vector<32x8xf32>
    %55 = vector.shape_cast %54 : vector<32x8xf32> to vector<1x32x8xf32>
    %cst_29 = arith.constant dense<0.000000e+00> : vector<1xf32>
    %56 = vector.multi_reduction <add>, %55, %cst_29 [1, 2] : vector<1x32x8xf32> to vector<1xf32>
    %57 = vector.shape_cast %56 : vector<1xf32> to vector<1x1x1xf32>
    %58 = vector.extract %57[0, 0, 0] : f32 from vector<1x1x1xf32>
    %59 = arith.addf %53, %58 : f32
    %c1_30 = arith.constant 1 : index
    %60 = memref.load %arg7[%c1_30] : memref<3xf32, #tpu.memory_space<smem>>
    memref.store %59, %arg7[%c1_30] : memref<3xf32, #tpu.memory_space<smem>>
    %c2 = arith.constant 2 : index
    %61 = memref.load %arg7[%c2] : memref<3xf32, #tpu.memory_space<smem>>
    %cst_31 = arith.constant 1.000000e-07 : f32
    %62 = vector.broadcast %cst_31 : f32 to vector<32x8xf32>
    %63 = arith.addf %42, %62 : vector<32x8xf32>
    %64 = math.log %63 : vector<32x8xf32>
    %cst_32 = arith.constant 1.000000e-07 : f32
    %65 = vector.broadcast %cst_32 : f32 to vector<32x8xf32>
    %66 = arith.addf %43, %65 : vector<32x8xf32>
    %67 = math.log %66 : vector<32x8xf32>
    %68 = arith.subf %64, %67 : vector<32x8xf32>
    %69 = math.absf %68 : vector<32x8xf32>
    %70 = vector.shape_cast %69 : vector<32x8xf32> to vector<1x32x8xf32>
    %cst_33 = arith.constant dense<0.000000e+00> : vector<1xf32>
    %71 = vector.multi_reduction <add>, %70, %cst_33 [1, 2] : vector<1x32x8xf32> to vector<1xf32>
    %72 = vector.shape_cast %71 : vector<1xf32> to vector<1x1x1xf32>
    %73 = vector.extract %72[0, 0, 0] : f32 from vector<1x1x1xf32>
    %74 = arith.addf %61, %73 : f32
    %c2_34 = arith.constant 2 : index
    %75 = memref.load %arg7[%c2_34] : memref<3xf32, #tpu.memory_space<smem>>
    memref.store %74, %arg7[%c2_34] : memref<3xf32, #tpu.memory_space<smem>>
    return
  }
  func.func @transform_0(%arg0: i32) -> (i32, i32) {
    %c0_i32 = arith.constant 0 : i32
    %c0_i32_0 = arith.constant 0 : i32
    return %arg0, %c0_i32 : i32, i32
  }
  func.func @transform_1(%arg0: i32) -> (i32, i32) {
    %c0_i32 = arith.constant 0 : i32
    %c0_i32_0 = arith.constant 0 : i32
    return %arg0, %c0_i32 : i32, i32
  }
  func.func @transform_2(%arg0: i32) -> (i32, i32) {
    %c0_i32 = arith.constant 0 : i32
    %c0_i32_0 = arith.constant 0 : i32
    %c0_i32_1 = arith.constant 0 : i32
    return %c0_i32, %c0_i32_0 : i32, i32
  }
  func.func @transform_3(%arg0: i32) -> (i32, i32) {
    %c0_i32 = arith.constant 0 : i32
    %c0_i32_0 = arith.constant 0 : i32
    %c0_i32_1 = arith.constant 0 : i32
    return %c0_i32, %c0_i32_0 : i32, i32
  }
  func.func @transform_4(%arg0: i32) -> (i32, i32) {
    %c0_i32 = arith.constant 0 : i32
    %c0_i32_0 = arith.constant 0 : i32
    %c0_i32_1 = arith.constant 0 : i32
    return %c0_i32, %c0_i32_0 : i32, i32
  }
  func.func @transform_5(%arg0: i32) -> (i32, i32) {
    %c0_i32 = arith.constant 0 : i32
    %c0_i32_0 = arith.constant 0 : i32
    %c0_i32_1 = arith.constant 0 : i32
    return %c0_i32, %c0_i32_0 : i32, i32
  }
  func.func @transform_6(%arg0: i32) -> i32 {
    %c0_i32 = arith.constant 0 : i32
    %c0_i32_0 = arith.constant 0 : i32
    return %c0_i32 : i32
  }
}

module attributes {stable_mosaic.version = 11 : i64} {
  func.func @_stft_dist_kernel(%arg0: i32, %arg1: memref<128x16xf32, #tpu.memory_space<vmem>>, %arg2: memref<128x16xf32, #tpu.memory_space<vmem>>, %arg3: memref<1x16xf32, #tpu.memory_space<vmem>>, %arg4: memref<16x9xf32, #tpu.memory_space<vmem>>, %arg5: memref<16x9xf32, #tpu.memory_space<vmem>>, %arg6: memref<9x4xf32, #tpu.memory_space<vmem>>, %arg7: memref<3xf32, #tpu.memory_space<smem>>) attributes {dimension_semantics = [#tpu.dimension_semantics<arbitrary>], iteration_bounds = array<i64: 2>, scalar_prefetch = 0 : i64, scratch_operands = 0 : i64, tpu.core_type = #tpu.core_type<tc>, window_params = [{transform_indices = @transform_0, window_bounds = array<i64: 128, 16>}, {transform_indices = @transform_1, window_bounds = array<i64: 128, 16>}, {pipeline_mode = #tpu.pipeline_mode<synchronous>, transform_indices = @transform_2, window_bounds = array<i64: 1, 16>}, {pipeline_mode = #tpu.pipeline_mode<synchronous>, transform_indices = @transform_3, window_bounds = array<i64: 16, 9>}, {pipeline_mode = #tpu.pipeline_mode<synchronous>, transform_indices = @transform_4, window_bounds = array<i64: 16, 9>}, {pipeline_mode = #tpu.pipeline_mode<synchronous>, transform_indices = @transform_5, window_bounds = array<i64: 9, 4>}, {transform_indices = @transform_6, window_bounds = array<i64: 3>}]} {
    %c0_i32 = arith.constant 0 : i32
    %0 = arith.cmpi eq, %arg0, %c0_i32 : i32
    %1 = arith.extui %0 : i1 to i32
    %c0_i32_0 = arith.constant 0 : i32
    %2 = arith.cmpi ne, %1, %c0_i32_0 : i32
    scf.if %2 {
      %cst_34 = arith.constant 0.000000e+00 : f32
      %c0_35 = arith.constant 0 : index
      %76 = memref.load %arg7[%c0_35] : memref<3xf32, #tpu.memory_space<smem>>
      memref.store %cst_34, %arg7[%c0_35] : memref<3xf32, #tpu.memory_space<smem>>
      %cst_36 = arith.constant 0.000000e+00 : f32
      %c1_37 = arith.constant 1 : index
      %77 = memref.load %arg7[%c1_37] : memref<3xf32, #tpu.memory_space<smem>>
      memref.store %cst_36, %arg7[%c1_37] : memref<3xf32, #tpu.memory_space<smem>>
      %cst_38 = arith.constant 0.000000e+00 : f32
      %c2_39 = arith.constant 2 : index
      %78 = memref.load %arg7[%c2_39] : memref<3xf32, #tpu.memory_space<smem>>
      memref.store %cst_38, %arg7[%c2_39] : memref<3xf32, #tpu.memory_space<smem>>
    } else {
    }
    %c0 = arith.constant 0 : index
    %c0_1 = arith.constant 0 : index
    %3 = vector.load %arg3[%c0, %c0_1] : memref<1x16xf32, #tpu.memory_space<vmem>>, vector<1x16xf32>
    %c0_2 = arith.constant 0 : index
    %c0_3 = arith.constant 0 : index
    %4 = vector.load %arg1[%c0_2, %c0_3] : memref<128x16xf32, #tpu.memory_space<vmem>>, vector<128x16xf32>
    %5 = vector.broadcast %3 : vector<1x16xf32> to vector<128x16xf32>
    %6 = arith.mulf %4, %5 : vector<128x16xf32>
    %c0_4 = arith.constant 0 : index
    %c0_5 = arith.constant 0 : index
    %7 = vector.load %arg2[%c0_4, %c0_5] : memref<128x16xf32, #tpu.memory_space<vmem>>, vector<128x16xf32>
    %8 = vector.broadcast %3 : vector<1x16xf32> to vector<128x16xf32>
    %9 = arith.mulf %7, %8 : vector<128x16xf32>
    %c0_6 = arith.constant 0 : index
    %c0_7 = arith.constant 0 : index
    %10 = vector.load %arg4[%c0_6, %c0_7] : memref<16x9xf32, #tpu.memory_space<vmem>>, vector<16x9xf32>
    %cst = arith.constant dense<0.000000e+00> : vector<128x9xf32>
    %11 = tpu.matmul %6, %10, %cst {dimension_numbers = #tpu.dot_dimension_numbers<[1], [0], [0], [1], [0, 0, 1, 1], [], []>} : vector<128x16xf32>, vector<16x9xf32>, vector<128x9xf32> -> vector<128x9xf32>
    %c0_8 = arith.constant 0 : index
    %c0_9 = arith.constant 0 : index
    %12 = vector.load %arg5[%c0_8, %c0_9] : memref<16x9xf32, #tpu.memory_space<vmem>>, vector<16x9xf32>
    %cst_10 = arith.constant dense<0.000000e+00> : vector<128x9xf32>
    %13 = tpu.matmul %6, %12, %cst_10 {dimension_numbers = #tpu.dot_dimension_numbers<[1], [0], [0], [1], [0, 0, 1, 1], [], []>} : vector<128x16xf32>, vector<16x9xf32>, vector<128x9xf32> -> vector<128x9xf32>
    %c0_11 = arith.constant 0 : index
    %c0_12 = arith.constant 0 : index
    %14 = vector.load %arg4[%c0_11, %c0_12] : memref<16x9xf32, #tpu.memory_space<vmem>>, vector<16x9xf32>
    %cst_13 = arith.constant dense<0.000000e+00> : vector<128x9xf32>
    %15 = tpu.matmul %9, %14, %cst_13 {dimension_numbers = #tpu.dot_dimension_numbers<[1], [0], [0], [1], [0, 0, 1, 1], [], []>} : vector<128x16xf32>, vector<16x9xf32>, vector<128x9xf32> -> vector<128x9xf32>
    %c0_14 = arith.constant 0 : index
    %c0_15 = arith.constant 0 : index
    %16 = vector.load %arg5[%c0_14, %c0_15] : memref<16x9xf32, #tpu.memory_space<vmem>>, vector<16x9xf32>
    %cst_16 = arith.constant dense<0.000000e+00> : vector<128x9xf32>
    %17 = tpu.matmul %9, %16, %cst_16 {dimension_numbers = #tpu.dot_dimension_numbers<[1], [0], [0], [1], [0, 0, 1, 1], [], []>} : vector<128x16xf32>, vector<16x9xf32>, vector<128x9xf32> -> vector<128x9xf32>
    %18 = arith.mulf %11, %11 : vector<128x9xf32>
    %19 = arith.mulf %13, %13 : vector<128x9xf32>
    %20 = arith.addf %18, %19 : vector<128x9xf32>
    %cst_17 = arith.constant 9.99999996E-13 : f32
    %21 = vector.broadcast %cst_17 : f32 to vector<128x9xf32>
    %22 = arith.addf %20, %21 : vector<128x9xf32>
    %23 = math.sqrt %22 : vector<128x9xf32>
    %24 = arith.mulf %15, %15 : vector<128x9xf32>
    %25 = arith.mulf %17, %17 : vector<128x9xf32>
    %26 = arith.addf %24, %25 : vector<128x9xf32>
    %cst_18 = arith.constant 9.99999996E-13 : f32
    %27 = vector.broadcast %cst_18 : f32 to vector<128x9xf32>
    %28 = arith.addf %26, %27 : vector<128x9xf32>
    %29 = math.sqrt %28 : vector<128x9xf32>
    %c0_19 = arith.constant 0 : index
    %c0_20 = arith.constant 0 : index
    %30 = vector.load %arg6[%c0_19, %c0_20] : memref<9x4xf32, #tpu.memory_space<vmem>>, vector<9x4xf32>
    %cst_21 = arith.constant dense<0.000000e+00> : vector<128x4xf32>
    %31 = tpu.matmul %23, %30, %cst_21 {dimension_numbers = #tpu.dot_dimension_numbers<[1], [0], [0], [1], [0, 0, 1, 1], [], []>} : vector<128x9xf32>, vector<9x4xf32>, vector<128x4xf32> -> vector<128x4xf32>
    %c0_22 = arith.constant 0 : index
    %c0_23 = arith.constant 0 : index
    %32 = vector.load %arg6[%c0_22, %c0_23] : memref<9x4xf32, #tpu.memory_space<vmem>>, vector<9x4xf32>
    %cst_24 = arith.constant dense<0.000000e+00> : vector<128x4xf32>
    %33 = tpu.matmul %29, %32, %cst_24 {dimension_numbers = #tpu.dot_dimension_numbers<[1], [0], [0], [1], [0, 0, 1, 1], [], []>} : vector<128x9xf32>, vector<9x4xf32>, vector<128x4xf32> -> vector<128x4xf32>
    %34 = tpu.iota {dimensions = array<i32: 0>} : vector<128x4xi32>
    %c128_i32 = arith.constant 128 : i32
    %35 = arith.muli %arg0, %c128_i32 : i32
    %36 = vector.broadcast %35 : i32 to vector<128x4xi32>
    %37 = arith.addi %34, %36 : vector<128x4xi32>
    %c160_i32 = arith.constant 160 : i32
    %38 = vector.broadcast %c160_i32 : i32 to vector<128x4xi32>
    %39 = arith.cmpi slt, %37, %38 : vector<128x4xi32>
    %40 = arith.extui %39 : vector<128x4xi1> to vector<128x4xi32>
    %41 = arith.sitofp %40 : vector<128x4xi32> to vector<128x4xf32>
    %42 = arith.mulf %31, %41 : vector<128x4xf32>
    %43 = arith.mulf %33, %41 : vector<128x4xf32>
    %44 = arith.subf %42, %43 : vector<128x4xf32>
    %c0_25 = arith.constant 0 : index
    %45 = memref.load %arg7[%c0_25] : memref<3xf32, #tpu.memory_space<smem>>
    %46 = arith.mulf %44, %44 : vector<128x4xf32>
    %47 = vector.shape_cast %46 : vector<128x4xf32> to vector<1x128x4xf32>
    %cst_26 = arith.constant dense<0.000000e+00> : vector<1xf32>
    %48 = vector.multi_reduction <add>, %47, %cst_26 [1, 2] : vector<1x128x4xf32> to vector<1xf32>
    %49 = vector.shape_cast %48 : vector<1xf32> to vector<1x1x1xf32>
    %50 = vector.extract %49[0, 0, 0] : f32 from vector<1x1x1xf32>
    %51 = arith.addf %45, %50 : f32
    %c0_27 = arith.constant 0 : index
    %52 = memref.load %arg7[%c0_27] : memref<3xf32, #tpu.memory_space<smem>>
    memref.store %51, %arg7[%c0_27] : memref<3xf32, #tpu.memory_space<smem>>
    %c1 = arith.constant 1 : index
    %53 = memref.load %arg7[%c1] : memref<3xf32, #tpu.memory_space<smem>>
    %54 = arith.mulf %42, %42 : vector<128x4xf32>
    %55 = vector.shape_cast %54 : vector<128x4xf32> to vector<1x128x4xf32>
    %cst_28 = arith.constant dense<0.000000e+00> : vector<1xf32>
    %56 = vector.multi_reduction <add>, %55, %cst_28 [1, 2] : vector<1x128x4xf32> to vector<1xf32>
    %57 = vector.shape_cast %56 : vector<1xf32> to vector<1x1x1xf32>
    %58 = vector.extract %57[0, 0, 0] : f32 from vector<1x1x1xf32>
    %59 = arith.addf %53, %58 : f32
    %c1_29 = arith.constant 1 : index
    %60 = memref.load %arg7[%c1_29] : memref<3xf32, #tpu.memory_space<smem>>
    memref.store %59, %arg7[%c1_29] : memref<3xf32, #tpu.memory_space<smem>>
    %c2 = arith.constant 2 : index
    %61 = memref.load %arg7[%c2] : memref<3xf32, #tpu.memory_space<smem>>
    %cst_30 = arith.constant 1.000000e-07 : f32
    %62 = vector.broadcast %cst_30 : f32 to vector<128x4xf32>
    %63 = arith.addf %42, %62 : vector<128x4xf32>
    %64 = math.log %63 : vector<128x4xf32>
    %cst_31 = arith.constant 1.000000e-07 : f32
    %65 = vector.broadcast %cst_31 : f32 to vector<128x4xf32>
    %66 = arith.addf %43, %65 : vector<128x4xf32>
    %67 = math.log %66 : vector<128x4xf32>
    %68 = arith.subf %64, %67 : vector<128x4xf32>
    %69 = math.absf %68 : vector<128x4xf32>
    %70 = vector.shape_cast %69 : vector<128x4xf32> to vector<1x128x4xf32>
    %cst_32 = arith.constant dense<0.000000e+00> : vector<1xf32>
    %71 = vector.multi_reduction <add>, %70, %cst_32 [1, 2] : vector<1x128x4xf32> to vector<1xf32>
    %72 = vector.shape_cast %71 : vector<1xf32> to vector<1x1x1xf32>
    %73 = vector.extract %72[0, 0, 0] : f32 from vector<1x1x1xf32>
    %74 = arith.addf %61, %73 : f32
    %c2_33 = arith.constant 2 : index
    %75 = memref.load %arg7[%c2_33] : memref<3xf32, #tpu.memory_space<smem>>
    memref.store %74, %arg7[%c2_33] : memref<3xf32, #tpu.memory_space<smem>>
    return
  }
  func.func @transform_0(%arg0: i32) -> (i32, i32) {
    %c0_i32 = arith.constant 0 : i32
    %c0_i32_0 = arith.constant 0 : i32
    return %arg0, %c0_i32 : i32, i32
  }
  func.func @transform_1(%arg0: i32) -> (i32, i32) {
    %c0_i32 = arith.constant 0 : i32
    %c0_i32_0 = arith.constant 0 : i32
    return %arg0, %c0_i32 : i32, i32
  }
  func.func @transform_2(%arg0: i32) -> (i32, i32) {
    %c0_i32 = arith.constant 0 : i32
    %c0_i32_0 = arith.constant 0 : i32
    %c0_i32_1 = arith.constant 0 : i32
    return %c0_i32, %c0_i32_0 : i32, i32
  }
  func.func @transform_3(%arg0: i32) -> (i32, i32) {
    %c0_i32 = arith.constant 0 : i32
    %c0_i32_0 = arith.constant 0 : i32
    %c0_i32_1 = arith.constant 0 : i32
    return %c0_i32, %c0_i32_0 : i32, i32
  }
  func.func @transform_4(%arg0: i32) -> (i32, i32) {
    %c0_i32 = arith.constant 0 : i32
    %c0_i32_0 = arith.constant 0 : i32
    %c0_i32_1 = arith.constant 0 : i32
    return %c0_i32, %c0_i32_0 : i32, i32
  }
  func.func @transform_5(%arg0: i32) -> (i32, i32) {
    %c0_i32 = arith.constant 0 : i32
    %c0_i32_0 = arith.constant 0 : i32
    %c0_i32_1 = arith.constant 0 : i32
    return %c0_i32, %c0_i32_0 : i32, i32
  }
  func.func @transform_6(%arg0: i32) -> i32 {
    %c0_i32 = arith.constant 0 : i32
    %c0_i32_0 = arith.constant 0 : i32
    return %c0_i32 : i32
  }
}

module attributes {stable_mosaic.version = 11 : i64} {
  func.func @_stft_dist_kernel(%arg0: i32, %arg1: memref<128x32xf32, #tpu.memory_space<vmem>>, %arg2: memref<128x32xf32, #tpu.memory_space<vmem>>, %arg3: memref<1x32xf32, #tpu.memory_space<vmem>>, %arg4: memref<32x17xf32, #tpu.memory_space<vmem>>, %arg5: memref<32x17xf32, #tpu.memory_space<vmem>>, %arg6: memref<17x8xf32, #tpu.memory_space<vmem>>, %arg7: memref<3xf32, #tpu.memory_space<smem>>) attributes {dimension_semantics = [#tpu.dimension_semantics<arbitrary>], iteration_bounds = array<i64: 1>, scalar_prefetch = 0 : i64, scratch_operands = 0 : i64, tpu.core_type = #tpu.core_type<tc>, window_params = [{transform_indices = @transform_0, window_bounds = array<i64: 128, 32>}, {transform_indices = @transform_1, window_bounds = array<i64: 128, 32>}, {pipeline_mode = #tpu.pipeline_mode<synchronous>, transform_indices = @transform_2, window_bounds = array<i64: 1, 32>}, {pipeline_mode = #tpu.pipeline_mode<synchronous>, transform_indices = @transform_3, window_bounds = array<i64: 32, 17>}, {pipeline_mode = #tpu.pipeline_mode<synchronous>, transform_indices = @transform_4, window_bounds = array<i64: 32, 17>}, {pipeline_mode = #tpu.pipeline_mode<synchronous>, transform_indices = @transform_5, window_bounds = array<i64: 17, 8>}, {transform_indices = @transform_6, window_bounds = array<i64: 3>}]} {
    %c0_i32 = arith.constant 0 : i32
    %0 = arith.cmpi eq, %arg0, %c0_i32 : i32
    %1 = arith.extui %0 : i1 to i32
    %c0_i32_0 = arith.constant 0 : i32
    %2 = arith.cmpi ne, %1, %c0_i32_0 : i32
    scf.if %2 {
      %cst_34 = arith.constant 0.000000e+00 : f32
      %c0_35 = arith.constant 0 : index
      %76 = memref.load %arg7[%c0_35] : memref<3xf32, #tpu.memory_space<smem>>
      memref.store %cst_34, %arg7[%c0_35] : memref<3xf32, #tpu.memory_space<smem>>
      %cst_36 = arith.constant 0.000000e+00 : f32
      %c1_37 = arith.constant 1 : index
      %77 = memref.load %arg7[%c1_37] : memref<3xf32, #tpu.memory_space<smem>>
      memref.store %cst_36, %arg7[%c1_37] : memref<3xf32, #tpu.memory_space<smem>>
      %cst_38 = arith.constant 0.000000e+00 : f32
      %c2_39 = arith.constant 2 : index
      %78 = memref.load %arg7[%c2_39] : memref<3xf32, #tpu.memory_space<smem>>
      memref.store %cst_38, %arg7[%c2_39] : memref<3xf32, #tpu.memory_space<smem>>
    } else {
    }
    %c0 = arith.constant 0 : index
    %c0_1 = arith.constant 0 : index
    %3 = vector.load %arg3[%c0, %c0_1] : memref<1x32xf32, #tpu.memory_space<vmem>>, vector<1x32xf32>
    %c0_2 = arith.constant 0 : index
    %c0_3 = arith.constant 0 : index
    %4 = vector.load %arg1[%c0_2, %c0_3] : memref<128x32xf32, #tpu.memory_space<vmem>>, vector<128x32xf32>
    %5 = vector.broadcast %3 : vector<1x32xf32> to vector<128x32xf32>
    %6 = arith.mulf %4, %5 : vector<128x32xf32>
    %c0_4 = arith.constant 0 : index
    %c0_5 = arith.constant 0 : index
    %7 = vector.load %arg2[%c0_4, %c0_5] : memref<128x32xf32, #tpu.memory_space<vmem>>, vector<128x32xf32>
    %8 = vector.broadcast %3 : vector<1x32xf32> to vector<128x32xf32>
    %9 = arith.mulf %7, %8 : vector<128x32xf32>
    %c0_6 = arith.constant 0 : index
    %c0_7 = arith.constant 0 : index
    %10 = vector.load %arg4[%c0_6, %c0_7] : memref<32x17xf32, #tpu.memory_space<vmem>>, vector<32x17xf32>
    %cst = arith.constant dense<0.000000e+00> : vector<128x17xf32>
    %11 = tpu.matmul %6, %10, %cst {dimension_numbers = #tpu.dot_dimension_numbers<[1], [0], [0], [1], [0, 0, 1, 1], [], []>} : vector<128x32xf32>, vector<32x17xf32>, vector<128x17xf32> -> vector<128x17xf32>
    %c0_8 = arith.constant 0 : index
    %c0_9 = arith.constant 0 : index
    %12 = vector.load %arg5[%c0_8, %c0_9] : memref<32x17xf32, #tpu.memory_space<vmem>>, vector<32x17xf32>
    %cst_10 = arith.constant dense<0.000000e+00> : vector<128x17xf32>
    %13 = tpu.matmul %6, %12, %cst_10 {dimension_numbers = #tpu.dot_dimension_numbers<[1], [0], [0], [1], [0, 0, 1, 1], [], []>} : vector<128x32xf32>, vector<32x17xf32>, vector<128x17xf32> -> vector<128x17xf32>
    %c0_11 = arith.constant 0 : index
    %c0_12 = arith.constant 0 : index
    %14 = vector.load %arg4[%c0_11, %c0_12] : memref<32x17xf32, #tpu.memory_space<vmem>>, vector<32x17xf32>
    %cst_13 = arith.constant dense<0.000000e+00> : vector<128x17xf32>
    %15 = tpu.matmul %9, %14, %cst_13 {dimension_numbers = #tpu.dot_dimension_numbers<[1], [0], [0], [1], [0, 0, 1, 1], [], []>} : vector<128x32xf32>, vector<32x17xf32>, vector<128x17xf32> -> vector<128x17xf32>
    %c0_14 = arith.constant 0 : index
    %c0_15 = arith.constant 0 : index
    %16 = vector.load %arg5[%c0_14, %c0_15] : memref<32x17xf32, #tpu.memory_space<vmem>>, vector<32x17xf32>
    %cst_16 = arith.constant dense<0.000000e+00> : vector<128x17xf32>
    %17 = tpu.matmul %9, %16, %cst_16 {dimension_numbers = #tpu.dot_dimension_numbers<[1], [0], [0], [1], [0, 0, 1, 1], [], []>} : vector<128x32xf32>, vector<32x17xf32>, vector<128x17xf32> -> vector<128x17xf32>
    %18 = arith.mulf %11, %11 : vector<128x17xf32>
    %19 = arith.mulf %13, %13 : vector<128x17xf32>
    %20 = arith.addf %18, %19 : vector<128x17xf32>
    %cst_17 = arith.constant 9.99999996E-13 : f32
    %21 = vector.broadcast %cst_17 : f32 to vector<128x17xf32>
    %22 = arith.addf %20, %21 : vector<128x17xf32>
    %23 = math.sqrt %22 : vector<128x17xf32>
    %24 = arith.mulf %15, %15 : vector<128x17xf32>
    %25 = arith.mulf %17, %17 : vector<128x17xf32>
    %26 = arith.addf %24, %25 : vector<128x17xf32>
    %cst_18 = arith.constant 9.99999996E-13 : f32
    %27 = vector.broadcast %cst_18 : f32 to vector<128x17xf32>
    %28 = arith.addf %26, %27 : vector<128x17xf32>
    %29 = math.sqrt %28 : vector<128x17xf32>
    %c0_19 = arith.constant 0 : index
    %c0_20 = arith.constant 0 : index
    %30 = vector.load %arg6[%c0_19, %c0_20] : memref<17x8xf32, #tpu.memory_space<vmem>>, vector<17x8xf32>
    %cst_21 = arith.constant dense<0.000000e+00> : vector<128x8xf32>
    %31 = tpu.matmul %23, %30, %cst_21 {dimension_numbers = #tpu.dot_dimension_numbers<[1], [0], [0], [1], [0, 0, 1, 1], [], []>} : vector<128x17xf32>, vector<17x8xf32>, vector<128x8xf32> -> vector<128x8xf32>
    %c0_22 = arith.constant 0 : index
    %c0_23 = arith.constant 0 : index
    %32 = vector.load %arg6[%c0_22, %c0_23] : memref<17x8xf32, #tpu.memory_space<vmem>>, vector<17x8xf32>
    %cst_24 = arith.constant dense<0.000000e+00> : vector<128x8xf32>
    %33 = tpu.matmul %29, %32, %cst_24 {dimension_numbers = #tpu.dot_dimension_numbers<[1], [0], [0], [1], [0, 0, 1, 1], [], []>} : vector<128x17xf32>, vector<17x8xf32>, vector<128x8xf32> -> vector<128x8xf32>
    %34 = tpu.iota {dimensions = array<i32: 0>} : vector<128x8xi32>
    %c128_i32 = arith.constant 128 : i32
    %35 = arith.muli %arg0, %c128_i32 : i32
    %36 = vector.broadcast %35 : i32 to vector<128x8xi32>
    %37 = arith.addi %34, %36 : vector<128x8xi32>
    %c122_i32 = arith.constant 122 : i32
    %38 = vector.broadcast %c122_i32 : i32 to vector<128x8xi32>
    %39 = arith.cmpi slt, %37, %38 : vector<128x8xi32>
    %40 = arith.extui %39 : vector<128x8xi1> to vector<128x8xi32>
    %41 = arith.sitofp %40 : vector<128x8xi32> to vector<128x8xf32>
    %42 = arith.mulf %31, %41 : vector<128x8xf32>
    %43 = arith.mulf %33, %41 : vector<128x8xf32>
    %44 = arith.subf %42, %43 : vector<128x8xf32>
    %c0_25 = arith.constant 0 : index
    %45 = memref.load %arg7[%c0_25] : memref<3xf32, #tpu.memory_space<smem>>
    %46 = arith.mulf %44, %44 : vector<128x8xf32>
    %47 = vector.shape_cast %46 : vector<128x8xf32> to vector<1x128x8xf32>
    %cst_26 = arith.constant dense<0.000000e+00> : vector<1xf32>
    %48 = vector.multi_reduction <add>, %47, %cst_26 [1, 2] : vector<1x128x8xf32> to vector<1xf32>
    %49 = vector.shape_cast %48 : vector<1xf32> to vector<1x1x1xf32>
    %50 = vector.extract %49[0, 0, 0] : f32 from vector<1x1x1xf32>
    %51 = arith.addf %45, %50 : f32
    %c0_27 = arith.constant 0 : index
    %52 = memref.load %arg7[%c0_27] : memref<3xf32, #tpu.memory_space<smem>>
    memref.store %51, %arg7[%c0_27] : memref<3xf32, #tpu.memory_space<smem>>
    %c1 = arith.constant 1 : index
    %53 = memref.load %arg7[%c1] : memref<3xf32, #tpu.memory_space<smem>>
    %54 = arith.mulf %42, %42 : vector<128x8xf32>
    %55 = vector.shape_cast %54 : vector<128x8xf32> to vector<1x128x8xf32>
    %cst_28 = arith.constant dense<0.000000e+00> : vector<1xf32>
    %56 = vector.multi_reduction <add>, %55, %cst_28 [1, 2] : vector<1x128x8xf32> to vector<1xf32>
    %57 = vector.shape_cast %56 : vector<1xf32> to vector<1x1x1xf32>
    %58 = vector.extract %57[0, 0, 0] : f32 from vector<1x1x1xf32>
    %59 = arith.addf %53, %58 : f32
    %c1_29 = arith.constant 1 : index
    %60 = memref.load %arg7[%c1_29] : memref<3xf32, #tpu.memory_space<smem>>
    memref.store %59, %arg7[%c1_29] : memref<3xf32, #tpu.memory_space<smem>>
    %c2 = arith.constant 2 : index
    %61 = memref.load %arg7[%c2] : memref<3xf32, #tpu.memory_space<smem>>
    %cst_30 = arith.constant 1.000000e-07 : f32
    %62 = vector.broadcast %cst_30 : f32 to vector<128x8xf32>
    %63 = arith.addf %42, %62 : vector<128x8xf32>
    %64 = math.log %63 : vector<128x8xf32>
    %cst_31 = arith.constant 1.000000e-07 : f32
    %65 = vector.broadcast %cst_31 : f32 to vector<128x8xf32>
    %66 = arith.addf %43, %65 : vector<128x8xf32>
    %67 = math.log %66 : vector<128x8xf32>
    %68 = arith.subf %64, %67 : vector<128x8xf32>
    %69 = math.absf %68 : vector<128x8xf32>
    %70 = vector.shape_cast %69 : vector<128x8xf32> to vector<1x128x8xf32>
    %cst_32 = arith.constant dense<0.000000e+00> : vector<1xf32>
    %71 = vector.multi_reduction <add>, %70, %cst_32 [1, 2] : vector<1x128x8xf32> to vector<1xf32>
    %72 = vector.shape_cast %71 : vector<1xf32> to vector<1x1x1xf32>
    %73 = vector.extract %72[0, 0, 0] : f32 from vector<1x1x1xf32>
    %74 = arith.addf %61, %73 : f32
    %c2_33 = arith.constant 2 : index
    %75 = memref.load %arg7[%c2_33] : memref<3xf32, #tpu.memory_space<smem>>
    memref.store %74, %arg7[%c2_33] : memref<3xf32, #tpu.memory_space<smem>>
    return
  }
  func.func @transform_0(%arg0: i32) -> (i32, i32) {
    %c0_i32 = arith.constant 0 : i32
    %c0_i32_0 = arith.constant 0 : i32
    return %arg0, %c0_i32 : i32, i32
  }
  func.func @transform_1(%arg0: i32) -> (i32, i32) {
    %c0_i32 = arith.constant 0 : i32
    %c0_i32_0 = arith.constant 0 : i32
    return %arg0, %c0_i32 : i32, i32
  }
  func.func @transform_2(%arg0: i32) -> (i32, i32) {
    %c0_i32 = arith.constant 0 : i32
    %c0_i32_0 = arith.constant 0 : i32
    %c0_i32_1 = arith.constant 0 : i32
    return %c0_i32, %c0_i32_0 : i32, i32
  }
  func.func @transform_3(%arg0: i32) -> (i32, i32) {
    %c0_i32 = arith.constant 0 : i32
    %c0_i32_0 = arith.constant 0 : i32
    %c0_i32_1 = arith.constant 0 : i32
    return %c0_i32, %c0_i32_0 : i32, i32
  }
  func.func @transform_4(%arg0: i32) -> (i32, i32) {
    %c0_i32 = arith.constant 0 : i32
    %c0_i32_0 = arith.constant 0 : i32
    %c0_i32_1 = arith.constant 0 : i32
    return %c0_i32, %c0_i32_0 : i32, i32
  }
  func.func @transform_5(%arg0: i32) -> (i32, i32) {
    %c0_i32 = arith.constant 0 : i32
    %c0_i32_0 = arith.constant 0 : i32
    %c0_i32_1 = arith.constant 0 : i32
    return %c0_i32, %c0_i32_0 : i32, i32
  }
  func.func @transform_6(%arg0: i32) -> i32 {
    %c0_i32 = arith.constant 0 : i32
    %c0_i32_0 = arith.constant 0 : i32
    return %c0_i32 : i32
  }
}

module attributes {stable_mosaic.version = 11 : i64} {
  func.func @_stft_dist_kernel(%arg0: i32, %arg1: memref<128x16xf32, #tpu.memory_space<vmem>>, %arg2: memref<128x16xf32, #tpu.memory_space<vmem>>, %arg3: memref<1x16xf32, #tpu.memory_space<vmem>>, %arg4: memref<16x9xf32, #tpu.memory_space<vmem>>, %arg5: memref<16x9xf32, #tpu.memory_space<vmem>>, %arg6: memref<9x4xf32, #tpu.memory_space<vmem>>, %arg7: memref<3xf32, #tpu.memory_space<smem>>) attributes {dimension_semantics = [#tpu.dimension_semantics<arbitrary>], iteration_bounds = array<i64: 2>, scalar_prefetch = 0 : i64, scratch_operands = 0 : i64, tpu.core_type = #tpu.core_type<tc>, window_params = [{transform_indices = @transform_0, window_bounds = array<i64: 128, 16>}, {transform_indices = @transform_1, window_bounds = array<i64: 128, 16>}, {pipeline_mode = #tpu.pipeline_mode<synchronous>, transform_indices = @transform_2, window_bounds = array<i64: 1, 16>}, {pipeline_mode = #tpu.pipeline_mode<synchronous>, transform_indices = @transform_3, window_bounds = array<i64: 16, 9>}, {pipeline_mode = #tpu.pipeline_mode<synchronous>, transform_indices = @transform_4, window_bounds = array<i64: 16, 9>}, {pipeline_mode = #tpu.pipeline_mode<synchronous>, transform_indices = @transform_5, window_bounds = array<i64: 9, 4>}, {transform_indices = @transform_6, window_bounds = array<i64: 3>}]} {
    %c0_i32 = arith.constant 0 : i32
    %0 = arith.cmpi eq, %arg0, %c0_i32 : i32
    %1 = arith.extui %0 : i1 to i32
    %c0_i32_0 = arith.constant 0 : i32
    %2 = arith.cmpi ne, %1, %c0_i32_0 : i32
    scf.if %2 {
      %cst_34 = arith.constant 0.000000e+00 : f32
      %c0_35 = arith.constant 0 : index
      %76 = memref.load %arg7[%c0_35] : memref<3xf32, #tpu.memory_space<smem>>
      memref.store %cst_34, %arg7[%c0_35] : memref<3xf32, #tpu.memory_space<smem>>
      %cst_36 = arith.constant 0.000000e+00 : f32
      %c1_37 = arith.constant 1 : index
      %77 = memref.load %arg7[%c1_37] : memref<3xf32, #tpu.memory_space<smem>>
      memref.store %cst_36, %arg7[%c1_37] : memref<3xf32, #tpu.memory_space<smem>>
      %cst_38 = arith.constant 0.000000e+00 : f32
      %c2_39 = arith.constant 2 : index
      %78 = memref.load %arg7[%c2_39] : memref<3xf32, #tpu.memory_space<smem>>
      memref.store %cst_38, %arg7[%c2_39] : memref<3xf32, #tpu.memory_space<smem>>
    } else {
    }
    %c0 = arith.constant 0 : index
    %c0_1 = arith.constant 0 : index
    %3 = vector.load %arg3[%c0, %c0_1] : memref<1x16xf32, #tpu.memory_space<vmem>>, vector<1x16xf32>
    %c0_2 = arith.constant 0 : index
    %c0_3 = arith.constant 0 : index
    %4 = vector.load %arg1[%c0_2, %c0_3] : memref<128x16xf32, #tpu.memory_space<vmem>>, vector<128x16xf32>
    %5 = vector.broadcast %3 : vector<1x16xf32> to vector<128x16xf32>
    %6 = arith.mulf %4, %5 : vector<128x16xf32>
    %c0_4 = arith.constant 0 : index
    %c0_5 = arith.constant 0 : index
    %7 = vector.load %arg2[%c0_4, %c0_5] : memref<128x16xf32, #tpu.memory_space<vmem>>, vector<128x16xf32>
    %8 = vector.broadcast %3 : vector<1x16xf32> to vector<128x16xf32>
    %9 = arith.mulf %7, %8 : vector<128x16xf32>
    %c0_6 = arith.constant 0 : index
    %c0_7 = arith.constant 0 : index
    %10 = vector.load %arg4[%c0_6, %c0_7] : memref<16x9xf32, #tpu.memory_space<vmem>>, vector<16x9xf32>
    %cst = arith.constant dense<0.000000e+00> : vector<128x9xf32>
    %11 = tpu.matmul %6, %10, %cst {dimension_numbers = #tpu.dot_dimension_numbers<[1], [0], [0], [1], [0, 0, 1, 1], [], []>} : vector<128x16xf32>, vector<16x9xf32>, vector<128x9xf32> -> vector<128x9xf32>
    %c0_8 = arith.constant 0 : index
    %c0_9 = arith.constant 0 : index
    %12 = vector.load %arg5[%c0_8, %c0_9] : memref<16x9xf32, #tpu.memory_space<vmem>>, vector<16x9xf32>
    %cst_10 = arith.constant dense<0.000000e+00> : vector<128x9xf32>
    %13 = tpu.matmul %6, %12, %cst_10 {dimension_numbers = #tpu.dot_dimension_numbers<[1], [0], [0], [1], [0, 0, 1, 1], [], []>} : vector<128x16xf32>, vector<16x9xf32>, vector<128x9xf32> -> vector<128x9xf32>
    %c0_11 = arith.constant 0 : index
    %c0_12 = arith.constant 0 : index
    %14 = vector.load %arg4[%c0_11, %c0_12] : memref<16x9xf32, #tpu.memory_space<vmem>>, vector<16x9xf32>
    %cst_13 = arith.constant dense<0.000000e+00> : vector<128x9xf32>
    %15 = tpu.matmul %9, %14, %cst_13 {dimension_numbers = #tpu.dot_dimension_numbers<[1], [0], [0], [1], [0, 0, 1, 1], [], []>} : vector<128x16xf32>, vector<16x9xf32>, vector<128x9xf32> -> vector<128x9xf32>
    %c0_14 = arith.constant 0 : index
    %c0_15 = arith.constant 0 : index
    %16 = vector.load %arg5[%c0_14, %c0_15] : memref<16x9xf32, #tpu.memory_space<vmem>>, vector<16x9xf32>
    %cst_16 = arith.constant dense<0.000000e+00> : vector<128x9xf32>
    %17 = tpu.matmul %9, %16, %cst_16 {dimension_numbers = #tpu.dot_dimension_numbers<[1], [0], [0], [1], [0, 0, 1, 1], [], []>} : vector<128x16xf32>, vector<16x9xf32>, vector<128x9xf32> -> vector<128x9xf32>
    %18 = arith.mulf %11, %11 : vector<128x9xf32>
    %19 = arith.mulf %13, %13 : vector<128x9xf32>
    %20 = arith.addf %18, %19 : vector<128x9xf32>
    %cst_17 = arith.constant 9.99999996E-13 : f32
    %21 = vector.broadcast %cst_17 : f32 to vector<128x9xf32>
    %22 = arith.addf %20, %21 : vector<128x9xf32>
    %23 = math.sqrt %22 : vector<128x9xf32>
    %24 = arith.mulf %15, %15 : vector<128x9xf32>
    %25 = arith.mulf %17, %17 : vector<128x9xf32>
    %26 = arith.addf %24, %25 : vector<128x9xf32>
    %cst_18 = arith.constant 9.99999996E-13 : f32
    %27 = vector.broadcast %cst_18 : f32 to vector<128x9xf32>
    %28 = arith.addf %26, %27 : vector<128x9xf32>
    %29 = math.sqrt %28 : vector<128x9xf32>
    %c0_19 = arith.constant 0 : index
    %c0_20 = arith.constant 0 : index
    %30 = vector.load %arg6[%c0_19, %c0_20] : memref<9x4xf32, #tpu.memory_space<vmem>>, vector<9x4xf32>
    %cst_21 = arith.constant dense<0.000000e+00> : vector<128x4xf32>
    %31 = tpu.matmul %23, %30, %cst_21 {dimension_numbers = #tpu.dot_dimension_numbers<[1], [0], [0], [1], [0, 0, 1, 1], [], []>} : vector<128x9xf32>, vector<9x4xf32>, vector<128x4xf32> -> vector<128x4xf32>
    %c0_22 = arith.constant 0 : index
    %c0_23 = arith.constant 0 : index
    %32 = vector.load %arg6[%c0_22, %c0_23] : memref<9x4xf32, #tpu.memory_space<vmem>>, vector<9x4xf32>
    %cst_24 = arith.constant dense<0.000000e+00> : vector<128x4xf32>
    %33 = tpu.matmul %29, %32, %cst_24 {dimension_numbers = #tpu.dot_dimension_numbers<[1], [0], [0], [1], [0, 0, 1, 1], [], []>} : vector<128x9xf32>, vector<9x4xf32>, vector<128x4xf32> -> vector<128x4xf32>
    %34 = tpu.iota {dimensions = array<i32: 0>} : vector<128x4xi32>
    %c128_i32 = arith.constant 128 : i32
    %35 = arith.muli %arg0, %c128_i32 : i32
    %36 = vector.broadcast %35 : i32 to vector<128x4xi32>
    %37 = arith.addi %34, %36 : vector<128x4xi32>
    %c250_i32 = arith.constant 250 : i32
    %38 = vector.broadcast %c250_i32 : i32 to vector<128x4xi32>
    %39 = arith.cmpi slt, %37, %38 : vector<128x4xi32>
    %40 = arith.extui %39 : vector<128x4xi1> to vector<128x4xi32>
    %41 = arith.sitofp %40 : vector<128x4xi32> to vector<128x4xf32>
    %42 = arith.mulf %31, %41 : vector<128x4xf32>
    %43 = arith.mulf %33, %41 : vector<128x4xf32>
    %44 = arith.subf %42, %43 : vector<128x4xf32>
    %c0_25 = arith.constant 0 : index
    %45 = memref.load %arg7[%c0_25] : memref<3xf32, #tpu.memory_space<smem>>
    %46 = arith.mulf %44, %44 : vector<128x4xf32>
    %47 = vector.shape_cast %46 : vector<128x4xf32> to vector<1x128x4xf32>
    %cst_26 = arith.constant dense<0.000000e+00> : vector<1xf32>
    %48 = vector.multi_reduction <add>, %47, %cst_26 [1, 2] : vector<1x128x4xf32> to vector<1xf32>
    %49 = vector.shape_cast %48 : vector<1xf32> to vector<1x1x1xf32>
    %50 = vector.extract %49[0, 0, 0] : f32 from vector<1x1x1xf32>
    %51 = arith.addf %45, %50 : f32
    %c0_27 = arith.constant 0 : index
    %52 = memref.load %arg7[%c0_27] : memref<3xf32, #tpu.memory_space<smem>>
    memref.store %51, %arg7[%c0_27] : memref<3xf32, #tpu.memory_space<smem>>
    %c1 = arith.constant 1 : index
    %53 = memref.load %arg7[%c1] : memref<3xf32, #tpu.memory_space<smem>>
    %54 = arith.mulf %42, %42 : vector<128x4xf32>
    %55 = vector.shape_cast %54 : vector<128x4xf32> to vector<1x128x4xf32>
    %cst_28 = arith.constant dense<0.000000e+00> : vector<1xf32>
    %56 = vector.multi_reduction <add>, %55, %cst_28 [1, 2] : vector<1x128x4xf32> to vector<1xf32>
    %57 = vector.shape_cast %56 : vector<1xf32> to vector<1x1x1xf32>
    %58 = vector.extract %57[0, 0, 0] : f32 from vector<1x1x1xf32>
    %59 = arith.addf %53, %58 : f32
    %c1_29 = arith.constant 1 : index
    %60 = memref.load %arg7[%c1_29] : memref<3xf32, #tpu.memory_space<smem>>
    memref.store %59, %arg7[%c1_29] : memref<3xf32, #tpu.memory_space<smem>>
    %c2 = arith.constant 2 : index
    %61 = memref.load %arg7[%c2] : memref<3xf32, #tpu.memory_space<smem>>
    %cst_30 = arith.constant 1.000000e-07 : f32
    %62 = vector.broadcast %cst_30 : f32 to vector<128x4xf32>
    %63 = arith.addf %42, %62 : vector<128x4xf32>
    %64 = math.log %63 : vector<128x4xf32>
    %cst_31 = arith.constant 1.000000e-07 : f32
    %65 = vector.broadcast %cst_31 : f32 to vector<128x4xf32>
    %66 = arith.addf %43, %65 : vector<128x4xf32>
    %67 = math.log %66 : vector<128x4xf32>
    %68 = arith.subf %64, %67 : vector<128x4xf32>
    %69 = math.absf %68 : vector<128x4xf32>
    %70 = vector.shape_cast %69 : vector<128x4xf32> to vector<1x128x4xf32>
    %cst_32 = arith.constant dense<0.000000e+00> : vector<1xf32>
    %71 = vector.multi_reduction <add>, %70, %cst_32 [1, 2] : vector<1x128x4xf32> to vector<1xf32>
    %72 = vector.shape_cast %71 : vector<1xf32> to vector<1x1x1xf32>
    %73 = vector.extract %72[0, 0, 0] : f32 from vector<1x1x1xf32>
    %74 = arith.addf %61, %73 : f32
    %c2_33 = arith.constant 2 : index
    %75 = memref.load %arg7[%c2_33] : memref<3xf32, #tpu.memory_space<smem>>
    memref.store %74, %arg7[%c2_33] : memref<3xf32, #tpu.memory_space<smem>>
    return
  }
  func.func @transform_0(%arg0: i32) -> (i32, i32) {
    %c0_i32 = arith.constant 0 : i32
    %c0_i32_0 = arith.constant 0 : i32
    return %arg0, %c0_i32 : i32, i32
  }
  func.func @transform_1(%arg0: i32) -> (i32, i32) {
    %c0_i32 = arith.constant 0 : i32
    %c0_i32_0 = arith.constant 0 : i32
    return %arg0, %c0_i32 : i32, i32
  }
  func.func @transform_2(%arg0: i32) -> (i32, i32) {
    %c0_i32 = arith.constant 0 : i32
    %c0_i32_0 = arith.constant 0 : i32
    %c0_i32_1 = arith.constant 0 : i32
    return %c0_i32, %c0_i32_0 : i32, i32
  }
  func.func @transform_3(%arg0: i32) -> (i32, i32) {
    %c0_i32 = arith.constant 0 : i32
    %c0_i32_0 = arith.constant 0 : i32
    %c0_i32_1 = arith.constant 0 : i32
    return %c0_i32, %c0_i32_0 : i32, i32
  }
  func.func @transform_4(%arg0: i32) -> (i32, i32) {
    %c0_i32 = arith.constant 0 : i32
    %c0_i32_0 = arith.constant 0 : i32
    %c0_i32_1 = arith.constant 0 : i32
    return %c0_i32, %c0_i32_0 : i32, i32
  }
  func.func @transform_5(%arg0: i32) -> (i32, i32) {
    %c0_i32 = arith.constant 0 : i32
    %c0_i32_0 = arith.constant 0 : i32
    %c0_i32_1 = arith.constant 0 : i32
    return %c0_i32, %c0_i32_0 : i32, i32
  }
  func.func @transform_6(%arg0: i32) -> i32 {
    %c0_i32 = arith.constant 0 : i32
    %c0_i32_0 = arith.constant 0 : i32
    return %c0_i32 : i32
  }
}

module attributes {stable_mosaic.version = 11 : i64} {
  func.func @_proj_kernel(%arg0: i32, %arg1: memref<8x128xf32, #tpu.memory_space<vmem>>, %arg2: memref<16x8xf32, #tpu.memory_space<vmem>>, %arg3: memref<16x128xf32, #tpu.memory_space<vmem>>) attributes {dimension_semantics = [#tpu.dimension_semantics<parallel>], iteration_bounds = array<i64: 1>, scalar_prefetch = 0 : i64, scratch_operands = 0 : i64, tpu.core_type = #tpu.core_type<tc>, window_params = [{transform_indices = @transform_0, window_bounds = array<i64: 8, 128>}, {pipeline_mode = #tpu.pipeline_mode<synchronous>, transform_indices = @transform_1, window_bounds = array<i64: 16, 8>}, {transform_indices = @transform_2, window_bounds = array<i64: 16, 128>}]} {
    %c0 = arith.constant 0 : index
    %c0_0 = arith.constant 0 : index
    %0 = vector.load %arg2[%c0, %c0_0] : memref<16x8xf32, #tpu.memory_space<vmem>>, vector<16x8xf32>
    %c0_1 = arith.constant 0 : index
    %c0_2 = arith.constant 0 : index
    %1 = vector.load %arg1[%c0_1, %c0_2] : memref<8x128xf32, #tpu.memory_space<vmem>>, vector<8x128xf32>
    %cst = arith.constant dense<0.000000e+00> : vector<16x128xf32>
    %2 = tpu.matmul %0, %1, %cst {dimension_numbers = #tpu.dot_dimension_numbers<[1], [0], [0], [1], [0, 0, 1, 1], [], []>} : vector<16x8xf32>, vector<8x128xf32>, vector<16x128xf32> -> vector<16x128xf32>
    %c0_3 = arith.constant 0 : index
    %c0_4 = arith.constant 0 : index
    %3 = vector.load %arg3[%c0_3, %c0_4] : memref<16x128xf32, #tpu.memory_space<vmem>>, vector<16x128xf32>
    tpu.vector_store %arg3[%c0_3, %c0_4], %2 {strides = array<i32>} : memref<16x128xf32, #tpu.memory_space<vmem>>, vector<16x128xf32>,
    return
  }
  func.func @transform_0(%arg0: i32) -> (i32, i32) {
    %c0_i32 = arith.constant 0 : i32
    %c0_i32_0 = arith.constant 0 : i32
    return %c0_i32, %arg0 : i32, i32
  }
  func.func @transform_1(%arg0: i32) -> (i32, i32) {
    %c0_i32 = arith.constant 0 : i32
    %c0_i32_0 = arith.constant 0 : i32
    %c0_i32_1 = arith.constant 0 : i32
    return %c0_i32, %c0_i32_0 : i32, i32
  }
  func.func @transform_2(%arg0: i32) -> (i32, i32) {
    %c0_i32 = arith.constant 0 : i32
    %c0_i32_0 = arith.constant 0 : i32
    return %c0_i32, %arg0 : i32, i32
  }
}

module attributes {stable_mosaic.version = 11 : i64} {
  func.func @_sumsq_diff_kernel(%arg0: i32, %arg1: memref<16x64xf32, #tpu.memory_space<vmem>>, %arg2: memref<16x64xf32, #tpu.memory_space<vmem>>, %arg3: memref<1xf32, #tpu.memory_space<smem>>) attributes {dimension_semantics = [#tpu.dimension_semantics<arbitrary>], iteration_bounds = array<i64: 1>, scalar_prefetch = 0 : i64, scratch_operands = 0 : i64, tpu.core_type = #tpu.core_type<tc>, window_params = [{pipeline_mode = #tpu.pipeline_mode<synchronous>, transform_indices = @transform_0, window_bounds = array<i64: 16, 64>}, {pipeline_mode = #tpu.pipeline_mode<synchronous>, transform_indices = @transform_1, window_bounds = array<i64: 16, 64>}, {transform_indices = @transform_2, window_bounds = array<i64: 1>}]} {
    %c0 = arith.constant 0 : index
    %c0_0 = arith.constant 0 : index
    %0 = vector.load %arg1[%c0, %c0_0] : memref<16x64xf32, #tpu.memory_space<vmem>>, vector<16x64xf32>
    %c0_1 = arith.constant 0 : index
    %c0_2 = arith.constant 0 : index
    %1 = vector.load %arg2[%c0_1, %c0_2] : memref<16x64xf32, #tpu.memory_space<vmem>>, vector<16x64xf32>
    %2 = arith.subf %0, %1 : vector<16x64xf32>
    %3 = arith.mulf %2, %2 : vector<16x64xf32>
    %4 = vector.shape_cast %3 : vector<16x64xf32> to vector<1x16x64xf32>
    %cst = arith.constant dense<0.000000e+00> : vector<1xf32>
    %5 = vector.multi_reduction <add>, %4, %cst [1, 2] : vector<1x16x64xf32> to vector<1xf32>
    %6 = vector.shape_cast %5 : vector<1xf32> to vector<1x1x1xf32>
    %7 = vector.extract %6[0, 0, 0] : f32 from vector<1x1x1xf32>
    %c0_3 = arith.constant 0 : index
    %8 = memref.load %arg3[%c0_3] : memref<1xf32, #tpu.memory_space<smem>>
    memref.store %7, %arg3[%c0_3] : memref<1xf32, #tpu.memory_space<smem>>
    return
  }
  func.func @transform_0(%arg0: i32) -> (i32, i32) {
    %c0_i32 = arith.constant 0 : i32
    %c0_i32_0 = arith.constant 0 : i32
    %c0_i32_1 = arith.constant 0 : i32
    return %c0_i32, %c0_i32_0 : i32, i32
  }
  func.func @transform_1(%arg0: i32) -> (i32, i32) {
    %c0_i32 = arith.constant 0 : i32
    %c0_i32_0 = arith.constant 0 : i32
    %c0_i32_1 = arith.constant 0 : i32
    return %c0_i32, %c0_i32_0 : i32, i32
  }
  func.func @transform_2(%arg0: i32) -> i32 {
    %c0_i32 = arith.constant 0 : i32
    %c0_i32_0 = arith.constant 0 : i32
    return %c0_i32 : i32
  }
}

</mosaic_0001>

<llo_original>
// kernel: forward.8
$region0: #{forward.8}
  #allocation0 [shape = 'u32[]', space=smem, size = 0x4, offset = 0x4, fixed_abs, tag = 'smem constant byte address 0x4 - core index']
  #allocation1 [shape = 'u32[144,128]{1,0:T(1,128)}', space=vmem, size = 0x12000, scoped, tag = 'internal scratch']
  %s0 = inlined_call_operand.vmem [shape: f32[16,64], index: 0, kind: input, shape index: {}]
  %s1 = inlined_call_operand.vmem [shape: f32[16,16], index: 1, kind: input, shape index: {}]
  %s2 = inlined_call_operand.vmem [shape: f32[8,16], index: 2, kind: input, shape index: {}]
  %s3 = inlined_call_operand.vmem [shape: f32[8,1], index: 3, kind: input, shape index: {}]
  %s4 = inlined_call_operand.vmem [shape: f32[16,8], index: 4, kind: input, shape index: {}]
  %s5 = inlined_call_operand.vmem [shape: f32[16,1], index: 5, kind: input, shape index: {}]
  %s6 = inlined_call_operand.vmem [shape: f32[16,16], index: 6, kind: input, shape index: {}]
  %s7 = inlined_call_operand.vmem [shape: f32[16,64], index: 7, kind: output, shape index: {0}]
  %s8 = inlined_call_operand.vmem [shape: f32[8,64], index: 8, kind: output, shape index: {1}]
  %s9 = inlined_call_operand.vmem [shape: f32[16,64], index: 9, kind: output, shape index: {2}]
  %s10 = inlined_call_operand.vmem [shape: f32[16,64], index: 10, kind: output, shape index: {3}]
  %11 = xla_tuple %s7, %s8, %s9, %s10
  %s12 = sld [smem:[#allocation0]]
  $region62: #{forward.8} parent=0
    _
  %s14 = ssub.s32 1, %s12
  %s15 = scalar_select 0, %s14, %s12
  // Predicated region
  $region2: #{forward.8} parent=0 // pred_check
    _
  $region3: #{forward.8} parent=0 // pred_check_branch
    %17 = sbr.rel (0) target = $region5
  $region4: #{forward.8} parent=0 // pred_region
    _
  $region5: #{forward.8} parent=0 // pred_fallthru
    _
  // Predicated region
  $region6: #{forward.8} parent=0 // pred_check
    _
  $region7: #{forward.8} parent=0 // pred_check_branch
    %19 = sbr.rel (0) target = $region9
  $region8: #{forward.8} parent=0 // pred_region
    _
  $region9: #{forward.8} parent=0 // pred_fallthru
    _
  // Predicated region
  $region10: #{forward.8} parent=0 // pred_check
    _
  $region11: #{forward.8} parent=0 // pred_check_branch
    %21 = sbr.rel (0) target = $region13
  $region12: #{forward.8} parent=0 // pred_region
    _
  $region13: #{forward.8} parent=0 // pred_fallthru
    _
  // Predicated region
  $region14: #{forward.8} parent=0 // pred_check
    _
  $region15: #{forward.8} parent=0 // pred_check_branch
    %23 = sbr.rel (0) target = $region17
  $region16: #{forward.8} parent=0 // pred_region
    _
  $region17: #{forward.8} parent=0 // pred_fallthru
    _
  // Predicated region
  $region18: #{forward.8} parent=0 // pred_check
    _
  $region19: #{forward.8} parent=0 // pred_check_branch
    %25 = sbr.rel (0) target = $region21
  $region20: #{forward.8} parent=0 // pred_region
    _
  $region21: #{forward.8} parent=0 // pred_fallthru
    _
  // Predicated region
  $region22: #{forward.8} parent=0 // pred_check
    _
  $region23: #{forward.8} parent=0 // pred_check_branch
    %27 = sbr.rel (0) target = $region25
  $region24: #{forward.8} parent=0 // pred_region
    _
  $region25: #{forward.8} parent=0 // pred_fallthru
    _
  // Predicated region
  $region26: #{forward.8} parent=0 // pred_check
    _
  $region27: #{forward.8} parent=0 // pred_check_branch
    %29 = sbr.rel (0) target = $region29
  $region28: #{forward.8} parent=0 // pred_region
    _
  $region29: #{forward.8} parent=0 // pred_fallthru
    _
  %v30 = vld [vmem:[%s0] sm:$0xff]
  %v31 = vld [vmem:[%s0 + $0x8] sm:$0xff]
  %v32 = vld [vmem:[%s1] sm:$0xff]
  %v33 = vld [vmem:[%s1 + $0x8] sm:$0xff]
  %vm34 = vcmask 130048
  %v36 = vsel %vm34, %v32, 0
  %v39 = vsel %vm34, %v33, 0
  %41 = vmatprep.subr.mxu0 0.0
  %42 = vmatpush1.msra.mxu0 %v30
  %43 = vmatprep.subr.mxu0 0.0
  %44 = vmatpush1.msra.mxu0 %v31
  %45 = vmatprep.subr.mxu0 0.0
  %46 = vmatpush1.msra.mxu0 0.0
  %47 = vmatprep.subr.mxu0 0.0
  %48 = vmatpush1.msra.mxu0 0.0
  %49 = vmatprep.subr.mxu0 0.0
  %50 = vmatpush1.msra.mxu0 0.0
  %51 = vmatprep.subr.mxu0 0.0
  %52 = vmatpush1.msra.mxu0 0.0
  %53 = vmatprep.subr.mxu0 0.0
  %54 = vmatpush1.msra.mxu0 0.0
  %55 = vmatprep.subr.mxu0 0.0
  %56 = vmatpush1.msra.mxu0 0.0
  %57 = vmatprep.subr.mxu0 0.0
  %58 = vmatpush1.msra.mxu0 0.0
  %59 = vmatprep.subr.mxu0 0.0
  %60 = vmatpush1.msra.mxu0 0.0
  %61 = vmatprep.subr.mxu0 0.0
  %62 = vmatpush1.msra.mxu0 0.0
  %63 = vmatprep.subr.mxu0 0.0
  %64 = vmatpush1.msra.mxu0 0.0
  %65 = vmatprep.subr.mxu0 0.0
  %66 = vmatpush1.msra.mxu0 0.0
  %67 = vmatprep.subr.mxu0 0.0
  %68 = vmatpush1.msra.mxu0 0.0
  %69 = vmatprep.subr.mxu0 0.0
  %70 = vmatpush1.msra.mxu0 0.0
  %71 = vmatprep.subr.mxu0 0.0
  %72 = vmatpush1.msra.mxu0 0.0
  %73 = vmatprep.subr.mxu0 0.0
  %74 = vmatpush1.msra.mxu0 0.0
  %75 = vmatprep.subr.mxu0 0.0
  %76 = vmatpush1.msra.mxu0 0.0
  %77 = vmatprep.subr.mxu0 0.0
  %78 = vmatpush1.msra.mxu0 0.0
  %79 = vmatprep.subr.mxu0 0.0
  %80 = vmatpush1.msra.mxu0 0.0
  %81 = vmatprep.subr.mxu0 0.0
  %82 = vmatpush1.msra.mxu0 0.0
  %83 = vmatprep.subr.mxu0 0.0
  %84 = vmatpush1.msra.mxu0 0.0
  %85 = vmatprep.subr.mxu0 0.0
  %86 = vmatpush1.msra.mxu0 0.0
  %87 = vmatprep.subr.mxu0 0.0
  %88 = vmatpush1.msra.mxu0 0.0
  %89 = vmatprep.subr.mxu0 0.0
  %90 = vmatpush1.msra.mxu0 0.0
  %91 = vmatprep.subr.mxu0 0.0
  %92 = vmatpush1.msra.mxu0 0.0
  %93 = vmatprep.subr.mxu0 0.0
  %94 = vmatpush1.msra.mxu0 0.0
  %95 = vmatprep.subr.mxu0 0.0
  %96 = vmatpush1.msra.mxu0 0.0
  %97 = vmatprep.subr.mxu0 0.0
  %98 = vmatpush1.msra.mxu0 0.0
  %99 = vmatprep.subr.mxu0 0.0
  %100 = vmatpush1.msra.mxu0 0.0
  %101 = vmatprep.subr.mxu0 0.0
  %102 = vmatpush1.msra.mxu0 0.0
  %103 = vmatprep.subr.mxu0 0.0
  %104 = vmatpush1.msra.mxu0 0.0
  %105 = vmatprep.mubr.f32.mxu0 0.0
  %106 = vmatmul.mubr.f32.gmra.mrb[0].mxu0 %v36
  %v107 = vpop.f32.mrb[0].mxu0
  %v108 = vadd.f32 0.0, %v107
  %v109 = vpop.f32.mrb[0].mxu0
  %110 = vmatprep.mubr.f32.mxu0 0.0
  %111 = vmatmul.mubr.f32.gmra.mrb[0].mxu0 %v39
  %v112 = vpop.f32.mrb[0].mxu0
  %v113 = vadd.f32 0.0, %v112
  %v114 = vpop.f32.mrb[0].mxu0
  %115 = vdwg.mxu0
  %v116 = vld [vmem:[%s2] sm:$0xff]
  %v117 = vld [vmem:[%s3] sm:$0xff]
  %119 = vset.pattern.permute.xlu0 0
  %120 = vperm.xlu0 %119, %v117
  %v121 = vpop.permute.xlu0 %120
  %v124 = vsel %vm34, %v116, 0
  %126 = vmatprep.subr.mxu0 0.0
  %127 = vmatpush1.msra.mxu0 %v108
  %128 = vmatprep.subr.mxu0 0.0
  %129 = vmatpush1.msra.mxu0 %v113
  %130 = vmatprep.subr.mxu0 0.0
  %131 = vmatpush1.msra.mxu0 0.0
  %132 = vmatprep.subr.mxu0 0.0
  %133 = vmatpush1.msra.mxu0 0.0
  %134 = vmatprep.subr.mxu0 0.0
  %135 = vmatpush1.msra.mxu0 0.0
  %136 = vmatprep.subr.mxu0 0.0
  %137 = vmatpush1.msra.mxu0 0.0
  %138 = vmatprep.subr.mxu0 0.0
  %139 = vmatpush1.msra.mxu0 0.0
  %140 = vmatprep.subr.mxu0 0.0
  %141 = vmatpush1.msra.mxu0 0.0
  %142 = vmatprep.subr.mxu0 0.0
  %143 = vmatpush1.msra.mxu0 0.0
  %144 = vmatprep.subr.mxu0 0.0
  %145 = vmatpush1.msra.mxu0 0.0
  %146 = vmatprep.subr.mxu0 0.0
  %147 = vmatpush1.msra.mxu0 0.0
  %148 = vmatprep.subr.mxu0 0.0
  %149 = vmatpush1.msra.mxu0 0.0
  %150 = vmatprep.subr.mxu0 0.0
  %151 = vmatpush1.msra.mxu0 0.0
  %152 = vmatprep.subr.mxu0 0.0
  %153 = vmatpush1.msra.mxu0 0.0
  %154 = vmatprep.subr.mxu0 0.0
  %155 = vmatpush1.msra.mxu0 0.0
  %156 = vmatprep.subr.mxu0 0.0
  %157 = vmatpush1.msra.mxu0 0.0
  %158 = vmatprep.subr.mxu0 0.0
  %159 = vmatpush1.msra.mxu0 0.0
  %160 = vmatprep.subr.mxu0 0.0
  %161 = vmatpush1.msra.mxu0 0.0
  %162 = vmatprep.subr.mxu0 0.0
  %163 = vmatpush1.msra.mxu0 0.0
  %164 = vmatprep.subr.mxu0 0.0
  %165 = vmatpush1.msra.mxu0 0.0
  %166 = vmatprep.subr.mxu0 0.0
  %167 = vmatpush1.msra.mxu0 0.0
  %168 = vmatprep.subr.mxu0 0.0
  %169 = vmatpush1.msra.mxu0 0.0
  %170 = vmatprep.subr.mxu0 0.0
  %171 = vmatpush1.msra.mxu0 0.0
  %172 = vmatprep.subr.mxu0 0.0
  %173 = vmatpush1.msra.mxu0 0.0
  %174 = vmatprep.subr.mxu0 0.0
  %175 = vmatpush1.msra.mxu0 0.0
  %176 = vmatprep.subr.mxu0 0.0
  %177 = vmatpush1.msra.mxu0 0.0
  %178 = vmatprep.subr.mxu0 0.0
  %179 = vmatpush1.msra.mxu0 0.0
  %180 = vmatprep.subr.mxu0 0.0
  %181 = vmatpush1.msra.mxu0 0.0
  %182 = vmatprep.subr.mxu0 0.0
  %183 = vmatpush1.msra.mxu0 0.0
  %184 = vmatprep.subr.mxu0 0.0
  %185 = vmatpush1.msra.mxu0 0.0
  %186 = vmatprep.subr.mxu0 0.0
  %187 = vmatpush1.msra.mxu0 0.0
  %188 = vmatprep.subr.mxu0 0.0
  %189 = vmatpush1.msra.mxu0 0.0
  %190 = vmatprep.mubr.f32.mxu0 0.0
  %191 = vmatmul.mubr.f32.gmra.mrb[0].mxu0 %v124
  %v192 = vpop.f32.mrb[0].mxu0
  %v193 = vadd.f32 %v121, %v192
  %v194 = vpop.f32.mrb[0].mxu0
  %195 = vdwg.mxu0
  %v196 = vtanh.pop %v193
  %v197 = vld [vmem:[%s4] sm:$0xff]
  %v198 = vld [vmem:[%s4 + $0x8] sm:$0xff]
  %v199 = vld [vmem:[%s5] sm:$0xff]
  %v200 = vld [vmem:[%s5 + $0x8] sm:$0xff]
  %202 = vset.pattern.permute.xlu0 0
  %203 = vperm.xlu0 %202, %v199
  %v204 = vpop.permute.xlu0 %203
  %207 = vset.pattern.permute.xlu0 0
  %208 = vperm.xlu0 %207, %v200
  %v209 = vpop.permute.xlu0 %208
  %vm211 = vcmask 64512
  %v213 = vsel %vm211, %v197, 0
  %v216 = vsel %vm211, %v198, 0
  %218 = vmatprep.subr.mxu0 0.0
  %219 = vmatpush1.msra.mxu0 %v196
  %220 = vmatprep.subr.mxu0 0.0
  %221 = vmatpush1.msra.mxu0 0.0
  %222 = vmatprep.subr.mxu0 0.0
  %223 = vmatpush1.msra.mxu0 0.0
  %224 = vmatprep.subr.mxu0 0.0
  %225 = vmatpush1.msra.mxu0 0.0
  %226 = vmatprep.subr.mxu0 0.0
  %227 = vmatpush1.msra.mxu0 0.0
  %228 = vmatprep.subr.mxu0 0.0
  %229 = vmatpush1.msra.mxu0 0.0
  %230 = vmatprep.subr.mxu0 0.0
  %231 = vmatpush1.msra.mxu0 0.0
  %232 = vmatprep.subr.mxu0 0.0
  %233 = vmatpush1.msra.mxu0 0.0
  %234 = vmatprep.subr.mxu0 0.0
  %235 = vmatpush1.msra.mxu0 0.0
  %236 = vmatprep.subr.mxu0 0.0
  %237 = vmatpush1.msra.mxu0 0.0
  %238 = vmatprep.subr.mxu0 0.0
  %239 = vmatpush1.msra.mxu0 0.0
  %240 = vmatprep.subr.mxu0 0.0
  %241 = vmatpush1.msra.mxu0 0.0
  %242 = vmatprep.subr.mxu0 0.0
  %243 = vmatpush1.msra.mxu0 0.0
  %244 = vmatprep.subr.mxu0 0.0
  %245 = vmatpush1.msra.mxu0 0.0
  %246 = vmatprep.subr.mxu0 0.0
  %247 = vmatpush1.msra.mxu0 0.0
  %248 = vmatprep.subr.mxu0 0.0
  %249 = vmatpush1.msra.mxu0 0.0
  %250 = vmatprep.subr.mxu0 0.0
  %251 = vmatpush1.msra.mxu0 0.0
  %252 = vmatprep.subr.mxu0 0.0
  %253 = vmatpush1.msra.mxu0 0.0
  %254 = vmatprep.subr.mxu0 0.0
  %255 = vmatpush1.msra.mxu0 0.0
  %256 = vmatprep.subr.mxu0 0.0
  %257 = vmatpush1.msra.mxu0 0.0
  %258 = vmatprep.subr.mxu0 0.0
  %259 = vmatpush1.msra.mxu0 0.0
  %260 = vmatprep.subr.mxu0 0.0
  %261 = vmatpush1.msra.mxu0 0.0
  %262 = vmatprep.subr.mxu0 0.0
  %263 = vmatpush1.msra.mxu0 0.0
  %264 = vmatprep.subr.mxu0 0.0
  %265 = vmatpush1.msra.mxu0 0.0
  %266 = vmatprep.subr.mxu0 0.0
  %267 = vmatpush1.msra.mxu0 0.0
  %268 = vmatprep.subr.mxu0 0.0
  %269 = vmatpush1.msra.mxu0 0.0
  %270 = vmatprep.subr.mxu0 0.0
  %271 = vmatpush1.msra.mxu0 0.0
  %272 = vmatprep.subr.mxu0 0.0
  %273 = vmatpush1.msra.mxu0 0.0
  %274 = vmatprep.subr.mxu0 0.0
  %275 = vmatpush1.msra.mxu0 0.0
  %276 = vmatprep.subr.mxu0 0.0
  %277 = vmatpush1.msra.mxu0 0.0
  %278 = vmatprep.subr.mxu0 0.0
  %279 = vmatpush1.msra.mxu0 0.0
  %280 = vmatprep.subr.mxu0 0.0
  %281 = vmatpush1.msra.mxu0 0.0
  %282 = vmatprep.mubr.f32.mxu0 0.0
  %283 = vmatmul.mubr.f32.gmra.mrb[0].mxu0 %v213
  %v284 = vpop.f32.mrb[0].mxu0
  %v285 = vadd.f32 %v204, %v284
  %v286 = vpop.f32.mrb[0].mxu0
  %287 = vmatprep.mubr.f32.mxu0 0.0
  %288 = vmatmul.mubr.f32.gmra.mrb[0].mxu0 %v216
  %v289 = vpop.f32.mrb[0].mxu0
  %v290 = vadd.f32 %v209, %v289
  %v291 = vpop.f32.mrb[0].mxu0
  %292 = vdwg.mxu0
  %v293 = vtanh.pop %v285
  %v294 = vtanh.pop %v290
  %v295 = vld [vmem:[%s6] sm:$0xff]
  %v296 = vld [vmem:[%s6 + $0x8] sm:$0xff]
  %v298 = vsel %vm34, %v295, 0
  %v301 = vsel %vm34, %v296, 0
  %303 = vmatprep.subr.mxu0 0.0
  %304 = vmatpush1.msra.mxu0 %v293
  %305 = vmatprep.subr.mxu0 0.0
  %306 = vmatpush1.msra.mxu0 %v294
  %307 = vmatprep.subr.mxu0 0.0
  %308 = vmatpush1.msra.mxu0 0.0
  %309 = vmatprep.subr.mxu0 0.0
  %310 = vmatpush1.msra.mxu0 0.0
  %311 = vmatprep.subr.mxu0 0.0
  %312 = vmatpush1.msra.mxu0 0.0
  %313 = vmatprep.subr.mxu0 0.0
  %314 = vmatpush1.msra.mxu0 0.0
  %315 = vmatprep.subr.mxu0 0.0
  %316 = vmatpush1.msra.mxu0 0.0
  %317 = vmatprep.subr.mxu0 0.0
  %318 = vmatpush1.msra.mxu0 0.0
  %319 = vmatprep.subr.mxu0 0.0
  %320 = vmatpush1.msra.mxu0 0.0
  %321 = vmatprep.subr.mxu0 0.0
  %322 = vmatpush1.msra.mxu0 0.0
  %323 = vmatprep.subr.mxu0 0.0
  %324 = vmatpush1.msra.mxu0 0.0
  %325 = vmatprep.subr.mxu0 0.0
  %326 = vmatpush1.msra.mxu0 0.0
  %327 = vmatprep.subr.mxu0 0.0
  %328 = vmatpush1.msra.mxu0 0.0
  %329 = vmatprep.subr.mxu0 0.0
  %330 = vmatpush1.msra.mxu0 0.0
  %331 = vmatprep.subr.mxu0 0.0
  %332 = vmatpush1.msra.mxu0 0.0
  %333 = vmatprep.subr.mxu0 0.0
  %334 = vmatpush1.msra.mxu0 0.0
  %335 = vmatprep.subr.mxu0 0.0
  %336 = vmatpush1.msra.mxu0 0.0
  %337 = vmatprep.subr.mxu0 0.0
  %338 = vmatpush1.msra.mxu0 0.0
  %339 = vmatprep.subr.mxu0 0.0
  %340 = vmatpush1.msra.mxu0 0.0
  %341 = vmatprep.subr.mxu0 0.0
  %342 = vmatpush1.msra.mxu0 0.0
  %343 = vmatprep.subr.mxu0 0.0
  %344 = vmatpush1.msra.mxu0 0.0
  %345 = vmatprep.subr.mxu0 0.0
  %346 = vmatpush1.msra.mxu0 0.0
  %347 = vmatprep.subr.mxu0 0.0
  %348 = vmatpush1.msra.mxu0 0.0
  %349 = vmatprep.subr.mxu0 0.0
  %350 = vmatpush1.msra.mxu0 0.0
  %351 = vmatprep.subr.mxu0 0.0
  %352 = vmatpush1.msra.mxu0 0.0
  %353 = vmatprep.subr.mxu0 0.0
  %354 = vmatpush1.msra.mxu0 0.0
  %355 = vmatprep.subr.mxu0 0.0
  %356 = vmatpush1.msra.mxu0 0.0
  %357 = vmatprep.subr.mxu0 0.0
  %358 = vmatpush1.msra.mxu0 0.0
  %359 = vmatprep.subr.mxu0 0.0
  %360 = vmatpush1.msra.mxu0 0.0
  %361 = vmatprep.subr.mxu0 0.0
  %362 = vmatpush1.msra.mxu0 0.0
  %363 = vmatprep.subr.mxu0 0.0
  %364 = vmatpush1.msra.mxu0 0.0
  %365 = vmatprep.subr.mxu0 0.0
  %366 = vmatpush1.msra.mxu0 0.0
  %367 = vmatprep.mubr.f32.mxu0 0.0
  %368 = vmatmul.mubr.f32.gmra.mrb[0].mxu0 %v298
  %v369 = vpop.f32.mrb[0].mxu0
  %v370 = vadd.f32 0.0, %v369
  %v371 = vpop.f32.mrb[0].mxu0
  %372 = vmatprep.mubr.f32.mxu0 0.0
  %373 = vmatmul.mubr.f32.gmra.mrb[0].mxu0 %v301
  %v374 = vpop.f32.mrb[0].mxu0
  %v375 = vadd.f32 0.0, %v374
  %v376 = vpop.f32.mrb[0].mxu0
  %377 = vdwg.mxu0
  %vm378 = vcmask 523264
  %379 = vst.msk [vmem:[%s7] sm:$0xff] %vm378, %v108
  %380 = vst.msk [vmem:[%s7 + $0x8] sm:$0xff] %vm378, %v113
  %381 = vst.msk [vmem:[%s8] sm:$0xff] %vm378, %v196
  %382 = vst.msk [vmem:[%s9] sm:$0xff] %vm378, %v293
  %383 = vst.msk [vmem:[%s9 + $0x8] sm:$0xff] %vm378, %v294
  %384 = vst.msk [vmem:[%s10] sm:$0xff] %vm378, %v370
  %385 = vst.msk [vmem:[%s10 + $0x8] sm:$0xff] %vm378, %v375
  // Predicated region
  $region30: #{forward.8} parent=0 // pred_check
    _
  $region31: #{forward.8} parent=0 // pred_check_branch
    %387 = sbr.rel (0) target = $region33
  $region32: #{forward.8} parent=0 // pred_region
    _
  $region33: #{forward.8} parent=0 // pred_fallthru
    _
  // Predicated region
  $region34: #{forward.8} parent=0 // pred_check
    _
  $region35: #{forward.8} parent=0 // pred_check_branch
    %389 = sbr.rel (0) target = $region37
  $region36: #{forward.8} parent=0 // pred_region
    _
  $region37: #{forward.8} parent=0 // pred_fallthru
    _
  // Predicated region
  $region38: #{forward.8} parent=0 // pred_check
    _
  $region39: #{forward.8} parent=0 // pred_check_branch
    %391 = sbr.rel (0) target = $region41
  $region40: #{forward.8} parent=0 // pred_region
    _
  $region41: #{forward.8} parent=0 // pred_fallthru
    _
  // Predicated region
  $region42: #{forward.8} parent=0 // pred_check
    _
  $region43: #{forward.8} parent=0 // pred_check_branch
    %393 = sbr.rel (0) target = $region45
  $region44: #{forward.8} parent=0 // pred_region
    _
  $region45: #{forward.8} parent=0 // pred_fallthru
    _
  // Predicated region
  $region46: #{forward.8} parent=0 // pred_check
    _
  $region47: #{forward.8} parent=0 // pred_check_branch
    %395 = sbr.rel (0) target = $region49
  $region48: #{forward.8} parent=0 // pred_region
    _
  $region49: #{forward.8} parent=0 // pred_fallthru
    _
  // Predicated region
  $region50: #{forward.8} parent=0 // pred_check
    _
  $region51: #{forward.8} parent=0 // pred_check_branch
    %397 = sbr.rel (0) target = $region53
  $region52: #{forward.8} parent=0 // pred_region
    _
  $region53: #{forward.8} parent=0 // pred_fallthru
    _
  // Predicated region
  $region54: #{forward.8} parent=0 // pred_check
    _
  $region55: #{forward.8} parent=0 // pred_check_branch
    %399 = sbr.rel (0) target = $region57
  $region56: #{forward.8} parent=0 // pred_region
    _
  $region57: #{forward.8} parent=0 // pred_fallthru
    _
  // Predicated region
  $region58: #{forward.8} parent=0 // pred_check
    _
  $region59: #{forward.8} parent=0 // pred_check_branch
    %401 = sbr.rel (0) target = $region61
  $region60: #{forward.8} parent=0 // pred_region
    _
  $region61: #{forward.8} parent=0 // pred_fallthru
    _

// kernel: forward.9
$region0: #{forward.9}
  #allocation0 [shape = 'u32[]', space=smem, size = 0x4, offset = 0x4, fixed_abs, tag = 'smem constant byte address 0x4 - core index']
  #allocation1 [shape = 'u32[144,128]{1,0:T(1,128)}', space=vmem, size = 0x12000, scoped, tag = 'internal scratch']
  %s0 = inlined_call_operand.vmem [shape: f32[32,32], index: 0, kind: input, shape index: {}]
  %s1 = inlined_call_operand.vmem [shape: f32[32,32], index: 1, kind: input, shape index: {}]
  %s2 = inlined_call_operand.vmem [shape: f32[1,32], index: 2, kind: input, shape index: {}]
  %s3 = inlined_call_operand.vmem [shape: f32[32,17], index: 3, kind: input, shape index: {}]
  %s4 = inlined_call_operand.vmem [shape: f32[32,17], index: 4, kind: input, shape index: {}]
  %s5 = inlined_call_operand.vmem [shape: f32[17,8], index: 5, kind: input, shape index: {}]
  %s6 = inlined_call_operand.vmem [shape: f32[3], index: 6, kind: output, shape index: {}]
  %s7 = sld [smem:[#allocation0]]
  $region38: #{forward.9} parent=0
    _
  %s9 = ssub.s32 1, %s7
  %s10 = scalar_select 0, %s9, %s7
  $region1: #{forward.9} parent=0
    #allocation2 [shape = 'u8[512]{0}', space=smem, size = 0x200, scoped, tag = 'output window, operand 0, single buffered']
    #allocation3 [shape = 's32[1]{0}', space=sflag, size = 0x4, scoped, tag = 'scoped memory for forward.9']
    %11 = vsyncpa [#allocation3], 0
    // Predicated region
    $region2: #{forward.9} parent=1 // pred_check
      _
    $region3: #{forward.9} parent=1 // pred_check_branch
      %13 = sbr.rel (0) target = $region5
    $region4: #{forward.9} parent=1 // pred_region
      _
    $region5: #{forward.9} parent=1 // pred_fallthru
      _
    // Predicated region
    $region6: #{forward.9} parent=1 // pred_check
      _
    $region7: #{forward.9} parent=1 // pred_check_branch
      %15 = sbr.rel (0) target = $region9
    $region8: #{forward.9} parent=1 // pred_region
      _
    $region9: #{forward.9} parent=1 // pred_fallthru
      _
    // Predicated region
    $region10: #{forward.9} parent=1 // pred_check
      _
    $region11: #{forward.9} parent=1 // pred_check_branch
      %17 = sbr.rel (0) target = $region13
    $region12: #{forward.9} parent=1 // pred_region
      _
    $region13: #{forward.9} parent=1 // pred_fallthru
      _
    // Predicated region
    $region14: #{forward.9} parent=1 // pred_check
      _
    $region15: #{forward.9} parent=1 // pred_check_branch
      %19 = sbr.rel (0) target = $region17
    $region16: #{forward.9} parent=1 // pred_region
      _
    $region17: #{forward.9} parent=1 // pred_fallthru
      _
    // Predicated region
    $region18: #{forward.9} parent=1 // pred_check
      _
    $region19: #{forward.9} parent=1 // pred_check_branch
      %21 = sbr.rel (0) target = $region21
    $region20: #{forward.9} parent=1 // pred_region
      _
    $region21: #{forward.9} parent=1 // pred_fallthru
      _
    // Predicated region
    $region22: #{forward.9} parent=1 // pred_check
      _
    $region23: #{forward.9} parent=1 // pred_check_branch
      %23 = sbr.rel (0) target = $region25
    $region24: #{forward.9} parent=1 // pred_region
      _
    $region25: #{forward.9} parent=1 // pred_fallthru
      _
    %p24 = scmp.eq.s32.totalorder 0, 0
    // Predicated region
    $region26: #{forward.9} parent=1 // pred_check
      %p25 = pneg %p24
    $region27: #{forward.9} parent=1 // pred_check_branch
      %27 = sbr.rel (%p25) target = $region29
    $region28: #{forward.9} parent=1 // pred_region
      %s28 = scalar_lea.smem [#allocation2], 0
      %29 = sst [smem:[%s28]] 0.0
      %s30 = scalar_lea.smem [#allocation2], 1
      %31 = sst [smem:[%s30]] 0.0
      %s32 = scalar_lea.smem [#allocation2], 2
      %33 = sst [smem:[%s32]] 0.0
    $region29: #{forward.9} parent=1 // pred_fallthru
      _
    %v34 = vld [vmem:[%s2] sm:$0x1]
    %v35 = vld [vmem:[%s0] sm:$0xff]
    %v36 = vld [vmem:[%s0 + $0x8] sm:$0xff]
    %v37 = vld [vmem:[%s0 + $0x10] sm:$0xff]
    %v38 = vld [vmem:[%s0 + $0x18] sm:$0xff]
    %v40 = vlaneseq
    %v41 = vshrl.u32 %v40, 7
    %v42 = vsub.s32 0, %v41
    %v43 = vrot.slane %v34, %v42
    %v45 = vmul.f32 %v35, %v43
    %v46 = vmul.f32 %v36, %v43
    %v47 = vmul.f32 %v37, %v43
    %v48 = vmul.f32 %v38, %v43
    %v49 = vld [vmem:[%s1] sm:$0xff]
    %v50 = vld [vmem:[%s1 + $0x8] sm:$0xff]
    %v51 = vld [vmem:[%s1 + $0x10] sm:$0xff]
    %v52 = vld [vmem:[%s1 + $0x18] sm:$0xff]
    %v53 = vmul.f32 %v49, %v43
    %v54 = vmul.f32 %v50, %v43
    %v55 = vmul.f32 %v51, %v43
    %v56 = vmul.f32 %v52, %v43
    %v57 = vld [vmem:[%s3] sm:$0xff]
    %v58 = vld [vmem:[%s3 + $0x8] sm:$0xff]
    %v59 = vld [vmem:[%s3 + $0x10] sm:$0xff]
    %v60 = vld [vmem:[%s3 + $0x18] sm:$0xff]
    %vm61 = vcmask 261120
    %v63 = vsel %vm61, %v45, 0
    %v66 = vsel %vm61, %v46, 0
    %v69 = vsel %vm61, %v47, 0
    %v72 = vsel %vm61, %v48, 0
    %74 = vmatprep.subr.mxu0 0.0
    %75 = vmatpush1.msra.mxu0 %v57
    %76 = vmatprep.subr.mxu0 0.0
    %77 = vmatpush1.msra.mxu0 %v58
    %78 = vmatprep.subr.mxu0 0.0
    %79 = vmatpush1.msra.mxu0 %v59
    %80 = vmatprep.subr.mxu0 0.0
    %81 = vmatpush1.msra.mxu0 %v60
    %82 = vmatprep.subr.mxu0 0.0
    %83 = vmatpush1.msra.mxu0 0.0
    %84 = vmatprep.subr.mxu0 0.0
    %85 = vmatpush1.msra.mxu0 0.0
    %86 = vmatprep.subr.mxu0 0.0
    %87 = vmatpush1.msra.mxu0 0.0
    %88 = vmatprep.subr.mxu0 0.0
    %89 = vmatpush1.msra.mxu0 0.0
    %90 = vmatprep.subr.mxu0 0.0
    %91 = vmatpush1.msra.mxu0 0.0
    %92 = vmatprep.subr.mxu0 0.0
    %93 = vmatpush1.msra.mxu0 0.0
    %94 = vmatprep.subr.mxu0 0.0
    %95 = vmatpush1.msra.mxu0 0.0
    %96 = vmatprep.subr.mxu0 0.0
    %97 = vmatpush1.msra.mxu0 0.0
    %98 = vmatprep.subr.mxu0 0.0
    %99 = vmatpush1.msra.mxu0 0.0
    %100 = vmatprep.subr.mxu0 0.0
    %101 = vmatpush1.msra.mxu0 0.0
    %102 = vmatprep.subr.mxu0 0.0
    %103 = vmatpush1.msra.mxu0 0.0
    %104 = vmatprep.subr.mxu0 0.0
    %105 = vmatpush1.msra.mxu0 0.0
    %106 = vmatprep.subr.mxu0 0.0
    %107 = vmatpush1.msra.mxu0 0.0
    %108 = vmatprep.subr.mxu0 0.0
    %109 = vmatpush1.msra.mxu0 0.0
    %110 = vmatprep.subr.mxu0 0.0
    %111 = vmatpush1.msra.mxu0 0.0
    %112 = vmatprep.subr.mxu0 0.0
    %113 = vmatpush1.msra.mxu0 0.0
    %114 = vmatprep.subr.mxu0 0.0
    %115 = vmatpush1.msra.mxu0 0.0
    %116 = vmatprep.subr.mxu0 0.0
    %117 = vmatpush1.msra.mxu0 0.0
    %118 = vmatprep.subr.mxu0 0.0
    %119 = vmatpush1.msra.mxu0 0.0
    %120 = vmatprep.subr.mxu0 0.0
    %121 = vmatpush1.msra.mxu0 0.0
    %122 = vmatprep.subr.mxu0 0.0
    %123 = vmatpush1.msra.mxu0 0.0
    %124 = vmatprep.subr.mxu0 0.0
    %125 = vmatpush1.msra.mxu0 0.0
    %126 = vmatprep.subr.mxu0 0.0
    %127 = vmatpush1.msra.mxu0 0.0
    %128 = vmatprep.subr.mxu0 0.0
    %129 = vmatpush1.msra.mxu0 0.0
    %130 = vmatprep.subr.mxu0 0.0
    %131 = vmatpush1.msra.mxu0 0.0
    %132 = vmatprep.subr.mxu0 0.0
    %133 = vmatpush1.msra.mxu0 0.0
    %134 = vmatprep.subr.mxu0 0.0
    %135 = vmatpush1.msra.mxu0 0.0
    %136 = vmatprep.subr.mxu0 0.0
    %137 = vmatpush1.msra.mxu0 0.0
    %138 = vmatprep.mubr.f32.mxu0 0.0
    %139 = vmatmul.mubr.f32.gmra.mrb[0].mxu0 %v63
    %v140 = vpop.f32.mrb[0].mxu0
    %v141 = vadd.f32 0.0, %v140
    %v142 = vpop.f32.mrb[0].mxu0
    %143 = vmatprep.mubr.f32.mxu0 0.0
    %144 = vmatmul.mubr.f32.gmra.mrb[0].mxu0 %v66
    %v145 = vpop.f32.mrb[0].mxu0
    %v146 = vadd.f32 0.0, %v145
    %v147 = vpop.f32.mrb[0].mxu0
    %148 = vmatprep.mubr.f32.mxu0 0.0
    %149 = vmatmul.mubr.f32.gmra.mrb[0].mxu0 %v69
    %v150 = vpop.f32.mrb[0].mxu0
    %v151 = vadd.f32 0.0, %v150
    %v152 = vpop.f32.mrb[0].mxu0
    %153 = vmatprep.mubr.f32.mxu0 0.0
    %154 = vmatmul.mubr.f32.gmra.mrb[0].mxu0 %v72
    %v155 = vpop.f32.mrb[0].mxu0
    %v156 = vadd.f32 0.0, %v155
    %v157 = vpop.f32.mrb[0].mxu0
    %158 = vdwg.mxu0
    %v159 = vld [vmem:[%s4] sm:$0xff]
    %v160 = vld [vmem:[%s4 + $0x8] sm:$0xff]
    %v161 = vld [vmem:[%s4 + $0x10] sm:$0xff]
    %v162 = vld [vmem:[%s4 + $0x18] sm:$0xff]
    %163 = vmatprep.subr.mxu0 0.0
    %164 = vmatpush1.msra.mxu0 %v159
    %165 = vmatprep.subr.mxu0 0.0
    %166 = vmatpush1.msra.mxu0 %v160
    %167 = vmatprep.subr.mxu0 0.0
    %168 = vmatpush1.msra.mxu0 %v161
    %169 = vmatprep.subr.mxu0 0.0
    %170 = vmatpush1.msra.mxu0 %v162
    %171 = vmatprep.subr.mxu0 0.0
    %172 = vmatpush1.msra.mxu0 0.0
    %173 = vmatprep.subr.mxu0 0.0
    %174 = vmatpush1.msra.mxu0 0.0
    %175 = vmatprep.subr.mxu0 0.0
    %176 = vmatpush1.msra.mxu0 0.0
    %177 = vmatprep.subr.mxu0 0.0
    %178 = vmatpush1.msra.mxu0 0.0
    %179 = vmatprep.subr.mxu0 0.0
    %180 = vmatpush1.msra.mxu0 0.0
    %181 = vmatprep.subr.mxu0 0.0
    %182 = vmatpush1.msra.mxu0 0.0
    %183 = vmatprep.subr.mxu0 0.0
    %184 = vmatpush1.msra.mxu0 0.0
    %185 = vmatprep.subr.mxu0 0.0
    %186 = vmatpush1.msra.mxu0 0.0
    %187 = vmatprep.subr.mxu0 0.0
    %188 = vmatpush1.msra.mxu0 0.0
    %189 = vmatprep.subr.mxu0 0.0
    %190 = vmatpush1.msra.mxu0 0.0
    %191 = vmatprep.subr.mxu0 0.0
    %192 = vmatpush1.msra.mxu0 0.0
    %193 = vmatprep.subr.mxu0 0.0
    %194 = vmatpush1.msra.mxu0 0.0
    %195 = vmatprep.subr.mxu0 0.0
    %196 = vmatpush1.msra.mxu0 0.0
    %197 = vmatprep.subr.mxu0 0.0
    %198 = vmatpush1.msra.mxu0 0.0
    %199 = vmatprep.subr.mxu0 0.0
    %200 = vmatpush1.msra.mxu0 0.0
    %201 = vmatprep.subr.mxu0 0.0
    %202 = vmatpush1.msra.mxu0 0.0
    %203 = vmatprep.subr.mxu0 0.0
    %204 = vmatpush1.msra.mxu0 0.0
    %205 = vmatprep.subr.mxu0 0.0
    %206 = vmatpush1.msra.mxu0 0.0
    %207 = vmatprep.subr.mxu0 0.0
    %208 = vmatpush1.msra.mxu0 0.0
    %209 = vmatprep.subr.mxu0 0.0
    %210 = vmatpush1.msra.mxu0 0.0
    %211 = vmatprep.subr.mxu0 0.0
    %212 = vmatpush1.msra.mxu0 0.0
    %213 = vmatprep.subr.mxu0 0.0
    %214 = vmatpush1.msra.mxu0 0.0
    %215 = vmatprep.subr.mxu0 0.0
    %216 = vmatpush1.msra.mxu0 0.0
    %217 = vmatprep.subr.mxu0 0.0
    %218 = vmatpush1.msra.mxu0 0.0
    %219 = vmatprep.subr.mxu0 0.0
    %220 = vmatpush1.msra.mxu0 0.0
    %221 = vmatprep.subr.mxu0 0.0
    %222 = vmatpush1.msra.mxu0 0.0
    %223 = vmatprep.subr.mxu0 0.0
    %224 = vmatpush1.msra.mxu0 0.0
    %225 = vmatprep.subr.mxu0 0.0
    %226 = vmatpush1.msra.mxu0 0.0
    %227 = vmatprep.mubr.f32.mxu0 0.0
    %228 = vmatmul.mubr.f32.gmra.mrb[0].mxu0 %v63
    %v229 = vpop.f32.mrb[0].mxu0
    %v230 = vadd.f32 0.0, %v229
    %v231 = vpop.f32.mrb[0].mxu0
    %232 = vmatprep.mubr.f32.mxu0 0.0
    %233 = vmatmul.mubr.f32.gmra.mrb[0].mxu0 %v66
    %v234 = vpop.f32.mrb[0].mxu0
    %v235 = vadd.f32 0.0, %v234
    %v236 = vpop.f32.mrb[0].mxu0
    %237 = vmatprep.mubr.f32.mxu0 0.0
    %238 = vmatmul.mubr.f32.gmra.mrb[0].mxu0 %v69
    %v239 = vpop.f32.mrb[0].mxu0
    %v240 = vadd.f32 0.0, %v239
    %v241 = vpop.f32.mrb[0].mxu0
    %242 = vmatprep.mubr.f32.mxu0 0.0
    %243 = vmatmul.mubr.f32.gmra.mrb[0].mxu0 %v72
    %v244 = vpop.f32.mrb[0].mxu0
    %v245 = vadd.f32 0.0, %v244
    %v246 = vpop.f32.mrb[0].mxu0
    %247 = vdwg.mxu0
    %v249 = vsel %vm61, %v53, 0
    %v252 = vsel %vm61, %v54, 0
    %v255 = vsel %vm61, %v55, 0
    %v258 = vsel %vm61, %v56, 0
    %260 = vmatprep.subr.mxu0 0.0
    %261 = vmatpush1.msra.mxu0 %v57
    %262 = vmatprep.subr.mxu0 0.0
    %263 = vmatpush1.msra.mxu0 %v58
    %264 = vmatprep.subr.mxu0 0.0
    %265 = vmatpush1.msra.mxu0 %v59
    %266 = vmatprep.subr.mxu0 0.0
    %267 = vmatpush1.msra.mxu0 %v60
    %268 = vmatprep.subr.mxu0 0.0
    %269 = vmatpush1.msra.mxu0 0.0
    %270 = vmatprep.subr.mxu0 0.0
    %271 = vmatpush1.msra.mxu0 0.0
    %272 = vmatprep.subr.mxu0 0.0
    %273 = vmatpush1.msra.mxu0 0.0
    %274 = vmatprep.subr.mxu0 0.0
    %275 = vmatpush1.msra.mxu0 0.0
    %276 = vmatprep.subr.mxu0 0.0
    %277 = vmatpush1.msra.mxu0 0.0
    %278 = vmatprep.subr.mxu0 0.0
    %279 = vmatpush1.msra.mxu0 0.0
    %280 = vmatprep.subr.mxu0 0.0
    %281 = vmatpush1.msra.mxu0 0.0
    %282 = vmatprep.subr.mxu0 0.0
    %283 = vmatpush1.msra.mxu0 0.0
    %284 = vmatprep.subr.mxu0 0.0
    %285 = vmatpush1.msra.mxu0 0.0
    %286 = vmatprep.subr.mxu0 0.0
    %287 = vmatpush1.msra.mxu0 0.0
    %288 = vmatprep.subr.mxu0 0.0
    %289 = vmatpush1.msra.mxu0 0.0
    %290 = vmatprep.subr.mxu0 0.0
    %291 = vmatpush1.msra.mxu0 0.0
    %292 = vmatprep.subr.mxu0 0.0
    %293 = vmatpush1.msra.mxu0 0.0
    %294 = vmatprep.subr.mxu0 0.0
    %295 = vmatpush1.msra.mxu0 0.0
    %296 = vmatprep.subr.mxu0 0.0
    %297 = vmatpush1.msra.mxu0 0.0
    %298 = vmatprep.subr.mxu0 0.0
    %299 = vmatpush1.msra.mxu0 0.0
    %300 = vmatprep.subr.mxu0 0.0
    %301 = vmatpush1.msra.mxu0 0.0
    %302 = vmatprep.subr.mxu0 0.0
    %303 = vmatpush1.msra.mxu0 0.0
    %304 = vmatprep.subr.mxu0 0.0
    %305 = vmatpush1.msra.mxu0 0.0
    %306 = vmatprep.subr.mxu0 0.0
    %307 = vmatpush1.msra.mxu0 0.0
    %308 = vmatprep.subr.mxu0 0.0
    %309 = vmatpush1.msra.mxu0 0.0
    %310 = vmatprep.subr.mxu0 0.0
    %311 = vmatpush1.msra.mxu0 0.0
    %312 = vmatprep.subr.mxu0 0.0
    %313 = vmatpush1.msra.mxu0 0.0
    %314 = vmatprep.subr.mxu0 0.0
    %315 = vmatpush1.msra.mxu0 0.0
    %316 = vmatprep.subr.mxu0 0.0
    %317 = vmatpush1.msra.mxu0 0.0
    %318 = vmatprep.subr.mxu0 0.0
    %319 = vmatpush1.msra.mxu0 0.0
    %320 = vmatprep.subr.mxu0 0.0
    %321 = vmatpush1.msra.mxu0 0.0
    %322 = vmatprep.subr.mxu0 0.0
    %323 = vmatpush1.msra.mxu0 0.0
    %324 = vmatprep.mubr.f32.mxu0 0.0
    %325 = vmatmul.mubr.f32.gmra.mrb[0].mxu0 %v249
    %v326 = vpop.f32.mrb[0].mxu0
    %v327 = vadd.f32 0.0, %v326
    %v328 = vpop.f32.mrb[0].mxu0
    %329 = vmatprep.mubr.f32.mxu0 0.0
    %330 = vmatmul.mubr.f32.gmra.mrb[0].mxu0 %v252
    %v331 = vpop.f32.mrb[0].mxu0
    %v332 = vadd.f32 0.0, %v331
    %v333 = vpop.f32.mrb[0].mxu0
    %334 = vmatprep.mubr.f32.mxu0 0.0
    %335 = vmatmul.mubr.f32.gmra.mrb[0].mxu0 %v255
    %v336 = vpop.f32.mrb[0].mxu0
    %v337 = vadd.f32 0.0, %v336
    %v338 = vpop.f32.mrb[0].mxu0
    %339 = vmatprep.mubr.f32.mxu0 0.0
    %340 = vmatmul.mubr.f32.gmra.mrb[0].mxu0 %v258
    %v341 = vpop.f32.mrb[0].mxu0
    %v342 = vadd.f32 0.0, %v341
    %v343 = vpop.f32.mrb[0].mxu0
    %344 = vdwg.mxu0
    %345 = vmatprep.subr.mxu0 0.0
    %346 = vmatpush1.msra.mxu0 %v159
    %347 = vmatprep.subr.mxu0 0.0
    %348 = vmatpush1.msra.mxu0 %v160
    %349 = vmatprep.subr.mxu0 0.0
    %350 = vmatpush1.msra.mxu0 %v161
    %351 = vmatprep.subr.mxu0 0.0
    %352 = vmatpush1.msra.mxu0 %v162
    %353 = vmatprep.subr.mxu0 0.0
    %354 = vmatpush1.msra.mxu0 0.0
    %355 = vmatprep.subr.mxu0 0.0
    %356 = vmatpush1.msra.mxu0 0.0
    %357 = vmatprep.subr.mxu0 0.0
    %358 = vmatpush1.msra.mxu0 0.0
    %359 = vmatprep.subr.mxu0 0.0
    %360 = vmatpush1.msra.mxu0 0.0
    %361 = vmatprep.subr.mxu0 0.0
    %362 = vmatpush1.msra.mxu0 0.0
    %363 = vmatprep.subr.mxu0 0.0
    %364 = vmatpush1.msra.mxu0 0.0
    %365 = vmatprep.subr.mxu0 0.0
    %366 = vmatpush1.msra.mxu0 0.0
    %367 = vmatprep.subr.mxu0 0.0
    %368 = vmatpush1.msra.mxu0 0.0
    %369 = vmatprep.subr.mxu0 0.0
    %370 = vmatpush1.msra.mxu0 0.0
    %371 = vmatprep.subr.mxu0 0.0
    %372 = vmatpush1.msra.mxu0 0.0
    %373 = vmatprep.subr.mxu0 0.0
    %374 = vmatpush1.msra.mxu0 0.0
    %375 = vmatprep.subr.mxu0 0.0
    %376 = vmatpush1.msra.mxu0 0.0
    %377 = vmatprep.subr.mxu0 0.0
    %378 = vmatpush1.msra.mxu0 0.0
    %379 = vmatprep.subr.mxu0 0.0
    %380 = vmatpush1.msra.mxu0 0.0
    %381 = vmatprep.subr.mxu0 0.0
    %382 = vmatpush1.msra.mxu0 0.0
    %383 = vmatprep.subr.mxu0 0.0
    %384 = vmatpush1.msra.mxu0 0.0
    %385 = vmatprep.subr.mxu0 0.0
    %386 = vmatpush1.msra.mxu0 0.0
    %387 = vmatprep.subr.mxu0 0.0
    %388 = vmatpush1.msra.mxu0 0.0
    %389 = vmatprep.subr.mxu0 0.0
    %390 = vmatpush1.msra.mxu0 0.0
    %391 = vmatprep.subr.mxu0 0.0
    %392 = vmatpush1.msra.mxu0 0.0
    %393 = vmatprep.subr.mxu0 0.0
    %394 = vmatpush1.msra.mxu0 0.0
    %395 = vmatprep.subr.mxu0 0.0
    %396 = vmatpush1.msra.mxu0 0.0
    %397 = vmatprep.subr.mxu0 0.0
    %398 = vmatpush1.msra.mxu0 0.0
    %399 = vmatprep.subr.mxu0 0.0
    %400 = vmatpush1.msra.mxu0 0.0
    %401 = vmatprep.subr.mxu0 0.0
    %402 = vmatpush1.msra.mxu0 0.0
    %403 = vmatprep.subr.mxu0 0.0
    %404 = vmatpush1.msra.mxu0 0.0
    %405 = vmatprep.subr.mxu0 0.0
    %406 = vmatpush1.msra.mxu0 0.0
    %407 = vmatprep.subr.mxu0 0.0
    %408 = vmatpush1.msra.mxu0 0.0
    %409 = vmatprep.mubr.f32.mxu0 0.0
    %410 = vmatmul.mubr.f32.gmra.mrb[0].mxu0 %v249
    %v411 = vpop.f32.mrb[0].mxu0
    %v412 = vadd.f32 0.0, %v411
    %v413 = vpop.f32.mrb[0].mxu0
    %414 = vmatprep.mubr.f32.mxu0 0.0
    %415 = vmatmul.mubr.f32.gmra.mrb[0].mxu0 %v252
    %v416 = vpop.f32.mrb[0].mxu0
    %v417 = vadd.f32 0.0, %v416
    %v418 = vpop.f32.mrb[0].mxu0
    %419 = vmatprep.mubr.f32.mxu0 0.0
    %420 = vmatmul.mubr.f32.gmra.mrb[0].mxu0 %v255
    %v421 = vpop.f32.mrb[0].mxu0
    %v422 = vadd.f32 0.0, %v421
    %v423 = vpop.f32.mrb[0].mxu0
    %424 = vmatprep.mubr.f32.mxu0 0.0
    %425 = vmatmul.mubr.f32.gmra.mrb[0].mxu0 %v258
    %v426 = vpop.f32.mrb[0].mxu0
    %v427 = vadd.f32 0.0, %v426
    %v428 = vpop.f32.mrb[0].mxu0
    %429 = vdwg.mxu0
    %v430 = vmul.f32 %v141, %v141
    %v431 = vmul.f32 %v146, %v146
    %v432 = vmul.f32 %v151, %v151
    %v433 = vmul.f32 %v156, %v156
    %v434 = vmul.f32 %v230, %v230
    %v435 = vmul.f32 %v235, %v235
    %v436 = vmul.f32 %v240, %v240
    %v437 = vmul.f32 %v245, %v245
    %v438 = vadd.f32 %v430, %v434
    %v439 = vadd.f32 %v431, %v435
    %v440 = vadd.f32 %v432, %v436
    %v441 = vadd.f32 %v433, %v437
    %v442 = vadd.f32 %v438, 1e-12
    %v443 = vadd.f32 %v439, 1e-12
    %v444 = vadd.f32 %v440, 1e-12
    %v445 = vadd.f32 %v441, 1e-12
    %v446 = vrsqrt.pop %v442
    %v447 = vmul.f32 %v442, %v446
    %vm448 = vcmp.eq.f32.partialorder %v442, inf
    %v449 = vsel %vm448, %v442, %v447
    %vm450 = vcmp.eq.f32.partialorder %v442, 0.0
    %v451 = vand.u32 %v442, 2147483648
    %v452 = vsel %vm450, %v451, %v449
    %v453 = vrsqrt.pop %v443
    %v454 = vmul.f32 %v443, %v453
    %vm455 = vcmp.eq.f32.partialorder %v443, inf
    %v456 = vsel %vm455, %v443, %v454
    %vm457 = vcmp.eq.f32.partialorder %v443, 0.0
    %v458 = vand.u32 %v443, 2147483648
    %v459 = vsel %vm457, %v458, %v456
    %v460 = vrsqrt.pop %v444
    %v461 = vmul.f32 %v444, %v460
    %vm462 = vcmp.eq.f32.partialorder %v444, inf
    %v463 = vsel %vm462, %v444, %v461
    %vm464 = vcmp.eq.f32.partialorder %v444, 0.0
    %v465 = vand.u32 %v444, 2147483648
    %v466 = vsel %vm464, %v465, %v463
    %v467 = vrsqrt.pop %v445
    %v468 = vmul.f32 %v445, %v467
    %vm469 = vcmp.eq.f32.partialorder %v445, inf
    %v470 = vsel %vm469, %v445, %v468
    %vm471 = vcmp.eq.f32.partialorder %v445, 0.0
    %v472 = vand.u32 %v445, 2147483648
    %v473 = vsel %vm471, %v472, %v470
    %v474 = vmul.f32 %v327, %v327
    %v475 = vmul.f32 %v332, %v332
    %v476 = vmul.f32 %v337, %v337
    %v477 = vmul.f32 %v342, %v342
    %v478 = vmul.f32 %v412, %v412
    %v479 = vmul.f32 %v417, %v417
    %v480 = vmul.f32 %v422, %v422
    %v481 = vmul.f32 %v427, %v427
    %v482 = vadd.f32 %v474, %v478
    %v483 = vadd.f32 %v475, %v479
    %v484 = vadd.f32 %v476, %v480
    %v485 = vadd.f32 %v477, %v481
    %v486 = vadd.f32 %v482, 1e-12
    %v487 = vadd.f32 %v483, 1e-12
    %v488 = vadd.f32 %v484, 1e-12
    %v489 = vadd.f32 %v485, 1e-12
    %v490 = vrsqrt.pop %v486
    %v491 = vmul.f32 %v486, %v490
    %vm492 = vcmp.eq.f32.partialorder %v486, inf
    %v493 = vsel %vm492, %v486, %v491
    %vm494 = vcmp.eq.f32.partialorder %v486, 0.0
    %v495 = vand.u32 %v486, 2147483648
    %v496 = vsel %vm494, %v495, %v493
    %v497 = vrsqrt.pop %v487
    %v498 = vmul.f32 %v487, %v497
    %vm499 = vcmp.eq.f32.partialorder %v487, inf
    %v500 = vsel %vm499, %v487, %v498
    %vm501 = vcmp.eq.f32.partialorder %v487, 0.0
    %v502 = vand.u32 %v487, 2147483648
    %v503 = vsel %vm501, %v502, %v500
    %v504 = vrsqrt.pop %v488
    %v505 = vmul.f32 %v488, %v504
    %vm506 = vcmp.eq.f32.partialorder %v488, inf
    %v507 = vsel %vm506, %v488, %v505
    %vm508 = vcmp.eq.f32.partialorder %v488, 0.0
    %v509 = vand.u32 %v488, 2147483648
    %v510 = vsel %vm508, %v509, %v507
    %v511 = vrsqrt.pop %v489
    %v512 = vmul.f32 %v489, %v511
    %vm513 = vcmp.eq.f32.partialorder %v489, inf
    %v514 = vsel %vm513, %v489, %v512
    %vm515 = vcmp.eq.f32.partialorder %v489, 0.0
    %v516 = vand.u32 %v489, 2147483648
    %v517 = vsel %vm515, %v516, %v514
    %v518 = vld [vmem:[%s5] sm:$0xff]
    %v519 = vld [vmem:[%s5 + $0x8] sm:$0xff]
    %v520 = vld [vmem:[%s5 + $0x10] sm:$0x1]
    %vm521 = vcmask 138240
    %v523 = vsel %vm521, %v452, 0
    %v526 = vsel %vm521, %v459, 0
    %v529 = vsel %vm521, %v466, 0
    %v532 = vsel %vm521, %v473, 0
    %vm534 = vcmask 1040384
    %v536 = vsel %vm534, %v520, 0
    %538 = vmatprep.subr.mxu0 0.0
    %539 = vmatpush1.msra.mxu0 %v518
    %540 = vmatprep.subr.mxu0 0.0
    %541 = vmatpush1.msra.mxu0 %v519
    %542 = vmatprep.subr.mxu0 0.0
    %543 = vmatpush1.msra.mxu0 %v536
    %544 = vmatprep.subr.mxu0 0.0
    %545 = vmatpush1.msra.mxu0 0.0
    %546 = vmatprep.subr.mxu0 0.0
    %547 = vmatpush1.msra.mxu0 0.0
    %548 = vmatprep.subr.mxu0 0.0
    %549 = vmatpush1.msra.mxu0 0.0
    %550 = vmatprep.subr.mxu0 0.0
    %551 = vmatpush1.msra.mxu0 0.0
    %552 = vmatprep.subr.mxu0 0.0
    %553 = vmatpush1.msra.mxu0 0.0
    %554 = vmatprep.subr.mxu0 0.0
    %555 = vmatpush1.msra.mxu0 0.0
    %556 = vmatprep.subr.mxu0 0.0
    %557 = vmatpush1.msra.mxu0 0.0
    %558 = vmatprep.subr.mxu0 0.0
    %559 = vmatpush1.msra.mxu0 0.0
    %560 = vmatprep.subr.mxu0 0.0
    %561 = vmatpush1.msra.mxu0 0.0
    %562 = vmatprep.subr.mxu0 0.0
    %563 = vmatpush1.msra.mxu0 0.0
    %564 = vmatprep.subr.mxu0 0.0
    %565 = vmatpush1.msra.mxu0 0.0
    %566 = vmatprep.subr.mxu0 0.0
    %567 = vmatpush1.msra.mxu0 0.0
    %568 = vmatprep.subr.mxu0 0.0
    %569 = vmatpush1.msra.mxu0 0.0
    %570 = vmatprep.subr.mxu0 0.0
    %571 = vmatpush1.msra.mxu0 0.0
    %572 = vmatprep.subr.mxu0 0.0
    %573 = vmatpush1.msra.mxu0 0.0
    %574 = vmatprep.subr.mxu0 0.0
    %575 = vmatpush1.msra.mxu0 0.0
    %576 = vmatprep.subr.mxu0 0.0
    %577 = vmatpush1.msra.mxu0 0.0
    %578 = vmatprep.subr.mxu0 0.0
    %579 = vmatpush1.msra.mxu0 0.0
    %580 = vmatprep.subr.mxu0 0.0
    %581 = vmatpush1.msra.mxu0 0.0
    %582 = vmatprep.subr.mxu0 0.0
    %583 = vmatpush1.msra.mxu0 0.0
    %584 = vmatprep.subr.mxu0 0.0
    %585 = vmatpush1.msra.mxu0 0.0
    %586 = vmatprep.subr.mxu0 0.0
    %587 = vmatpush1.msra.mxu0 0.0
    %588 = vmatprep.subr.mxu0 0.0
    %589 = vmatpush1.msra.mxu0 0.0
    %590 = vmatprep.subr.mxu0 0.0
    %591 = vmatpush1.msra.mxu0 0.0
    %592 = vmatprep.subr.mxu0 0.0
    %593 = vmatpush1.msra.mxu0 0.0
    %594 = vmatprep.subr.mxu0 0.0
    %595 = vmatpush1.msra.mxu0 0.0
    %596 = vmatprep.subr.mxu0 0.0
    %597 = vmatpush1.msra.mxu0 0.0
    %598 = vmatprep.subr.mxu0 0.0
    %599 = vmatpush1.msra.mxu0 0.0
    %600 = vmatprep.subr.mxu0 0.0
    %601 = vmatpush1.msra.mxu0 0.0
    %602 = vmatprep.mubr.f32.mxu0 0.0
    %603 = vmatmul.mubr.f32.gmra.mrb[0].mxu0 %v523
    %v604 = vpop.f32.mrb[0].mxu0
    %v605 = vadd.f32 0.0, %v604
    %v606 = vpop.f32.mrb[0].mxu0
    %607 = vmatprep.mubr.f32.mxu0 0.0
    %608 = vmatmul.mubr.f32.gmra.mrb[0].mxu0 %v526
    %v609 = vpop.f32.mrb[0].mxu0
    %v610 = vadd.f32 0.0, %v609
    %v611 = vpop.f32.mrb[0].mxu0
    %612 = vmatprep.mubr.f32.mxu0 0.0
    %613 = vmatmul.mubr.f32.gmra.mrb[0].mxu0 %v529
    %v614 = vpop.f32.mrb[0].mxu0
    %v615 = vadd.f32 0.0, %v614
    %v616 = vpop.f32.mrb[0].mxu0
    %617 = vmatprep.mubr.f32.mxu0 0.0
    %618 = vmatmul.mubr.f32.gmra.mrb[0].mxu0 %v532
    %v619 = vpop.f32.mrb[0].mxu0
    %v620 = vadd.f32 0.0, %v619
    %v621 = vpop.f32.mrb[0].mxu0
    %622 = vdwg.mxu0
    %v624 = vsel %vm521, %v496, 0
    %v627 = vsel %vm521, %v503, 0
    %v630 = vsel %vm521, %v510, 0
    %v633 = vsel %vm521, %v517, 0
    %635 = vmatprep.subr.mxu0 0.0
    %636 = vmatpush1.msra.mxu0 %v518
    %637 = vmatprep.subr.mxu0 0.0
    %638 = vmatpush1.msra.mxu0 %v519
    %639 = vmatprep.subr.mxu0 0.0
    %640 = vmatpush1.msra.mxu0 %v536
    %641 = vmatprep.subr.mxu0 0.0
    %642 = vmatpush1.msra.mxu0 0.0
    %643 = vmatprep.subr.mxu0 0.0
    %644 = vmatpush1.msra.mxu0 0.0
    %645 = vmatprep.subr.mxu0 0.0
    %646 = vmatpush1.msra.mxu0 0.0
    %647 = vmatprep.subr.mxu0 0.0
    %648 = vmatpush1.msra.mxu0 0.0
    %649 = vmatprep.subr.mxu0 0.0
    %650 = vmatpush1.msra.mxu0 0.0
    %651 = vmatprep.subr.mxu0 0.0
    %652 = vmatpush1.msra.mxu0 0.0
    %653 = vmatprep.subr.mxu0 0.0
    %654 = vmatpush1.msra.mxu0 0.0
    %655 = vmatprep.subr.mxu0 0.0
    %656 = vmatpush1.msra.mxu0 0.0
    %657 = vmatprep.subr.mxu0 0.0
    %658 = vmatpush1.msra.mxu0 0.0
    %659 = vmatprep.subr.mxu0 0.0
    %660 = vmatpush1.msra.mxu0 0.0
    %661 = vmatprep.subr.mxu0 0.0
    %662 = vmatpush1.msra.mxu0 0.0
    %663 = vmatprep.subr.mxu0 0.0
    %664 = vmatpush1.msra.mxu0 0.0
    %665 = vmatprep.subr.mxu0 0.0
    %666 = vmatpush1.msra.mxu0 0.0
    %667 = vmatprep.subr.mxu0 0.0
    %668 = vmatpush1.msra.mxu0 0.0
    %669 = vmatprep.subr.mxu0 0.0
    %670 = vmatpush1.msra.mxu0 0.0
    %671 = vmatprep.subr.mxu0 0.0
    %672 = vmatpush1.msra.mxu0 0.0
    %673 = vmatprep.subr.mxu0 0.0
    %674 = vmatpush1.msra.mxu0 0.0
    %675 = vmatprep.subr.mxu0 0.0
    %676 = vmatpush1.msra.mxu0 0.0
    %677 = vmatprep.subr.mxu0 0.0
    %678 = vmatpush1.msra.mxu0 0.0
    %679 = vmatprep.subr.mxu0 0.0
    %680 = vmatpush1.msra.mxu0 0.0
    %681 = vmatprep.subr.mxu0 0.0
    %682 = vmatpush1.msra.mxu0 0.0
    %683 = vmatprep.subr.mxu0 0.0
    %684 = vmatpush1.msra.mxu0 0.0
    %685 = vmatprep.subr.mxu0 0.0
    %686 = vmatpush1.msra.mxu0 0.0
    %687 = vmatprep.subr.mxu0 0.0
    %688 = vmatpush1.msra.mxu0 0.0
    %689 = vmatprep.subr.mxu0 0.0
    %690 = vmatpush1.msra.mxu0 0.0
    %691 = vmatprep.subr.mxu0 0.0
    %692 = vmatpush1.msra.mxu0 0.0
    %693 = vmatprep.subr.mxu0 0.0
    %694 = vmatpush1.msra.mxu0 0.0
    %695 = vmatprep.subr.mxu0 0.0
    %696 = vmatpush1.msra.mxu0 0.0
    %697 = vmatprep.subr.mxu0 0.0
    %698 = vmatpush1.msra.mxu0 0.0
    %699 = vmatprep.mubr.f32.mxu0 0.0
    %700 = vmatmul.mubr.f32.gmra.mrb[0].mxu0 %v624
    %v701 = vpop.f32.mrb[0].mxu0
    %v702 = vadd.f32 0.0, %v701
    %v703 = vpop.f32.mrb[0].mxu0
    %704 = vmatprep.mubr.f32.mxu0 0.0
    %705 = vmatmul.mubr.f32.gmra.mrb[0].mxu0 %v627
    %v706 = vpop.f32.mrb[0].mxu0
    %v707 = vadd.f32 0.0, %v706
    %v708 = vpop.f32.mrb[0].mxu0
    %709 = vmatprep.mubr.f32.mxu0 0.0
    %710 = vmatmul.mubr.f32.gmra.mrb[0].mxu0 %v630
    %v711 = vpop.f32.mrb[0].mxu0
    %v712 = vadd.f32 0.0, %v711
    %v713 = vpop.f32.mrb[0].mxu0
    %714 = vmatprep.mubr.f32.mxu0 0.0
    %715 = vmatmul.mubr.f32.gmra.mrb[0].mxu0 %v633
    %v716 = vpop.f32.mrb[0].mxu0
    %v717 = vadd.f32 0.0, %v716
    %v718 = vpop.f32.mrb[0].mxu0
    %719 = vdwg.mxu0
    %v720 = vlaneseq
    %v721 = vshrl.u32 %v720, 7
    %v722 = vadd.s32 %v721, 8
    %v723 = vadd.s32 %v721, 16
    %v724 = vadd.s32 %v721, 24
    %s725 = smul.u32 0, 32
    %v726 = vstv %s725
    %v727 = vadd.s32 %v721, %v726
    %v728 = vadd.s32 %v722, %v726
    %v729 = vadd.s32 %v723, %v726
    %v730 = vadd.s32 %v724, %v726
    %vm731 = vcmp.lt.s32.totalorder %v727, 32
    %vm732 = vcmp.lt.s32.totalorder %v728, 32
    %vm733 = vcmp.lt.s32.totalorder %v729, 32
    %vm734 = vcmp.lt.s32.totalorder %v730, 32
    %v735 = vsel %vm731, 1, 0
    %v736 = vsel %vm732, 1, 0
    %v737 = vsel %vm733, 1, 0
    %v738 = vsel %vm734, 1, 0
    %v739 = vcvt.s32.f32 %v735
    %v740 = vcvt.s32.f32 %v736
    %v741 = vcvt.s32.f32 %v737
    %v742 = vcvt.s32.f32 %v738
    %v743 = vmul.f32 %v605, %v739
    %v744 = vmul.f32 %v610, %v740
    %v745 = vmul.f32 %v615, %v741
    %v746 = vmul.f32 %v620, %v742
    %v747 = vmul.f32 %v702, %v739
    %v748 = vmul.f32 %v707, %v740
    %v749 = vmul.f32 %v712, %v741
    %v750 = vmul.f32 %v717, %v742
    %v751 = vsub.f32 %v743, %v747
    %v752 = vsub.f32 %v744, %v748
    %v753 = vsub.f32 %v745, %v749
    %v754 = vsub.f32 %v746, %v750
    %s755 = sld [smem:[#allocation2]]
    %v756 = vmul.f32 %v751, %v751
    %v757 = vmul.f32 %v752, %v752
    %v758 = vmul.f32 %v753, %v753
    %v759 = vmul.f32 %v754, %v754
    %vm760 = vcmask 64512
    %v761 = vsel %vm760, %v756, 0.0
    %v762 = vsel %vm760, %v757, 0.0
    %v763 = vadd.f32 %v761, %v762
    %v764 = vsel %vm760, %v758, 0.0
    %v765 = vadd.f32 %v763, %v764
    %v766 = vsel %vm760, %v759, 0.0
    %v767 = vadd.f32 %v765, %v766
    %768 = vadd.xlane.f32.xlu0 %v767
    %v769 = vpop.xlane.xlu0 %768
    %v770 = vrot.slane %v769, 4
    %v771 = vadd.f32 %v769, %v770
    %v772 = vrot.slane %v771, 2
    %v773 = vadd.f32 %v771, %v772
    %v774 = vrot.slane %v773, 1
    %v775 = vadd.f32 %v773, %v774
    %s776 = vtos %v775
    %s777 = sadd.f32 %s755, %s776
    %s778 = scalar_lea.smem [#allocation2], 0
    %779 = sst [smem:[%s778]] %s777
    %s780 = sld [smem:[#allocation2 + $0x1]]
    %v781 = vmul.f32 %v743, %v743
    %v782 = vmul.f32 %v744, %v744
    %v783 = vmul.f32 %v745, %v745
    %v784 = vmul.f32 %v746, %v746
    %v785 = vsel %vm760, %v781, 0.0
    %v786 = vsel %vm760, %v782, 0.0
    %v787 = vadd.f32 %v785, %v786
    %v788 = vsel %vm760, %v783, 0.0
    %v789 = vadd.f32 %v787, %v788
    %v790 = vsel %vm760, %v784, 0.0
    %v791 = vadd.f32 %v789, %v790
    %792 = vadd.xlane.f32.xlu0 %v791
    %v793 = vpop.xlane.xlu0 %792
    %v794 = vrot.slane %v793, 4
    %v795 = vadd.f32 %v793, %v794
    %v796 = vrot.slane %v795, 2
    %v797 = vadd.f32 %v795, %v796
    %v798 = vrot.slane %v797, 1
    %v799 = vadd.f32 %v797, %v798
    %s800 = vtos %v799
    %s801 = sadd.f32 %s780, %s800
    %s802 = scalar_lea.smem [#allocation2], 1
    %803 = sst [smem:[%s802]] %s801
    %s804 = sld [smem:[#allocation2 + $0x2]]
    %v805 = vadd.f32 %v743, 1e-07
    %v806 = vadd.f32 %v744, 1e-07
    %v807 = vadd.f32 %v745, 1e-07
    %v808 = vadd.f32 %v746, 1e-07
    %v809 = vlog2.pop %v805
    %v810 = vmul.f32 %v809, 0.6931472
    %v811 = vlog2.pop %v806
    %v812 = vmul.f32 %v811, 0.6931472
    %v813 = vlog2.pop %v807
    %v814 = vmul.f32 %v813, 0.6931472
    %v815 = vlog2.pop %v808
    %v816 = vmul.f32 %v815, 0.6931472
    %v817 = vadd.f32 %v747, 1e-07
    %v818 = vadd.f32 %v748, 1e-07
    %v819 = vadd.f32 %v749, 1e-07
    %v820 = vadd.f32 %v750, 1e-07
    %v821 = vlog2.pop %v817
    %v822 = vmul.f32 %v821, 0.6931472
    %v823 = vlog2.pop %v818
    %v824 = vmul.f32 %v823, 0.6931472
    %v825 = vlog2.pop %v819
    %v826 = vmul.f32 %v825, 0.6931472
    %v827 = vlog2.pop %v820
    %v828 = vmul.f32 %v827, 0.6931472
    %v829 = vsub.f32 %v810, %v822
    %v830 = vsub.f32 %v812, %v824
    %v831 = vsub.f32 %v814, %v826
    %v832 = vsub.f32 %v816, %v828
    %v833 = vand.u32 2147483647, %v829
    %v834 = vand.u32 2147483647, %v830
    %v835 = vand.u32 2147483647, %v831
    %v836 = vand.u32 2147483647, %v832
    %v837 = vsel %vm760, %v833, 0.0
    %v838 = vsel %vm760, %v834, 0.0
    %v839 = vadd.f32 %v837, %v838
    %v840 = vsel %vm760, %v835, 0.0
    %v841 = vadd.f32 %v839, %v840
    %v842 = vsel %vm760, %v836, 0.0
    %v843 = vadd.f32 %v841, %v842
    %844 = vadd.xlane.f32.xlu0 %v843
    %v845 = vpop.xlane.xlu0 %844
    %v846 = vrot.slane %v845, 4
    %v847 = vadd.f32 %v845, %v846
    %v848 = vrot.slane %v847, 2
    %v849 = vadd.f32 %v847, %v848
    %v850 = vrot.slane %v849, 1
    %v851 = vadd.f32 %v849, %v850
    %s852 = vtos %v851
    %s853 = sadd.f32 %s804, %s852
    %s854 = scalar_lea.smem [#allocation2], 2
    %855 = sst [smem:[%s854]] %s853
    // Predicated region
    $region30: #{forward.9} parent=1 // pred_check
      _
    $region31: #{forward.9} parent=1 // pred_check_branch
      %857 = sbr.rel (0) target = $region33
    $region32: #{forward.9} parent=1 // pred_region
      %s859 = ssub.s32 16, 16
      %860 = vsyncadd [#allocation3], %s859
      %s862 = sshll.u32 %s6, 4
      %s863 = int_to_ptr.vmem [resolvable:$true] %s862
      %865 = dma.smem_to_vmem [#allocation2], 16, %s863, [#allocation3]
    $region33: #{forward.9} parent=1 // pred_fallthru
      _
    // Predicated region
    $region34: #{forward.9} parent=1 // pred_check
      _
    $region35: #{forward.9} parent=1 // pred_check_branch
      %867 = sbr.rel (0) target = $region37
    $region36: #{forward.9} parent=1 // pred_region
      %868 = dma.done [#allocation3], 16
    $region37: #{forward.9} parent=1 // pred_fallthru
      _
    %869 = sfence
    %870 = vsyncpa [#allocation3], 1

// kernel: forward.10
$region0: #{forward.10}
  #allocation0 [shape = 'u32[]', space=smem, size = 0x4, offset = 0x4, fixed_abs, tag = 'smem constant byte address 0x4 - core index']
  #allocation1 [shape = 'u32[144,128]{1,0:T(1,128)}', space=vmem, size = 0x12000, scoped, tag = 'internal scratch']
  %s0 = inlined_call_operand.vmem [shape: f32[256,16], index: 0, kind: input, shape index: {}]
  %s1 = inlined_call_operand.vmem [shape: f32[256,16], index: 1, kind: input, shape index: {}]
  %s2 = inlined_call_operand.vmem [shape: f32[1,16], index: 2, kind: input, shape index: {}]
  %s3 = inlined_call_operand.vmem [shape: f32[16,9], index: 3, kind: input, shape index: {}]
  %s4 = inlined_call_operand.vmem [shape: f32[16,9], index: 4, kind: input, shape index: {}]
  %s5 = inlined_call_operand.vmem [shape: f32[9,4], index: 5, kind: input, shape index: {}]
  %s6 = inlined_call_operand.vmem [shape: f32[3], index: 6, kind: output, shape index: {}]
  %s7 = sld [smem:[#allocation0]]
  $region61: #{forward.10} parent=0
    _
  %s9 = ssub.s32 1, %s7
  %s10 = scalar_select 0, %s9, %s7
  $region1: #{forward.10} parent=0
    #allocation2 [shape = 'u8[512]{0}', space=smem, size = 0x200, scoped, tag = 'output window, operand 0, single buffered']
    #allocation3 [shape = 's32[2]{0}', space=sflag, size = 0x8, scoped, tag = 'scoped memory for forward.10']
    %11 = vsyncpa [#allocation3], 0
    loop: start=0, step=1, limit=4
    $region2: #{forward.10} parent=1 // loop_pre_header
      _
    $region3: #{forward.10} parent=1 // loop_header
      %s13 = sphi 0, %s17
      %p14 = scmp.ge.s32.totalorder %s13, 4
      %s23 = sphi 0, %s25
      %s26 = sphi 0, %s23
      %s27 = sphi 0, %s26
      %s43 = sphi 0, %s27
      %s49 = sphi 0, %s51
      %s52 = sphi 0, %s49
      %s53 = sphi 0, %s52
      %s69 = sphi 0, %s53
      %s73 = sphi 0, %s73
      %s75 = sphi 0, %s73
      %s76 = sphi 0, %s75
      %s90 = sphi 0, %s76
      %s94 = sphi 0, %s94
      %s96 = sphi 0, %s94
      %s97 = sphi 0, %s96
      %s111 = sphi 0, %s97
      %s115 = sphi 0, %s115
      %s117 = sphi 0, %s115
      %s118 = sphi 0, %s117
      %s132 = sphi 0, %s118
      %s136 = sphi 0, %s136
      %s138 = sphi 0, %s136
      %s139 = sphi 0, %s138
      %s153 = sphi 0, %s139
      %s157 = sphi 0, %s157
      %s159 = sphi 0, %s157
      %s160 = sphi 0, %s159
      %s174 = sphi 0, %s160
    $region4: #{forward.10} parent=1 // loop_header_branch
      %16 = sbr.rel (%p14) target = $region8
    $region5: #{forward.10} parent=1 // loop_body
      %s18 = ssub.s32 %s13, 1
      %s19 = ssub.s32 %s13, 2
      %s20 = sadd.s32 %s13, 1
      %s21 = ssub.s32 %s13, %s20
      %p22 = scmp.eq.s32.totalorder %s21, 0
      %s24 = sadd.s32 %s23, 1
      %s25 = scalar_select %p22, %s23, %s24
      %p28 = pneg %p22
      %p29 = scmp.eq.s32.totalorder %s13, 1
      %p30 = por %p28, %p29
      %p31 = scmp.ne.s32.totalorder %s23, %s26
      %p32 = scmp.eq.s32.totalorder %s13, 0
      %p33 = por %p31, %p32
      %p34 = scmp.ne.s32.totalorder %s23, %s26
      %p35 = scmp.eq.s32.totalorder %s18, 1
      %p36 = por %p34, %p35
      %p37 = scmp.ne.s32.totalorder %s26, %s27
      %p38 = scmp.eq.s32.totalorder %s18, 0
      %p39 = por %p37, %p38
      %p40 = scmp.ne.s32.totalorder %s26, %s27
      %p41 = scmp.eq.s32.totalorder %s19, 1
      %p42 = por %p40, %p41
      %p44 = scmp.ne.s32.totalorder %s27, %s43
      %p45 = scmp.eq.s32.totalorder %s19, 0
      %p46 = por %p44, %p45
      %s47 = ssub.s32 %s13, %s20
      %p48 = scmp.eq.s32.totalorder %s47, 0
      %s50 = sadd.s32 %s49, 1
      %s51 = scalar_select %p48, %s49, %s50
      %p54 = pneg %p48
      %p55 = scmp.eq.s32.totalorder %s13, 1
      %p56 = por %p54, %p55
      %p57 = scmp.ne.s32.totalorder %s49, %s52
      %p58 = scmp.eq.s32.totalorder %s13, 0
      %p59 = por %p57, %p58
      %p60 = scmp.ne.s32.totalorder %s49, %s52
      %p61 = scmp.eq.s32.totalorder %s18, 1
      %p62 = por %p60, %p61
      %p63 = scmp.ne.s32.totalorder %s52, %s53
      %p64 = scmp.eq.s32.totalorder %s18, 0
      %p65 = por %p63, %p64
      %p66 = scmp.ne.s32.totalorder %s52, %s53
      %p67 = scmp.eq.s32.totalorder %s19, 1
      %p68 = por %p66, %p67
      %p70 = scmp.ne.s32.totalorder %s53, %s69
      %p71 = scmp.eq.s32.totalorder %s19, 0
      %p72 = por %p70, %p71
      %s74 = sadd.s32 %s73, 1
      %p77 = scmp.eq.s32.totalorder %s13, 1
      %p78 = scmp.ne.s32.totalorder %s73, %s75
      %p79 = scmp.eq.s32.totalorder %s13, 0
      %p80 = por %p78, %p79
      %p81 = scmp.ne.s32.totalorder %s73, %s75
      %p82 = scmp.eq.s32.totalorder %s18, 1
      %p83 = por %p81, %p82
      %p84 = scmp.ne.s32.totalorder %s75, %s76
      %p85 = scmp.eq.s32.totalorder %s18, 0
      %p86 = por %p84, %p85
      %p87 = scmp.ne.s32.totalorder %s75, %s76
      %p88 = scmp.eq.s32.totalorder %s19, 1
      %p89 = por %p87, %p88
      %p91 = scmp.ne.s32.totalorder %s76, %s90
      %p92 = scmp.eq.s32.totalorder %s19, 0
      %p93 = por %p91, %p92
      %s95 = sadd.s32 %s94, 1
      %p98 = scmp.eq.s32.totalorder %s13, 1
      %p99 = scmp.ne.s32.totalorder %s94, %s96
      %p100 = scmp.eq.s32.totalorder %s13, 0
      %p101 = por %p99, %p100
      %p102 = scmp.ne.s32.totalorder %s94, %s96
      %p103 = scmp.eq.s32.totalorder %s18, 1
      %p104 = por %p102, %p103
      %p105 = scmp.ne.s32.totalorder %s96, %s97
      %p106 = scmp.eq.s32.totalorder %s18, 0
      %p107 = por %p105, %p106
      %p108 = scmp.ne.s32.totalorder %s96, %s97
      %p109 = scmp.eq.s32.totalorder %s19, 1
      %p110 = por %p108, %p109
      %p112 = scmp.ne.s32.totalorder %s97, %s111
      %p113 = scmp.eq.s32.totalorder %s19, 0
      %p114 = por %p112, %p113
      %s116 = sadd.s32 %s115, 1
      %p119 = scmp.eq.s32.totalorder %s13, 1
      %p120 = scmp.ne.s32.totalorder %s115, %s117
      %p121 = scmp.eq.s32.totalorder %s13, 0
      %p122 = por %p120, %p121
      %p123 = scmp.ne.s32.totalorder %s115, %s117
      %p124 = scmp.eq.s32.totalorder %s18, 1
      %p125 = por %p123, %p124
      %p126 = scmp.ne.s32.totalorder %s117, %s118
      %p127 = scmp.eq.s32.totalorder %s18, 0
      %p128 = por %p126, %p127
      %p129 = scmp.ne.s32.totalorder %s117, %s118
      %p130 = scmp.eq.s32.totalorder %s19, 1
      %p131 = por %p129, %p130
      %p133 = scmp.ne.s32.totalorder %s118, %s132
      %p134 = scmp.eq.s32.totalorder %s19, 0
      %p135 = por %p133, %p134
      %s137 = sadd.s32 %s136, 1
      %p140 = scmp.eq.s32.totalorder %s13, 1
      %p141 = scmp.ne.s32.totalorder %s136, %s138
      %p142 = scmp.eq.s32.totalorder %s13, 0
      %p143 = por %p141, %p142
      %p144 = scmp.ne.s32.totalorder %s136, %s138
      %p145 = scmp.eq.s32.totalorder %s18, 1
      %p146 = por %p144, %p145
      %p147 = scmp.ne.s32.totalorder %s138, %s139
      %p148 = scmp.eq.s32.totalorder %s18, 0
      %p149 = por %p147, %p148
      %p150 = scmp.ne.s32.totalorder %s138, %s139
      %p151 = scmp.eq.s32.totalorder %s19, 1
      %p152 = por %p150, %p151
      %p154 = scmp.ne.s32.totalorder %s139, %s153
      %p155 = scmp.eq.s32.totalorder %s19, 0
      %p156 = por %p154, %p155
      %s158 = sadd.s32 %s157, 1
      %p161 = scmp.eq.s32.totalorder %s13, 1
      %p162 = scmp.ne.s32.totalorder %s157, %s159
      %p163 = scmp.eq.s32.totalorder %s13, 0
      %p164 = por %p162, %p163
      %p165 = scmp.ne.s32.totalorder %s157, %s159
      %p166 = scmp.eq.s32.totalorder %s18, 1
      %p167 = por %p165, %p166
      %p168 = scmp.ne.s32.totalorder %s159, %s160
      %p169 = scmp.eq.s32.totalorder %s18, 0
      %p170 = por %p168, %p169
      %p171 = scmp.ne.s32.totalorder %s159, %s160
      %p172 = scmp.eq.s32.totalorder %s19, 1
      %p173 = por %p171, %p172
      %p175 = scmp.ne.s32.totalorder %s160, %s174
      %p176 = scmp.eq.s32.totalorder %s19, 0
      %p177 = por %p175, %p176
      %p178 = scmp.le.s32.totalorder 1, %s13
      %p179 = scmp.lt.s32.totalorder %s13, 3
      %p180 = pnand %p178, %p179
      %p181 = pneg %p180
      // Predicated region
      $region9: #{forward.10} parent=5 // pred_check
        _
      $region10: #{forward.10} parent=5 // pred_check_branch
        %183 = sbr.rel (%p180) target = $region12
      $region11: #{forward.10} parent=5 // pred_region
        %s184 = ssub.s32 %s13, 1
        // Predicated region
        $region13: #{forward.10} parent=11 // pred_check
          %p185 = pneg %p86
        $region14: #{forward.10} parent=11 // pred_check_branch
          %187 = sbr.rel (%p185) target = $region16
        $region15: #{forward.10} parent=11 // pred_region
          _
        $region16: #{forward.10} parent=11 // pred_fallthru
          _
        // Predicated region
        $region17: #{forward.10} parent=11 // pred_check
          %p188 = pneg %p107
        $region18: #{forward.10} parent=11 // pred_check_branch
          %190 = sbr.rel (%p188) target = $region20
        $region19: #{forward.10} parent=11 // pred_region
          _
        $region20: #{forward.10} parent=11 // pred_fallthru
          _
        // Predicated region
        $region21: #{forward.10} parent=11 // pred_check
          %p191 = pneg %p128
        $region22: #{forward.10} parent=11 // pred_check_branch
          %193 = sbr.rel (%p191) target = $region24
        $region23: #{forward.10} parent=11 // pred_region
          _
        $region24: #{forward.10} parent=11 // pred_fallthru
          _
        // Predicated region
        $region25: #{forward.10} parent=11 // pred_check
          %p194 = pneg %p149
        $region26: #{forward.10} parent=11 // pred_check_branch
          %196 = sbr.rel (%p194) target = $region28
        $region27: #{forward.10} parent=11 // pred_region
          _
        $region28: #{forward.10} parent=11 // pred_fallthru
          _
      $region12: #{forward.10} parent=5 // pred_fallthru
        _
      %p197 = scmp.lt.s32.totalorder %s13, 2
      // Predicated region
      $region29: #{forward.10} parent=5 // pred_check
        %p198 = pneg %p197
      $region30: #{forward.10} parent=5 // pred_check_branch
        %200 = sbr.rel (%p198) target = $region32
      $region31: #{forward.10} parent=5 // pred_region
        // Predicated region
        $region33: #{forward.10} parent=31 // pred_check
          %p201 = pneg %p33
        $region34: #{forward.10} parent=31 // pred_check_branch
          %203 = sbr.rel (%p201) target = $region36
        $region35: #{forward.10} parent=31 // pred_region
          %s204 = smul.u32 16, %s13
          %p205 = scmp.lt.s32.totalorder %s204, 31
          %s206 = scalar_select %p205, %s204, 31
          %s207 = smul.addr %s206, 8
          %s208 = scalar_lea.vmem %s0, %s207
          %s209 = smul.u32 16, %s13
        $region36: #{forward.10} parent=31 // pred_fallthru
          _
        // Predicated region
        $region37: #{forward.10} parent=31 // pred_check
          %p210 = pneg %p59
        $region38: #{forward.10} parent=31 // pred_check_branch
          %212 = sbr.rel (%p210) target = $region40
        $region39: #{forward.10} parent=31 // pred_region
          %s213 = smul.u32 16, %s13
          %p214 = scmp.lt.s32.totalorder %s213, 31
          %s215 = scalar_select %p214, %s213, 31
          %s216 = smul.addr %s215, 8
          %s217 = scalar_lea.vmem %s1, %s216
          %s218 = smul.u32 16, %s13
        $region40: #{forward.10} parent=31 // pred_fallthru
          _
      $region32: #{forward.10} parent=5 // pred_fallthru
        _
      %p219 = scmp.le.s32.totalorder 1, %s13
      %p220 = scmp.lt.s32.totalorder %s13, 3
      %p221 = pnand %p219, %p220
      %p222 = pneg %p221
      // Predicated region
      $region41: #{forward.10} parent=5 // pred_check
        _
      $region42: #{forward.10} parent=5 // pred_check_branch
        %224 = sbr.rel (%p221) target = $region44
      $region43: #{forward.10} parent=5 // pred_region
        %s225 = ssub.s32 %s13, 1
        %s226 = smul.u32 16, %s18
        %p227 = scmp.lt.s32.totalorder %s226, 31
        %s228 = scalar_select %p227, %s226, 31
        %s229 = smul.addr %s228, 8
        %s230 = scalar_lea.vmem %s0, %s229
        %p231 = pneg %p39
        %p232 = pneg %p36
        %s233 = smul.u32 16, %s18
        %p234 = scmp.lt.s32.totalorder %s233, 31
        %s235 = scalar_select %p234, %s233, 31
        %s236 = smul.addr %s235, 8
        %s237 = scalar_lea.vmem %s1, %s236
        %p238 = pneg %p65
        %p239 = pneg %p62
        %p240 = pneg %p86
        %p241 = pneg %p83
        %p242 = pneg %p107
        %p243 = pneg %p104
        %p244 = pneg %p128
        %p245 = pneg %p125
        %p246 = pneg %p149
        %p247 = pneg %p146
        %p248 = pneg %p170
        %p249 = pneg %p167
        %s250 = smul.u32 16, %s18
        %p251 = scmp.lt.s32.totalorder %s250, 31
        %s252 = scalar_select %p251, %s250, 31
        %s253 = smul.addr %s252, 8
        %s254 = scalar_lea.vmem %s0, %s253
        %s255 = smul.u32 16, %s18
        %s256 = smul.u32 16, %s18
        %p257 = scmp.lt.s32.totalorder %s256, 31
        %s258 = scalar_select %p257, %s256, 31
        %s259 = smul.addr %s258, 8
        %s260 = scalar_lea.vmem %s1, %s259
        %s261 = smul.u32 16, %s18
        %p262 = scmp.eq.s32.totalorder %s18, 0
        // Predicated region
        $region45: #{forward.10} parent=43 // pred_check
          %p263 = pneg %p262
        $region46: #{forward.10} parent=43 // pred_check_branch
          %265 = sbr.rel (%p263) target = $region48
        $region47: #{forward.10} parent=43 // pred_region
          %s266 = scalar_lea.smem [#allocation2], 0
          %267 = sst [smem:[%s266]] 0.0
          %s268 = scalar_lea.smem [#allocation2], 1
          %269 = sst [smem:[%s268]] 0.0
          %s270 = scalar_lea.smem [#allocation2], 2
          %271 = sst [smem:[%s270]] 0.0
        $region48: #{forward.10} parent=43 // pred_fallthru
          _
        %v272 = vld [vmem:[%s2] sm:$0x1]
        %v273 = vld [vmem:[%s254] sm:$0xff]
        %v274 = vld [vmem:[%s254 + $0x8] sm:$0xff]
        %v275 = vld [vmem:[%s254 + $0x10] sm:$0xff]
        %v276 = vld [vmem:[%s254 + $0x18] sm:$0xff]
        %v277 = vld [vmem:[%s254 + $0x20] sm:$0xff]
        %v278 = vld [vmem:[%s254 + $0x28] sm:$0xff]
        %v279 = vld [vmem:[%s254 + $0x30] sm:$0xff]
        %v280 = vld [vmem:[%s254 + $0x38] sm:$0xff]
        %v281 = vld [vmem:[%s254 + $0x40] sm:$0xff]
        %v282 = vld [vmem:[%s254 + $0x48] sm:$0xff]
        %v283 = vld [vmem:[%s254 + $0x50] sm:$0xff]
        %v284 = vld [vmem:[%s254 + $0x58] sm:$0xff]
        %v285 = vld [vmem:[%s254 + $0x60] sm:$0xff]
        %v286 = vld [vmem:[%s254 + $0x68] sm:$0xff]
        %v287 = vld [vmem:[%s254 + $0x70] sm:$0xff]
        %v288 = vld [vmem:[%s254 + $0x78] sm:$0xff]
        %v290 = vlaneseq
        %v291 = vshrl.u32 %v290, 7
        %v292 = vsub.s32 0, %v291
        %v293 = vrot.slane %v272, %v292
        %v295 = vmul.f32 %v273, %v293
        %v296 = vmul.f32 %v274, %v293
        %v297 = vmul.f32 %v275, %v293
        %v298 = vmul.f32 %v276, %v293
        %v299 = vmul.f32 %v277, %v293
        %v300 = vmul.f32 %v278, %v293
        %v301 = vmul.f32 %v279, %v293
        %v302 = vmul.f32 %v280, %v293
        %v303 = vmul.f32 %v281, %v293
        %v304 = vmul.f32 %v282, %v293
        %v305 = vmul.f32 %v283, %v293
        %v306 = vmul.f32 %v284, %v293
        %v307 = vmul.f32 %v285, %v293
        %v308 = vmul.f32 %v286, %v293
        %v309 = vmul.f32 %v287, %v293
        %v310 = vmul.f32 %v288, %v293
        %v311 = vld [vmem:[%s260] sm:$0xff]
        %v312 = vld [vmem:[%s260 + $0x8] sm:$0xff]
        %v313 = vld [vmem:[%s260 + $0x10] sm:$0xff]
        %v314 = vld [vmem:[%s260 + $0x18] sm:$0xff]
        %v315 = vld [vmem:[%s260 + $0x20] sm:$0xff]
        %v316 = vld [vmem:[%s260 + $0x28] sm:$0xff]
        %v317 = vld [vmem:[%s260 + $0x30] sm:$0xff]
        %v318 = vld [vmem:[%s260 + $0x38] sm:$0xff]
        %v319 = vld [vmem:[%s260 + $0x40] sm:$0xff]
        %v320 = vld [vmem:[%s260 + $0x48] sm:$0xff]
        %v321 = vld [vmem:[%s260 + $0x50] sm:$0xff]
        %v322 = vld [vmem:[%s260 + $0x58] sm:$0xff]
        %v323 = vld [vmem:[%s260 + $0x60] sm:$0xff]
        %v324 = vld [vmem:[%s260 + $0x68] sm:$0xff]
        %v325 = vld [vmem:[%s260 + $0x70] sm:$0xff]
        %v326 = vld [vmem:[%s260 + $0x78] sm:$0xff]
        %v327 = vmul.f32 %v311, %v293
        %v328 = vmul.f32 %v312, %v293
        %v329 = vmul.f32 %v313, %v293
        %v330 = vmul.f32 %v314, %v293
        %v331 = vmul.f32 %v315, %v293
        %v332 = vmul.f32 %v316, %v293
        %v333 = vmul.f32 %v317, %v293
        %v334 = vmul.f32 %v318, %v293
        %v335 = vmul.f32 %v319, %v293
        %v336 = vmul.f32 %v320, %v293
        %v337 = vmul.f32 %v321, %v293
        %v338 = vmul.f32 %v322, %v293
        %v339 = vmul.f32 %v323, %v293
        %v340 = vmul.f32 %v324, %v293
        %v341 = vmul.f32 %v325, %v293
        %v342 = vmul.f32 %v326, %v293
        %v343 = vld [vmem:[%s3] sm:$0xff]
        %v344 = vld [vmem:[%s3 + $0x8] sm:$0xff]
        %vm345 = vcmask 130048
        %v347 = vsel %vm345, %v295, 0
        %v350 = vsel %vm345, %v296, 0
        %v353 = vsel %vm345, %v297, 0
        %v356 = vsel %vm345, %v298, 0
        %v359 = vsel %vm345, %v299, 0
        %v362 = vsel %vm345, %v300, 0
        %v365 = vsel %vm345, %v301, 0
        %v368 = vsel %vm345, %v302, 0
        %v371 = vsel %vm345, %v303, 0
        %v374 = vsel %vm345, %v304, 0
        %v377 = vsel %vm345, %v305, 0
        %v380 = vsel %vm345, %v306, 0
        %v383 = vsel %vm345, %v307, 0
        %v386 = vsel %vm345, %v308, 0
        %v389 = vsel %vm345, %v309, 0
        %v392 = vsel %vm345, %v310, 0
        %394 = vmatprep.subr.mxu0 0.0
        %395 = vmatpush1.msra.mxu0 %v343
        %396 = vmatprep.subr.mxu0 0.0
        %397 = vmatpush1.msra.mxu0 %v344
        %398 = vmatprep.subr.mxu0 0.0
        %399 = vmatpush1.msra.mxu0 0.0
        %400 = vmatprep.subr.mxu0 0.0
        %401 = vmatpush1.msra.mxu0 0.0
        %402 = vmatprep.subr.mxu0 0.0
        %403 = vmatpush1.msra.mxu0 0.0
        %404 = vmatprep.subr.mxu0 0.0
        %405 = vmatpush1.msra.mxu0 0.0
        %406 = vmatprep.subr.mxu0 0.0
        %407 = vmatpush1.msra.mxu0 0.0
        %408 = vmatprep.subr.mxu0 0.0
        %409 = vmatpush1.msra.mxu0 0.0
        %410 = vmatprep.subr.mxu0 0.0
        %411 = vmatpush1.msra.mxu0 0.0
        %412 = vmatprep.subr.mxu0 0.0
        %413 = vmatpush1.msra.mxu0 0.0
        %414 = vmatprep.subr.mxu0 0.0
        %415 = vmatpush1.msra.mxu0 0.0
        %416 = vmatprep.subr.mxu0 0.0
        %417 = vmatpush1.msra.mxu0 0.0
        %418 = vmatprep.subr.mxu0 0.0
        %419 = vmatpush1.msra.mxu0 0.0
        %420 = vmatprep.subr.mxu0 0.0
        %421 = vmatpush1.msra.mxu0 0.0
        %422 = vmatprep.subr.mxu0 0.0
        %423 = vmatpush1.msra.mxu0 0.0
        %424 = vmatprep.subr.mxu0 0.0
        %425 = vmatpush1.msra.mxu0 0.0
        %426 = vmatprep.subr.mxu0 0.0
        %427 = vmatpush1.msra.mxu0 0.0
        %428 = vmatprep.subr.mxu0 0.0
        %429 = vmatpush1.msra.mxu0 0.0
        %430 = vmatprep.subr.mxu0 0.0
        %431 = vmatpush1.msra.mxu0 0.0
        %432 = vmatprep.subr.mxu0 0.0
        %433 = vmatpush1.msra.mxu0 0.0
        %434 = vmatprep.subr.mxu0 0.0
        %435 = vmatpush1.msra.mxu0 0.0
        %436 = vmatprep.subr.mxu0 0.0
        %437 = vmatpush1.msra.mxu0 0.0
        %438 = vmatprep.subr.mxu0 0.0
        %439 = vmatpush1.msra.mxu0 0.0
        %440 = vmatprep.subr.mxu0 0.0
        %441 = vmatpush1.msra.mxu0 0.0
        %442 = vmatprep.subr.mxu0 0.0
        %443 = vmatpush1.msra.mxu0 0.0
        %444 = vmatprep.subr.mxu0 0.0
        %445 = vmatpush1.msra.mxu0 0.0
        %446 = vmatprep.subr.mxu0 0.0
        %447 = vmatpush1.msra.mxu0 0.0
        %448 = vmatprep.subr.mxu0 0.0
        %449 = vmatpush1.msra.mxu0 0.0
        %450 = vmatprep.subr.mxu0 0.0
        %451 = vmatpush1.msra.mxu0 0.0
        %452 = vmatprep.subr.mxu0 0.0
        %453 = vmatpush1.msra.mxu0 0.0
        %454 = vmatprep.subr.mxu0 0.0
        %455 = vmatpush1.msra.mxu0 0.0
        %456 = vmatprep.subr.mxu0 0.0
        %457 = vmatpush1.msra.mxu0 0.0
        %458 = vmatprep.mubr.f32.mxu0 0.0
        %459 = vmatmul.mubr.f32.gmra.mrb[0].mxu0 %v347
        %v460 = vpop.f32.mrb[0].mxu0
        %v461 = vadd.f32 0.0, %v460
        %v462 = vpop.f32.mrb[0].mxu0
        %463 = vmatprep.mubr.f32.mxu0 0.0
        %464 = vmatmul.mubr.f32.gmra.mrb[0].mxu0 %v350
        %v465 = vpop.f32.mrb[0].mxu0
        %v466 = vadd.f32 0.0, %v465
        %v467 = vpop.f32.mrb[0].mxu0
        %468 = vmatprep.mubr.f32.mxu0 0.0
        %469 = vmatmul.mubr.f32.gmra.mrb[0].mxu0 %v353
        %v470 = vpop.f32.mrb[0].mxu0
        %v471 = vadd.f32 0.0, %v470
        %v472 = vpop.f32.mrb[0].mxu0
        %473 = vmatprep.mubr.f32.mxu0 0.0
        %474 = vmatmul.mubr.f32.gmra.mrb[0].mxu0 %v356
        %v475 = vpop.f32.mrb[0].mxu0
        %v476 = vadd.f32 0.0, %v475
        %v477 = vpop.f32.mrb[0].mxu0
        %478 = vmatprep.mubr.f32.mxu0 0.0
        %479 = vmatmul.mubr.f32.gmra.mrb[0].mxu0 %v359
        %v480 = vpop.f32.mrb[0].mxu0
        %v481 = vadd.f32 0.0, %v480
        %v482 = vpop.f32.mrb[0].mxu0
        %483 = vmatprep.mubr.f32.mxu0 0.0
        %484 = vmatmul.mubr.f32.gmra.mrb[0].mxu0 %v362
        %v485 = vpop.f32.mrb[0].mxu0
        %v486 = vadd.f32 0.0, %v485
        %v487 = vpop.f32.mrb[0].mxu0
        %488 = vmatprep.mubr.f32.mxu0 0.0
        %489 = vmatmul.mubr.f32.gmra.mrb[0].mxu0 %v365
        %v490 = vpop.f32.mrb[0].mxu0
        %v491 = vadd.f32 0.0, %v490
        %v492 = vpop.f32.mrb[0].mxu0
        %493 = vmatprep.mubr.f32.mxu0 0.0
        %494 = vmatmul.mubr.f32.gmra.mrb[0].mxu0 %v368
        %v495 = vpop.f32.mrb[0].mxu0
        %v496 = vadd.f32 0.0, %v495
        %v497 = vpop.f32.mrb[0].mxu0
        %498 = vmatprep.mubr.f32.mxu0 0.0
        %499 = vmatmul.mubr.f32.gmra.mrb[0].mxu0 %v371
        %v500 = vpop.f32.mrb[0].mxu0
        %v501 = vadd.f32 0.0, %v500
        %v502 = vpop.f32.mrb[0].mxu0
        %503 = vmatprep.mubr.f32.mxu0 0.0
        %504 = vmatmul.mubr.f32.gmra.mrb[0].mxu0 %v374
        %v505 = vpop.f32.mrb[0].mxu0
        %v506 = vadd.f32 0.0, %v505
        %v507 = vpop.f32.mrb[0].mxu0
        %508 = vmatprep.mubr.f32.mxu0 0.0
        %509 = vmatmul.mubr.f32.gmra.mrb[0].mxu0 %v377
        %v510 = vpop.f32.mrb[0].mxu0
        %v511 = vadd.f32 0.0, %v510
        %v512 = vpop.f32.mrb[0].mxu0
        %513 = vmatprep.mubr.f32.mxu0 0.0
        %514 = vmatmul.mubr.f32.gmra.mrb[0].mxu0 %v380
        %v515 = vpop.f32.mrb[0].mxu0
        %v516 = vadd.f32 0.0, %v515
        %v517 = vpop.f32.mrb[0].mxu0
        %518 = vmatprep.mubr.f32.mxu0 0.0
        %519 = vmatmul.mubr.f32.gmra.mrb[0].mxu0 %v383
        %v520 = vpop.f32.mrb[0].mxu0
        %v521 = vadd.f32 0.0, %v520
        %v522 = vpop.f32.mrb[0].mxu0
        %523 = vmatprep.mubr.f32.mxu0 0.0
        %524 = vmatmul.mubr.f32.gmra.mrb[0].mxu0 %v386
        %v525 = vpop.f32.mrb[0].mxu0
        %v526 = vadd.f32 0.0, %v525
        %v527 = vpop.f32.mrb[0].mxu0
        %528 = vmatprep.mubr.f32.mxu0 0.0
        %529 = vmatmul.mubr.f32.gmra.mrb[0].mxu0 %v389
        %v530 = vpop.f32.mrb[0].mxu0
        %v531 = vadd.f32 0.0, %v530
        %v532 = vpop.f32.mrb[0].mxu0
        %533 = vmatprep.mubr.f32.mxu0 0.0
        %534 = vmatmul.mubr.f32.gmra.mrb[0].mxu0 %v392
        %v535 = vpop.f32.mrb[0].mxu0
        %v536 = vadd.f32 0.0, %v535
        %v537 = vpop.f32.mrb[0].mxu0
        %538 = vdwg.mxu0
        %v539 = vld [vmem:[%s4] sm:$0xff]
        %v540 = vld [vmem:[%s4 + $0x8] sm:$0xff]
        %541 = vmatprep.subr.mxu0 0.0
        %542 = vmatpush1.msra.mxu0 %v539
        %543 = vmatprep.subr.mxu0 0.0
        %544 = vmatpush1.msra.mxu0 %v540
        %545 = vmatprep.subr.mxu0 0.0
        %546 = vmatpush1.msra.mxu0 0.0
        %547 = vmatprep.subr.mxu0 0.0
        %548 = vmatpush1.msra.mxu0 0.0
        %549 = vmatprep.subr.mxu0 0.0
        %550 = vmatpush1.msra.mxu0 0.0
        %551 = vmatprep.subr.mxu0 0.0
        %552 = vmatpush1.msra.mxu0 0.0
        %553 = vmatprep.subr.mxu0 0.0
        %554 = vmatpush1.msra.mxu0 0.0
        %555 = vmatprep.subr.mxu0 0.0
        %556 = vmatpush1.msra.mxu0 0.0
        %557 = vmatprep.subr.mxu0 0.0
        %558 = vmatpush1.msra.mxu0 0.0
        %559 = vmatprep.subr.mxu0 0.0
        %560 = vmatpush1.msra.mxu0 0.0
        %561 = vmatprep.subr.mxu0 0.0
        %562 = vmatpush1.msra.mxu0 0.0
        %563 = vmatprep.subr.mxu0 0.0
        %564 = vmatpush1.msra.mxu0 0.0
        %565 = vmatprep.subr.mxu0 0.0
        %566 = vmatpush1.msra.mxu0 0.0
        %567 = vmatprep.subr.mxu0 0.0
        %568 = vmatpush1.msra.mxu0 0.0
        %569 = vmatprep.subr.mxu0 0.0
        %570 = vmatpush1.msra.mxu0 0.0
        %571 = vmatprep.subr.mxu0 0.0
        %572 = vmatpush1.msra.mxu0 0.0
        %573 = vmatprep.subr.mxu0 0.0
        %574 = vmatpush1.msra.mxu0 0.0
        %575 = vmatprep.subr.mxu0 0.0
        %576 = vmatpush1.msra.mxu0 0.0
        %577 = vmatprep.subr.mxu0 0.0
        %578 = vmatpush1.msra.mxu0 0.0
        %579 = vmatprep.subr.mxu0 0.0
        %580 = vmatpush1.msra.mxu0 0.0
        %581 = vmatprep.subr.mxu0 0.0
        %582 = vmatpush1.msra.mxu0 0.0
        %583 = vmatprep.subr.mxu0 0.0
        %584 = vmatpush1.msra.mxu0 0.0
        %585 = vmatprep.subr.mxu0 0.0
        %586 = vmatpush1.msra.mxu0 0.0
        %587 = vmatprep.subr.mxu0 0.0
        %588 = vmatpush1.msra.mxu0 0.0
        %589 = vmatprep.subr.mxu0 0.0
        %590 = vmatpush1.msra.mxu0 0.0
        %591 = vmatprep.subr.mxu0 0.0
        %592 = vmatpush1.msra.mxu0 0.0
        %593 = vmatprep.subr.mxu0 0.0
        %594 = vmatpush1.msra.mxu0 0.0
        %595 = vmatprep.subr.mxu0 0.0
        %596 = vmatpush1.msra.mxu0 0.0
        %597 = vmatprep.subr.mxu0 0.0
        %598 = vmatpush1.msra.mxu0 0.0
        %599 = vmatprep.subr.mxu0 0.0
        %600 = vmatpush1.msra.mxu0 0.0
        %601 = vmatprep.subr.mxu0 0.0
        %602 = vmatpush1.msra.mxu0 0.0
        %603 = vmatprep.subr.mxu0 0.0
        %604 = vmatpush1.msra.mxu0 0.0
        %605 = vmatprep.mubr.f32.mxu0 0.0
        %606 = vmatmul.mubr.f32.gmra.mrb[0].mxu0 %v347
        %v607 = vpop.f32.mrb[0].mxu0
        %v608 = vadd.f32 0.0, %v607
        %v609 = vpop.f32.mrb[0].mxu0
        %610 = vmatprep.mubr.f32.mxu0 0.0
        %611 = vmatmul.mubr.f32.gmra.mrb[0].mxu0 %v350
        %v612 = vpop.f32.mrb[0].mxu0
        %v613 = vadd.f32 0.0, %v612
        %v614 = vpop.f32.mrb[0].mxu0
        %615 = vmatprep.mubr.f32.mxu0 0.0
        %616 = vmatmul.mubr.f32.gmra.mrb[0].mxu0 %v353
        %v617 = vpop.f32.mrb[0].mxu0
        %v618 = vadd.f32 0.0, %v617
        %v619 = vpop.f32.mrb[0].mxu0
        %620 = vmatprep.mubr.f32.mxu0 0.0
        %621 = vmatmul.mubr.f32.gmra.mrb[0].mxu0 %v356
        %v622 = vpop.f32.mrb[0].mxu0
        %v623 = vadd.f32 0.0, %v622
        %v624 = vpop.f32.mrb[0].mxu0
        %625 = vmatprep.mubr.f32.mxu0 0.0
        %626 = vmatmul.mubr.f32.gmra.mrb[0].mxu0 %v359
        %v627 = vpop.f32.mrb[0].mxu0
        %v628 = vadd.f32 0.0, %v627
        %v629 = vpop.f32.mrb[0].mxu0
        %630 = vmatprep.mubr.f32.mxu0 0.0
        %631 = vmatmul.mubr.f32.gmra.mrb[0].mxu0 %v362
        %v632 = vpop.f32.mrb[0].mxu0
        %v633 = vadd.f32 0.0, %v632
        %v634 = vpop.f32.mrb[0].mxu0
        %635 = vmatprep.mubr.f32.mxu0 0.0
        %636 = vmatmul.mubr.f32.gmra.mrb[0].mxu0 %v365
        %v637 = vpop.f32.mrb[0].mxu0
        %v638 = vadd.f32 0.0, %v637
        %v639 = vpop.f32.mrb[0].mxu0
        %640 = vmatprep.mubr.f32.mxu0 0.0
        %641 = vmatmul.mubr.f32.gmra.mrb[0].mxu0 %v368
        %v642 = vpop.f32.mrb[0].mxu0
        %v643 = vadd.f32 0.0, %v642
        %v644 = vpop.f32.mrb[0].mxu0
        %645 = vmatprep.mubr.f32.mxu0 0.0
        %646 = vmatmul.mubr.f32.gmra.mrb[0].mxu0 %v371
        %v647 = vpop.f32.mrb[0].mxu0
        %v648 = vadd.f32 0.0, %v647
        %v649 = vpop.f32.mrb[0].mxu0
        %650 = vmatprep.mubr.f32.mxu0 0.0
        %651 = vmatmul.mubr.f32.gmra.mrb[0].mxu0 %v374
        %v652 = vpop.f32.mrb[0].mxu0
        %v653 = vadd.f32 0.0, %v652
        %v654 = vpop.f32.mrb[0].mxu0
        %655 = vmatprep.mubr.f32.mxu0 0.0
        %656 = vmatmul.mubr.f32.gmra.mrb[0].mxu0 %v377
        %v657 = vpop.f32.mrb[0].mxu0
        %v658 = vadd.f32 0.0, %v657
        %v659 = vpop.f32.mrb[0].mxu0
        %660 = vmatprep.mubr.f32.mxu0 0.0
        %661 = vmatmul.mubr.f32.gmra.mrb[0].mxu0 %v380
        %v662 = vpop.f32.mrb[0].mxu0
        %v663 = vadd.f32 0.0, %v662
        %v664 = vpop.f32.mrb[0].mxu0
        %665 = vmatprep.mubr.f32.mxu0 0.0
        %666 = vmatmul.mubr.f32.gmra.mrb[0].mxu0 %v383
        %v667 = vpop.f32.mrb[0].mxu0
        %v668 = vadd.f32 0.0, %v667
        %v669 = vpop.f32.mrb[0].mxu0
        %670 = vmatprep.mubr.f32.mxu0 0.0
        %671 = vmatmul.mubr.f32.gmra.mrb[0].mxu0 %v386
        %v672 = vpop.f32.mrb[0].mxu0
        %v673 = vadd.f32 0.0, %v672
        %v674 = vpop.f32.mrb[0].mxu0
        %675 = vmatprep.mubr.f32.mxu0 0.0
        %676 = vmatmul.mubr.f32.gmra.mrb[0].mxu0 %v389
        %v677 = vpop.f32.mrb[0].mxu0
        %v678 = vadd.f32 0.0, %v677
        %v679 = vpop.f32.mrb[0].mxu0
        %680 = vmatprep.mubr.f32.mxu0 0.0
        %681 = vmatmul.mubr.f32.gmra.mrb[0].mxu0 %v392
        %v682 = vpop.f32.mrb[0].mxu0
        %v683 = vadd.f32 0.0, %v682
        %v684 = vpop.f32.mrb[0].mxu0
        %685 = vdwg.mxu0
        %v687 = vsel %vm345, %v327, 0
        %v690 = vsel %vm345, %v328, 0
        %v693 = vsel %vm345, %v329, 0
        %v696 = vsel %vm345, %v330, 0
        %v699 = vsel %vm345, %v331, 0
        %v702 = vsel %vm345, %v332, 0
        %v705 = vsel %vm345, %v333, 0
        %v708 = vsel %vm345, %v334, 0
        %v711 = vsel %vm345, %v335, 0
        %v714 = vsel %vm345, %v336, 0
        %v717 = vsel %vm345, %v337, 0
        %v720 = vsel %vm345, %v338, 0
        %v723 = vsel %vm345, %v339, 0
        %v726 = vsel %vm345, %v340, 0
        %v729 = vsel %vm345, %v341, 0
        %v732 = vsel %vm345, %v342, 0
        %734 = vmatprep.subr.mxu0 0.0
        %735 = vmatpush1.msra.mxu0 %v343
        %736 = vmatprep.subr.mxu0 0.0
        %737 = vmatpush1.msra.mxu0 %v344
        %738 = vmatprep.subr.mxu0 0.0
        %739 = vmatpush1.msra.mxu0 0.0
        %740 = vmatprep.subr.mxu0 0.0
        %741 = vmatpush1.msra.mxu0 0.0
        %742 = vmatprep.subr.mxu0 0.0
        %743 = vmatpush1.msra.mxu0 0.0
        %744 = vmatprep.subr.mxu0 0.0
        %745 = vmatpush1.msra.mxu0 0.0
        %746 = vmatprep.subr.mxu0 0.0
        %747 = vmatpush1.msra.mxu0 0.0
        %748 = vmatprep.subr.mxu0 0.0
        %749 = vmatpush1.msra.mxu0 0.0
        %750 = vmatprep.subr.mxu0 0.0
        %751 = vmatpush1.msra.mxu0 0.0
        %752 = vmatprep.subr.mxu0 0.0
        %753 = vmatpush1.msra.mxu0 0.0
        %754 = vmatprep.subr.mxu0 0.0
        %755 = vmatpush1.msra.mxu0 0.0
        %756 = vmatprep.subr.mxu0 0.0
        %757 = vmatpush1.msra.mxu0 0.0
        %758 = vmatprep.subr.mxu0 0.0
        %759 = vmatpush1.msra.mxu0 0.0
        %760 = vmatprep.subr.mxu0 0.0
        %761 = vmatpush1.msra.mxu0 0.0
        %762 = vmatprep.subr.mxu0 0.0
        %763 = vmatpush1.msra.mxu0 0.0
        %764 = vmatprep.subr.mxu0 0.0
        %765 = vmatpush1.msra.mxu0 0.0
        %766 = vmatprep.subr.mxu0 0.0
        %767 = vmatpush1.msra.mxu0 0.0
        %768 = vmatprep.subr.mxu0 0.0
        %769 = vmatpush1.msra.mxu0 0.0
        %770 = vmatprep.subr.mxu0 0.0
        %771 = vmatpush1.msra.mxu0 0.0
        %772 = vmatprep.subr.mxu0 0.0
        %773 = vmatpush1.msra.mxu0 0.0
        %774 = vmatprep.subr.mxu0 0.0
        %775 = vmatpush1.msra.mxu0 0.0
        %776 = vmatprep.subr.mxu0 0.0
        %777 = vmatpush1.msra.mxu0 0.0
        %778 = vmatprep.subr.mxu0 0.0
        %779 = vmatpush1.msra.mxu0 0.0
        %780 = vmatprep.subr.mxu0 0.0
        %781 = vmatpush1.msra.mxu0 0.0
        %782 = vmatprep.subr.mxu0 0.0
        %783 = vmatpush1.msra.mxu0 0.0
        %784 = vmatprep.subr.mxu0 0.0
        %785 = vmatpush1.msra.mxu0 0.0
        %786 = vmatprep.subr.mxu0 0.0
        %787 = vmatpush1.msra.mxu0 0.0
        %788 = vmatprep.subr.mxu0 0.0
        %789 = vmatpush1.msra.mxu0 0.0
        %790 = vmatprep.subr.mxu0 0.0
        %791 = vmatpush1.msra.mxu0 0.0
        %792 = vmatprep.subr.mxu0 0.0
        %793 = vmatpush1.msra.mxu0 0.0
        %794 = vmatprep.subr.mxu0 0.0
        %795 = vmatpush1.msra.mxu0 0.0
        %796 = vmatprep.subr.mxu0 0.0
        %797 = vmatpush1.msra.mxu0 0.0
        %798 = vmatprep.mubr.f32.mxu0 0.0
        %799 = vmatmul.mubr.f32.gmra.mrb[0].mxu0 %v687
        %v800 = vpop.f32.mrb[0].mxu0
        %v801 = vadd.f32 0.0, %v800
        %v802 = vpop.f32.mrb[0].mxu0
        %803 = vmatprep.mubr.f32.mxu0 0.0
        %804 = vmatmul.mubr.f32.gmra.mrb[0].mxu0 %v690
        %v805 = vpop.f32.mrb[0].mxu0
        %v806 = vadd.f32 0.0, %v805
        %v807 = vpop.f32.mrb[0].mxu0
        %808 = vmatprep.mubr.f32.mxu0 0.0
        %809 = vmatmul.mubr.f32.gmra.mrb[0].mxu0 %v693
        %v810 = vpop.f32.mrb[0].mxu0
        %v811 = vadd.f32 0.0, %v810
        %v812 = vpop.f32.mrb[0].mxu0
        %813 = vmatprep.mubr.f32.mxu0 0.0
        %814 = vmatmul.mubr.f32.gmra.mrb[0].mxu0 %v696
        %v815 = vpop.f32.mrb[0].mxu0
        %v816 = vadd.f32 0.0, %v815
        %v817 = vpop.f32.mrb[0].mxu0
        %818 = vmatprep.mubr.f32.mxu0 0.0
        %819 = vmatmul.mubr.f32.gmra.mrb[0].mxu0 %v699
        %v820 = vpop.f32.mrb[0].mxu0
        %v821 = vadd.f32 0.0, %v820
        %v822 = vpop.f32.mrb[0].mxu0
        %823 = vmatprep.mubr.f32.mxu0 0.0
        %824 = vmatmul.mubr.f32.gmra.mrb[0].mxu0 %v702
        %v825 = vpop.f32.mrb[0].mxu0
        %v826 = vadd.f32 0.0, %v825
        %v827 = vpop.f32.mrb[0].mxu0
        %828 = vmatprep.mubr.f32.mxu0 0.0
        %829 = vmatmul.mubr.f32.gmra.mrb[0].mxu0 %v705
        %v830 = vpop.f32.mrb[0].mxu0
        %v831 = vadd.f32 0.0, %v830
        %v832 = vpop.f32.mrb[0].mxu0
        %833 = vmatprep.mubr.f32.mxu0 0.0
        %834 = vmatmul.mubr.f32.gmra.mrb[0].mxu0 %v708
        %v835 = vpop.f32.mrb[0].mxu0
        %v836 = vadd.f32 0.0, %v835
        %v837 = vpop.f32.mrb[0].mxu0
        %838 = vmatprep.mubr.f32.mxu0 0.0
        %839 = vmatmul.mubr.f32.gmra.mrb[0].mxu0 %v711
        %v840 = vpop.f32.mrb[0].mxu0
        %v841 = vadd.f32 0.0, %v840
        %v842 = vpop.f32.mrb[0].mxu0
        %843 = vmatprep.mubr.f32.mxu0 0.0
        %844 = vmatmul.mubr.f32.gmra.mrb[0].mxu0 %v714
        %v845 = vpop.f32.mrb[0].mxu0
        %v846 = vadd.f32 0.0, %v845
        %v847 = vpop.f32.mrb[0].mxu0
        %848 = vmatprep.mubr.f32.mxu0 0.0
        %849 = vmatmul.mubr.f32.gmra.mrb[0].mxu0 %v717
        %v850 = vpop.f32.mrb[0].mxu0
        %v851 = vadd.f32 0.0, %v850
        %v852 = vpop.f32.mrb[0].mxu0
        %853 = vmatprep.mubr.f32.mxu0 0.0
        %854 = vmatmul.mubr.f32.gmra.mrb[0].mxu0 %v720
        %v855 = vpop.f32.mrb[0].mxu0
        %v856 = vadd.f32 0.0, %v855
        %v857 = vpop.f32.mrb[0].mxu0
        %858 = vmatprep.mubr.f32.mxu0 0.0
        %859 = vmatmul.mubr.f32.gmra.mrb[0].mxu0 %v723
        %v860 = vpop.f32.mrb[0].mxu0
        %v861 = vadd.f32 0.0, %v860
        %v862 = vpop.f32.mrb[0].mxu0
        %863 = vmatprep.mubr.f32.mxu0 0.0
        %864 = vmatmul.mubr.f32.gmra.mrb[0].mxu0 %v726
        %v865 = vpop.f32.mrb[0].mxu0
        %v866 = vadd.f32 0.0, %v865
        %v867 = vpop.f32.mrb[0].mxu0
        %868 = vmatprep.mubr.f32.mxu0 0.0
        %869 = vmatmul.mubr.f32.gmra.mrb[0].mxu0 %v729
        %v870 = vpop.f32.mrb[0].mxu0
        %v871 = vadd.f32 0.0, %v870
        %v872 = vpop.f32.mrb[0].mxu0
        %873 = vmatprep.mubr.f32.mxu0 0.0
        %874 = vmatmul.mubr.f32.gmra.mrb[0].mxu0 %v732
        %v875 = vpop.f32.mrb[0].mxu0
        %v876 = vadd.f32 0.0, %v875
        %v877 = vpop.f32.mrb[0].mxu0
        %878 = vdwg.mxu0
        %879 = vmatprep.subr.mxu0 0.0
        %880 = vmatpush1.msra.mxu0 %v539
        %881 = vmatprep.subr.mxu0 0.0
        %882 = vmatpush1.msra.mxu0 %v540
        %883 = vmatprep.subr.mxu0 0.0
        %884 = vmatpush1.msra.mxu0 0.0
        %885 = vmatprep.subr.mxu0 0.0
        %886 = vmatpush1.msra.mxu0 0.0
        %887 = vmatprep.subr.mxu0 0.0
        %888 = vmatpush1.msra.mxu0 0.0
        %889 = vmatprep.subr.mxu0 0.0
        %890 = vmatpush1.msra.mxu0 0.0
        %891 = vmatprep.subr.mxu0 0.0
        %892 = vmatpush1.msra.mxu0 0.0
        %893 = vmatprep.subr.mxu0 0.0
        %894 = vmatpush1.msra.mxu0 0.0
        %895 = vmatprep.subr.mxu0 0.0
        %896 = vmatpush1.msra.mxu0 0.0
        %897 = vmatprep.subr.mxu0 0.0
        %898 = vmatpush1.msra.mxu0 0.0
        %899 = vmatprep.subr.mxu0 0.0
        %900 = vmatpush1.msra.mxu0 0.0
        %901 = vmatprep.subr.mxu0 0.0
        %902 = vmatpush1.msra.mxu0 0.0
        %903 = vmatprep.subr.mxu0 0.0
        %904 = vmatpush1.msra.mxu0 0.0
        %905 = vmatprep.subr.mxu0 0.0
        %906 = vmatpush1.msra.mxu0 0.0
        %907 = vmatprep.subr.mxu0 0.0
        %908 = vmatpush1.msra.mxu0 0.0
        %909 = vmatprep.subr.mxu0 0.0
        %910 = vmatpush1.msra.mxu0 0.0
        %911 = vmatprep.subr.mxu0 0.0
        %912 = vmatpush1.msra.mxu0 0.0
        %913 = vmatprep.subr.mxu0 0.0
        %914 = vmatpush1.msra.mxu0 0.0
        %915 = vmatprep.subr.mxu0 0.0
        %916 = vmatpush1.msra.mxu0 0.0
        %917 = vmatprep.subr.mxu0 0.0
        %918 = vmatpush1.msra.mxu0 0.0
        %919 = vmatprep.subr.mxu0 0.0
        %920 = vmatpush1.msra.mxu0 0.0
        %921 = vmatprep.subr.mxu0 0.0
        %922 = vmatpush1.msra.mxu0 0.0
        %923 = vmatprep.subr.mxu0 0.0
        %924 = vmatpush1.msra.mxu0 0.0
        %925 = vmatprep.subr.mxu0 0.0
        %926 = vmatpush1.msra.mxu0 0.0
        %927 = vmatprep.subr.mxu0 0.0
        %928 = vmatpush1.msra.mxu0 0.0
        %929 = vmatprep.subr.mxu0 0.0
        %930 = vmatpush1.msra.mxu0 0.0
        %931 = vmatprep.subr.mxu0 0.0
        %932 = vmatpush1.msra.mxu0 0.0
        %933 = vmatprep.subr.mxu0 0.0
        %934 = vmatpush1.msra.mxu0 0.0
        %935 = vmatprep.subr.mxu0 0.0
        %936 = vmatpush1.msra.mxu0 0.0
        %937 = vmatprep.subr.mxu0 0.0
        %938 = vmatpush1.msra.mxu0 0.0
        %939 = vmatprep.subr.mxu0 0.0
        %940 = vmatpush1.msra.mxu0 0.0
        %941 = vmatprep.subr.mxu0 0.0
        %942 = vmatpush1.msra.mxu0 0.0
        %943 = vmatprep.mubr.f32.mxu0 0.0
        %944 = vmatmul.mubr.f32.gmra.mrb[0].mxu0 %v687
        %v945 = vpop.f32.mrb[0].mxu0
        %v946 = vadd.f32 0.0, %v945
        %v947 = vpop.f32.mrb[0].mxu0
        %948 = vmatprep.mubr.f32.mxu0 0.0
        %949 = vmatmul.mubr.f32.gmra.mrb[0].mxu0 %v690
        %v950 = vpop.f32.mrb[0].mxu0
        %v951 = vadd.f32 0.0, %v950
        %v952 = vpop.f32.mrb[0].mxu0
        %953 = vmatprep.mubr.f32.mxu0 0.0
        %954 = vmatmul.mubr.f32.gmra.mrb[0].mxu0 %v693
        %v955 = vpop.f32.mrb[0].mxu0
        %v956 = vadd.f32 0.0, %v955
        %v957 = vpop.f32.mrb[0].mxu0
        %958 = vmatprep.mubr.f32.mxu0 0.0
        %959 = vmatmul.mubr.f32.gmra.mrb[0].mxu0 %v696
        %v960 = vpop.f32.mrb[0].mxu0
        %v961 = vadd.f32 0.0, %v960
        %v962 = vpop.f32.mrb[0].mxu0
        %963 = vmatprep.mubr.f32.mxu0 0.0
        %964 = vmatmul.mubr.f32.gmra.mrb[0].mxu0 %v699
        %v965 = vpop.f32.mrb[0].mxu0
        %v966 = vadd.f32 0.0, %v965
        %v967 = vpop.f32.mrb[0].mxu0
        %968 = vmatprep.mubr.f32.mxu0 0.0
        %969 = vmatmul.mubr.f32.gmra.mrb[0].mxu0 %v702
        %v970 = vpop.f32.mrb[0].mxu0
        %v971 = vadd.f32 0.0, %v970
        %v972 = vpop.f32.mrb[0].mxu0
        %973 = vmatprep.mubr.f32.mxu0 0.0
        %974 = vmatmul.mubr.f32.gmra.mrb[0].mxu0 %v705
        %v975 = vpop.f32.mrb[0].mxu0
        %v976 = vadd.f32 0.0, %v975
        %v977 = vpop.f32.mrb[0].mxu0
        %978 = vmatprep.mubr.f32.mxu0 0.0
        %979 = vmatmul.mubr.f32.gmra.mrb[0].mxu0 %v708
        %v980 = vpop.f32.mrb[0].mxu0
        %v981 = vadd.f32 0.0, %v980
        %v982 = vpop.f32.mrb[0].mxu0
        %983 = vmatprep.mubr.f32.mxu0 0.0
        %984 = vmatmul.mubr.f32.gmra.mrb[0].mxu0 %v711
        %v985 = vpop.f32.mrb[0].mxu0
        %v986 = vadd.f32 0.0, %v985
        %v987 = vpop.f32.mrb[0].mxu0
        %988 = vmatprep.mubr.f32.mxu0 0.0
        %989 = vmatmul.mubr.f32.gmra.mrb[0].mxu0 %v714
        %v990 = vpop.f32.mrb[0].mxu0
        %v991 = vadd.f32 0.0, %v990
        %v992 = vpop.f32.mrb[0].mxu0
        %993 = vmatprep.mubr.f32.mxu0 0.0
        %994 = vmatmul.mubr.f32.gmra.mrb[0].mxu0 %v717
        %v995 = vpop.f32.mrb[0].mxu0
        %v996 = vadd.f32 0.0, %v995
        %v997 = vpop.f32.mrb[0].mxu0
        %998 = vmatprep.mubr.f32.mxu0 0.0
        %999 = vmatmul.mubr.f32.gmra.mrb[0].mxu0 %v720
        %v1000 = vpop.f32.mrb[0].mxu0
        %v1001 = vadd.f32 0.0, %v1000
        %v1002 = vpop.f32.mrb[0].mxu0
        %1003 = vmatprep.mubr.f32.mxu0 0.0
        %1004 = vmatmul.mubr.f32.gmra.mrb[0].mxu0 %v723
        %v1005 = vpop.f32.mrb[0].mxu0
        %v1006 = vadd.f32 0.0, %v1005
        %v1007 = vpop.f32.mrb[0].mxu0
        %1008 = vmatprep.mubr.f32.mxu0 0.0
        %1009 = vmatmul.mubr.f32.gmra.mrb[0].mxu0 %v726
        %v1010 = vpop.f32.mrb[0].mxu0
        %v1011 = vadd.f32 0.0, %v1010
        %v1012 = vpop.f32.mrb[0].mxu0
        %1013 = vmatprep.mubr.f32.mxu0 0.0
        %1014 = vmatmul.mubr.f32.gmra.mrb[0].mxu0 %v729
        %v1015 = vpop.f32.mrb[0].mxu0
        %v1016 = vadd.f32 0.0, %v1015
        %v1017 = vpop.f32.mrb[0].mxu0
        %1018 = vmatprep.mubr.f32.mxu0 0.0
        %1019 = vmatmul.mubr.f32.gmra.mrb[0].mxu0 %v732
        %v1020 = vpop.f32.mrb[0].mxu0
        %v1021 = vadd.f32 0.0, %v1020
        %v1022 = vpop.f32.mrb[0].mxu0
        %1023 = vdwg.mxu0
        %v1024 = vmul.f32 %v461, %v461
        %v1025 = vmul.f32 %v466, %v466
        %v1026 = vmul.f32 %v471, %v471
        %v1027 = vmul.f32 %v476, %v476
        %v1028 = vmul.f32 %v481, %v481
        %v1029 = vmul.f32 %v486, %v486
        %v1030 = vmul.f32 %v491, %v491
        %v1031 = vmul.f32 %v496, %v496
        %v1032 = vmul.f32 %v501, %v501
        %v1033 = vmul.f32 %v506, %v506
        %v1034 = vmul.f32 %v511, %v511
        %v1035 = vmul.f32 %v516, %v516
        %v1036 = vmul.f32 %v521, %v521
        %v1037 = vmul.f32 %v526, %v526
        %v1038 = vmul.f32 %v531, %v531
        %v1039 = vmul.f32 %v536, %v536
        %v1040 = vmul.f32 %v608, %v608
        %v1041 = vmul.f32 %v613, %v613
        %v1042 = vmul.f32 %v618, %v618
        %v1043 = vmul.f32 %v623, %v623
        %v1044 = vmul.f32 %v628, %v628
        %v1045 = vmul.f32 %v633, %v633
        %v1046 = vmul.f32 %v638, %v638
        %v1047 = vmul.f32 %v643, %v643
        %v1048 = vmul.f32 %v648, %v648
        %v1049 = vmul.f32 %v653, %v653
        %v1050 = vmul.f32 %v658, %v658
        %v1051 = vmul.f32 %v663, %v663
        %v1052 = vmul.f32 %v668, %v668
        %v1053 = vmul.f32 %v673, %v673
        %v1054 = vmul.f32 %v678, %v678
        %v1055 = vmul.f32 %v683, %v683
        %v1056 = vadd.f32 %v1024, %v1040
        %v1057 = vadd.f32 %v1025, %v1041
        %v1058 = vadd.f32 %v1026, %v1042
        %v1059 = vadd.f32 %v1027, %v1043
        %v1060 = vadd.f32 %v1028, %v1044
        %v1061 = vadd.f32 %v1029, %v1045
        %v1062 = vadd.f32 %v1030, %v1046
        %v1063 = vadd.f32 %v1031, %v1047
        %v1064 = vadd.f32 %v1032, %v1048
        %v1065 = vadd.f32 %v1033, %v1049
        %v1066 = vadd.f32 %v1034, %v1050
        %v1067 = vadd.f32 %v1035, %v1051
        %v1068 = vadd.f32 %v1036, %v1052
        %v1069 = vadd.f32 %v1037, %v1053
        %v1070 = vadd.f32 %v1038, %v1054
        %v1071 = vadd.f32 %v1039, %v1055
        %v1072 = vadd.f32 %v1056, 1e-12
        %v1073 = vadd.f32 %v1057, 1e-12
        %v1074 = vadd.f32 %v1058, 1e-12
        %v1075 = vadd.f32 %v1059, 1e-12
        %v1076 = vadd.f32 %v1060, 1e-12
        %v1077 = vadd.f32 %v1061, 1e-12
        %v1078 = vadd.f32 %v1062, 1e-12
        %v1079 = vadd.f32 %v1063, 1e-12
        %v1080 = vadd.f32 %v1064, 1e-12
        %v1081 = vadd.f32 %v1065, 1e-12
        %v1082 = vadd.f32 %v1066, 1e-12
        %v1083 = vadd.f32 %v1067, 1e-12
        %v1084 = vadd.f32 %v1068, 1e-12
        %v1085 = vadd.f32 %v1069, 1e-12
        %v1086 = vadd.f32 %v1070, 1e-12
        %v1087 = vadd.f32 %v1071, 1e-12
        %v1088 = vrsqrt.pop %v1072
        %v1089 = vmul.f32 %v1072, %v1088
        %vm1090 = vcmp.eq.f32.partialorder %v1072, inf
        %v1091 = vsel %vm1090, %v1072, %v1089
        %vm1092 = vcmp.eq.f32.partialorder %v1072, 0.0
        %v1093 = vand.u32 %v1072, 2147483648
        %v1094 = vsel %vm1092, %v1093, %v1091
        %v1095 = vrsqrt.pop %v1073
        %v1096 = vmul.f32 %v1073, %v1095
        %vm1097 = vcmp.eq.f32.partialorder %v1073, inf
        %v1098 = vsel %vm1097, %v1073, %v1096
        %vm1099 = vcmp.eq.f32.partialorder %v1073, 0.0
        %v1100 = vand.u32 %v1073, 2147483648
        %v1101 = vsel %vm1099, %v1100, %v1098
        %v1102 = vrsqrt.pop %v1074
        %v1103 = vmul.f32 %v1074, %v1102
        %vm1104 = vcmp.eq.f32.partialorder %v1074, inf
        %v1105 = vsel %vm1104, %v1074, %v1103
        %vm1106 = vcmp.eq.f32.partialorder %v1074, 0.0
        %v1107 = vand.u32 %v1074, 2147483648
        %v1108 = vsel %vm1106, %v1107, %v1105
        %v1109 = vrsqrt.pop %v1075
        %v1110 = vmul.f32 %v1075, %v1109
        %vm1111 = vcmp.eq.f32.partialorder %v1075, inf
        %v1112 = vsel %vm1111, %v1075, %v1110
        %vm1113 = vcmp.eq.f32.partialorder %v1075, 0.0
        %v1114 = vand.u32 %v1075, 2147483648
        %v1115 = vsel %vm1113, %v1114, %v1112
        %v1116 = vrsqrt.pop %v1076
        %v1117 = vmul.f32 %v1076, %v1116
        %vm1118 = vcmp.eq.f32.partialorder %v1076, inf
        %v1119 = vsel %vm1118, %v1076, %v1117
        %vm1120 = vcmp.eq.f32.partialorder %v1076, 0.0
        %v1121 = vand.u32 %v1076, 2147483648
        %v1122 = vsel %vm1120, %v1121, %v1119
        %v1123 = vrsqrt.pop %v1077
        %v1124 = vmul.f32 %v1077, %v1123
        %vm1125 = vcmp.eq.f32.partialorder %v1077, inf
        %v1126 = vsel %vm1125, %v1077, %v1124
        %vm1127 = vcmp.eq.f32.partialorder %v1077, 0.0
        %v1128 = vand.u32 %v1077, 2147483648
        %v1129 = vsel %vm1127, %v1128, %v1126
        %v1130 = vrsqrt.pop %v1078
        %v1131 = vmul.f32 %v1078, %v1130
        %vm1132 = vcmp.eq.f32.partialorder %v1078, inf
        %v1133 = vsel %vm1132, %v1078, %v1131
        %vm1134 = vcmp.eq.f32.partialorder %v1078, 0.0
        %v1135 = vand.u32 %v1078, 2147483648
        %v1136 = vsel %vm1134, %v1135, %v1133
        %v1137 = vrsqrt.pop %v1079
        %v1138 = vmul.f32 %v1079, %v1137
        %vm1139 = vcmp.eq.f32.partialorder %v1079, inf
        %v1140 = vsel %vm1139, %v1079, %v1138
        %vm1141 = vcmp.eq.f32.partialorder %v1079, 0.0
        %v1142 = vand.u32 %v1079, 2147483648
        %v1143 = vsel %vm1141, %v1142, %v1140
        %v1144 = vrsqrt.pop %v1080
        %v1145 = vmul.f32 %v1080, %v1144
        %vm1146 = vcmp.eq.f32.partialorder %v1080, inf
        %v1147 = vsel %vm1146, %v1080, %v1145
        %vm1148 = vcmp.eq.f32.partialorder %v1080, 0.0
        %v1149 = vand.u32 %v1080, 2147483648
        %v1150 = vsel %vm1148, %v1149, %v1147
        %v1151 = vrsqrt.pop %v1081
        %v1152 = vmul.f32 %v1081, %v1151
        %vm1153 = vcmp.eq.f32.partialorder %v1081, inf
        %v1154 = vsel %vm1153, %v1081, %v1152
        %vm1155 = vcmp.eq.f32.partialorder %v1081, 0.0
        %v1156 = vand.u32 %v1081, 2147483648
        %v1157 = vsel %vm1155, %v1156, %v1154
        %v1158 = vrsqrt.pop %v1082
        %v1159 = vmul.f32 %v1082, %v1158
        %vm1160 = vcmp.eq.f32.partialorder %v1082, inf
        %v1161 = vsel %vm1160, %v1082, %v1159
        %vm1162 = vcmp.eq.f32.partialorder %v1082, 0.0
        %v1163 = vand.u32 %v1082, 2147483648
        %v1164 = vsel %vm1162, %v1163, %v1161
        %v1165 = vrsqrt.pop %v1083
        %v1166 = vmul.f32 %v1083, %v1165
        %vm1167 = vcmp.eq.f32.partialorder %v1083, inf
        %v1168 = vsel %vm1167, %v1083, %v1166
        %vm1169 = vcmp.eq.f32.partialorder %v1083, 0.0
        %v1170 = vand.u32 %v1083, 2147483648
        %v1171 = vsel %vm1169, %v1170, %v1168
        %v1172 = vrsqrt.pop %v1084
        %v1173 = vmul.f32 %v1084, %v1172
        %vm1174 = vcmp.eq.f32.partialorder %v1084, inf
        %v1175 = vsel %vm1174, %v1084, %v1173
        %vm1176 = vcmp.eq.f32.partialorder %v1084, 0.0
        %v1177 = vand.u32 %v1084, 2147483648
        %v1178 = vsel %vm1176, %v1177, %v1175
        %v1179 = vrsqrt.pop %v1085
        %v1180 = vmul.f32 %v1085, %v1179
        %vm1181 = vcmp.eq.f32.partialorder %v1085, inf
        %v1182 = vsel %vm1181, %v1085, %v1180
        %vm1183 = vcmp.eq.f32.partialorder %v1085, 0.0
        %v1184 = vand.u32 %v1085, 2147483648
        %v1185 = vsel %vm1183, %v1184, %v1182
        %v1186 = vrsqrt.pop %v1086
        %v1187 = vmul.f32 %v1086, %v1186
        %vm1188 = vcmp.eq.f32.partialorder %v1086, inf
        %v1189 = vsel %vm1188, %v1086, %v1187
        %vm1190 = vcmp.eq.f32.partialorder %v1086, 0.0
        %v1191 = vand.u32 %v1086, 2147483648
        %v1192 = vsel %vm1190, %v1191, %v1189
        %v1193 = vrsqrt.pop %v1087
        %v1194 = vmul.f32 %v1087, %v1193
        %vm1195 = vcmp.eq.f32.partialorder %v1087, inf
        %v1196 = vsel %vm1195, %v1087, %v1194
        %vm1197 = vcmp.eq.f32.partialorder %v1087, 0.0
        %v1198 = vand.u32 %v1087, 2147483648
        %v1199 = vsel %vm1197, %v1198, %v1196
        %v1200 = vmul.f32 %v801, %v801
        %v1201 = vmul.f32 %v806, %v806
        %v1202 = vmul.f32 %v811, %v811
        %v1203 = vmul.f32 %v816, %v816
        %v1204 = vmul.f32 %v821, %v821
        %v1205 = vmul.f32 %v826, %v826
        %v1206 = vmul.f32 %v831, %v831
        %v1207 = vmul.f32 %v836, %v836
        %v1208 = vmul.f32 %v841, %v841
        %v1209 = vmul.f32 %v846, %v846
        %v1210 = vmul.f32 %v851, %v851
        %v1211 = vmul.f32 %v856, %v856
        %v1212 = vmul.f32 %v861, %v861
        %v1213 = vmul.f32 %v866, %v866
        %v1214 = vmul.f32 %v871, %v871
        %v1215 = vmul.f32 %v876, %v876
        %v1216 = vmul.f32 %v946, %v946
        %v1217 = vmul.f32 %v951, %v951
        %v1218 = vmul.f32 %v956, %v956
        %v1219 = vmul.f32 %v961, %v961
        %v1220 = vmul.f32 %v966, %v966
        %v1221 = vmul.f32 %v971, %v971
        %v1222 = vmul.f32 %v976, %v976
        %v1223 = vmul.f32 %v981, %v981
        %v1224 = vmul.f32 %v986, %v986
        %v1225 = vmul.f32 %v991, %v991
        %v1226 = vmul.f32 %v996, %v996
        %v1227 = vmul.f32 %v1001, %v1001
        %v1228 = vmul.f32 %v1006, %v1006
        %v1229 = vmul.f32 %v1011, %v1011
        %v1230 = vmul.f32 %v1016, %v1016
        %v1231 = vmul.f32 %v1021, %v1021
        %v1232 = vadd.f32 %v1200, %v1216
        %v1233 = vadd.f32 %v1201, %v1217
        %v1234 = vadd.f32 %v1202, %v1218
        %v1235 = vadd.f32 %v1203, %v1219
        %v1236 = vadd.f32 %v1204, %v1220
        %v1237 = vadd.f32 %v1205, %v1221
        %v1238 = vadd.f32 %v1206, %v1222
        %v1239 = vadd.f32 %v1207, %v1223
        %v1240 = vadd.f32 %v1208, %v1224
        %v1241 = vadd.f32 %v1209, %v1225
        %v1242 = vadd.f32 %v1210, %v1226
        %v1243 = vadd.f32 %v1211, %v1227
        %v1244 = vadd.f32 %v1212, %v1228
        %v1245 = vadd.f32 %v1213, %v1229
        %v1246 = vadd.f32 %v1214, %v1230
        %v1247 = vadd.f32 %v1215, %v1231
        %v1248 = vadd.f32 %v1232, 1e-12
        %v1249 = vadd.f32 %v1233, 1e-12
        %v1250 = vadd.f32 %v1234, 1e-12
        %v1251 = vadd.f32 %v1235, 1e-12
        %v1252 = vadd.f32 %v1236, 1e-12
        %v1253 = vadd.f32 %v1237, 1e-12
        %v1254 = vadd.f32 %v1238, 1e-12
        %v1255 = vadd.f32 %v1239, 1e-12
        %v1256 = vadd.f32 %v1240, 1e-12
        %v1257 = vadd.f32 %v1241, 1e-12
        %v1258 = vadd.f32 %v1242, 1e-12
        %v1259 = vadd.f32 %v1243, 1e-12
        %v1260 = vadd.f32 %v1244, 1e-12
        %v1261 = vadd.f32 %v1245, 1e-12
        %v1262 = vadd.f32 %v1246, 1e-12
        %v1263 = vadd.f32 %v1247, 1e-12
        %v1264 = vrsqrt.pop %v1248
        %v1265 = vmul.f32 %v1248, %v1264
        %vm1266 = vcmp.eq.f32.partialorder %v1248, inf
        %v1267 = vsel %vm1266, %v1248, %v1265
        %vm1268 = vcmp.eq.f32.partialorder %v1248, 0.0
        %v1269 = vand.u32 %v1248, 2147483648
        %v1270 = vsel %vm1268, %v1269, %v1267
        %v1271 = vrsqrt.pop %v1249
        %v1272 = vmul.f32 %v1249, %v1271
        %vm1273 = vcmp.eq.f32.partialorder %v1249, inf
        %v1274 = vsel %vm1273, %v1249, %v1272
        %vm1275 = vcmp.eq.f32.partialorder %v1249, 0.0
        %v1276 = vand.u32 %v1249, 2147483648
        %v1277 = vsel %vm1275, %v1276, %v1274
        %v1278 = vrsqrt.pop %v1250
        %v1279 = vmul.f32 %v1250, %v1278
        %vm1280 = vcmp.eq.f32.partialorder %v1250, inf
        %v1281 = vsel %vm1280, %v1250, %v1279
        %vm1282 = vcmp.eq.f32.partialorder %v1250, 0.0
        %v1283 = vand.u32 %v1250, 2147483648
        %v1284 = vsel %vm1282, %v1283, %v1281
        %v1285 = vrsqrt.pop %v1251
        %v1286 = vmul.f32 %v1251, %v1285
        %vm1287 = vcmp.eq.f32.partialorder %v1251, inf
        %v1288 = vsel %vm1287, %v1251, %v1286
        %vm1289 = vcmp.eq.f32.partialorder %v1251, 0.0
        %v1290 = vand.u32 %v1251, 2147483648
        %v1291 = vsel %vm1289, %v1290, %v1288
        %v1292 = vrsqrt.pop %v1252
        %v1293 = vmul.f32 %v1252, %v1292
        %vm1294 = vcmp.eq.f32.partialorder %v1252, inf
        %v1295 = vsel %vm1294, %v1252, %v1293
        %vm1296 = vcmp.eq.f32.partialorder %v1252, 0.0
        %v1297 = vand.u32 %v1252, 2147483648
        %v1298 = vsel %vm1296, %v1297, %v1295
        %v1299 = vrsqrt.pop %v1253
        %v1300 = vmul.f32 %v1253, %v1299
        %vm1301 = vcmp.eq.f32.partialorder %v1253, inf
        %v1302 = vsel %vm1301, %v1253, %v1300
        %vm1303 = vcmp.eq.f32.partialorder %v1253, 0.0
        %v1304 = vand.u32 %v1253, 2147483648
        %v1305 = vsel %vm1303, %v1304, %v1302
        %v1306 = vrsqrt.pop %v1254
        %v1307 = vmul.f32 %v1254, %v1306
        %vm1308 = vcmp.eq.f32.partialorder %v1254, inf
        %v1309 = vsel %vm1308, %v1254, %v1307
        %vm1310 = vcmp.eq.f32.partialorder %v1254, 0.0
        %v1311 = vand.u32 %v1254, 2147483648
        %v1312 = vsel %vm1310, %v1311, %v1309
        %v1313 = vrsqrt.pop %v1255
        %v1314 = vmul.f32 %v1255, %v1313
        %vm1315 = vcmp.eq.f32.partialorder %v1255, inf
        %v1316 = vsel %vm1315, %v1255, %v1314
        %vm1317 = vcmp.eq.f32.partialorder %v1255, 0.0
        %v1318 = vand.u32 %v1255, 2147483648
        %v1319 = vsel %vm1317, %v1318, %v1316
        %v1320 = vrsqrt.pop %v1256
        %v1321 = vmul.f32 %v1256, %v1320
        %vm1322 = vcmp.eq.f32.partialorder %v1256, inf
        %v1323 = vsel %vm1322, %v1256, %v1321
        %vm1324 = vcmp.eq.f32.partialorder %v1256, 0.0
        %v1325 = vand.u32 %v1256, 2147483648
        %v1326 = vsel %vm1324, %v1325, %v1323
        %v1327 = vrsqrt.pop %v1257
        %v1328 = vmul.f32 %v1257, %v1327
        %vm1329 = vcmp.eq.f32.partialorder %v1257, inf
        %v1330 = vsel %vm1329, %v1257, %v1328
        %vm1331 = vcmp.eq.f32.partialorder %v1257, 0.0
        %v1332 = vand.u32 %v1257, 2147483648
        %v1333 = vsel %vm1331, %v1332, %v1330
        %v1334 = vrsqrt.pop %v1258
        %v1335 = vmul.f32 %v1258, %v1334
        %vm1336 = vcmp.eq.f32.partialorder %v1258, inf
        %v1337 = vsel %vm1336, %v1258, %v1335
        %vm1338 = vcmp.eq.f32.partialorder %v1258, 0.0
        %v1339 = vand.u32 %v1258, 2147483648
        %v1340 = vsel %vm1338, %v1339, %v1337
        %v1341 = vrsqrt.pop %v1259
        %v1342 = vmul.f32 %v1259, %v1341
        %vm1343 = vcmp.eq.f32.partialorder %v1259, inf
        %v1344 = vsel %vm1343, %v1259, %v1342
        %vm1345 = vcmp.eq.f32.partialorder %v1259, 0.0
        %v1346 = vand.u32 %v1259, 2147483648
        %v1347 = vsel %vm1345, %v1346, %v1344
        %v1348 = vrsqrt.pop %v1260
        %v1349 = vmul.f32 %v1260, %v1348
        %vm1350 = vcmp.eq.f32.partialorder %v1260, inf
        %v1351 = vsel %vm1350, %v1260, %v1349
        %vm1352 = vcmp.eq.f32.partialorder %v1260, 0.0
        %v1353 = vand.u32 %v1260, 2147483648
        %v1354 = vsel %vm1352, %v1353, %v1351
        %v1355 = vrsqrt.pop %v1261
        %v1356 = vmul.f32 %v1261, %v1355
        %vm1357 = vcmp.eq.f32.partialorder %v1261, inf
        %v1358 = vsel %vm1357, %v1261, %v1356
        %vm1359 = vcmp.eq.f32.partialorder %v1261, 0.0
        %v1360 = vand.u32 %v1261, 2147483648
        %v1361 = vsel %vm1359, %v1360, %v1358
        %v1362 = vrsqrt.pop %v1262
        %v1363 = vmul.f32 %v1262, %v1362
        %vm1364 = vcmp.eq.f32.partialorder %v1262, inf
        %v1365 = vsel %vm1364, %v1262, %v1363
        %vm1366 = vcmp.eq.f32.partialorder %v1262, 0.0
        %v1367 = vand.u32 %v1262, 2147483648
        %v1368 = vsel %vm1366, %v1367, %v1365
        %v1369 = vrsqrt.pop %v1263
        %v1370 = vmul.f32 %v1263, %v1369
        %vm1371 = vcmp.eq.f32.partialorder %v1263, inf
        %v1372 = vsel %vm1371, %v1263, %v1370
        %vm1373 = vcmp.eq.f32.partialorder %v1263, 0.0
        %v1374 = vand.u32 %v1263, 2147483648
        %v1375 = vsel %vm1373, %v1374, %v1372
        %v1376 = vld [vmem:[%s5] sm:$0xff]
        %v1377 = vld [vmem:[%s5 + $0x8] sm:$0x1]
        %vm1378 = vcmask 72704
        %v1380 = vsel %vm1378, %v1094, 0
        %v1383 = vsel %vm1378, %v1101, 0
        %v1386 = vsel %vm1378, %v1108, 0
        %v1389 = vsel %vm1378, %v1115, 0
        %v1392 = vsel %vm1378, %v1122, 0
        %v1395 = vsel %vm1378, %v1129, 0
        %v1398 = vsel %vm1378, %v1136, 0
        %v1401 = vsel %vm1378, %v1143, 0
        %v1404 = vsel %vm1378, %v1150, 0
        %v1407 = vsel %vm1378, %v1157, 0
        %v1410 = vsel %vm1378, %v1164, 0
        %v1413 = vsel %vm1378, %v1171, 0
        %v1416 = vsel %vm1378, %v1178, 0
        %v1419 = vsel %vm1378, %v1185, 0
        %v1422 = vsel %vm1378, %v1192, 0
        %v1425 = vsel %vm1378, %v1199, 0
        %vm1427 = vcmask 1040384
        %v1429 = vsel %vm1427, %v1377, 0
        %1431 = vmatprep.subr.mxu0 0.0
        %1432 = vmatpush1.msra.mxu0 %v1376
        %1433 = vmatprep.subr.mxu0 0.0
        %1434 = vmatpush1.msra.mxu0 %v1429
        %1435 = vmatprep.subr.mxu0 0.0
        %1436 = vmatpush1.msra.mxu0 0.0
        %1437 = vmatprep.subr.mxu0 0.0
        %1438 = vmatpush1.msra.mxu0 0.0
        %1439 = vmatprep.subr.mxu0 0.0
        %1440 = vmatpush1.msra.mxu0 0.0
        %1441 = vmatprep.subr.mxu0 0.0
        %1442 = vmatpush1.msra.mxu0 0.0
        %1443 = vmatprep.subr.mxu0 0.0
        %1444 = vmatpush1.msra.mxu0 0.0
        %1445 = vmatprep.subr.mxu0 0.0
        %1446 = vmatpush1.msra.mxu0 0.0
        %1447 = vmatprep.subr.mxu0 0.0
        %1448 = vmatpush1.msra.mxu0 0.0
        %1449 = vmatprep.subr.mxu0 0.0
        %1450 = vmatpush1.msra.mxu0 0.0
        %1451 = vmatprep.subr.mxu0 0.0
        %1452 = vmatpush1.msra.mxu0 0.0
        %1453 = vmatprep.subr.mxu0 0.0
        %1454 = vmatpush1.msra.mxu0 0.0
        %1455 = vmatprep.subr.mxu0 0.0
        %1456 = vmatpush1.msra.mxu0 0.0
        %1457 = vmatprep.subr.mxu0 0.0
        %1458 = vmatpush1.msra.mxu0 0.0
        %1459 = vmatprep.subr.mxu0 0.0
        %1460 = vmatpush1.msra.mxu0 0.0
        %1461 = vmatprep.subr.mxu0 0.0
        %1462 = vmatpush1.msra.mxu0 0.0
        %1463 = vmatprep.subr.mxu0 0.0
        %1464 = vmatpush1.msra.mxu0 0.0
        %1465 = vmatprep.subr.mxu0 0.0
        %1466 = vmatpush1.msra.mxu0 0.0
        %1467 = vmatprep.subr.mxu0 0.0
        %1468 = vmatpush1.msra.mxu0 0.0
        %1469 = vmatprep.subr.mxu0 0.0
        %1470 = vmatpush1.msra.mxu0 0.0
        %1471 = vmatprep.subr.mxu0 0.0
        %1472 = vmatpush1.msra.mxu0 0.0
        %1473 = vmatprep.subr.mxu0 0.0
        %1474 = vmatpush1.msra.mxu0 0.0
        %1475 = vmatprep.subr.mxu0 0.0
        %1476 = vmatpush1.msra.mxu0 0.0
        %1477 = vmatprep.subr.mxu0 0.0
        %1478 = vmatpush1.msra.mxu0 0.0
        %1479 = vmatprep.subr.mxu0 0.0
        %1480 = vmatpush1.msra.mxu0 0.0
        %1481 = vmatprep.subr.mxu0 0.0
        %1482 = vmatpush1.msra.mxu0 0.0
        %1483 = vmatprep.subr.mxu0 0.0
        %1484 = vmatpush1.msra.mxu0 0.0
        %1485 = vmatprep.subr.mxu0 0.0
        %1486 = vmatpush1.msra.mxu0 0.0
        %1487 = vmatprep.subr.mxu0 0.0
        %1488 = vmatpush1.msra.mxu0 0.0
        %1489 = vmatprep.subr.mxu0 0.0
        %1490 = vmatpush1.msra.mxu0 0.0
        %1491 = vmatprep.subr.mxu0 0.0
        %1492 = vmatpush1.msra.mxu0 0.0
        %1493 = vmatprep.subr.mxu0 0.0
        %1494 = vmatpush1.msra.mxu0 0.0
        %1495 = vmatprep.mubr.f32.mxu0 0.0
        %1496 = vmatmul.mubr.f32.gmra.mrb[0].mxu0 %v1380
        %v1497 = vpop.f32.mrb[0].mxu0
        %v1498 = vadd.f32 0.0, %v1497
        %v1499 = vpop.f32.mrb[0].mxu0
        %1500 = vmatprep.mubr.f32.mxu0 0.0
        %1501 = vmatmul.mubr.f32.gmra.mrb[0].mxu0 %v1383
        %v1502 = vpop.f32.mrb[0].mxu0
        %v1503 = vadd.f32 0.0, %v1502
        %v1504 = vpop.f32.mrb[0].mxu0
        %1505 = vmatprep.mubr.f32.mxu0 0.0
        %1506 = vmatmul.mubr.f32.gmra.mrb[0].mxu0 %v1386
        %v1507 = vpop.f32.mrb[0].mxu0
        %v1508 = vadd.f32 0.0, %v1507
        %v1509 = vpop.f32.mrb[0].mxu0
        %1510 = vmatprep.mubr.f32.mxu0 0.0
        %1511 = vmatmul.mubr.f32.gmra.mrb[0].mxu0 %v1389
        %v1512 = vpop.f32.mrb[0].mxu0
        %v1513 = vadd.f32 0.0, %v1512
        %v1514 = vpop.f32.mrb[0].mxu0
        %1515 = vmatprep.mubr.f32.mxu0 0.0
        %1516 = vmatmul.mubr.f32.gmra.mrb[0].mxu0 %v1392
        %v1517 = vpop.f32.mrb[0].mxu0
        %v1518 = vadd.f32 0.0, %v1517
        %v1519 = vpop.f32.mrb[0].mxu0
        %1520 = vmatprep.mubr.f32.mxu0 0.0
        %1521 = vmatmul.mubr.f32.gmra.mrb[0].mxu0 %v1395
        %v1522 = vpop.f32.mrb[0].mxu0
        %v1523 = vadd.f32 0.0, %v1522
        %v1524 = vpop.f32.mrb[0].mxu0
        %1525 = vmatprep.mubr.f32.mxu0 0.0
        %1526 = vmatmul.mubr.f32.gmra.mrb[0].mxu0 %v1398
        %v1527 = vpop.f32.mrb[0].mxu0
        %v1528 = vadd.f32 0.0, %v1527
        %v1529 = vpop.f32.mrb[0].mxu0
        %1530 = vmatprep.mubr.f32.mxu0 0.0
        %1531 = vmatmul.mubr.f32.gmra.mrb[0].mxu0 %v1401
        %v1532 = vpop.f32.mrb[0].mxu0
        %v1533 = vadd.f32 0.0, %v1532
        %v1534 = vpop.f32.mrb[0].mxu0
        %1535 = vmatprep.mubr.f32.mxu0 0.0
        %1536 = vmatmul.mubr.f32.gmra.mrb[0].mxu0 %v1404
        %v1537 = vpop.f32.mrb[0].mxu0
        %v1538 = vadd.f32 0.0, %v1537
        %v1539 = vpop.f32.mrb[0].mxu0
        %1540 = vmatprep.mubr.f32.mxu0 0.0
        %1541 = vmatmul.mubr.f32.gmra.mrb[0].mxu0 %v1407
        %v1542 = vpop.f32.mrb[0].mxu0
        %v1543 = vadd.f32 0.0, %v1542
        %v1544 = vpop.f32.mrb[0].mxu0
        %1545 = vmatprep.mubr.f32.mxu0 0.0
        %1546 = vmatmul.mubr.f32.gmra.mrb[0].mxu0 %v1410
        %v1547 = vpop.f32.mrb[0].mxu0
        %v1548 = vadd.f32 0.0, %v1547
        %v1549 = vpop.f32.mrb[0].mxu0
        %1550 = vmatprep.mubr.f32.mxu0 0.0
        %1551 = vmatmul.mubr.f32.gmra.mrb[0].mxu0 %v1413
        %v1552 = vpop.f32.mrb[0].mxu0
        %v1553 = vadd.f32 0.0, %v1552
        %v1554 = vpop.f32.mrb[0].mxu0
        %1555 = vmatprep.mubr.f32.mxu0 0.0
        %1556 = vmatmul.mubr.f32.gmra.mrb[0].mxu0 %v1416
        %v1557 = vpop.f32.mrb[0].mxu0
        %v1558 = vadd.f32 0.0, %v1557
        %v1559 = vpop.f32.mrb[0].mxu0
        %1560 = vmatprep.mubr.f32.mxu0 0.0
        %1561 = vmatmul.mubr.f32.gmra.mrb[0].mxu0 %v1419
        %v1562 = vpop.f32.mrb[0].mxu0
        %v1563 = vadd.f32 0.0, %v1562
        %v1564 = vpop.f32.mrb[0].mxu0
        %1565 = vmatprep.mubr.f32.mxu0 0.0
        %1566 = vmatmul.mubr.f32.gmra.mrb[0].mxu0 %v1422
        %v1567 = vpop.f32.mrb[0].mxu0
        %v1568 = vadd.f32 0.0, %v1567
        %v1569 = vpop.f32.mrb[0].mxu0
        %1570 = vmatprep.mubr.f32.mxu0 0.0
        %1571 = vmatmul.mubr.f32.gmra.mrb[0].mxu0 %v1425
        %v1572 = vpop.f32.mrb[0].mxu0
        %v1573 = vadd.f32 0.0, %v1572
        %v1574 = vpop.f32.mrb[0].mxu0
        %1575 = vdwg.mxu0
        %v1577 = vsel %vm1378, %v1270, 0
        %v1580 = vsel %vm1378, %v1277, 0
        %v1583 = vsel %vm1378, %v1284, 0
        %v1586 = vsel %vm1378, %v1291, 0
        %v1589 = vsel %vm1378, %v1298, 0
        %v1592 = vsel %vm1378, %v1305, 0
        %v1595 = vsel %vm1378, %v1312, 0
        %v1598 = vsel %vm1378, %v1319, 0
        %v1601 = vsel %vm1378, %v1326, 0
        %v1604 = vsel %vm1378, %v1333, 0
        %v1607 = vsel %vm1378, %v1340, 0
        %v1610 = vsel %vm1378, %v1347, 0
        %v1613 = vsel %vm1378, %v1354, 0
        %v1616 = vsel %vm1378, %v1361, 0
        %v1619 = vsel %vm1378, %v1368, 0
        %v1622 = vsel %vm1378, %v1375, 0
        %1624 = vmatprep.subr.mxu0 0.0
        %1625 = vmatpush1.msra.mxu0 %v1376
        %1626 = vmatprep.subr.mxu0 0.0
        %1627 = vmatpush1.msra.mxu0 %v1429
        %1628 = vmatprep.subr.mxu0 0.0
        %1629 = vmatpush1.msra.mxu0 0.0
        %1630 = vmatprep.subr.mxu0 0.0
        %1631 = vmatpush1.msra.mxu0 0.0
        %1632 = vmatprep.subr.mxu0 0.0
        %1633 = vmatpush1.msra.mxu0 0.0
        %1634 = vmatprep.subr.mxu0 0.0
        %1635 = vmatpush1.msra.mxu0 0.0
        %1636 = vmatprep.subr.mxu0 0.0
        %1637 = vmatpush1.msra.mxu0 0.0
        %1638 = vmatprep.subr.mxu0 0.0
        %1639 = vmatpush1.msra.mxu0 0.0
        %1640 = vmatprep.subr.mxu0 0.0
        %1641 = vmatpush1.msra.mxu0 0.0
        %1642 = vmatprep.subr.mxu0 0.0
        %1643 = vmatpush1.msra.mxu0 0.0
        %1644 = vmatprep.subr.mxu0 0.0
        %1645 = vmatpush1.msra.mxu0 0.0
        %1646 = vmatprep.subr.mxu0 0.0
        %1647 = vmatpush1.msra.mxu0 0.0
        %1648 = vmatprep.subr.mxu0 0.0
        %1649 = vmatpush1.msra.mxu0 0.0
        %1650 = vmatprep.subr.mxu0 0.0
        %1651 = vmatpush1.msra.mxu0 0.0
        %1652 = vmatprep.subr.mxu0 0.0
        %1653 = vmatpush1.msra.mxu0 0.0
        %1654 = vmatprep.subr.mxu0 0.0
        %1655 = vmatpush1.msra.mxu0 0.0
        %1656 = vmatprep.subr.mxu0 0.0
        %1657 = vmatpush1.msra.mxu0 0.0
        %1658 = vmatprep.subr.mxu0 0.0
        %1659 = vmatpush1.msra.mxu0 0.0
        %1660 = vmatprep.subr.mxu0 0.0
        %1661 = vmatpush1.msra.mxu0 0.0
        %1662 = vmatprep.subr.mxu0 0.0
        %1663 = vmatpush1.msra.mxu0 0.0
        %1664 = vmatprep.subr.mxu0 0.0
        %1665 = vmatpush1.msra.mxu0 0.0
        %1666 = vmatprep.subr.mxu0 0.0
        %1667 = vmatpush1.msra.mxu0 0.0
        %1668 = vmatprep.subr.mxu0 0.0
        %1669 = vmatpush1.msra.mxu0 0.0
        %1670 = vmatprep.subr.mxu0 0.0
        %1671 = vmatpush1.msra.mxu0 0.0
        %1672 = vmatprep.subr.mxu0 0.0
        %1673 = vmatpush1.msra.mxu0 0.0
        %1674 = vmatprep.subr.mxu0 0.0
        %1675 = vmatpush1.msra.mxu0 0.0
        %1676 = vmatprep.subr.mxu0 0.0
        %1677 = vmatpush1.msra.mxu0 0.0
        %1678 = vmatprep.subr.mxu0 0.0
        %1679 = vmatpush1.msra.mxu0 0.0
        %1680 = vmatprep.subr.mxu0 0.0
        %1681 = vmatpush1.msra.mxu0 0.0
        %1682 = vmatprep.subr.mxu0 0.0
        %1683 = vmatpush1.msra.mxu0 0.0
        %1684 = vmatprep.subr.mxu0 0.0
        %1685 = vmatpush1.msra.mxu0 0.0
        %1686 = vmatprep.subr.mxu0 0.0
        %1687 = vmatpush1.msra.mxu0 0.0
        %1688 = vmatprep.mubr.f32.mxu0 0.0
        %1689 = vmatmul.mubr.f32.gmra.mrb[0].mxu0 %v1577
        %v1690 = vpop.f32.mrb[0].mxu0
        %v1691 = vadd.f32 0.0, %v1690
        %v1692 = vpop.f32.mrb[0].mxu0
        %1693 = vmatprep.mubr.f32.mxu0 0.0
        %1694 = vmatmul.mubr.f32.gmra.mrb[0].mxu0 %v1580
        %v1695 = vpop.f32.mrb[0].mxu0
        %v1696 = vadd.f32 0.0, %v1695
        %v1697 = vpop.f32.mrb[0].mxu0
        %1698 = vmatprep.mubr.f32.mxu0 0.0
        %1699 = vmatmul.mubr.f32.gmra.mrb[0].mxu0 %v1583
        %v1700 = vpop.f32.mrb[0].mxu0
        %v1701 = vadd.f32 0.0, %v1700
        %v1702 = vpop.f32.mrb[0].mxu0
        %1703 = vmatprep.mubr.f32.mxu0 0.0
        %1704 = vmatmul.mubr.f32.gmra.mrb[0].mxu0 %v1586
        %v1705 = vpop.f32.mrb[0].mxu0
        %v1706 = vadd.f32 0.0, %v1705
        %v1707 = vpop.f32.mrb[0].mxu0
        %1708 = vmatprep.mubr.f32.mxu0 0.0
        %1709 = vmatmul.mubr.f32.gmra.mrb[0].mxu0 %v1589
        %v1710 = vpop.f32.mrb[0].mxu0
        %v1711 = vadd.f32 0.0, %v1710
        %v1712 = vpop.f32.mrb[0].mxu0
        %1713 = vmatprep.mubr.f32.mxu0 0.0
        %1714 = vmatmul.mubr.f32.gmra.mrb[0].mxu0 %v1592
        %v1715 = vpop.f32.mrb[0].mxu0
        %v1716 = vadd.f32 0.0, %v1715
        %v1717 = vpop.f32.mrb[0].mxu0
        %1718 = vmatprep.mubr.f32.mxu0 0.0
        %1719 = vmatmul.mubr.f32.gmra.mrb[0].mxu0 %v1595
        %v1720 = vpop.f32.mrb[0].mxu0
        %v1721 = vadd.f32 0.0, %v1720
        %v1722 = vpop.f32.mrb[0].mxu0
        %1723 = vmatprep.mubr.f32.mxu0 0.0
        %1724 = vmatmul.mubr.f32.gmra.mrb[0].mxu0 %v1598
        %v1725 = vpop.f32.mrb[0].mxu0
        %v1726 = vadd.f32 0.0, %v1725
        %v1727 = vpop.f32.mrb[0].mxu0
        %1728 = vmatprep.mubr.f32.mxu0 0.0
        %1729 = vmatmul.mubr.f32.gmra.mrb[0].mxu0 %v1601
        %v1730 = vpop.f32.mrb[0].mxu0
        %v1731 = vadd.f32 0.0, %v1730
        %v1732 = vpop.f32.mrb[0].mxu0
        %1733 = vmatprep.mubr.f32.mxu0 0.0
        %1734 = vmatmul.mubr.f32.gmra.mrb[0].mxu0 %v1604
        %v1735 = vpop.f32.mrb[0].mxu0
        %v1736 = vadd.f32 0.0, %v1735
        %v1737 = vpop.f32.mrb[0].mxu0
        %1738 = vmatprep.mubr.f32.mxu0 0.0
        %1739 = vmatmul.mubr.f32.gmra.mrb[0].mxu0 %v1607
        %v1740 = vpop.f32.mrb[0].mxu0
        %v1741 = vadd.f32 0.0, %v1740
        %v1742 = vpop.f32.mrb[0].mxu0
        %1743 = vmatprep.mubr.f32.mxu0 0.0
        %1744 = vmatmul.mubr.f32.gmra.mrb[0].mxu0 %v1610
        %v1745 = vpop.f32.mrb[0].mxu0
        %v1746 = vadd.f32 0.0, %v1745
        %v1747 = vpop.f32.mrb[0].mxu0
        %1748 = vmatprep.mubr.f32.mxu0 0.0
        %1749 = vmatmul.mubr.f32.gmra.mrb[0].mxu0 %v1613
        %v1750 = vpop.f32.mrb[0].mxu0
        %v1751 = vadd.f32 0.0, %v1750
        %v1752 = vpop.f32.mrb[0].mxu0
        %1753 = vmatprep.mubr.f32.mxu0 0.0
        %1754 = vmatmul.mubr.f32.gmra.mrb[0].mxu0 %v1616
        %v1755 = vpop.f32.mrb[0].mxu0
        %v1756 = vadd.f32 0.0, %v1755
        %v1757 = vpop.f32.mrb[0].mxu0
        %1758 = vmatprep.mubr.f32.mxu0 0.0
        %1759 = vmatmul.mubr.f32.gmra.mrb[0].mxu0 %v1619
        %v1760 = vpop.f32.mrb[0].mxu0
        %v1761 = vadd.f32 0.0, %v1760
        %v1762 = vpop.f32.mrb[0].mxu0
        %1763 = vmatprep.mubr.f32.mxu0 0.0
        %1764 = vmatmul.mubr.f32.gmra.mrb[0].mxu0 %v1622
        %v1765 = vpop.f32.mrb[0].mxu0
        %v1766 = vadd.f32 0.0, %v1765
        %v1767 = vpop.f32.mrb[0].mxu0
        %1768 = vdwg.mxu0
        %v1769 = vlaneseq
        %v1770 = vshrl.u32 %v1769, 7
        %v1771 = vadd.s32 %v1770, 8
        %v1772 = vadd.s32 %v1770, 16
        %v1773 = vadd.s32 %v1770, 24
        %v1774 = vadd.s32 %v1770, 32
        %v1775 = vadd.s32 %v1770, 40
        %v1776 = vadd.s32 %v1770, 48
        %v1777 = vadd.s32 %v1770, 56
        %v1778 = vadd.s32 %v1770, 64
        %v1779 = vadd.s32 %v1770, 72
        %v1780 = vadd.s32 %v1770, 80
        %v1781 = vadd.s32 %v1770, 88
        %v1782 = vadd.s32 %v1770, 96
        %v1783 = vadd.s32 %v1770, 104
        %v1784 = vadd.s32 %v1770, 112
        %v1785 = vadd.s32 %v1770, 120
        %s1786 = smul.u32 %s18, 128
        %v1787 = vstv %s1786
        %v1788 = vadd.s32 %v1770, %v1787
        %v1789 = vadd.s32 %v1771, %v1787
        %v1790 = vadd.s32 %v1772, %v1787
        %v1791 = vadd.s32 %v1773, %v1787
        %v1792 = vadd.s32 %v1774, %v1787
        %v1793 = vadd.s32 %v1775, %v1787
        %v1794 = vadd.s32 %v1776, %v1787
        %v1795 = vadd.s32 %v1777, %v1787
        %v1796 = vadd.s32 %v1778, %v1787
        %v1797 = vadd.s32 %v1779, %v1787
        %v1798 = vadd.s32 %v1780, %v1787
        %v1799 = vadd.s32 %v1781, %v1787
        %v1800 = vadd.s32 %v1782, %v1787
        %v1801 = vadd.s32 %v1783, %v1787
        %v1802 = vadd.s32 %v1784, %v1787
        %v1803 = vadd.s32 %v1785, %v1787
        %vm1804 = vcmp.lt.s32.totalorder %v1788, 160
        %vm1805 = vcmp.lt.s32.totalorder %v1789, 160
        %vm1806 = vcmp.lt.s32.totalorder %v1790, 160
        %vm1807 = vcmp.lt.s32.totalorder %v1791, 160
        %vm1808 = vcmp.lt.s32.totalorder %v1792, 160
        %vm1809 = vcmp.lt.s32.totalorder %v1793, 160
        %vm1810 = vcmp.lt.s32.totalorder %v1794, 160
        %vm1811 = vcmp.lt.s32.totalorder %v1795, 160
        %vm1812 = vcmp.lt.s32.totalorder %v1796, 160
        %vm1813 = vcmp.lt.s32.totalorder %v1797, 160
        %vm1814 = vcmp.lt.s32.totalorder %v1798, 160
        %vm1815 = vcmp.lt.s32.totalorder %v1799, 160
        %vm1816 = vcmp.lt.s32.totalorder %v1800, 160
        %vm1817 = vcmp.lt.s32.totalorder %v1801, 160
        %vm1818 = vcmp.lt.s32.totalorder %v1802, 160
        %vm1819 = vcmp.lt.s32.totalorder %v1803, 160
        %v1820 = vsel %vm1804, 1, 0
        %v1821 = vsel %vm1805, 1, 0
        %v1822 = vsel %vm1806, 1, 0
        %v1823 = vsel %vm1807, 1, 0
        %v1824 = vsel %vm1808, 1, 0
        %v1825 = vsel %vm1809, 1, 0
        %v1826 = vsel %vm1810, 1, 0
        %v1827 = vsel %vm1811, 1, 0
        %v1828 = vsel %vm1812, 1, 0
        %v1829 = vsel %vm1813, 1, 0
        %v1830 = vsel %vm1814, 1, 0
        %v1831 = vsel %vm1815, 1, 0
        %v1832 = vsel %vm1816, 1, 0
        %v1833 = vsel %vm1817, 1, 0
        %v1834 = vsel %vm1818, 1, 0
        %v1835 = vsel %vm1819, 1, 0
        %v1836 = vcvt.s32.f32 %v1820
        %v1837 = vcvt.s32.f32 %v1821
        %v1838 = vcvt.s32.f32 %v1822
        %v1839 = vcvt.s32.f32 %v1823
        %v1840 = vcvt.s32.f32 %v1824
        %v1841 = vcvt.s32.f32 %v1825
        %v1842 = vcvt.s32.f32 %v1826
        %v1843 = vcvt.s32.f32 %v1827
        %v1844 = vcvt.s32.f32 %v1828
        %v1845 = vcvt.s32.f32 %v1829
        %v1846 = vcvt.s32.f32 %v1830
        %v1847 = vcvt.s32.f32 %v1831
        %v1848 = vcvt.s32.f32 %v1832
        %v1849 = vcvt.s32.f32 %v1833
        %v1850 = vcvt.s32.f32 %v1834
        %v1851 = vcvt.s32.f32 %v1835
        %v1852 = vmul.f32 %v1498, %v1836
        %v1853 = vmul.f32 %v1503, %v1837
        %v1854 = vmul.f32 %v1508, %v1838
        %v1855 = vmul.f32 %v1513, %v1839
        %v1856 = vmul.f32 %v1518, %v1840
        %v1857 = vmul.f32 %v1523, %v1841
        %v1858 = vmul.f32 %v1528, %v1842
        %v1859 = vmul.f32 %v1533, %v1843
        %v1860 = vmul.f32 %v1538, %v1844
        %v1861 = vmul.f32 %v1543, %v1845
        %v1862 = vmul.f32 %v1548, %v1846
        %v1863 = vmul.f32 %v1553, %v1847
        %v1864 = vmul.f32 %v1558, %v1848
        %v1865 = vmul.f32 %v1563, %v1849
        %v1866 = vmul.f32 %v1568, %v1850
        %v1867 = vmul.f32 %v1573, %v1851
        %v1868 = vmul.f32 %v1691, %v1836
        %v1869 = vmul.f32 %v1696, %v1837
        %v1870 = vmul.f32 %v1701, %v1838
        %v1871 = vmul.f32 %v1706, %v1839
        %v1872 = vmul.f32 %v1711, %v1840
        %v1873 = vmul.f32 %v1716, %v1841
        %v1874 = vmul.f32 %v1721, %v1842
        %v1875 = vmul.f32 %v1726, %v1843
        %v1876 = vmul.f32 %v1731, %v1844
        %v1877 = vmul.f32 %v1736, %v1845
        %v1878 = vmul.f32 %v1741, %v1846
        %v1879 = vmul.f32 %v1746, %v1847
        %v1880 = vmul.f32 %v1751, %v1848
        %v1881 = vmul.f32 %v1756, %v1849
        %v1882 = vmul.f32 %v1761, %v1850
        %v1883 = vmul.f32 %v1766, %v1851
        %v1884 = vsub.f32 %v1852, %v1868
        %v1885 = vsub.f32 %v1853, %v1869
        %v1886 = vsub.f32 %v1854, %v1870
        %v1887 = vsub.f32 %v1855, %v1871
        %v1888 = vsub.f32 %v1856, %v1872
        %v1889 = vsub.f32 %v1857, %v1873
        %v1890 = vsub.f32 %v1858, %v1874
        %v1891 = vsub.f32 %v1859, %v1875
        %v1892 = vsub.f32 %v1860, %v1876
        %v1893 = vsub.f32 %v1861, %v1877
        %v1894 = vsub.f32 %v1862, %v1878
        %v1895 = vsub.f32 %v1863, %v1879
        %v1896 = vsub.f32 %v1864, %v1880
        %v1897 = vsub.f32 %v1865, %v1881
        %v1898 = vsub.f32 %v1866, %v1882
        %v1899 = vsub.f32 %v1867, %v1883
        %s1900 = sld [smem:[#allocation2]]
        %v1901 = vmul.f32 %v1884, %v1884
        %v1902 = vmul.f32 %v1885, %v1885
        %v1903 = vmul.f32 %v1886, %v1886
        %v1904 = vmul.f32 %v1887, %v1887
        %v1905 = vmul.f32 %v1888, %v1888
        %v1906 = vmul.f32 %v1889, %v1889
        %v1907 = vmul.f32 %v1890, %v1890
        %v1908 = vmul.f32 %v1891, %v1891
        %v1909 = vmul.f32 %v1892, %v1892
        %v1910 = vmul.f32 %v1893, %v1893
        %v1911 = vmul.f32 %v1894, %v1894
        %v1912 = vmul.f32 %v1895, %v1895
        %v1913 = vmul.f32 %v1896, %v1896
        %v1914 = vmul.f32 %v1897, %v1897
        %v1915 = vmul.f32 %v1898, %v1898
        %v1916 = vmul.f32 %v1899, %v1899
        %vm1917 = vcmask 31744
        %v1918 = vsel %vm1917, %v1901, 0.0
        %v1919 = vsel %vm1917, %v1902, 0.0
        %v1920 = vadd.f32 %v1918, %v1919
        %v1921 = vsel %vm1917, %v1903, 0.0
        %v1922 = vadd.f32 %v1920, %v1921
        %v1923 = vsel %vm1917, %v1904, 0.0
        %v1924 = vadd.f32 %v1922, %v1923
        %v1925 = vsel %vm1917, %v1905, 0.0
        %v1926 = vadd.f32 %v1924, %v1925
        %v1927 = vsel %vm1917, %v1906, 0.0
        %v1928 = vadd.f32 %v1926, %v1927
        %v1929 = vsel %vm1917, %v1907, 0.0
        %v1930 = vadd.f32 %v1928, %v1929
        %v1931 = vsel %vm1917, %v1908, 0.0
        %v1932 = vadd.f32 %v1930, %v1931
        %v1933 = vsel %vm1917, %v1909, 0.0
        %v1934 = vadd.f32 %v1932, %v1933
        %v1935 = vsel %vm1917, %v1910, 0.0
        %v1936 = vadd.f32 %v1934, %v1935
        %v1937 = vsel %vm1917, %v1911, 0.0
        %v1938 = vadd.f32 %v1936, %v1937
        %v1939 = vsel %vm1917, %v1912, 0.0
        %v1940 = vadd.f32 %v1938, %v1939
        %v1941 = vsel %vm1917, %v1913, 0.0
        %v1942 = vadd.f32 %v1940, %v1941
        %v1943 = vsel %vm1917, %v1914, 0.0
        %v1944 = vadd.f32 %v1942, %v1943
        %v1945 = vsel %vm1917, %v1915, 0.0
        %v1946 = vadd.f32 %v1944, %v1945
        %v1947 = vsel %vm1917, %v1916, 0.0
        %v1948 = vadd.f32 %v1946, %v1947
        %1949 = vadd.xlane.f32.xlu0 %v1948
        %v1950 = vpop.xlane.xlu0 %1949
        %v1951 = vrot.slane %v1950, 4
        %v1952 = vadd.f32 %v1950, %v1951
        %v1953 = vrot.slane %v1952, 2
        %v1954 = vadd.f32 %v1952, %v1953
        %v1955 = vrot.slane %v1954, 1
        %v1956 = vadd.f32 %v1954, %v1955
        %s1957 = vtos %v1956
        %s1958 = sadd.f32 %s1900, %s1957
        %s1959 = scalar_lea.smem [#allocation2], 0
        %1960 = sst [smem:[%s1959]] %s1958
        %s1961 = sld [smem:[#allocation2 + $0x1]]
        %v1962 = vmul.f32 %v1852, %v1852
        %v1963 = vmul.f32 %v1853, %v1853
        %v1964 = vmul.f32 %v1854, %v1854
        %v1965 = vmul.f32 %v1855, %v1855
        %v1966 = vmul.f32 %v1856, %v1856
        %v1967 = vmul.f32 %v1857, %v1857
        %v1968 = vmul.f32 %v1858, %v1858
        %v1969 = vmul.f32 %v1859, %v1859
        %v1970 = vmul.f32 %v1860, %v1860
        %v1971 = vmul.f32 %v1861, %v1861
        %v1972 = vmul.f32 %v1862, %v1862
        %v1973 = vmul.f32 %v1863, %v1863
        %v1974 = vmul.f32 %v1864, %v1864
        %v1975 = vmul.f32 %v1865, %v1865
        %v1976 = vmul.f32 %v1866, %v1866
        %v1977 = vmul.f32 %v1867, %v1867
        %v1978 = vsel %vm1917, %v1962, 0.0
        %v1979 = vsel %vm1917, %v1963, 0.0
        %v1980 = vadd.f32 %v1978, %v1979
        %v1981 = vsel %vm1917, %v1964, 0.0
        %v1982 = vadd.f32 %v1980, %v1981
        %v1983 = vsel %vm1917, %v1965, 0.0
        %v1984 = vadd.f32 %v1982, %v1983
        %v1985 = vsel %vm1917, %v1966, 0.0
        %v1986 = vadd.f32 %v1984, %v1985
        %v1987 = vsel %vm1917, %v1967, 0.0
        %v1988 = vadd.f32 %v1986, %v1987
        %v1989 = vsel %vm1917, %v1968, 0.0
        %v1990 = vadd.f32 %v1988, %v1989
        %v1991 = vsel %vm1917, %v1969, 0.0
        %v1992 = vadd.f32 %v1990, %v1991
        %v1993 = vsel %vm1917, %v1970, 0.0
        %v1994 = vadd.f32 %v1992, %v1993
        %v1995 = vsel %vm1917, %v1971, 0.0
        %v1996 = vadd.f32 %v1994, %v1995
        %v1997 = vsel %vm1917, %v1972, 0.0
        %v1998 = vadd.f32 %v1996, %v1997
        %v1999 = vsel %vm1917, %v1973, 0.0
        %v2000 = vadd.f32 %v1998, %v1999
        %v2001 = vsel %vm1917, %v1974, 0.0
        %v2002 = vadd.f32 %v2000, %v2001
        %v2003 = vsel %vm1917, %v1975, 0.0
        %v2004 = vadd.f32 %v2002, %v2003
        %v2005 = vsel %vm1917, %v1976, 0.0
        %v2006 = vadd.f32 %v2004, %v2005
        %v2007 = vsel %vm1917, %v1977, 0.0
        %v2008 = vadd.f32 %v2006, %v2007
        %2009 = vadd.xlane.f32.xlu0 %v2008
        %v2010 = vpop.xlane.xlu0 %2009
        %v2011 = vrot.slane %v2010, 4
        %v2012 = vadd.f32 %v2010, %v2011
        %v2013 = vrot.slane %v2012, 2
        %v2014 = vadd.f32 %v2012, %v2013
        %v2015 = vrot.slane %v2014, 1
        %v2016 = vadd.f32 %v2014, %v2015
        %s2017 = vtos %v2016
        %s2018 = sadd.f32 %s1961, %s2017
        %s2019 = scalar_lea.smem [#allocation2], 1
        %2020 = sst [smem:[%s2019]] %s2018
        %s2021 = sld [smem:[#allocation2 + $0x2]]
        %v2022 = vadd.f32 %v1852, 1e-07
        %v2023 = vadd.f32 %v1853, 1e-07
        %v2024 = vadd.f32 %v1854, 1e-07
        %v2025 = vadd.f32 %v1855, 1e-07
        %v2026 = vadd.f32 %v1856, 1e-07
        %v2027 = vadd.f32 %v1857, 1e-07
        %v2028 = vadd.f32 %v1858, 1e-07
        %v2029 = vadd.f32 %v1859, 1e-07
        %v2030 = vadd.f32 %v1860, 1e-07
        %v2031 = vadd.f32 %v1861, 1e-07
        %v2032 = vadd.f32 %v1862, 1e-07
        %v2033 = vadd.f32 %v1863, 1e-07
        %v2034 = vadd.f32 %v1864, 1e-07
        %v2035 = vadd.f32 %v1865, 1e-07
        %v2036 = vadd.f32 %v1866, 1e-07
        %v2037 = vadd.f32 %v1867, 1e-07
        %v2038 = vlog2.pop %v2022
        %v2039 = vmul.f32 %v2038, 0.6931472
        %v2040 = vlog2.pop %v2023
        %v2041 = vmul.f32 %v2040, 0.6931472
        %v2042 = vlog2.pop %v2024
        %v2043 = vmul.f32 %v2042, 0.6931472
        %v2044 = vlog2.pop %v2025
        %v2045 = vmul.f32 %v2044, 0.6931472
        %v2046 = vlog2.pop %v2026
        %v2047 = vmul.f32 %v2046, 0.6931472
        %v2048 = vlog2.pop %v2027
        %v2049 = vmul.f32 %v2048, 0.6931472
        %v2050 = vlog2.pop %v2028
        %v2051 = vmul.f32 %v2050, 0.6931472
        %v2052 = vlog2.pop %v2029
        %v2053 = vmul.f32 %v2052, 0.6931472
        %v2054 = vlog2.pop %v2030
        %v2055 = vmul.f32 %v2054, 0.6931472
        %v2056 = vlog2.pop %v2031
        %v2057 = vmul.f32 %v2056, 0.6931472
        %v2058 = vlog2.pop %v2032
        %v2059 = vmul.f32 %v2058, 0.6931472
        %v2060 = vlog2.pop %v2033
        %v2061 = vmul.f32 %v2060, 0.6931472
        %v2062 = vlog2.pop %v2034
        %v2063 = vmul.f32 %v2062, 0.6931472
        %v2064 = vlog2.pop %v2035
        %v2065 = vmul.f32 %v2064, 0.6931472
        %v2066 = vlog2.pop %v2036
        %v2067 = vmul.f32 %v2066, 0.6931472
        %v2068 = vlog2.pop %v2037
        %v2069 = vmul.f32 %v2068, 0.6931472
        %v2070 = vadd.f32 %v1868, 1e-07
        %v2071 = vadd.f32 %v1869, 1e-07
        %v2072 = vadd.f32 %v1870, 1e-07
        %v2073 = vadd.f32 %v1871, 1e-07
        %v2074 = vadd.f32 %v1872, 1e-07
        %v2075 = vadd.f32 %v1873, 1e-07
        %v2076 = vadd.f32 %v1874, 1e-07
        %v2077 = vadd.f32 %v1875, 1e-07
        %v2078 = vadd.f32 %v1876, 1e-07
        %v2079 = vadd.f32 %v1877, 1e-07
        %v2080 = vadd.f32 %v1878, 1e-07
        %v2081 = vadd.f32 %v1879, 1e-07
        %v2082 = vadd.f32 %v1880, 1e-07
        %v2083 = vadd.f32 %v1881, 1e-07
        %v2084 = vadd.f32 %v1882, 1e-07
        %v2085 = vadd.f32 %v1883, 1e-07
        %v2086 = vlog2.pop %v2070
        %v2087 = vmul.f32 %v2086, 0.6931472
        %v2088 = vlog2.pop %v2071
        %v2089 = vmul.f32 %v2088, 0.6931472
        %v2090 = vlog2.pop %v2072
        %v2091 = vmul.f32 %v2090, 0.6931472
        %v2092 = vlog2.pop %v2073
        %v2093 = vmul.f32 %v2092, 0.6931472
        %v2094 = vlog2.pop %v2074
        %v2095 = vmul.f32 %v2094, 0.6931472
        %v2096 = vlog2.pop %v2075
        %v2097 = vmul.f32 %v2096, 0.6931472
        %v2098 = vlog2.pop %v2076
        %v2099 = vmul.f32 %v2098, 0.6931472
        %v2100 = vlog2.pop %v2077
        %v2101 = vmul.f32 %v2100, 0.6931472
        %v2102 = vlog2.pop %v2078
        %v2103 = vmul.f32 %v2102, 0.6931472
        %v2104 = vlog2.pop %v2079
        %v2105 = vmul.f32 %v2104, 0.6931472
        %v2106 = vlog2.pop %v2080
        %v2107 = vmul.f32 %v2106, 0.6931472
        %v2108 = vlog2.pop %v2081
        %v2109 = vmul.f32 %v2108, 0.6931472
        %v2110 = vlog2.pop %v2082
        %v2111 = vmul.f32 %v2110, 0.6931472
        %v2112 = vlog2.pop %v2083
        %v2113 = vmul.f32 %v2112, 0.6931472
        %v2114 = vlog2.pop %v2084
        %v2115 = vmul.f32 %v2114, 0.6931472
        %v2116 = vlog2.pop %v2085
        %v2117 = vmul.f32 %v2116, 0.6931472
        %v2118 = vsub.f32 %v2039, %v2087
        %v2119 = vsub.f32 %v2041, %v2089
        %v2120 = vsub.f32 %v2043, %v2091
        %v2121 = vsub.f32 %v2045, %v2093
        %v2122 = vsub.f32 %v2047, %v2095
        %v2123 = vsub.f32 %v2049, %v2097
        %v2124 = vsub.f32 %v2051, %v2099
        %v2125 = vsub.f32 %v2053, %v2101
        %v2126 = vsub.f32 %v2055, %v2103
        %v2127 = vsub.f32 %v2057, %v2105
        %v2128 = vsub.f32 %v2059, %v2107
        %v2129 = vsub.f32 %v2061, %v2109
        %v2130 = vsub.f32 %v2063, %v2111
        %v2131 = vsub.f32 %v2065, %v2113
        %v2132 = vsub.f32 %v2067, %v2115
        %v2133 = vsub.f32 %v2069, %v2117
        %v2134 = vand.u32 2147483647, %v2118
        %v2135 = vand.u32 2147483647, %v2119
        %v2136 = vand.u32 2147483647, %v2120
        %v2137 = vand.u32 2147483647, %v2121
        %v2138 = vand.u32 2147483647, %v2122
        %v2139 = vand.u32 2147483647, %v2123
        %v2140 = vand.u32 2147483647, %v2124
        %v2141 = vand.u32 2147483647, %v2125
        %v2142 = vand.u32 2147483647, %v2126
        %v2143 = vand.u32 2147483647, %v2127
        %v2144 = vand.u32 2147483647, %v2128
        %v2145 = vand.u32 2147483647, %v2129
        %v2146 = vand.u32 2147483647, %v2130
        %v2147 = vand.u32 2147483647, %v2131
        %v2148 = vand.u32 2147483647, %v2132
        %v2149 = vand.u32 2147483647, %v2133
        %v2150 = vsel %vm1917, %v2134, 0.0
        %v2151 = vsel %vm1917, %v2135, 0.0
        %v2152 = vadd.f32 %v2150, %v2151
        %v2153 = vsel %vm1917, %v2136, 0.0
        %v2154 = vadd.f32 %v2152, %v2153
        %v2155 = vsel %vm1917, %v2137, 0.0
        %v2156 = vadd.f32 %v2154, %v2155
        %v2157 = vsel %vm1917, %v2138, 0.0
        %v2158 = vadd.f32 %v2156, %v2157
        %v2159 = vsel %vm1917, %v2139, 0.0
        %v2160 = vadd.f32 %v2158, %v2159
        %v2161 = vsel %vm1917, %v2140, 0.0
        %v2162 = vadd.f32 %v2160, %v2161
        %v2163 = vsel %vm1917, %v2141, 0.0
        %v2164 = vadd.f32 %v2162, %v2163
        %v2165 = vsel %vm1917, %v2142, 0.0
        %v2166 = vadd.f32 %v2164, %v2165
        %v2167 = vsel %vm1917, %v2143, 0.0
        %v2168 = vadd.f32 %v2166, %v2167
        %v2169 = vsel %vm1917, %v2144, 0.0
        %v2170 = vadd.f32 %v2168, %v2169
        %v2171 = vsel %vm1917, %v2145, 0.0
        %v2172 = vadd.f32 %v2170, %v2171
        %v2173 = vsel %vm1917, %v2146, 0.0
        %v2174 = vadd.f32 %v2172, %v2173
        %v2175 = vsel %vm1917, %v2147, 0.0
        %v2176 = vadd.f32 %v2174, %v2175
        %v2177 = vsel %vm1917, %v2148, 0.0
        %v2178 = vadd.f32 %v2176, %v2177
        %v2179 = vsel %vm1917, %v2149, 0.0
        %v2180 = vadd.f32 %v2178, %v2179
        %2181 = vadd.xlane.f32.xlu0 %v2180
        %v2182 = vpop.xlane.xlu0 %2181
        %v2183 = vrot.slane %v2182, 4
        %v2184 = vadd.f32 %v2182, %v2183
        %v2185 = vrot.slane %v2184, 2
        %v2186 = vadd.f32 %v2184, %v2185
        %v2187 = vrot.slane %v2186, 1
        %v2188 = vadd.f32 %v2186, %v2187
        %s2189 = vtos %v2188
        %s2190 = sadd.f32 %s2021, %s2189
        %s2191 = scalar_lea.smem [#allocation2], 2
        %2192 = sst [smem:[%s2191]] %s2190
        // Predicated region
        $region49: #{forward.10} parent=43 // pred_check
          %p2193 = pneg %p167
        $region50: #{forward.10} parent=43 // pred_check_branch
          %2195 = sbr.rel (%p2193) target = $region52
        $region51: #{forward.10} parent=43 // pred_region
          %s2197 = ssub.s32 16, 16
          %2198 = vsyncadd [#allocation3], %s2197
          %s2200 = sshll.u32 %s6, 4
          %s2201 = int_to_ptr.vmem [resolvable:$true] %s2200
          %2203 = dma.smem_to_vmem [#allocation2], 16, %s2201, [#allocation3]
        $region52: #{forward.10} parent=43 // pred_fallthru
          _
        // Predicated region
        $region53: #{forward.10} parent=43 // pred_check
          %p2204 = pneg %p167
        $region54: #{forward.10} parent=43 // pred_check_branch
          %2206 = sbr.rel (%p2204) target = $region56
        $region55: #{forward.10} parent=43 // pred_region
          %2207 = dma.done [#allocation3], 16
        $region56: #{forward.10} parent=43 // pred_fallthru
          _
        %2208 = sfence
      $region44: #{forward.10} parent=5 // pred_fallthru
        _
      %p2209 = scmp.le.s32.totalorder 2, %s13
      // Predicated region
      $region57: #{forward.10} parent=5 // pred_check
        %p2210 = pneg %p2209
      $region58: #{forward.10} parent=5 // pred_check_branch
        %2212 = sbr.rel (%p2210) target = $region60
      $region59: #{forward.10} parent=5 // pred_region
        %s2213 = ssub.s32 %s13, 2
      $region60: #{forward.10} parent=5 // pred_fallthru
        _
    $region6: #{forward.10} parent=1 // loop_footer
      %s17 = sadd.s32 1, %s13
    $region7: #{forward.10} parent=1 // loop_footer_branch
      %12 = sbr.rel target = $region3
    $region8: #{forward.10} parent=1 // loop_exit
      _
    %2214 = vsyncpa [#allocation3], 1
    %s2215 = scalar_lea.sflag [#allocation3], 1
    %2216 = vsyncpa %s2215, 1

// kernel: forward.11
$region0: #{forward.11}
  #allocation0 [shape = 'u32[]', space=smem, size = 0x4, offset = 0x4, fixed_abs, tag = 'smem constant byte address 0x4 - core index']
  #allocation1 [shape = 'u32[144,128]{1,0:T(1,128)}', space=vmem, size = 0x12000, scoped, tag = 'internal scratch']
  %s0 = inlined_call_operand.vmem [shape: f32[128,32], index: 0, kind: input, shape index: {}]
  %s1 = inlined_call_operand.vmem [shape: f32[128,32], index: 1, kind: input, shape index: {}]
  %s2 = inlined_call_operand.vmem [shape: f32[1,32], index: 2, kind: input, shape index: {}]
  %s3 = inlined_call_operand.vmem [shape: f32[32,17], index: 3, kind: input, shape index: {}]
  %s4 = inlined_call_operand.vmem [shape: f32[32,17], index: 4, kind: input, shape index: {}]
  %s5 = inlined_call_operand.vmem [shape: f32[17,8], index: 5, kind: input, shape index: {}]
  %s6 = inlined_call_operand.vmem [shape: f32[3], index: 6, kind: output, shape index: {}]
  %s7 = sld [smem:[#allocation0]]
  $region38: #{forward.11} parent=0
    _
  %s9 = ssub.s32 1, %s7
  %s10 = scalar_select 0, %s9, %s7
  $region1: #{forward.11} parent=0
    #allocation2 [shape = 'u8[512]{0}', space=smem, size = 0x200, scoped, tag = 'output window, operand 0, single buffered']
    #allocation3 [shape = 's32[1]{0}', space=sflag, size = 0x4, scoped, tag = 'scoped memory for forward.11']
    %11 = vsyncpa [#allocation3], 0
    // Predicated region
    $region2: #{forward.11} parent=1 // pred_check
      _
    $region3: #{forward.11} parent=1 // pred_check_branch
      %13 = sbr.rel (0) target = $region5
    $region4: #{forward.11} parent=1 // pred_region
      _
    $region5: #{forward.11} parent=1 // pred_fallthru
      _
    // Predicated region
    $region6: #{forward.11} parent=1 // pred_check
      _
    $region7: #{forward.11} parent=1 // pred_check_branch
      %15 = sbr.rel (0) target = $region9
    $region8: #{forward.11} parent=1 // pred_region
      _
    $region9: #{forward.11} parent=1 // pred_fallthru
      _
    // Predicated region
    $region10: #{forward.11} parent=1 // pred_check
      _
    $region11: #{forward.11} parent=1 // pred_check_branch
      %17 = sbr.rel (0) target = $region13
    $region12: #{forward.11} parent=1 // pred_region
      _
    $region13: #{forward.11} parent=1 // pred_fallthru
      _
    // Predicated region
    $region14: #{forward.11} parent=1 // pred_check
      _
    $region15: #{forward.11} parent=1 // pred_check_branch
      %19 = sbr.rel (0) target = $region17
    $region16: #{forward.11} parent=1 // pred_region
      _
    $region17: #{forward.11} parent=1 // pred_fallthru
      _
    // Predicated region
    $region18: #{forward.11} parent=1 // pred_check
      _
    $region19: #{forward.11} parent=1 // pred_check_branch
      %21 = sbr.rel (0) target = $region21
    $region20: #{forward.11} parent=1 // pred_region
      _
    $region21: #{forward.11} parent=1 // pred_fallthru
      _
    // Predicated region
    $region22: #{forward.11} parent=1 // pred_check
      _
    $region23: #{forward.11} parent=1 // pred_check_branch
      %23 = sbr.rel (0) target = $region25
    $region24: #{forward.11} parent=1 // pred_region
      _
    $region25: #{forward.11} parent=1 // pred_fallthru
      _
    %p24 = scmp.eq.s32.totalorder 0, 0
    // Predicated region
    $region26: #{forward.11} parent=1 // pred_check
      %p25 = pneg %p24
    $region27: #{forward.11} parent=1 // pred_check_branch
      %27 = sbr.rel (%p25) target = $region29
    $region28: #{forward.11} parent=1 // pred_region
      %s28 = scalar_lea.smem [#allocation2], 0
      %29 = sst [smem:[%s28]] 0.0
      %s30 = scalar_lea.smem [#allocation2], 1
      %31 = sst [smem:[%s30]] 0.0
      %s32 = scalar_lea.smem [#allocation2], 2
      %33 = sst [smem:[%s32]] 0.0
    $region29: #{forward.11} parent=1 // pred_fallthru
      _
    %v34 = vld [vmem:[%s2] sm:$0x1]
    %v35 = vld [vmem:[%s0] sm:$0xff]
    %v36 = vld [vmem:[%s0 + $0x8] sm:$0xff]
    %v37 = vld [vmem:[%s0 + $0x10] sm:$0xff]
    %v38 = vld [vmem:[%s0 + $0x18] sm:$0xff]
    %v39 = vld [vmem:[%s0 + $0x20] sm:$0xff]
    %v40 = vld [vmem:[%s0 + $0x28] sm:$0xff]
    %v41 = vld [vmem:[%s0 + $0x30] sm:$0xff]
    %v42 = vld [vmem:[%s0 + $0x38] sm:$0xff]
    %v43 = vld [vmem:[%s0 + $0x40] sm:$0xff]
    %v44 = vld [vmem:[%s0 + $0x48] sm:$0xff]
    %v45 = vld [vmem:[%s0 + $0x50] sm:$0xff]
    %v46 = vld [vmem:[%s0 + $0x58] sm:$0xff]
    %v47 = vld [vmem:[%s0 + $0x60] sm:$0xff]
    %v48 = vld [vmem:[%s0 + $0x68] sm:$0xff]
    %v49 = vld [vmem:[%s0 + $0x70] sm:$0xff]
    %v50 = vld [vmem:[%s0 + $0x78] sm:$0xff]
    %v52 = vlaneseq
    %v53 = vshrl.u32 %v52, 7
    %v54 = vsub.s32 0, %v53
    %v55 = vrot.slane %v34, %v54
    %v57 = vmul.f32 %v35, %v55
    %v58 = vmul.f32 %v36, %v55
    %v59 = vmul.f32 %v37, %v55
    %v60 = vmul.f32 %v38, %v55
    %v61 = vmul.f32 %v39, %v55
    %v62 = vmul.f32 %v40, %v55
    %v63 = vmul.f32 %v41, %v55
    %v64 = vmul.f32 %v42, %v55
    %v65 = vmul.f32 %v43, %v55
    %v66 = vmul.f32 %v44, %v55
    %v67 = vmul.f32 %v45, %v55
    %v68 = vmul.f32 %v46, %v55
    %v69 = vmul.f32 %v47, %v55
    %v70 = vmul.f32 %v48, %v55
    %v71 = vmul.f32 %v49, %v55
    %v72 = vmul.f32 %v50, %v55
    %v73 = vld [vmem:[%s1] sm:$0xff]
    %v74 = vld [vmem:[%s1 + $0x8] sm:$0xff]
    %v75 = vld [vmem:[%s1 + $0x10] sm:$0xff]
    %v76 = vld [vmem:[%s1 + $0x18] sm:$0xff]
    %v77 = vld [vmem:[%s1 + $0x20] sm:$0xff]
    %v78 = vld [vmem:[%s1 + $0x28] sm:$0xff]
    %v79 = vld [vmem:[%s1 + $0x30] sm:$0xff]
    %v80 = vld [vmem:[%s1 + $0x38] sm:$0xff]
    %v81 = vld [vmem:[%s1 + $0x40] sm:$0xff]
    %v82 = vld [vmem:[%s1 + $0x48] sm:$0xff]
    %v83 = vld [vmem:[%s1 + $0x50] sm:$0xff]
    %v84 = vld [vmem:[%s1 + $0x58] sm:$0xff]
    %v85 = vld [vmem:[%s1 + $0x60] sm:$0xff]
    %v86 = vld [vmem:[%s1 + $0x68] sm:$0xff]
    %v87 = vld [vmem:[%s1 + $0x70] sm:$0xff]
    %v88 = vld [vmem:[%s1 + $0x78] sm:$0xff]
    %v89 = vmul.f32 %v73, %v55
    %v90 = vmul.f32 %v74, %v55
    %v91 = vmul.f32 %v75, %v55
    %v92 = vmul.f32 %v76, %v55
    %v93 = vmul.f32 %v77, %v55
    %v94 = vmul.f32 %v78, %v55
    %v95 = vmul.f32 %v79, %v55
    %v96 = vmul.f32 %v80, %v55
    %v97 = vmul.f32 %v81, %v55
    %v98 = vmul.f32 %v82, %v55
    %v99 = vmul.f32 %v83, %v55
    %v100 = vmul.f32 %v84, %v55
    %v101 = vmul.f32 %v85, %v55
    %v102 = vmul.f32 %v86, %v55
    %v103 = vmul.f32 %v87, %v55
    %v104 = vmul.f32 %v88, %v55
    %v105 = vld [vmem:[%s3] sm:$0xff]
    %v106 = vld [vmem:[%s3 + $0x8] sm:$0xff]
    %v107 = vld [vmem:[%s3 + $0x10] sm:$0xff]
    %v108 = vld [vmem:[%s3 + $0x18] sm:$0xff]
    %vm109 = vcmask 261120
    %v111 = vsel %vm109, %v57, 0
    %v114 = vsel %vm109, %v58, 0
    %v117 = vsel %vm109, %v59, 0
    %v120 = vsel %vm109, %v60, 0
    %v123 = vsel %vm109, %v61, 0
    %v126 = vsel %vm109, %v62, 0
    %v129 = vsel %vm109, %v63, 0
    %v132 = vsel %vm109, %v64, 0
    %v135 = vsel %vm109, %v65, 0
    %v138 = vsel %vm109, %v66, 0
    %v141 = vsel %vm109, %v67, 0
    %v144 = vsel %vm109, %v68, 0
    %v147 = vsel %vm109, %v69, 0
    %v150 = vsel %vm109, %v70, 0
    %v153 = vsel %vm109, %v71, 0
    %v156 = vsel %vm109, %v72, 0
    %158 = vmatprep.subr.mxu0 0.0
    %159 = vmatpush1.msra.mxu0 %v105
    %160 = vmatprep.subr.mxu0 0.0
    %161 = vmatpush1.msra.mxu0 %v106
    %162 = vmatprep.subr.mxu0 0.0
    %163 = vmatpush1.msra.mxu0 %v107
    %164 = vmatprep.subr.mxu0 0.0
    %165 = vmatpush1.msra.mxu0 %v108
    %166 = vmatprep.subr.mxu0 0.0
    %167 = vmatpush1.msra.mxu0 0.0
    %168 = vmatprep.subr.mxu0 0.0
    %169 = vmatpush1.msra.mxu0 0.0
    %170 = vmatprep.subr.mxu0 0.0
    %171 = vmatpush1.msra.mxu0 0.0
    %172 = vmatprep.subr.mxu0 0.0
    %173 = vmatpush1.msra.mxu0 0.0
    %174 = vmatprep.subr.mxu0 0.0
    %175 = vmatpush1.msra.mxu0 0.0
    %176 = vmatprep.subr.mxu0 0.0
    %177 = vmatpush1.msra.mxu0 0.0
    %178 = vmatprep.subr.mxu0 0.0
    %179 = vmatpush1.msra.mxu0 0.0
    %180 = vmatprep.subr.mxu0 0.0
    %181 = vmatpush1.msra.mxu0 0.0
    %182 = vmatprep.subr.mxu0 0.0
    %183 = vmatpush1.msra.mxu0 0.0
    %184 = vmatprep.subr.mxu0 0.0
    %185 = vmatpush1.msra.mxu0 0.0
    %186 = vmatprep.subr.mxu0 0.0
    %187 = vmatpush1.msra.mxu0 0.0
    %188 = vmatprep.subr.mxu0 0.0
    %189 = vmatpush1.msra.mxu0 0.0
    %190 = vmatprep.subr.mxu0 0.0
    %191 = vmatpush1.msra.mxu0 0.0
    %192 = vmatprep.subr.mxu0 0.0
    %193 = vmatpush1.msra.mxu0 0.0
    %194 = vmatprep.subr.mxu0 0.0
    %195 = vmatpush1.msra.mxu0 0.0
    %196 = vmatprep.subr.mxu0 0.0
    %197 = vmatpush1.msra.mxu0 0.0
    %198 = vmatprep.subr.mxu0 0.0
    %199 = vmatpush1.msra.mxu0 0.0
    %200 = vmatprep.subr.mxu0 0.0
    %201 = vmatpush1.msra.mxu0 0.0
    %202 = vmatprep.subr.mxu0 0.0
    %203 = vmatpush1.msra.mxu0 0.0
    %204 = vmatprep.subr.mxu0 0.0
    %205 = vmatpush1.msra.mxu0 0.0
    %206 = vmatprep.subr.mxu0 0.0
    %207 = vmatpush1.msra.mxu0 0.0
    %208 = vmatprep.subr.mxu0 0.0
    %209 = vmatpush1.msra.mxu0 0.0
    %210 = vmatprep.subr.mxu0 0.0
    %211 = vmatpush1.msra.mxu0 0.0
    %212 = vmatprep.subr.mxu0 0.0
    %213 = vmatpush1.msra.mxu0 0.0
    %214 = vmatprep.subr.mxu0 0.0
    %215 = vmatpush1.msra.mxu0 0.0
    %216 = vmatprep.subr.mxu0 0.0
    %217 = vmatpush1.msra.mxu0 0.0
    %218 = vmatprep.subr.mxu0 0.0
    %219 = vmatpush1.msra.mxu0 0.0
    %220 = vmatprep.subr.mxu0 0.0
    %221 = vmatpush1.msra.mxu0 0.0
    %222 = vmatprep.mubr.f32.mxu0 0.0
    %223 = vmatmul.mubr.f32.gmra.mrb[0].mxu0 %v111
    %v224 = vpop.f32.mrb[0].mxu0
    %v225 = vadd.f32 0.0, %v224
    %v226 = vpop.f32.mrb[0].mxu0
    %227 = vmatprep.mubr.f32.mxu0 0.0
    %228 = vmatmul.mubr.f32.gmra.mrb[0].mxu0 %v114
    %v229 = vpop.f32.mrb[0].mxu0
    %v230 = vadd.f32 0.0, %v229
    %v231 = vpop.f32.mrb[0].mxu0
    %232 = vmatprep.mubr.f32.mxu0 0.0
    %233 = vmatmul.mubr.f32.gmra.mrb[0].mxu0 %v117
    %v234 = vpop.f32.mrb[0].mxu0
    %v235 = vadd.f32 0.0, %v234
    %v236 = vpop.f32.mrb[0].mxu0
    %237 = vmatprep.mubr.f32.mxu0 0.0
    %238 = vmatmul.mubr.f32.gmra.mrb[0].mxu0 %v120
    %v239 = vpop.f32.mrb[0].mxu0
    %v240 = vadd.f32 0.0, %v239
    %v241 = vpop.f32.mrb[0].mxu0
    %242 = vmatprep.mubr.f32.mxu0 0.0
    %243 = vmatmul.mubr.f32.gmra.mrb[0].mxu0 %v123
    %v244 = vpop.f32.mrb[0].mxu0
    %v245 = vadd.f32 0.0, %v244
    %v246 = vpop.f32.mrb[0].mxu0
    %247 = vmatprep.mubr.f32.mxu0 0.0
    %248 = vmatmul.mubr.f32.gmra.mrb[0].mxu0 %v126
    %v249 = vpop.f32.mrb[0].mxu0
    %v250 = vadd.f32 0.0, %v249
    %v251 = vpop.f32.mrb[0].mxu0
    %252 = vmatprep.mubr.f32.mxu0 0.0
    %253 = vmatmul.mubr.f32.gmra.mrb[0].mxu0 %v129
    %v254 = vpop.f32.mrb[0].mxu0
    %v255 = vadd.f32 0.0, %v254
    %v256 = vpop.f32.mrb[0].mxu0
    %257 = vmatprep.mubr.f32.mxu0 0.0
    %258 = vmatmul.mubr.f32.gmra.mrb[0].mxu0 %v132
    %v259 = vpop.f32.mrb[0].mxu0
    %v260 = vadd.f32 0.0, %v259
    %v261 = vpop.f32.mrb[0].mxu0
    %262 = vmatprep.mubr.f32.mxu0 0.0
    %263 = vmatmul.mubr.f32.gmra.mrb[0].mxu0 %v135
    %v264 = vpop.f32.mrb[0].mxu0
    %v265 = vadd.f32 0.0, %v264
    %v266 = vpop.f32.mrb[0].mxu0
    %267 = vmatprep.mubr.f32.mxu0 0.0
    %268 = vmatmul.mubr.f32.gmra.mrb[0].mxu0 %v138
    %v269 = vpop.f32.mrb[0].mxu0
    %v270 = vadd.f32 0.0, %v269
    %v271 = vpop.f32.mrb[0].mxu0
    %272 = vmatprep.mubr.f32.mxu0 0.0
    %273 = vmatmul.mubr.f32.gmra.mrb[0].mxu0 %v141
    %v274 = vpop.f32.mrb[0].mxu0
    %v275 = vadd.f32 0.0, %v274
    %v276 = vpop.f32.mrb[0].mxu0
    %277 = vmatprep.mubr.f32.mxu0 0.0
    %278 = vmatmul.mubr.f32.gmra.mrb[0].mxu0 %v144
    %v279 = vpop.f32.mrb[0].mxu0
    %v280 = vadd.f32 0.0, %v279
    %v281 = vpop.f32.mrb[0].mxu0
    %282 = vmatprep.mubr.f32.mxu0 0.0
    %283 = vmatmul.mubr.f32.gmra.mrb[0].mxu0 %v147
    %v284 = vpop.f32.mrb[0].mxu0
    %v285 = vadd.f32 0.0, %v284
    %v286 = vpop.f32.mrb[0].mxu0
    %287 = vmatprep.mubr.f32.mxu0 0.0
    %288 = vmatmul.mubr.f32.gmra.mrb[0].mxu0 %v150
    %v289 = vpop.f32.mrb[0].mxu0
    %v290 = vadd.f32 0.0, %v289
    %v291 = vpop.f32.mrb[0].mxu0
    %292 = vmatprep.mubr.f32.mxu0 0.0
    %293 = vmatmul.mubr.f32.gmra.mrb[0].mxu0 %v153
    %v294 = vpop.f32.mrb[0].mxu0
    %v295 = vadd.f32 0.0, %v294
    %v296 = vpop.f32.mrb[0].mxu0
    %297 = vmatprep.mubr.f32.mxu0 0.0
    %298 = vmatmul.mubr.f32.gmra.mrb[0].mxu0 %v156
    %v299 = vpop.f32.mrb[0].mxu0
    %v300 = vadd.f32 0.0, %v299
    %v301 = vpop.f32.mrb[0].mxu0
    %302 = vdwg.mxu0
    %v303 = vld [vmem:[%s4] sm:$0xff]
    %v304 = vld [vmem:[%s4 + $0x8] sm:$0xff]
    %v305 = vld [vmem:[%s4 + $0x10] sm:$0xff]
    %v306 = vld [vmem:[%s4 + $0x18] sm:$0xff]
    %307 = vmatprep.subr.mxu0 0.0
    %308 = vmatpush1.msra.mxu0 %v303
    %309 = vmatprep.subr.mxu0 0.0
    %310 = vmatpush1.msra.mxu0 %v304
    %311 = vmatprep.subr.mxu0 0.0
    %312 = vmatpush1.msra.mxu0 %v305
    %313 = vmatprep.subr.mxu0 0.0
    %314 = vmatpush1.msra.mxu0 %v306
    %315 = vmatprep.subr.mxu0 0.0
    %316 = vmatpush1.msra.mxu0 0.0
    %317 = vmatprep.subr.mxu0 0.0
    %318 = vmatpush1.msra.mxu0 0.0
    %319 = vmatprep.subr.mxu0 0.0
    %320 = vmatpush1.msra.mxu0 0.0
    %321 = vmatprep.subr.mxu0 0.0
    %322 = vmatpush1.msra.mxu0 0.0
    %323 = vmatprep.subr.mxu0 0.0
    %324 = vmatpush1.msra.mxu0 0.0
    %325 = vmatprep.subr.mxu0 0.0
    %326 = vmatpush1.msra.mxu0 0.0
    %327 = vmatprep.subr.mxu0 0.0
    %328 = vmatpush1.msra.mxu0 0.0
    %329 = vmatprep.subr.mxu0 0.0
    %330 = vmatpush1.msra.mxu0 0.0
    %331 = vmatprep.subr.mxu0 0.0
    %332 = vmatpush1.msra.mxu0 0.0
    %333 = vmatprep.subr.mxu0 0.0
    %334 = vmatpush1.msra.mxu0 0.0
    %335 = vmatprep.subr.mxu0 0.0
    %336 = vmatpush1.msra.mxu0 0.0
    %337 = vmatprep.subr.mxu0 0.0
    %338 = vmatpush1.msra.mxu0 0.0
    %339 = vmatprep.subr.mxu0 0.0
    %340 = vmatpush1.msra.mxu0 0.0
    %341 = vmatprep.subr.mxu0 0.0
    %342 = vmatpush1.msra.mxu0 0.0
    %343 = vmatprep.subr.mxu0 0.0
    %344 = vmatpush1.msra.mxu0 0.0
    %345 = vmatprep.subr.mxu0 0.0
    %346 = vmatpush1.msra.mxu0 0.0
    %347 = vmatprep.subr.mxu0 0.0
    %348 = vmatpush1.msra.mxu0 0.0
    %349 = vmatprep.subr.mxu0 0.0
    %350 = vmatpush1.msra.mxu0 0.0
    %351 = vmatprep.subr.mxu0 0.0
    %352 = vmatpush1.msra.mxu0 0.0
    %353 = vmatprep.subr.mxu0 0.0
    %354 = vmatpush1.msra.mxu0 0.0
    %355 = vmatprep.subr.mxu0 0.0
    %356 = vmatpush1.msra.mxu0 0.0
    %357 = vmatprep.subr.mxu0 0.0
    %358 = vmatpush1.msra.mxu0 0.0
    %359 = vmatprep.subr.mxu0 0.0
    %360 = vmatpush1.msra.mxu0 0.0
    %361 = vmatprep.subr.mxu0 0.0
    %362 = vmatpush1.msra.mxu0 0.0
    %363 = vmatprep.subr.mxu0 0.0
    %364 = vmatpush1.msra.mxu0 0.0
    %365 = vmatprep.subr.mxu0 0.0
    %366 = vmatpush1.msra.mxu0 0.0
    %367 = vmatprep.subr.mxu0 0.0
    %368 = vmatpush1.msra.mxu0 0.0
    %369 = vmatprep.subr.mxu0 0.0
    %370 = vmatpush1.msra.mxu0 0.0
    %371 = vmatprep.mubr.f32.mxu0 0.0
    %372 = vmatmul.mubr.f32.gmra.mrb[0].mxu0 %v111
    %v373 = vpop.f32.mrb[0].mxu0
    %v374 = vadd.f32 0.0, %v373
    %v375 = vpop.f32.mrb[0].mxu0
    %376 = vmatprep.mubr.f32.mxu0 0.0
    %377 = vmatmul.mubr.f32.gmra.mrb[0].mxu0 %v114
    %v378 = vpop.f32.mrb[0].mxu0
    %v379 = vadd.f32 0.0, %v378
    %v380 = vpop.f32.mrb[0].mxu0
    %381 = vmatprep.mubr.f32.mxu0 0.0
    %382 = vmatmul.mubr.f32.gmra.mrb[0].mxu0 %v117
    %v383 = vpop.f32.mrb[0].mxu0
    %v384 = vadd.f32 0.0, %v383
    %v385 = vpop.f32.mrb[0].mxu0
    %386 = vmatprep.mubr.f32.mxu0 0.0
    %387 = vmatmul.mubr.f32.gmra.mrb[0].mxu0 %v120
    %v388 = vpop.f32.mrb[0].mxu0
    %v389 = vadd.f32 0.0, %v388
    %v390 = vpop.f32.mrb[0].mxu0
    %391 = vmatprep.mubr.f32.mxu0 0.0
    %392 = vmatmul.mubr.f32.gmra.mrb[0].mxu0 %v123
    %v393 = vpop.f32.mrb[0].mxu0
    %v394 = vadd.f32 0.0, %v393
    %v395 = vpop.f32.mrb[0].mxu0
    %396 = vmatprep.mubr.f32.mxu0 0.0
    %397 = vmatmul.mubr.f32.gmra.mrb[0].mxu0 %v126
    %v398 = vpop.f32.mrb[0].mxu0
    %v399 = vadd.f32 0.0, %v398
    %v400 = vpop.f32.mrb[0].mxu0
    %401 = vmatprep.mubr.f32.mxu0 0.0
    %402 = vmatmul.mubr.f32.gmra.mrb[0].mxu0 %v129
    %v403 = vpop.f32.mrb[0].mxu0
    %v404 = vadd.f32 0.0, %v403
    %v405 = vpop.f32.mrb[0].mxu0
    %406 = vmatprep.mubr.f32.mxu0 0.0
    %407 = vmatmul.mubr.f32.gmra.mrb[0].mxu0 %v132
    %v408 = vpop.f32.mrb[0].mxu0
    %v409 = vadd.f32 0.0, %v408
    %v410 = vpop.f32.mrb[0].mxu0
    %411 = vmatprep.mubr.f32.mxu0 0.0
    %412 = vmatmul.mubr.f32.gmra.mrb[0].mxu0 %v135
    %v413 = vpop.f32.mrb[0].mxu0
    %v414 = vadd.f32 0.0, %v413
    %v415 = vpop.f32.mrb[0].mxu0
    %416 = vmatprep.mubr.f32.mxu0 0.0
    %417 = vmatmul.mubr.f32.gmra.mrb[0].mxu0 %v138
    %v418 = vpop.f32.mrb[0].mxu0
    %v419 = vadd.f32 0.0, %v418
    %v420 = vpop.f32.mrb[0].mxu0
    %421 = vmatprep.mubr.f32.mxu0 0.0
    %422 = vmatmul.mubr.f32.gmra.mrb[0].mxu0 %v141
    %v423 = vpop.f32.mrb[0].mxu0
    %v424 = vadd.f32 0.0, %v423
    %v425 = vpop.f32.mrb[0].mxu0
    %426 = vmatprep.mubr.f32.mxu0 0.0
    %427 = vmatmul.mubr.f32.gmra.mrb[0].mxu0 %v144
    %v428 = vpop.f32.mrb[0].mxu0
    %v429 = vadd.f32 0.0, %v428
    %v430 = vpop.f32.mrb[0].mxu0
    %431 = vmatprep.mubr.f32.mxu0 0.0
    %432 = vmatmul.mubr.f32.gmra.mrb[0].mxu0 %v147
    %v433 = vpop.f32.mrb[0].mxu0
    %v434 = vadd.f32 0.0, %v433
    %v435 = vpop.f32.mrb[0].mxu0
    %436 = vmatprep.mubr.f32.mxu0 0.0
    %437 = vmatmul.mubr.f32.gmra.mrb[0].mxu0 %v150
    %v438 = vpop.f32.mrb[0].mxu0
    %v439 = vadd.f32 0.0, %v438
    %v440 = vpop.f32.mrb[0].mxu0
    %441 = vmatprep.mubr.f32.mxu0 0.0
    %442 = vmatmul.mubr.f32.gmra.mrb[0].mxu0 %v153
    %v443 = vpop.f32.mrb[0].mxu0
    %v444 = vadd.f32 0.0, %v443
    %v445 = vpop.f32.mrb[0].mxu0
    %446 = vmatprep.mubr.f32.mxu0 0.0
    %447 = vmatmul.mubr.f32.gmra.mrb[0].mxu0 %v156
    %v448 = vpop.f32.mrb[0].mxu0
    %v449 = vadd.f32 0.0, %v448
    %v450 = vpop.f32.mrb[0].mxu0
    %451 = vdwg.mxu0
    %v453 = vsel %vm109, %v89, 0
    %v456 = vsel %vm109, %v90, 0
    %v459 = vsel %vm109, %v91, 0
    %v462 = vsel %vm109, %v92, 0
    %v465 = vsel %vm109, %v93, 0
    %v468 = vsel %vm109, %v94, 0
    %v471 = vsel %vm109, %v95, 0
    %v474 = vsel %vm109, %v96, 0
    %v477 = vsel %vm109, %v97, 0
    %v480 = vsel %vm109, %v98, 0
    %v483 = vsel %vm109, %v99, 0
    %v486 = vsel %vm109, %v100, 0
    %v489 = vsel %vm109, %v101, 0
    %v492 = vsel %vm109, %v102, 0
    %v495 = vsel %vm109, %v103, 0
    %v498 = vsel %vm109, %v104, 0
    %500 = vmatprep.subr.mxu0 0.0
    %501 = vmatpush1.msra.mxu0 %v105
    %502 = vmatprep.subr.mxu0 0.0
    %503 = vmatpush1.msra.mxu0 %v106
    %504 = vmatprep.subr.mxu0 0.0
    %505 = vmatpush1.msra.mxu0 %v107
    %506 = vmatprep.subr.mxu0 0.0
    %507 = vmatpush1.msra.mxu0 %v108
    %508 = vmatprep.subr.mxu0 0.0
    %509 = vmatpush1.msra.mxu0 0.0
    %510 = vmatprep.subr.mxu0 0.0
    %511 = vmatpush1.msra.mxu0 0.0
    %512 = vmatprep.subr.mxu0 0.0
    %513 = vmatpush1.msra.mxu0 0.0
    %514 = vmatprep.subr.mxu0 0.0
    %515 = vmatpush1.msra.mxu0 0.0
    %516 = vmatprep.subr.mxu0 0.0
    %517 = vmatpush1.msra.mxu0 0.0
    %518 = vmatprep.subr.mxu0 0.0
    %519 = vmatpush1.msra.mxu0 0.0
    %520 = vmatprep.subr.mxu0 0.0
    %521 = vmatpush1.msra.mxu0 0.0
    %522 = vmatprep.subr.mxu0 0.0
    %523 = vmatpush1.msra.mxu0 0.0
    %524 = vmatprep.subr.mxu0 0.0
    %525 = vmatpush1.msra.mxu0 0.0
    %526 = vmatprep.subr.mxu0 0.0
    %527 = vmatpush1.msra.mxu0 0.0
    %528 = vmatprep.subr.mxu0 0.0
    %529 = vmatpush1.msra.mxu0 0.0
    %530 = vmatprep.subr.mxu0 0.0
    %531 = vmatpush1.msra.mxu0 0.0
    %532 = vmatprep.subr.mxu0 0.0
    %533 = vmatpush1.msra.mxu0 0.0
    %534 = vmatprep.subr.mxu0 0.0
    %535 = vmatpush1.msra.mxu0 0.0
    %536 = vmatprep.subr.mxu0 0.0
    %537 = vmatpush1.msra.mxu0 0.0
    %538 = vmatprep.subr.mxu0 0.0
    %539 = vmatpush1.msra.mxu0 0.0
    %540 = vmatprep.subr.mxu0 0.0
    %541 = vmatpush1.msra.mxu0 0.0
    %542 = vmatprep.subr.mxu0 0.0
    %543 = vmatpush1.msra.mxu0 0.0
    %544 = vmatprep.subr.mxu0 0.0
    %545 = vmatpush1.msra.mxu0 0.0
    %546 = vmatprep.subr.mxu0 0.0
    %547 = vmatpush1.msra.mxu0 0.0
    %548 = vmatprep.subr.mxu0 0.0
    %549 = vmatpush1.msra.mxu0 0.0
    %550 = vmatprep.subr.mxu0 0.0
    %551 = vmatpush1.msra.mxu0 0.0
    %552 = vmatprep.subr.mxu0 0.0
    %553 = vmatpush1.msra.mxu0 0.0
    %554 = vmatprep.subr.mxu0 0.0
    %555 = vmatpush1.msra.mxu0 0.0
    %556 = vmatprep.subr.mxu0 0.0
    %557 = vmatpush1.msra.mxu0 0.0
    %558 = vmatprep.subr.mxu0 0.0
    %559 = vmatpush1.msra.mxu0 0.0
    %560 = vmatprep.subr.mxu0 0.0
    %561 = vmatpush1.msra.mxu0 0.0
    %562 = vmatprep.subr.mxu0 0.0
    %563 = vmatpush1.msra.mxu0 0.0
    %564 = vmatprep.mubr.f32.mxu0 0.0
    %565 = vmatmul.mubr.f32.gmra.mrb[0].mxu0 %v453
    %v566 = vpop.f32.mrb[0].mxu0
    %v567 = vadd.f32 0.0, %v566
    %v568 = vpop.f32.mrb[0].mxu0
    %569 = vmatprep.mubr.f32.mxu0 0.0
    %570 = vmatmul.mubr.f32.gmra.mrb[0].mxu0 %v456
    %v571 = vpop.f32.mrb[0].mxu0
    %v572 = vadd.f32 0.0, %v571
    %v573 = vpop.f32.mrb[0].mxu0
    %574 = vmatprep.mubr.f32.mxu0 0.0
    %575 = vmatmul.mubr.f32.gmra.mrb[0].mxu0 %v459
    %v576 = vpop.f32.mrb[0].mxu0
    %v577 = vadd.f32 0.0, %v576
    %v578 = vpop.f32.mrb[0].mxu0
    %579 = vmatprep.mubr.f32.mxu0 0.0
    %580 = vmatmul.mubr.f32.gmra.mrb[0].mxu0 %v462
    %v581 = vpop.f32.mrb[0].mxu0
    %v582 = vadd.f32 0.0, %v581
    %v583 = vpop.f32.mrb[0].mxu0
    %584 = vmatprep.mubr.f32.mxu0 0.0
    %585 = vmatmul.mubr.f32.gmra.mrb[0].mxu0 %v465
    %v586 = vpop.f32.mrb[0].mxu0
    %v587 = vadd.f32 0.0, %v586
    %v588 = vpop.f32.mrb[0].mxu0
    %589 = vmatprep.mubr.f32.mxu0 0.0
    %590 = vmatmul.mubr.f32.gmra.mrb[0].mxu0 %v468
    %v591 = vpop.f32.mrb[0].mxu0
    %v592 = vadd.f32 0.0, %v591
    %v593 = vpop.f32.mrb[0].mxu0
    %594 = vmatprep.mubr.f32.mxu0 0.0
    %595 = vmatmul.mubr.f32.gmra.mrb[0].mxu0 %v471
    %v596 = vpop.f32.mrb[0].mxu0
    %v597 = vadd.f32 0.0, %v596
    %v598 = vpop.f32.mrb[0].mxu0
    %599 = vmatprep.mubr.f32.mxu0 0.0
    %600 = vmatmul.mubr.f32.gmra.mrb[0].mxu0 %v474
    %v601 = vpop.f32.mrb[0].mxu0
    %v602 = vadd.f32 0.0, %v601
    %v603 = vpop.f32.mrb[0].mxu0
    %604 = vmatprep.mubr.f32.mxu0 0.0
    %605 = vmatmul.mubr.f32.gmra.mrb[0].mxu0 %v477
    %v606 = vpop.f32.mrb[0].mxu0
    %v607 = vadd.f32 0.0, %v606
    %v608 = vpop.f32.mrb[0].mxu0
    %609 = vmatprep.mubr.f32.mxu0 0.0
    %610 = vmatmul.mubr.f32.gmra.mrb[0].mxu0 %v480
    %v611 = vpop.f32.mrb[0].mxu0
    %v612 = vadd.f32 0.0, %v611
    %v613 = vpop.f32.mrb[0].mxu0
    %614 = vmatprep.mubr.f32.mxu0 0.0
    %615 = vmatmul.mubr.f32.gmra.mrb[0].mxu0 %v483
    %v616 = vpop.f32.mrb[0].mxu0
    %v617 = vadd.f32 0.0, %v616
    %v618 = vpop.f32.mrb[0].mxu0
    %619 = vmatprep.mubr.f32.mxu0 0.0
    %620 = vmatmul.mubr.f32.gmra.mrb[0].mxu0 %v486
    %v621 = vpop.f32.mrb[0].mxu0
    %v622 = vadd.f32 0.0, %v621
    %v623 = vpop.f32.mrb[0].mxu0
    %624 = vmatprep.mubr.f32.mxu0 0.0
    %625 = vmatmul.mubr.f32.gmra.mrb[0].mxu0 %v489
    %v626 = vpop.f32.mrb[0].mxu0
    %v627 = vadd.f32 0.0, %v626
    %v628 = vpop.f32.mrb[0].mxu0
    %629 = vmatprep.mubr.f32.mxu0 0.0
    %630 = vmatmul.mubr.f32.gmra.mrb[0].mxu0 %v492
    %v631 = vpop.f32.mrb[0].mxu0
    %v632 = vadd.f32 0.0, %v631
    %v633 = vpop.f32.mrb[0].mxu0
    %634 = vmatprep.mubr.f32.mxu0 0.0
    %635 = vmatmul.mubr.f32.gmra.mrb[0].mxu0 %v495
    %v636 = vpop.f32.mrb[0].mxu0
    %v637 = vadd.f32 0.0, %v636
    %v638 = vpop.f32.mrb[0].mxu0
    %639 = vmatprep.mubr.f32.mxu0 0.0
    %640 = vmatmul.mubr.f32.gmra.mrb[0].mxu0 %v498
    %v641 = vpop.f32.mrb[0].mxu0
    %v642 = vadd.f32 0.0, %v641
    %v643 = vpop.f32.mrb[0].mxu0
    %644 = vdwg.mxu0
    %645 = vmatprep.subr.mxu0 0.0
    %646 = vmatpush1.msra.mxu0 %v303
    %647 = vmatprep.subr.mxu0 0.0
    %648 = vmatpush1.msra.mxu0 %v304
    %649 = vmatprep.subr.mxu0 0.0
    %650 = vmatpush1.msra.mxu0 %v305
    %651 = vmatprep.subr.mxu0 0.0
    %652 = vmatpush1.msra.mxu0 %v306
    %653 = vmatprep.subr.mxu0 0.0
    %654 = vmatpush1.msra.mxu0 0.0
    %655 = vmatprep.subr.mxu0 0.0
    %656 = vmatpush1.msra.mxu0 0.0
    %657 = vmatprep.subr.mxu0 0.0
    %658 = vmatpush1.msra.mxu0 0.0
    %659 = vmatprep.subr.mxu0 0.0
    %660 = vmatpush1.msra.mxu0 0.0
    %661 = vmatprep.subr.mxu0 0.0
    %662 = vmatpush1.msra.mxu0 0.0
    %663 = vmatprep.subr.mxu0 0.0
    %664 = vmatpush1.msra.mxu0 0.0
    %665 = vmatprep.subr.mxu0 0.0
    %666 = vmatpush1.msra.mxu0 0.0
    %667 = vmatprep.subr.mxu0 0.0
    %668 = vmatpush1.msra.mxu0 0.0
    %669 = vmatprep.subr.mxu0 0.0
    %670 = vmatpush1.msra.mxu0 0.0
    %671 = vmatprep.subr.mxu0 0.0
    %672 = vmatpush1.msra.mxu0 0.0
    %673 = vmatprep.subr.mxu0 0.0
    %674 = vmatpush1.msra.mxu0 0.0
    %675 = vmatprep.subr.mxu0 0.0
    %676 = vmatpush1.msra.mxu0 0.0
    %677 = vmatprep.subr.mxu0 0.0
    %678 = vmatpush1.msra.mxu0 0.0
    %679 = vmatprep.subr.mxu0 0.0
    %680 = vmatpush1.msra.mxu0 0.0
    %681 = vmatprep.subr.mxu0 0.0
    %682 = vmatpush1.msra.mxu0 0.0
    %683 = vmatprep.subr.mxu0 0.0
    %684 = vmatpush1.msra.mxu0 0.0
    %685 = vmatprep.subr.mxu0 0.0
    %686 = vmatpush1.msra.mxu0 0.0
    %687 = vmatprep.subr.mxu0 0.0
    %688 = vmatpush1.msra.mxu0 0.0
    %689 = vmatprep.subr.mxu0 0.0
    %690 = vmatpush1.msra.mxu0 0.0
    %691 = vmatprep.subr.mxu0 0.0
    %692 = vmatpush1.msra.mxu0 0.0
    %693 = vmatprep.subr.mxu0 0.0
    %694 = vmatpush1.msra.mxu0 0.0
    %695 = vmatprep.subr.mxu0 0.0
    %696 = vmatpush1.msra.mxu0 0.0
    %697 = vmatprep.subr.mxu0 0.0
    %698 = vmatpush1.msra.mxu0 0.0
    %699 = vmatprep.subr.mxu0 0.0
    %700 = vmatpush1.msra.mxu0 0.0
    %701 = vmatprep.subr.mxu0 0.0
    %702 = vmatpush1.msra.mxu0 0.0
    %703 = vmatprep.subr.mxu0 0.0
    %704 = vmatpush1.msra.mxu0 0.0
    %705 = vmatprep.subr.mxu0 0.0
    %706 = vmatpush1.msra.mxu0 0.0
    %707 = vmatprep.subr.mxu0 0.0
    %708 = vmatpush1.msra.mxu0 0.0
    %709 = vmatprep.mubr.f32.mxu0 0.0
    %710 = vmatmul.mubr.f32.gmra.mrb[0].mxu0 %v453
    %v711 = vpop.f32.mrb[0].mxu0
    %v712 = vadd.f32 0.0, %v711
    %v713 = vpop.f32.mrb[0].mxu0
    %714 = vmatprep.mubr.f32.mxu0 0.0
    %715 = vmatmul.mubr.f32.gmra.mrb[0].mxu0 %v456
    %v716 = vpop.f32.mrb[0].mxu0
    %v717 = vadd.f32 0.0, %v716
    %v718 = vpop.f32.mrb[0].mxu0
    %719 = vmatprep.mubr.f32.mxu0 0.0
    %720 = vmatmul.mubr.f32.gmra.mrb[0].mxu0 %v459
    %v721 = vpop.f32.mrb[0].mxu0
    %v722 = vadd.f32 0.0, %v721
    %v723 = vpop.f32.mrb[0].mxu0
    %724 = vmatprep.mubr.f32.mxu0 0.0
    %725 = vmatmul.mubr.f32.gmra.mrb[0].mxu0 %v462
    %v726 = vpop.f32.mrb[0].mxu0
    %v727 = vadd.f32 0.0, %v726
    %v728 = vpop.f32.mrb[0].mxu0
    %729 = vmatprep.mubr.f32.mxu0 0.0
    %730 = vmatmul.mubr.f32.gmra.mrb[0].mxu0 %v465
    %v731 = vpop.f32.mrb[0].mxu0
    %v732 = vadd.f32 0.0, %v731
    %v733 = vpop.f32.mrb[0].mxu0
    %734 = vmatprep.mubr.f32.mxu0 0.0
    %735 = vmatmul.mubr.f32.gmra.mrb[0].mxu0 %v468
    %v736 = vpop.f32.mrb[0].mxu0
    %v737 = vadd.f32 0.0, %v736
    %v738 = vpop.f32.mrb[0].mxu0
    %739 = vmatprep.mubr.f32.mxu0 0.0
    %740 = vmatmul.mubr.f32.gmra.mrb[0].mxu0 %v471
    %v741 = vpop.f32.mrb[0].mxu0
    %v742 = vadd.f32 0.0, %v741
    %v743 = vpop.f32.mrb[0].mxu0
    %744 = vmatprep.mubr.f32.mxu0 0.0
    %745 = vmatmul.mubr.f32.gmra.mrb[0].mxu0 %v474
    %v746 = vpop.f32.mrb[0].mxu0
    %v747 = vadd.f32 0.0, %v746
    %v748 = vpop.f32.mrb[0].mxu0
    %749 = vmatprep.mubr.f32.mxu0 0.0
    %750 = vmatmul.mubr.f32.gmra.mrb[0].mxu0 %v477
    %v751 = vpop.f32.mrb[0].mxu0
    %v752 = vadd.f32 0.0, %v751
    %v753 = vpop.f32.mrb[0].mxu0
    %754 = vmatprep.mubr.f32.mxu0 0.0
    %755 = vmatmul.mubr.f32.gmra.mrb[0].mxu0 %v480
    %v756 = vpop.f32.mrb[0].mxu0
    %v757 = vadd.f32 0.0, %v756
    %v758 = vpop.f32.mrb[0].mxu0
    %759 = vmatprep.mubr.f32.mxu0 0.0
    %760 = vmatmul.mubr.f32.gmra.mrb[0].mxu0 %v483
    %v761 = vpop.f32.mrb[0].mxu0
    %v762 = vadd.f32 0.0, %v761
    %v763 = vpop.f32.mrb[0].mxu0
    %764 = vmatprep.mubr.f32.mxu0 0.0
    %765 = vmatmul.mubr.f32.gmra.mrb[0].mxu0 %v486
    %v766 = vpop.f32.mrb[0].mxu0
    %v767 = vadd.f32 0.0, %v766
    %v768 = vpop.f32.mrb[0].mxu0
    %769 = vmatprep.mubr.f32.mxu0 0.0
    %770 = vmatmul.mubr.f32.gmra.mrb[0].mxu0 %v489
    %v771 = vpop.f32.mrb[0].mxu0
    %v772 = vadd.f32 0.0, %v771
    %v773 = vpop.f32.mrb[0].mxu0
    %774 = vmatprep.mubr.f32.mxu0 0.0
    %775 = vmatmul.mubr.f32.gmra.mrb[0].mxu0 %v492
    %v776 = vpop.f32.mrb[0].mxu0
    %v777 = vadd.f32 0.0, %v776
    %v778 = vpop.f32.mrb[0].mxu0
    %779 = vmatprep.mubr.f32.mxu0 0.0
    %780 = vmatmul.mubr.f32.gmra.mrb[0].mxu0 %v495
    %v781 = vpop.f32.mrb[0].mxu0
    %v782 = vadd.f32 0.0, %v781
    %v783 = vpop.f32.mrb[0].mxu0
    %784 = vmatprep.mubr.f32.mxu0 0.0
    %785 = vmatmul.mubr.f32.gmra.mrb[0].mxu0 %v498
    %v786 = vpop.f32.mrb[0].mxu0
    %v787 = vadd.f32 0.0, %v786
    %v788 = vpop.f32.mrb[0].mxu0
    %789 = vdwg.mxu0
    %v790 = vmul.f32 %v225, %v225
    %v791 = vmul.f32 %v230, %v230
    %v792 = vmul.f32 %v235, %v235
    %v793 = vmul.f32 %v240, %v240
    %v794 = vmul.f32 %v245, %v245
    %v795 = vmul.f32 %v250, %v250
    %v796 = vmul.f32 %v255, %v255
    %v797 = vmul.f32 %v260, %v260
    %v798 = vmul.f32 %v265, %v265
    %v799 = vmul.f32 %v270, %v270
    %v800 = vmul.f32 %v275, %v275
    %v801 = vmul.f32 %v280, %v280
    %v802 = vmul.f32 %v285, %v285
    %v803 = vmul.f32 %v290, %v290
    %v804 = vmul.f32 %v295, %v295
    %v805 = vmul.f32 %v300, %v300
    %v806 = vmul.f32 %v374, %v374
    %v807 = vmul.f32 %v379, %v379
    %v808 = vmul.f32 %v384, %v384
    %v809 = vmul.f32 %v389, %v389
    %v810 = vmul.f32 %v394, %v394
    %v811 = vmul.f32 %v399, %v399
    %v812 = vmul.f32 %v404, %v404
    %v813 = vmul.f32 %v409, %v409
    %v814 = vmul.f32 %v414, %v414
    %v815 = vmul.f32 %v419, %v419
    %v816 = vmul.f32 %v424, %v424
    %v817 = vmul.f32 %v429, %v429
    %v818 = vmul.f32 %v434, %v434
    %v819 = vmul.f32 %v439, %v439
    %v820 = vmul.f32 %v444, %v444
    %v821 = vmul.f32 %v449, %v449
    %v822 = vadd.f32 %v790, %v806
    %v823 = vadd.f32 %v791, %v807
    %v824 = vadd.f32 %v792, %v808
    %v825 = vadd.f32 %v793, %v809
    %v826 = vadd.f32 %v794, %v810
    %v827 = vadd.f32 %v795, %v811
    %v828 = vadd.f32 %v796, %v812
    %v829 = vadd.f32 %v797, %v813
    %v830 = vadd.f32 %v798, %v814
    %v831 = vadd.f32 %v799, %v815
    %v832 = vadd.f32 %v800, %v816
    %v833 = vadd.f32 %v801, %v817
    %v834 = vadd.f32 %v802, %v818
    %v835 = vadd.f32 %v803, %v819
    %v836 = vadd.f32 %v804, %v820
    %v837 = vadd.f32 %v805, %v821
    %v838 = vadd.f32 %v822, 1e-12
    %v839 = vadd.f32 %v823, 1e-12
    %v840 = vadd.f32 %v824, 1e-12
    %v841 = vadd.f32 %v825, 1e-12
    %v842 = vadd.f32 %v826, 1e-12
    %v843 = vadd.f32 %v827, 1e-12
    %v844 = vadd.f32 %v828, 1e-12
    %v845 = vadd.f32 %v829, 1e-12
    %v846 = vadd.f32 %v830, 1e-12
    %v847 = vadd.f32 %v831, 1e-12
    %v848 = vadd.f32 %v832, 1e-12
    %v849 = vadd.f32 %v833, 1e-12
    %v850 = vadd.f32 %v834, 1e-12
    %v851 = vadd.f32 %v835, 1e-12
    %v852 = vadd.f32 %v836, 1e-12
    %v853 = vadd.f32 %v837, 1e-12
    %v854 = vrsqrt.pop %v838
    %v855 = vmul.f32 %v838, %v854
    %vm856 = vcmp.eq.f32.partialorder %v838, inf
    %v857 = vsel %vm856, %v838, %v855
    %vm858 = vcmp.eq.f32.partialorder %v838, 0.0
    %v859 = vand.u32 %v838, 2147483648
    %v860 = vsel %vm858, %v859, %v857
    %v861 = vrsqrt.pop %v839
    %v862 = vmul.f32 %v839, %v861
    %vm863 = vcmp.eq.f32.partialorder %v839, inf
    %v864 = vsel %vm863, %v839, %v862
    %vm865 = vcmp.eq.f32.partialorder %v839, 0.0
    %v866 = vand.u32 %v839, 2147483648
    %v867 = vsel %vm865, %v866, %v864
    %v868 = vrsqrt.pop %v840
    %v869 = vmul.f32 %v840, %v868
    %vm870 = vcmp.eq.f32.partialorder %v840, inf
    %v871 = vsel %vm870, %v840, %v869
    %vm872 = vcmp.eq.f32.partialorder %v840, 0.0
    %v873 = vand.u32 %v840, 2147483648
    %v874 = vsel %vm872, %v873, %v871
    %v875 = vrsqrt.pop %v841
    %v876 = vmul.f32 %v841, %v875
    %vm877 = vcmp.eq.f32.partialorder %v841, inf
    %v878 = vsel %vm877, %v841, %v876
    %vm879 = vcmp.eq.f32.partialorder %v841, 0.0
    %v880 = vand.u32 %v841, 2147483648
    %v881 = vsel %vm879, %v880, %v878
    %v882 = vrsqrt.pop %v842
    %v883 = vmul.f32 %v842, %v882
    %vm884 = vcmp.eq.f32.partialorder %v842, inf
    %v885 = vsel %vm884, %v842, %v883
    %vm886 = vcmp.eq.f32.partialorder %v842, 0.0
    %v887 = vand.u32 %v842, 2147483648
    %v888 = vsel %vm886, %v887, %v885
    %v889 = vrsqrt.pop %v843
    %v890 = vmul.f32 %v843, %v889
    %vm891 = vcmp.eq.f32.partialorder %v843, inf
    %v892 = vsel %vm891, %v843, %v890
    %vm893 = vcmp.eq.f32.partialorder %v843, 0.0
    %v894 = vand.u32 %v843, 2147483648
    %v895 = vsel %vm893, %v894, %v892
    %v896 = vrsqrt.pop %v844
    %v897 = vmul.f32 %v844, %v896
    %vm898 = vcmp.eq.f32.partialorder %v844, inf
    %v899 = vsel %vm898, %v844, %v897
    %vm900 = vcmp.eq.f32.partialorder %v844, 0.0
    %v901 = vand.u32 %v844, 2147483648
    %v902 = vsel %vm900, %v901, %v899
    %v903 = vrsqrt.pop %v845
    %v904 = vmul.f32 %v845, %v903
    %vm905 = vcmp.eq.f32.partialorder %v845, inf
    %v906 = vsel %vm905, %v845, %v904
    %vm907 = vcmp.eq.f32.partialorder %v845, 0.0
    %v908 = vand.u32 %v845, 2147483648
    %v909 = vsel %vm907, %v908, %v906
    %v910 = vrsqrt.pop %v846
    %v911 = vmul.f32 %v846, %v910
    %vm912 = vcmp.eq.f32.partialorder %v846, inf
    %v913 = vsel %vm912, %v846, %v911
    %vm914 = vcmp.eq.f32.partialorder %v846, 0.0
    %v915 = vand.u32 %v846, 2147483648
    %v916 = vsel %vm914, %v915, %v913
    %v917 = vrsqrt.pop %v847
    %v918 = vmul.f32 %v847, %v917
    %vm919 = vcmp.eq.f32.partialorder %v847, inf
    %v920 = vsel %vm919, %v847, %v918
    %vm921 = vcmp.eq.f32.partialorder %v847, 0.0
    %v922 = vand.u32 %v847, 2147483648
    %v923 = vsel %vm921, %v922, %v920
    %v924 = vrsqrt.pop %v848
    %v925 = vmul.f32 %v848, %v924
    %vm926 = vcmp.eq.f32.partialorder %v848, inf
    %v927 = vsel %vm926, %v848, %v925
    %vm928 = vcmp.eq.f32.partialorder %v848, 0.0
    %v929 = vand.u32 %v848, 2147483648
    %v930 = vsel %vm928, %v929, %v927
    %v931 = vrsqrt.pop %v849
    %v932 = vmul.f32 %v849, %v931
    %vm933 = vcmp.eq.f32.partialorder %v849, inf
    %v934 = vsel %vm933, %v849, %v932
    %vm935 = vcmp.eq.f32.partialorder %v849, 0.0
    %v936 = vand.u32 %v849, 2147483648
    %v937 = vsel %vm935, %v936, %v934
    %v938 = vrsqrt.pop %v850
    %v939 = vmul.f32 %v850, %v938
    %vm940 = vcmp.eq.f32.partialorder %v850, inf
    %v941 = vsel %vm940, %v850, %v939
    %vm942 = vcmp.eq.f32.partialorder %v850, 0.0
    %v943 = vand.u32 %v850, 2147483648
    %v944 = vsel %vm942, %v943, %v941
    %v945 = vrsqrt.pop %v851
    %v946 = vmul.f32 %v851, %v945
    %vm947 = vcmp.eq.f32.partialorder %v851, inf
    %v948 = vsel %vm947, %v851, %v946
    %vm949 = vcmp.eq.f32.partialorder %v851, 0.0
    %v950 = vand.u32 %v851, 2147483648
    %v951 = vsel %vm949, %v950, %v948
    %v952 = vrsqrt.pop %v852
    %v953 = vmul.f32 %v852, %v952
    %vm954 = vcmp.eq.f32.partialorder %v852, inf
    %v955 = vsel %vm954, %v852, %v953
    %vm956 = vcmp.eq.f32.partialorder %v852, 0.0
    %v957 = vand.u32 %v852, 2147483648
    %v958 = vsel %vm956, %v957, %v955
    %v959 = vrsqrt.pop %v853
    %v960 = vmul.f32 %v853, %v959
    %vm961 = vcmp.eq.f32.partialorder %v853, inf
    %v962 = vsel %vm961, %v853, %v960
    %vm963 = vcmp.eq.f32.partialorder %v853, 0.0
    %v964 = vand.u32 %v853, 2147483648
    %v965 = vsel %vm963, %v964, %v962
    %v966 = vmul.f32 %v567, %v567
    %v967 = vmul.f32 %v572, %v572
    %v968 = vmul.f32 %v577, %v577
    %v969 = vmul.f32 %v582, %v582
    %v970 = vmul.f32 %v587, %v587
    %v971 = vmul.f32 %v592, %v592
    %v972 = vmul.f32 %v597, %v597
    %v973 = vmul.f32 %v602, %v602
    %v974 = vmul.f32 %v607, %v607
    %v975 = vmul.f32 %v612, %v612
    %v976 = vmul.f32 %v617, %v617
    %v977 = vmul.f32 %v622, %v622
    %v978 = vmul.f32 %v627, %v627
    %v979 = vmul.f32 %v632, %v632
    %v980 = vmul.f32 %v637, %v637
    %v981 = vmul.f32 %v642, %v642
    %v982 = vmul.f32 %v712, %v712
    %v983 = vmul.f32 %v717, %v717
    %v984 = vmul.f32 %v722, %v722
    %v985 = vmul.f32 %v727, %v727
    %v986 = vmul.f32 %v732, %v732
    %v987 = vmul.f32 %v737, %v737
    %v988 = vmul.f32 %v742, %v742
    %v989 = vmul.f32 %v747, %v747
    %v990 = vmul.f32 %v752, %v752
    %v991 = vmul.f32 %v757, %v757
    %v992 = vmul.f32 %v762, %v762
    %v993 = vmul.f32 %v767, %v767
    %v994 = vmul.f32 %v772, %v772
    %v995 = vmul.f32 %v777, %v777
    %v996 = vmul.f32 %v782, %v782
    %v997 = vmul.f32 %v787, %v787
    %v998 = vadd.f32 %v966, %v982
    %v999 = vadd.f32 %v967, %v983
    %v1000 = vadd.f32 %v968, %v984
    %v1001 = vadd.f32 %v969, %v985
    %v1002 = vadd.f32 %v970, %v986
    %v1003 = vadd.f32 %v971, %v987
    %v1004 = vadd.f32 %v972, %v988
    %v1005 = vadd.f32 %v973, %v989
    %v1006 = vadd.f32 %v974, %v990
    %v1007 = vadd.f32 %v975, %v991
    %v1008 = vadd.f32 %v976, %v992
    %v1009 = vadd.f32 %v977, %v993
    %v1010 = vadd.f32 %v978, %v994
    %v1011 = vadd.f32 %v979, %v995
    %v1012 = vadd.f32 %v980, %v996
    %v1013 = vadd.f32 %v981, %v997
    %v1014 = vadd.f32 %v998, 1e-12
    %v1015 = vadd.f32 %v999, 1e-12
    %v1016 = vadd.f32 %v1000, 1e-12
    %v1017 = vadd.f32 %v1001, 1e-12
    %v1018 = vadd.f32 %v1002, 1e-12
    %v1019 = vadd.f32 %v1003, 1e-12
    %v1020 = vadd.f32 %v1004, 1e-12
    %v1021 = vadd.f32 %v1005, 1e-12
    %v1022 = vadd.f32 %v1006, 1e-12
    %v1023 = vadd.f32 %v1007, 1e-12
    %v1024 = vadd.f32 %v1008, 1e-12
    %v1025 = vadd.f32 %v1009, 1e-12
    %v1026 = vadd.f32 %v1010, 1e-12
    %v1027 = vadd.f32 %v1011, 1e-12
    %v1028 = vadd.f32 %v1012, 1e-12
    %v1029 = vadd.f32 %v1013, 1e-12
    %v1030 = vrsqrt.pop %v1014
    %v1031 = vmul.f32 %v1014, %v1030
    %vm1032 = vcmp.eq.f32.partialorder %v1014, inf
    %v1033 = vsel %vm1032, %v1014, %v1031
    %vm1034 = vcmp.eq.f32.partialorder %v1014, 0.0
    %v1035 = vand.u32 %v1014, 2147483648
    %v1036 = vsel %vm1034, %v1035, %v1033
    %v1037 = vrsqrt.pop %v1015
    %v1038 = vmul.f32 %v1015, %v1037
    %vm1039 = vcmp.eq.f32.partialorder %v1015, inf
    %v1040 = vsel %vm1039, %v1015, %v1038
    %vm1041 = vcmp.eq.f32.partialorder %v1015, 0.0
    %v1042 = vand.u32 %v1015, 2147483648
    %v1043 = vsel %vm1041, %v1042, %v1040
    %v1044 = vrsqrt.pop %v1016
    %v1045 = vmul.f32 %v1016, %v1044
    %vm1046 = vcmp.eq.f32.partialorder %v1016, inf
    %v1047 = vsel %vm1046, %v1016, %v1045
    %vm1048 = vcmp.eq.f32.partialorder %v1016, 0.0
    %v1049 = vand.u32 %v1016, 2147483648
    %v1050 = vsel %vm1048, %v1049, %v1047
    %v1051 = vrsqrt.pop %v1017
    %v1052 = vmul.f32 %v1017, %v1051
    %vm1053 = vcmp.eq.f32.partialorder %v1017, inf
    %v1054 = vsel %vm1053, %v1017, %v1052
    %vm1055 = vcmp.eq.f32.partialorder %v1017, 0.0
    %v1056 = vand.u32 %v1017, 2147483648
    %v1057 = vsel %vm1055, %v1056, %v1054
    %v1058 = vrsqrt.pop %v1018
    %v1059 = vmul.f32 %v1018, %v1058
    %vm1060 = vcmp.eq.f32.partialorder %v1018, inf
    %v1061 = vsel %vm1060, %v1018, %v1059
    %vm1062 = vcmp.eq.f32.partialorder %v1018, 0.0
    %v1063 = vand.u32 %v1018, 2147483648
    %v1064 = vsel %vm1062, %v1063, %v1061
    %v1065 = vrsqrt.pop %v1019
    %v1066 = vmul.f32 %v1019, %v1065
    %vm1067 = vcmp.eq.f32.partialorder %v1019, inf
    %v1068 = vsel %vm1067, %v1019, %v1066
    %vm1069 = vcmp.eq.f32.partialorder %v1019, 0.0
    %v1070 = vand.u32 %v1019, 2147483648
    %v1071 = vsel %vm1069, %v1070, %v1068
    %v1072 = vrsqrt.pop %v1020
    %v1073 = vmul.f32 %v1020, %v1072
    %vm1074 = vcmp.eq.f32.partialorder %v1020, inf
    %v1075 = vsel %vm1074, %v1020, %v1073
    %vm1076 = vcmp.eq.f32.partialorder %v1020, 0.0
    %v1077 = vand.u32 %v1020, 2147483648
    %v1078 = vsel %vm1076, %v1077, %v1075
    %v1079 = vrsqrt.pop %v1021
    %v1080 = vmul.f32 %v1021, %v1079
    %vm1081 = vcmp.eq.f32.partialorder %v1021, inf
    %v1082 = vsel %vm1081, %v1021, %v1080
    %vm1083 = vcmp.eq.f32.partialorder %v1021, 0.0
    %v1084 = vand.u32 %v1021, 2147483648
    %v1085 = vsel %vm1083, %v1084, %v1082
    %v1086 = vrsqrt.pop %v1022
    %v1087 = vmul.f32 %v1022, %v1086
    %vm1088 = vcmp.eq.f32.partialorder %v1022, inf
    %v1089 = vsel %vm1088, %v1022, %v1087
    %vm1090 = vcmp.eq.f32.partialorder %v1022, 0.0
    %v1091 = vand.u32 %v1022, 2147483648
    %v1092 = vsel %vm1090, %v1091, %v1089
    %v1093 = vrsqrt.pop %v1023
    %v1094 = vmul.f32 %v1023, %v1093
    %vm1095 = vcmp.eq.f32.partialorder %v1023, inf
    %v1096 = vsel %vm1095, %v1023, %v1094
    %vm1097 = vcmp.eq.f32.partialorder %v1023, 0.0
    %v1098 = vand.u32 %v1023, 2147483648
    %v1099 = vsel %vm1097, %v1098, %v1096
    %v1100 = vrsqrt.pop %v1024
    %v1101 = vmul.f32 %v1024, %v1100
    %vm1102 = vcmp.eq.f32.partialorder %v1024, inf
    %v1103 = vsel %vm1102, %v1024, %v1101
    %vm1104 = vcmp.eq.f32.partialorder %v1024, 0.0
    %v1105 = vand.u32 %v1024, 2147483648
    %v1106 = vsel %vm1104, %v1105, %v1103
    %v1107 = vrsqrt.pop %v1025
    %v1108 = vmul.f32 %v1025, %v1107
    %vm1109 = vcmp.eq.f32.partialorder %v1025, inf
    %v1110 = vsel %vm1109, %v1025, %v1108
    %vm1111 = vcmp.eq.f32.partialorder %v1025, 0.0
    %v1112 = vand.u32 %v1025, 2147483648
    %v1113 = vsel %vm1111, %v1112, %v1110
    %v1114 = vrsqrt.pop %v1026
    %v1115 = vmul.f32 %v1026, %v1114
    %vm1116 = vcmp.eq.f32.partialorder %v1026, inf
    %v1117 = vsel %vm1116, %v1026, %v1115
    %vm1118 = vcmp.eq.f32.partialorder %v1026, 0.0
    %v1119 = vand.u32 %v1026, 2147483648
    %v1120 = vsel %vm1118, %v1119, %v1117
    %v1121 = vrsqrt.pop %v1027
    %v1122 = vmul.f32 %v1027, %v1121
    %vm1123 = vcmp.eq.f32.partialorder %v1027, inf
    %v1124 = vsel %vm1123, %v1027, %v1122
    %vm1125 = vcmp.eq.f32.partialorder %v1027, 0.0
    %v1126 = vand.u32 %v1027, 2147483648
    %v1127 = vsel %vm1125, %v1126, %v1124
    %v1128 = vrsqrt.pop %v1028
    %v1129 = vmul.f32 %v1028, %v1128
    %vm1130 = vcmp.eq.f32.partialorder %v1028, inf
    %v1131 = vsel %vm1130, %v1028, %v1129
    %vm1132 = vcmp.eq.f32.partialorder %v1028, 0.0
    %v1133 = vand.u32 %v1028, 2147483648
    %v1134 = vsel %vm1132, %v1133, %v1131
    %v1135 = vrsqrt.pop %v1029
    %v1136 = vmul.f32 %v1029, %v1135
    %vm1137 = vcmp.eq.f32.partialorder %v1029, inf
    %v1138 = vsel %vm1137, %v1029, %v1136
    %vm1139 = vcmp.eq.f32.partialorder %v1029, 0.0
    %v1140 = vand.u32 %v1029, 2147483648
    %v1141 = vsel %vm1139, %v1140, %v1138
    %v1142 = vld [vmem:[%s5] sm:$0xff]
    %v1143 = vld [vmem:[%s5 + $0x8] sm:$0xff]
    %v1144 = vld [vmem:[%s5 + $0x10] sm:$0x1]
    %vm1145 = vcmask 138240
    %v1147 = vsel %vm1145, %v860, 0
    %v1150 = vsel %vm1145, %v867, 0
    %v1153 = vsel %vm1145, %v874, 0
    %v1156 = vsel %vm1145, %v881, 0
    %v1159 = vsel %vm1145, %v888, 0
    %v1162 = vsel %vm1145, %v895, 0
    %v1165 = vsel %vm1145, %v902, 0
    %v1168 = vsel %vm1145, %v909, 0
    %v1171 = vsel %vm1145, %v916, 0
    %v1174 = vsel %vm1145, %v923, 0
    %v1177 = vsel %vm1145, %v930, 0
    %v1180 = vsel %vm1145, %v937, 0
    %v1183 = vsel %vm1145, %v944, 0
    %v1186 = vsel %vm1145, %v951, 0
    %v1189 = vsel %vm1145, %v958, 0
    %v1192 = vsel %vm1145, %v965, 0
    %vm1194 = vcmask 1040384
    %v1196 = vsel %vm1194, %v1144, 0
    %1198 = vmatprep.subr.mxu0 0.0
    %1199 = vmatpush1.msra.mxu0 %v1142
    %1200 = vmatprep.subr.mxu0 0.0
    %1201 = vmatpush1.msra.mxu0 %v1143
    %1202 = vmatprep.subr.mxu0 0.0
    %1203 = vmatpush1.msra.mxu0 %v1196
    %1204 = vmatprep.subr.mxu0 0.0
    %1205 = vmatpush1.msra.mxu0 0.0
    %1206 = vmatprep.subr.mxu0 0.0
    %1207 = vmatpush1.msra.mxu0 0.0
    %1208 = vmatprep.subr.mxu0 0.0
    %1209 = vmatpush1.msra.mxu0 0.0
    %1210 = vmatprep.subr.mxu0 0.0
    %1211 = vmatpush1.msra.mxu0 0.0
    %1212 = vmatprep.subr.mxu0 0.0
    %1213 = vmatpush1.msra.mxu0 0.0
    %1214 = vmatprep.subr.mxu0 0.0
    %1215 = vmatpush1.msra.mxu0 0.0
    %1216 = vmatprep.subr.mxu0 0.0
    %1217 = vmatpush1.msra.mxu0 0.0
    %1218 = vmatprep.subr.mxu0 0.0
    %1219 = vmatpush1.msra.mxu0 0.0
    %1220 = vmatprep.subr.mxu0 0.0
    %1221 = vmatpush1.msra.mxu0 0.0
    %1222 = vmatprep.subr.mxu0 0.0
    %1223 = vmatpush1.msra.mxu0 0.0
    %1224 = vmatprep.subr.mxu0 0.0
    %1225 = vmatpush1.msra.mxu0 0.0
    %1226 = vmatprep.subr.mxu0 0.0
    %1227 = vmatpush1.msra.mxu0 0.0
    %1228 = vmatprep.subr.mxu0 0.0
    %1229 = vmatpush1.msra.mxu0 0.0
    %1230 = vmatprep.subr.mxu0 0.0
    %1231 = vmatpush1.msra.mxu0 0.0
    %1232 = vmatprep.subr.mxu0 0.0
    %1233 = vmatpush1.msra.mxu0 0.0
    %1234 = vmatprep.subr.mxu0 0.0
    %1235 = vmatpush1.msra.mxu0 0.0
    %1236 = vmatprep.subr.mxu0 0.0
    %1237 = vmatpush1.msra.mxu0 0.0
    %1238 = vmatprep.subr.mxu0 0.0
    %1239 = vmatpush1.msra.mxu0 0.0
    %1240 = vmatprep.subr.mxu0 0.0
    %1241 = vmatpush1.msra.mxu0 0.0
    %1242 = vmatprep.subr.mxu0 0.0
    %1243 = vmatpush1.msra.mxu0 0.0
    %1244 = vmatprep.subr.mxu0 0.0
    %1245 = vmatpush1.msra.mxu0 0.0
    %1246 = vmatprep.subr.mxu0 0.0
    %1247 = vmatpush1.msra.mxu0 0.0
    %1248 = vmatprep.subr.mxu0 0.0
    %1249 = vmatpush1.msra.mxu0 0.0
    %1250 = vmatprep.subr.mxu0 0.0
    %1251 = vmatpush1.msra.mxu0 0.0
    %1252 = vmatprep.subr.mxu0 0.0
    %1253 = vmatpush1.msra.mxu0 0.0
    %1254 = vmatprep.subr.mxu0 0.0
    %1255 = vmatpush1.msra.mxu0 0.0
    %1256 = vmatprep.subr.mxu0 0.0
    %1257 = vmatpush1.msra.mxu0 0.0
    %1258 = vmatprep.subr.mxu0 0.0
    %1259 = vmatpush1.msra.mxu0 0.0
    %1260 = vmatprep.subr.mxu0 0.0
    %1261 = vmatpush1.msra.mxu0 0.0
    %1262 = vmatprep.mubr.f32.mxu0 0.0
    %1263 = vmatmul.mubr.f32.gmra.mrb[0].mxu0 %v1147
    %v1264 = vpop.f32.mrb[0].mxu0
    %v1265 = vadd.f32 0.0, %v1264
    %v1266 = vpop.f32.mrb[0].mxu0
    %1267 = vmatprep.mubr.f32.mxu0 0.0
    %1268 = vmatmul.mubr.f32.gmra.mrb[0].mxu0 %v1150
    %v1269 = vpop.f32.mrb[0].mxu0
    %v1270 = vadd.f32 0.0, %v1269
    %v1271 = vpop.f32.mrb[0].mxu0
    %1272 = vmatprep.mubr.f32.mxu0 0.0
    %1273 = vmatmul.mubr.f32.gmra.mrb[0].mxu0 %v1153
    %v1274 = vpop.f32.mrb[0].mxu0
    %v1275 = vadd.f32 0.0, %v1274
    %v1276 = vpop.f32.mrb[0].mxu0
    %1277 = vmatprep.mubr.f32.mxu0 0.0
    %1278 = vmatmul.mubr.f32.gmra.mrb[0].mxu0 %v1156
    %v1279 = vpop.f32.mrb[0].mxu0
    %v1280 = vadd.f32 0.0, %v1279
    %v1281 = vpop.f32.mrb[0].mxu0
    %1282 = vmatprep.mubr.f32.mxu0 0.0
    %1283 = vmatmul.mubr.f32.gmra.mrb[0].mxu0 %v1159
    %v1284 = vpop.f32.mrb[0].mxu0
    %v1285 = vadd.f32 0.0, %v1284
    %v1286 = vpop.f32.mrb[0].mxu0
    %1287 = vmatprep.mubr.f32.mxu0 0.0
    %1288 = vmatmul.mubr.f32.gmra.mrb[0].mxu0 %v1162
    %v1289 = vpop.f32.mrb[0].mxu0
    %v1290 = vadd.f32 0.0, %v1289
    %v1291 = vpop.f32.mrb[0].mxu0
    %1292 = vmatprep.mubr.f32.mxu0 0.0
    %1293 = vmatmul.mubr.f32.gmra.mrb[0].mxu0 %v1165
    %v1294 = vpop.f32.mrb[0].mxu0
    %v1295 = vadd.f32 0.0, %v1294
    %v1296 = vpop.f32.mrb[0].mxu0
    %1297 = vmatprep.mubr.f32.mxu0 0.0
    %1298 = vmatmul.mubr.f32.gmra.mrb[0].mxu0 %v1168
    %v1299 = vpop.f32.mrb[0].mxu0
    %v1300 = vadd.f32 0.0, %v1299
    %v1301 = vpop.f32.mrb[0].mxu0
    %1302 = vmatprep.mubr.f32.mxu0 0.0
    %1303 = vmatmul.mubr.f32.gmra.mrb[0].mxu0 %v1171
    %v1304 = vpop.f32.mrb[0].mxu0
    %v1305 = vadd.f32 0.0, %v1304
    %v1306 = vpop.f32.mrb[0].mxu0
    %1307 = vmatprep.mubr.f32.mxu0 0.0
    %1308 = vmatmul.mubr.f32.gmra.mrb[0].mxu0 %v1174
    %v1309 = vpop.f32.mrb[0].mxu0
    %v1310 = vadd.f32 0.0, %v1309
    %v1311 = vpop.f32.mrb[0].mxu0
    %1312 = vmatprep.mubr.f32.mxu0 0.0
    %1313 = vmatmul.mubr.f32.gmra.mrb[0].mxu0 %v1177
    %v1314 = vpop.f32.mrb[0].mxu0
    %v1315 = vadd.f32 0.0, %v1314
    %v1316 = vpop.f32.mrb[0].mxu0
    %1317 = vmatprep.mubr.f32.mxu0 0.0
    %1318 = vmatmul.mubr.f32.gmra.mrb[0].mxu0 %v1180
    %v1319 = vpop.f32.mrb[0].mxu0
    %v1320 = vadd.f32 0.0, %v1319
    %v1321 = vpop.f32.mrb[0].mxu0
    %1322 = vmatprep.mubr.f32.mxu0 0.0
    %1323 = vmatmul.mubr.f32.gmra.mrb[0].mxu0 %v1183
    %v1324 = vpop.f32.mrb[0].mxu0
    %v1325 = vadd.f32 0.0, %v1324
    %v1326 = vpop.f32.mrb[0].mxu0
    %1327 = vmatprep.mubr.f32.mxu0 0.0
    %1328 = vmatmul.mubr.f32.gmra.mrb[0].mxu0 %v1186
    %v1329 = vpop.f32.mrb[0].mxu0
    %v1330 = vadd.f32 0.0, %v1329
    %v1331 = vpop.f32.mrb[0].mxu0
    %1332 = vmatprep.mubr.f32.mxu0 0.0
    %1333 = vmatmul.mubr.f32.gmra.mrb[0].mxu0 %v1189
    %v1334 = vpop.f32.mrb[0].mxu0
    %v1335 = vadd.f32 0.0, %v1334
    %v1336 = vpop.f32.mrb[0].mxu0
    %1337 = vmatprep.mubr.f32.mxu0 0.0
    %1338 = vmatmul.mubr.f32.gmra.mrb[0].mxu0 %v1192
    %v1339 = vpop.f32.mrb[0].mxu0
    %v1340 = vadd.f32 0.0, %v1339
    %v1341 = vpop.f32.mrb[0].mxu0
    %1342 = vdwg.mxu0
    %v1344 = vsel %vm1145, %v1036, 0
    %v1347 = vsel %vm1145, %v1043, 0
    %v1350 = vsel %vm1145, %v1050, 0
    %v1353 = vsel %vm1145, %v1057, 0
    %v1356 = vsel %vm1145, %v1064, 0
    %v1359 = vsel %vm1145, %v1071, 0
    %v1362 = vsel %vm1145, %v1078, 0
    %v1365 = vsel %vm1145, %v1085, 0
    %v1368 = vsel %vm1145, %v1092, 0
    %v1371 = vsel %vm1145, %v1099, 0
    %v1374 = vsel %vm1145, %v1106, 0
    %v1377 = vsel %vm1145, %v1113, 0
    %v1380 = vsel %vm1145, %v1120, 0
    %v1383 = vsel %vm1145, %v1127, 0
    %v1386 = vsel %vm1145, %v1134, 0
    %v1389 = vsel %vm1145, %v1141, 0
    %1391 = vmatprep.subr.mxu0 0.0
    %1392 = vmatpush1.msra.mxu0 %v1142
    %1393 = vmatprep.subr.mxu0 0.0
    %1394 = vmatpush1.msra.mxu0 %v1143
    %1395 = vmatprep.subr.mxu0 0.0
    %1396 = vmatpush1.msra.mxu0 %v1196
    %1397 = vmatprep.subr.mxu0 0.0
    %1398 = vmatpush1.msra.mxu0 0.0
    %1399 = vmatprep.subr.mxu0 0.0
    %1400 = vmatpush1.msra.mxu0 0.0
    %1401 = vmatprep.subr.mxu0 0.0
    %1402 = vmatpush1.msra.mxu0 0.0
    %1403 = vmatprep.subr.mxu0 0.0
    %1404 = vmatpush1.msra.mxu0 0.0
    %1405 = vmatprep.subr.mxu0 0.0
    %1406 = vmatpush1.msra.mxu0 0.0
    %1407 = vmatprep.subr.mxu0 0.0
    %1408 = vmatpush1.msra.mxu0 0.0
    %1409 = vmatprep.subr.mxu0 0.0
    %1410 = vmatpush1.msra.mxu0 0.0
    %1411 = vmatprep.subr.mxu0 0.0
    %1412 = vmatpush1.msra.mxu0 0.0
    %1413 = vmatprep.subr.mxu0 0.0
    %1414 = vmatpush1.msra.mxu0 0.0
    %1415 = vmatprep.subr.mxu0 0.0
    %1416 = vmatpush1.msra.mxu0 0.0
    %1417 = vmatprep.subr.mxu0 0.0
    %1418 = vmatpush1.msra.mxu0 0.0
    %1419 = vmatprep.subr.mxu0 0.0
    %1420 = vmatpush1.msra.mxu0 0.0
    %1421 = vmatprep.subr.mxu0 0.0
    %1422 = vmatpush1.msra.mxu0 0.0
    %1423 = vmatprep.subr.mxu0 0.0
    %1424 = vmatpush1.msra.mxu0 0.0
    %1425 = vmatprep.subr.mxu0 0.0
    %1426 = vmatpush1.msra.mxu0 0.0
    %1427 = vmatprep.subr.mxu0 0.0
    %1428 = vmatpush1.msra.mxu0 0.0
    %1429 = vmatprep.subr.mxu0 0.0
    %1430 = vmatpush1.msra.mxu0 0.0
    %1431 = vmatprep.subr.mxu0 0.0
    %1432 = vmatpush1.msra.mxu0 0.0
    %1433 = vmatprep.subr.mxu0 0.0
    %1434 = vmatpush1.msra.mxu0 0.0
    %1435 = vmatprep.subr.mxu0 0.0
    %1436 = vmatpush1.msra.mxu0 0.0
    %1437 = vmatprep.subr.mxu0 0.0
    %1438 = vmatpush1.msra.mxu0 0.0
    %1439 = vmatprep.subr.mxu0 0.0
    %1440 = vmatpush1.msra.mxu0 0.0
    %1441 = vmatprep.subr.mxu0 0.0
    %1442 = vmatpush1.msra.mxu0 0.0
    %1443 = vmatprep.subr.mxu0 0.0
    %1444 = vmatpush1.msra.mxu0 0.0
    %1445 = vmatprep.subr.mxu0 0.0
    %1446 = vmatpush1.msra.mxu0 0.0
    %1447 = vmatprep.subr.mxu0 0.0
    %1448 = vmatpush1.msra.mxu0 0.0
    %1449 = vmatprep.subr.mxu0 0.0
    %1450 = vmatpush1.msra.mxu0 0.0
    %1451 = vmatprep.subr.mxu0 0.0
    %1452 = vmatpush1.msra.mxu0 0.0
    %1453 = vmatprep.subr.mxu0 0.0
    %1454 = vmatpush1.msra.mxu0 0.0
    %1455 = vmatprep.mubr.f32.mxu0 0.0
    %1456 = vmatmul.mubr.f32.gmra.mrb[0].mxu0 %v1344
    %v1457 = vpop.f32.mrb[0].mxu0
    %v1458 = vadd.f32 0.0, %v1457
    %v1459 = vpop.f32.mrb[0].mxu0
    %1460 = vmatprep.mubr.f32.mxu0 0.0
    %1461 = vmatmul.mubr.f32.gmra.mrb[0].mxu0 %v1347
    %v1462 = vpop.f32.mrb[0].mxu0
    %v1463 = vadd.f32 0.0, %v1462
    %v1464 = vpop.f32.mrb[0].mxu0
    %1465 = vmatprep.mubr.f32.mxu0 0.0
    %1466 = vmatmul.mubr.f32.gmra.mrb[0].mxu0 %v1350
    %v1467 = vpop.f32.mrb[0].mxu0
    %v1468 = vadd.f32 0.0, %v1467
    %v1469 = vpop.f32.mrb[0].mxu0
    %1470 = vmatprep.mubr.f32.mxu0 0.0
    %1471 = vmatmul.mubr.f32.gmra.mrb[0].mxu0 %v1353
    %v1472 = vpop.f32.mrb[0].mxu0
    %v1473 = vadd.f32 0.0, %v1472
    %v1474 = vpop.f32.mrb[0].mxu0
    %1475 = vmatprep.mubr.f32.mxu0 0.0
    %1476 = vmatmul.mubr.f32.gmra.mrb[0].mxu0 %v1356
    %v1477 = vpop.f32.mrb[0].mxu0
    %v1478 = vadd.f32 0.0, %v1477
    %v1479 = vpop.f32.mrb[0].mxu0
    %1480 = vmatprep.mubr.f32.mxu0 0.0
    %1481 = vmatmul.mubr.f32.gmra.mrb[0].mxu0 %v1359
    %v1482 = vpop.f32.mrb[0].mxu0
    %v1483 = vadd.f32 0.0, %v1482
    %v1484 = vpop.f32.mrb[0].mxu0
    %1485 = vmatprep.mubr.f32.mxu0 0.0
    %1486 = vmatmul.mubr.f32.gmra.mrb[0].mxu0 %v1362
    %v1487 = vpop.f32.mrb[0].mxu0
    %v1488 = vadd.f32 0.0, %v1487
    %v1489 = vpop.f32.mrb[0].mxu0
    %1490 = vmatprep.mubr.f32.mxu0 0.0
    %1491 = vmatmul.mubr.f32.gmra.mrb[0].mxu0 %v1365
    %v1492 = vpop.f32.mrb[0].mxu0
    %v1493 = vadd.f32 0.0, %v1492
    %v1494 = vpop.f32.mrb[0].mxu0
    %1495 = vmatprep.mubr.f32.mxu0 0.0
    %1496 = vmatmul.mubr.f32.gmra.mrb[0].mxu0 %v1368
    %v1497 = vpop.f32.mrb[0].mxu0
    %v1498 = vadd.f32 0.0, %v1497
    %v1499 = vpop.f32.mrb[0].mxu0
    %1500 = vmatprep.mubr.f32.mxu0 0.0
    %1501 = vmatmul.mubr.f32.gmra.mrb[0].mxu0 %v1371
    %v1502 = vpop.f32.mrb[0].mxu0
    %v1503 = vadd.f32 0.0, %v1502
    %v1504 = vpop.f32.mrb[0].mxu0
    %1505 = vmatprep.mubr.f32.mxu0 0.0
    %1506 = vmatmul.mubr.f32.gmra.mrb[0].mxu0 %v1374
    %v1507 = vpop.f32.mrb[0].mxu0
    %v1508 = vadd.f32 0.0, %v1507
    %v1509 = vpop.f32.mrb[0].mxu0
    %1510 = vmatprep.mubr.f32.mxu0 0.0
    %1511 = vmatmul.mubr.f32.gmra.mrb[0].mxu0 %v1377
    %v1512 = vpop.f32.mrb[0].mxu0
    %v1513 = vadd.f32 0.0, %v1512
    %v1514 = vpop.f32.mrb[0].mxu0
    %1515 = vmatprep.mubr.f32.mxu0 0.0
    %1516 = vmatmul.mubr.f32.gmra.mrb[0].mxu0 %v1380
    %v1517 = vpop.f32.mrb[0].mxu0
    %v1518 = vadd.f32 0.0, %v1517
    %v1519 = vpop.f32.mrb[0].mxu0
    %1520 = vmatprep.mubr.f32.mxu0 0.0
    %1521 = vmatmul.mubr.f32.gmra.mrb[0].mxu0 %v1383
    %v1522 = vpop.f32.mrb[0].mxu0
    %v1523 = vadd.f32 0.0, %v1522
    %v1524 = vpop.f32.mrb[0].mxu0
    %1525 = vmatprep.mubr.f32.mxu0 0.0
    %1526 = vmatmul.mubr.f32.gmra.mrb[0].mxu0 %v1386
    %v1527 = vpop.f32.mrb[0].mxu0
    %v1528 = vadd.f32 0.0, %v1527
    %v1529 = vpop.f32.mrb[0].mxu0
    %1530 = vmatprep.mubr.f32.mxu0 0.0
    %1531 = vmatmul.mubr.f32.gmra.mrb[0].mxu0 %v1389
    %v1532 = vpop.f32.mrb[0].mxu0
    %v1533 = vadd.f32 0.0, %v1532
    %v1534 = vpop.f32.mrb[0].mxu0
    %1535 = vdwg.mxu0
    %v1536 = vlaneseq
    %v1537 = vshrl.u32 %v1536, 7
    %v1538 = vadd.s32 %v1537, 8
    %v1539 = vadd.s32 %v1537, 16
    %v1540 = vadd.s32 %v1537, 24
    %v1541 = vadd.s32 %v1537, 32
    %v1542 = vadd.s32 %v1537, 40
    %v1543 = vadd.s32 %v1537, 48
    %v1544 = vadd.s32 %v1537, 56
    %v1545 = vadd.s32 %v1537, 64
    %v1546 = vadd.s32 %v1537, 72
    %v1547 = vadd.s32 %v1537, 80
    %v1548 = vadd.s32 %v1537, 88
    %v1549 = vadd.s32 %v1537, 96
    %v1550 = vadd.s32 %v1537, 104
    %v1551 = vadd.s32 %v1537, 112
    %v1552 = vadd.s32 %v1537, 120
    %s1553 = smul.u32 0, 128
    %v1554 = vstv %s1553
    %v1555 = vadd.s32 %v1537, %v1554
    %v1556 = vadd.s32 %v1538, %v1554
    %v1557 = vadd.s32 %v1539, %v1554
    %v1558 = vadd.s32 %v1540, %v1554
    %v1559 = vadd.s32 %v1541, %v1554
    %v1560 = vadd.s32 %v1542, %v1554
    %v1561 = vadd.s32 %v1543, %v1554
    %v1562 = vadd.s32 %v1544, %v1554
    %v1563 = vadd.s32 %v1545, %v1554
    %v1564 = vadd.s32 %v1546, %v1554
    %v1565 = vadd.s32 %v1547, %v1554
    %v1566 = vadd.s32 %v1548, %v1554
    %v1567 = vadd.s32 %v1549, %v1554
    %v1568 = vadd.s32 %v1550, %v1554
    %v1569 = vadd.s32 %v1551, %v1554
    %v1570 = vadd.s32 %v1552, %v1554
    %vm1571 = vcmp.lt.s32.totalorder %v1555, 122
    %vm1572 = vcmp.lt.s32.totalorder %v1556, 122
    %vm1573 = vcmp.lt.s32.totalorder %v1557, 122
    %vm1574 = vcmp.lt.s32.totalorder %v1558, 122
    %vm1575 = vcmp.lt.s32.totalorder %v1559, 122
    %vm1576 = vcmp.lt.s32.totalorder %v1560, 122
    %vm1577 = vcmp.lt.s32.totalorder %v1561, 122
    %vm1578 = vcmp.lt.s32.totalorder %v1562, 122
    %vm1579 = vcmp.lt.s32.totalorder %v1563, 122
    %vm1580 = vcmp.lt.s32.totalorder %v1564, 122
    %vm1581 = vcmp.lt.s32.totalorder %v1565, 122
    %vm1582 = vcmp.lt.s32.totalorder %v1566, 122
    %vm1583 = vcmp.lt.s32.totalorder %v1567, 122
    %vm1584 = vcmp.lt.s32.totalorder %v1568, 122
    %vm1585 = vcmp.lt.s32.totalorder %v1569, 122
    %vm1586 = vcmp.lt.s32.totalorder %v1570, 122
    %v1587 = vsel %vm1571, 1, 0
    %v1588 = vsel %vm1572, 1, 0
    %v1589 = vsel %vm1573, 1, 0
    %v1590 = vsel %vm1574, 1, 0
    %v1591 = vsel %vm1575, 1, 0
    %v1592 = vsel %vm1576, 1, 0
    %v1593 = vsel %vm1577, 1, 0
    %v1594 = vsel %vm1578, 1, 0
    %v1595 = vsel %vm1579, 1, 0
    %v1596 = vsel %vm1580, 1, 0
    %v1597 = vsel %vm1581, 1, 0
    %v1598 = vsel %vm1582, 1, 0
    %v1599 = vsel %vm1583, 1, 0
    %v1600 = vsel %vm1584, 1, 0
    %v1601 = vsel %vm1585, 1, 0
    %v1602 = vsel %vm1586, 1, 0
    %v1603 = vcvt.s32.f32 %v1587
    %v1604 = vcvt.s32.f32 %v1588
    %v1605 = vcvt.s32.f32 %v1589
    %v1606 = vcvt.s32.f32 %v1590
    %v1607 = vcvt.s32.f32 %v1591
    %v1608 = vcvt.s32.f32 %v1592
    %v1609 = vcvt.s32.f32 %v1593
    %v1610 = vcvt.s32.f32 %v1594
    %v1611 = vcvt.s32.f32 %v1595
    %v1612 = vcvt.s32.f32 %v1596
    %v1613 = vcvt.s32.f32 %v1597
    %v1614 = vcvt.s32.f32 %v1598
    %v1615 = vcvt.s32.f32 %v1599
    %v1616 = vcvt.s32.f32 %v1600
    %v1617 = vcvt.s32.f32 %v1601
    %v1618 = vcvt.s32.f32 %v1602
    %v1619 = vmul.f32 %v1265, %v1603
    %v1620 = vmul.f32 %v1270, %v1604
    %v1621 = vmul.f32 %v1275, %v1605
    %v1622 = vmul.f32 %v1280, %v1606
    %v1623 = vmul.f32 %v1285, %v1607
    %v1624 = vmul.f32 %v1290, %v1608
    %v1625 = vmul.f32 %v1295, %v1609
    %v1626 = vmul.f32 %v1300, %v1610
    %v1627 = vmul.f32 %v1305, %v1611
    %v1628 = vmul.f32 %v1310, %v1612
    %v1629 = vmul.f32 %v1315, %v1613
    %v1630 = vmul.f32 %v1320, %v1614
    %v1631 = vmul.f32 %v1325, %v1615
    %v1632 = vmul.f32 %v1330, %v1616
    %v1633 = vmul.f32 %v1335, %v1617
    %v1634 = vmul.f32 %v1340, %v1618
    %v1635 = vmul.f32 %v1458, %v1603
    %v1636 = vmul.f32 %v1463, %v1604
    %v1637 = vmul.f32 %v1468, %v1605
    %v1638 = vmul.f32 %v1473, %v1606
    %v1639 = vmul.f32 %v1478, %v1607
    %v1640 = vmul.f32 %v1483, %v1608
    %v1641 = vmul.f32 %v1488, %v1609
    %v1642 = vmul.f32 %v1493, %v1610
    %v1643 = vmul.f32 %v1498, %v1611
    %v1644 = vmul.f32 %v1503, %v1612
    %v1645 = vmul.f32 %v1508, %v1613
    %v1646 = vmul.f32 %v1513, %v1614
    %v1647 = vmul.f32 %v1518, %v1615
    %v1648 = vmul.f32 %v1523, %v1616
    %v1649 = vmul.f32 %v1528, %v1617
    %v1650 = vmul.f32 %v1533, %v1618
    %v1651 = vsub.f32 %v1619, %v1635
    %v1652 = vsub.f32 %v1620, %v1636
    %v1653 = vsub.f32 %v1621, %v1637
    %v1654 = vsub.f32 %v1622, %v1638
    %v1655 = vsub.f32 %v1623, %v1639
    %v1656 = vsub.f32 %v1624, %v1640
    %v1657 = vsub.f32 %v1625, %v1641
    %v1658 = vsub.f32 %v1626, %v1642
    %v1659 = vsub.f32 %v1627, %v1643
    %v1660 = vsub.f32 %v1628, %v1644
    %v1661 = vsub.f32 %v1629, %v1645
    %v1662 = vsub.f32 %v1630, %v1646
    %v1663 = vsub.f32 %v1631, %v1647
    %v1664 = vsub.f32 %v1632, %v1648
    %v1665 = vsub.f32 %v1633, %v1649
    %v1666 = vsub.f32 %v1634, %v1650
    %s1667 = sld [smem:[#allocation2]]
    %v1668 = vmul.f32 %v1651, %v1651
    %v1669 = vmul.f32 %v1652, %v1652
    %v1670 = vmul.f32 %v1653, %v1653
    %v1671 = vmul.f32 %v1654, %v1654
    %v1672 = vmul.f32 %v1655, %v1655
    %v1673 = vmul.f32 %v1656, %v1656
    %v1674 = vmul.f32 %v1657, %v1657
    %v1675 = vmul.f32 %v1658, %v1658
    %v1676 = vmul.f32 %v1659, %v1659
    %v1677 = vmul.f32 %v1660, %v1660
    %v1678 = vmul.f32 %v1661, %v1661
    %v1679 = vmul.f32 %v1662, %v1662
    %v1680 = vmul.f32 %v1663, %v1663
    %v1681 = vmul.f32 %v1664, %v1664
    %v1682 = vmul.f32 %v1665, %v1665
    %v1683 = vmul.f32 %v1666, %v1666
    %vm1684 = vcmask 64512
    %v1685 = vsel %vm1684, %v1668, 0.0
    %v1686 = vsel %vm1684, %v1669, 0.0
    %v1687 = vadd.f32 %v1685, %v1686
    %v1688 = vsel %vm1684, %v1670, 0.0
    %v1689 = vadd.f32 %v1687, %v1688
    %v1690 = vsel %vm1684, %v1671, 0.0
    %v1691 = vadd.f32 %v1689, %v1690
    %v1692 = vsel %vm1684, %v1672, 0.0
    %v1693 = vadd.f32 %v1691, %v1692
    %v1694 = vsel %vm1684, %v1673, 0.0
    %v1695 = vadd.f32 %v1693, %v1694
    %v1696 = vsel %vm1684, %v1674, 0.0
    %v1697 = vadd.f32 %v1695, %v1696
    %v1698 = vsel %vm1684, %v1675, 0.0
    %v1699 = vadd.f32 %v1697, %v1698
    %v1700 = vsel %vm1684, %v1676, 0.0
    %v1701 = vadd.f32 %v1699, %v1700
    %v1702 = vsel %vm1684, %v1677, 0.0
    %v1703 = vadd.f32 %v1701, %v1702
    %v1704 = vsel %vm1684, %v1678, 0.0
    %v1705 = vadd.f32 %v1703, %v1704
    %v1706 = vsel %vm1684, %v1679, 0.0
    %v1707 = vadd.f32 %v1705, %v1706
    %v1708 = vsel %vm1684, %v1680, 0.0
    %v1709 = vadd.f32 %v1707, %v1708
    %v1710 = vsel %vm1684, %v1681, 0.0
    %v1711 = vadd.f32 %v1709, %v1710
    %v1712 = vsel %vm1684, %v1682, 0.0
    %v1713 = vadd.f32 %v1711, %v1712
    %v1714 = vsel %vm1684, %v1683, 0.0
    %v1715 = vadd.f32 %v1713, %v1714
    %1716 = vadd.xlane.f32.xlu0 %v1715
    %v1717 = vpop.xlane.xlu0 %1716
    %v1718 = vrot.slane %v1717, 4
    %v1719 = vadd.f32 %v1717, %v1718
    %v1720 = vrot.slane %v1719, 2
    %v1721 = vadd.f32 %v1719, %v1720
    %v1722 = vrot.slane %v1721, 1
    %v1723 = vadd.f32 %v1721, %v1722
    %s1724 = vtos %v1723
    %s1725 = sadd.f32 %s1667, %s1724
    %s1726 = scalar_lea.smem [#allocation2], 0
    %1727 = sst [smem:[%s1726]] %s1725
    %s1728 = sld [smem:[#allocation2 + $0x1]]
    %v1729 = vmul.f32 %v1619, %v1619
    %v1730 = vmul.f32 %v1620, %v1620
    %v1731 = vmul.f32 %v1621, %v1621
    %v1732 = vmul.f32 %v1622, %v1622
    %v1733 = vmul.f32 %v1623, %v1623
    %v1734 = vmul.f32 %v1624, %v1624
    %v1735 = vmul.f32 %v1625, %v1625
    %v1736 = vmul.f32 %v1626, %v1626
    %v1737 = vmul.f32 %v1627, %v1627
    %v1738 = vmul.f32 %v1628, %v1628
    %v1739 = vmul.f32 %v1629, %v1629
    %v1740 = vmul.f32 %v1630, %v1630
    %v1741 = vmul.f32 %v1631, %v1631
    %v1742 = vmul.f32 %v1632, %v1632
    %v1743 = vmul.f32 %v1633, %v1633
    %v1744 = vmul.f32 %v1634, %v1634
    %v1745 = vsel %vm1684, %v1729, 0.0
    %v1746 = vsel %vm1684, %v1730, 0.0
    %v1747 = vadd.f32 %v1745, %v1746
    %v1748 = vsel %vm1684, %v1731, 0.0
    %v1749 = vadd.f32 %v1747, %v1748
    %v1750 = vsel %vm1684, %v1732, 0.0
    %v1751 = vadd.f32 %v1749, %v1750
    %v1752 = vsel %vm1684, %v1733, 0.0
    %v1753 = vadd.f32 %v1751, %v1752
    %v1754 = vsel %vm1684, %v1734, 0.0
    %v1755 = vadd.f32 %v1753, %v1754
    %v1756 = vsel %vm1684, %v1735, 0.0
    %v1757 = vadd.f32 %v1755, %v1756
    %v1758 = vsel %vm1684, %v1736, 0.0
    %v1759 = vadd.f32 %v1757, %v1758
    %v1760 = vsel %vm1684, %v1737, 0.0
    %v1761 = vadd.f32 %v1759, %v1760
    %v1762 = vsel %vm1684, %v1738, 0.0
    %v1763 = vadd.f32 %v1761, %v1762
    %v1764 = vsel %vm1684, %v1739, 0.0
    %v1765 = vadd.f32 %v1763, %v1764
    %v1766 = vsel %vm1684, %v1740, 0.0
    %v1767 = vadd.f32 %v1765, %v1766
    %v1768 = vsel %vm1684, %v1741, 0.0
    %v1769 = vadd.f32 %v1767, %v1768
    %v1770 = vsel %vm1684, %v1742, 0.0
    %v1771 = vadd.f32 %v1769, %v1770
    %v1772 = vsel %vm1684, %v1743, 0.0
    %v1773 = vadd.f32 %v1771, %v1772
    %v1774 = vsel %vm1684, %v1744, 0.0
    %v1775 = vadd.f32 %v1773, %v1774
    %1776 = vadd.xlane.f32.xlu0 %v1775
    %v1777 = vpop.xlane.xlu0 %1776
    %v1778 = vrot.slane %v1777, 4
    %v1779 = vadd.f32 %v1777, %v1778
    %v1780 = vrot.slane %v1779, 2
    %v1781 = vadd.f32 %v1779, %v1780
    %v1782 = vrot.slane %v1781, 1
    %v1783 = vadd.f32 %v1781, %v1782
    %s1784 = vtos %v1783
    %s1785 = sadd.f32 %s1728, %s1784
    %s1786 = scalar_lea.smem [#allocation2], 1
    %1787 = sst [smem:[%s1786]] %s1785
    %s1788 = sld [smem:[#allocation2 + $0x2]]
    %v1789 = vadd.f32 %v1619, 1e-07
    %v1790 = vadd.f32 %v1620, 1e-07
    %v1791 = vadd.f32 %v1621, 1e-07
    %v1792 = vadd.f32 %v1622, 1e-07
    %v1793 = vadd.f32 %v1623, 1e-07
    %v1794 = vadd.f32 %v1624, 1e-07
    %v1795 = vadd.f32 %v1625, 1e-07
    %v1796 = vadd.f32 %v1626, 1e-07
    %v1797 = vadd.f32 %v1627, 1e-07
    %v1798 = vadd.f32 %v1628, 1e-07
    %v1799 = vadd.f32 %v1629, 1e-07
    %v1800 = vadd.f32 %v1630, 1e-07
    %v1801 = vadd.f32 %v1631, 1e-07
    %v1802 = vadd.f32 %v1632, 1e-07
    %v1803 = vadd.f32 %v1633, 1e-07
    %v1804 = vadd.f32 %v1634, 1e-07
    %v1805 = vlog2.pop %v1789
    %v1806 = vmul.f32 %v1805, 0.6931472
    %v1807 = vlog2.pop %v1790
    %v1808 = vmul.f32 %v1807, 0.6931472
    %v1809 = vlog2.pop %v1791
    %v1810 = vmul.f32 %v1809, 0.6931472
    %v1811 = vlog2.pop %v1792
    %v1812 = vmul.f32 %v1811, 0.6931472
    %v1813 = vlog2.pop %v1793
    %v1814 = vmul.f32 %v1813, 0.6931472
    %v1815 = vlog2.pop %v1794
    %v1816 = vmul.f32 %v1815, 0.6931472
    %v1817 = vlog2.pop %v1795
    %v1818 = vmul.f32 %v1817, 0.6931472
    %v1819 = vlog2.pop %v1796
    %v1820 = vmul.f32 %v1819, 0.6931472
    %v1821 = vlog2.pop %v1797
    %v1822 = vmul.f32 %v1821, 0.6931472
    %v1823 = vlog2.pop %v1798
    %v1824 = vmul.f32 %v1823, 0.6931472
    %v1825 = vlog2.pop %v1799
    %v1826 = vmul.f32 %v1825, 0.6931472
    %v1827 = vlog2.pop %v1800
    %v1828 = vmul.f32 %v1827, 0.6931472
    %v1829 = vlog2.pop %v1801
    %v1830 = vmul.f32 %v1829, 0.6931472
    %v1831 = vlog2.pop %v1802
    %v1832 = vmul.f32 %v1831, 0.6931472
    %v1833 = vlog2.pop %v1803
    %v1834 = vmul.f32 %v1833, 0.6931472
    %v1835 = vlog2.pop %v1804
    %v1836 = vmul.f32 %v1835, 0.6931472
    %v1837 = vadd.f32 %v1635, 1e-07
    %v1838 = vadd.f32 %v1636, 1e-07
    %v1839 = vadd.f32 %v1637, 1e-07
    %v1840 = vadd.f32 %v1638, 1e-07
    %v1841 = vadd.f32 %v1639, 1e-07
    %v1842 = vadd.f32 %v1640, 1e-07
    %v1843 = vadd.f32 %v1641, 1e-07
    %v1844 = vadd.f32 %v1642, 1e-07
    %v1845 = vadd.f32 %v1643, 1e-07
    %v1846 = vadd.f32 %v1644, 1e-07
    %v1847 = vadd.f32 %v1645, 1e-07
    %v1848 = vadd.f32 %v1646, 1e-07
    %v1849 = vadd.f32 %v1647, 1e-07
    %v1850 = vadd.f32 %v1648, 1e-07
    %v1851 = vadd.f32 %v1649, 1e-07
    %v1852 = vadd.f32 %v1650, 1e-07
    %v1853 = vlog2.pop %v1837
    %v1854 = vmul.f32 %v1853, 0.6931472
    %v1855 = vlog2.pop %v1838
    %v1856 = vmul.f32 %v1855, 0.6931472
    %v1857 = vlog2.pop %v1839
    %v1858 = vmul.f32 %v1857, 0.6931472
    %v1859 = vlog2.pop %v1840
    %v1860 = vmul.f32 %v1859, 0.6931472
    %v1861 = vlog2.pop %v1841
    %v1862 = vmul.f32 %v1861, 0.6931472
    %v1863 = vlog2.pop %v1842
    %v1864 = vmul.f32 %v1863, 0.6931472
    %v1865 = vlog2.pop %v1843
    %v1866 = vmul.f32 %v1865, 0.6931472
    %v1867 = vlog2.pop %v1844
    %v1868 = vmul.f32 %v1867, 0.6931472
    %v1869 = vlog2.pop %v1845
    %v1870 = vmul.f32 %v1869, 0.6931472
    %v1871 = vlog2.pop %v1846
    %v1872 = vmul.f32 %v1871, 0.6931472
    %v1873 = vlog2.pop %v1847
    %v1874 = vmul.f32 %v1873, 0.6931472
    %v1875 = vlog2.pop %v1848
    %v1876 = vmul.f32 %v1875, 0.6931472
    %v1877 = vlog2.pop %v1849
    %v1878 = vmul.f32 %v1877, 0.6931472
    %v1879 = vlog2.pop %v1850
    %v1880 = vmul.f32 %v1879, 0.6931472
    %v1881 = vlog2.pop %v1851
    %v1882 = vmul.f32 %v1881, 0.6931472
    %v1883 = vlog2.pop %v1852
    %v1884 = vmul.f32 %v1883, 0.6931472
    %v1885 = vsub.f32 %v1806, %v1854
    %v1886 = vsub.f32 %v1808, %v1856
    %v1887 = vsub.f32 %v1810, %v1858
    %v1888 = vsub.f32 %v1812, %v1860
    %v1889 = vsub.f32 %v1814, %v1862
    %v1890 = vsub.f32 %v1816, %v1864
    %v1891 = vsub.f32 %v1818, %v1866
    %v1892 = vsub.f32 %v1820, %v1868
    %v1893 = vsub.f32 %v1822, %v1870
    %v1894 = vsub.f32 %v1824, %v1872
    %v1895 = vsub.f32 %v1826, %v1874
    %v1896 = vsub.f32 %v1828, %v1876
    %v1897 = vsub.f32 %v1830, %v1878
    %v1898 = vsub.f32 %v1832, %v1880
    %v1899 = vsub.f32 %v1834, %v1882
    %v1900 = vsub.f32 %v1836, %v1884
    %v1901 = vand.u32 2147483647, %v1885
    %v1902 = vand.u32 2147483647, %v1886
    %v1903 = vand.u32 2147483647, %v1887
    %v1904 = vand.u32 2147483647, %v1888
    %v1905 = vand.u32 2147483647, %v1889
    %v1906 = vand.u32 2147483647, %v1890
    %v1907 = vand.u32 2147483647, %v1891
    %v1908 = vand.u32 2147483647, %v1892
    %v1909 = vand.u32 2147483647, %v1893
    %v1910 = vand.u32 2147483647, %v1894
    %v1911 = vand.u32 2147483647, %v1895
    %v1912 = vand.u32 2147483647, %v1896
    %v1913 = vand.u32 2147483647, %v1897
    %v1914 = vand.u32 2147483647, %v1898
    %v1915 = vand.u32 2147483647, %v1899
    %v1916 = vand.u32 2147483647, %v1900
    %v1917 = vsel %vm1684, %v1901, 0.0
    %v1918 = vsel %vm1684, %v1902, 0.0
    %v1919 = vadd.f32 %v1917, %v1918
    %v1920 = vsel %vm1684, %v1903, 0.0
    %v1921 = vadd.f32 %v1919, %v1920
    %v1922 = vsel %vm1684, %v1904, 0.0
    %v1923 = vadd.f32 %v1921, %v1922
    %v1924 = vsel %vm1684, %v1905, 0.0
    %v1925 = vadd.f32 %v1923, %v1924
    %v1926 = vsel %vm1684, %v1906, 0.0
    %v1927 = vadd.f32 %v1925, %v1926
    %v1928 = vsel %vm1684, %v1907, 0.0
    %v1929 = vadd.f32 %v1927, %v1928
    %v1930 = vsel %vm1684, %v1908, 0.0
    %v1931 = vadd.f32 %v1929, %v1930
    %v1932 = vsel %vm1684, %v1909, 0.0
    %v1933 = vadd.f32 %v1931, %v1932
    %v1934 = vsel %vm1684, %v1910, 0.0
    %v1935 = vadd.f32 %v1933, %v1934
    %v1936 = vsel %vm1684, %v1911, 0.0
    %v1937 = vadd.f32 %v1935, %v1936
    %v1938 = vsel %vm1684, %v1912, 0.0
    %v1939 = vadd.f32 %v1937, %v1938
    %v1940 = vsel %vm1684, %v1913, 0.0
    %v1941 = vadd.f32 %v1939, %v1940
    %v1942 = vsel %vm1684, %v1914, 0.0
    %v1943 = vadd.f32 %v1941, %v1942
    %v1944 = vsel %vm1684, %v1915, 0.0
    %v1945 = vadd.f32 %v1943, %v1944
    %v1946 = vsel %vm1684, %v1916, 0.0
    %v1947 = vadd.f32 %v1945, %v1946
    %1948 = vadd.xlane.f32.xlu0 %v1947
    %v1949 = vpop.xlane.xlu0 %1948
    %v1950 = vrot.slane %v1949, 4
    %v1951 = vadd.f32 %v1949, %v1950
    %v1952 = vrot.slane %v1951, 2
    %v1953 = vadd.f32 %v1951, %v1952
    %v1954 = vrot.slane %v1953, 1
    %v1955 = vadd.f32 %v1953, %v1954
    %s1956 = vtos %v1955
    %s1957 = sadd.f32 %s1788, %s1956
    %s1958 = scalar_lea.smem [#allocation2], 2
    %1959 = sst [smem:[%s1958]] %s1957
    // Predicated region
    $region30: #{forward.11} parent=1 // pred_check
      _
    $region31: #{forward.11} parent=1 // pred_check_branch
      %1961 = sbr.rel (0) target = $region33
    $region32: #{forward.11} parent=1 // pred_region
      %s1963 = ssub.s32 16, 16
      %1964 = vsyncadd [#allocation3], %s1963
      %s1966 = sshll.u32 %s6, 4
      %s1967 = int_to_ptr.vmem [resolvable:$true] %s1966
      %1969 = dma.smem_to_vmem [#allocation2], 16, %s1967, [#allocation3]
    $region33: #{forward.11} parent=1 // pred_fallthru
      _
    // Predicated region
    $region34: #{forward.11} parent=1 // pred_check
      _
    $region35: #{forward.11} parent=1 // pred_check_branch
      %1971 = sbr.rel (0) target = $region37
    $region36: #{forward.11} parent=1 // pred_region
      %1972 = dma.done [#allocation3], 16
    $region37: #{forward.11} parent=1 // pred_fallthru
      _
    %1973 = sfence
    %1974 = vsyncpa [#allocation3], 1

// kernel: forward.13
$region0: #{forward.13}
  #allocation0 [shape = 'u32[]', space=smem, size = 0x4, offset = 0x4, fixed_abs, tag = 'smem constant byte address 0x4 - core index']
  #allocation1 [shape = 'u32[144,128]{1,0:T(1,128)}', space=vmem, size = 0x12000, scoped, tag = 'internal scratch']
  %s0 = inlined_call_operand.vmem [shape: f32[8,128], index: 0, kind: input, shape index: {}]
  %s1 = inlined_call_operand.vmem [shape: f32[16,8], index: 1, kind: input, shape index: {}]
  %s2 = inlined_call_operand.vmem [shape: f32[16,128], index: 2, kind: output, shape index: {}]
  %s3 = sld [smem:[#allocation0]]
  $region18: #{forward.13} parent=0
    _
  %s5 = ssub.s32 1, %s3
  %s6 = scalar_select 0, %s5, %s3
  // Predicated region
  $region2: #{forward.13} parent=0 // pred_check
    _
  $region3: #{forward.13} parent=0 // pred_check_branch
    %8 = sbr.rel (0) target = $region5
  $region4: #{forward.13} parent=0 // pred_region
    _
  $region5: #{forward.13} parent=0 // pred_fallthru
    _
  // Predicated region
  $region6: #{forward.13} parent=0 // pred_check
    _
  $region7: #{forward.13} parent=0 // pred_check_branch
    %10 = sbr.rel (0) target = $region9
  $region8: #{forward.13} parent=0 // pred_region
    _
  $region9: #{forward.13} parent=0 // pred_fallthru
    _
  %v11 = vld [vmem:[%s1] sm:$0xff]
  %v12 = vld [vmem:[%s1 + $0x8] sm:$0xff]
  %v13 = vld [vmem:[%s0] sm:$0xff]
  %vm14 = vcmask 64512
  %v16 = vsel %vm14, %v11, 0
  %v19 = vsel %vm14, %v12, 0
  %21 = vmatprep.subr.mxu0 0.0
  %22 = vmatpush1.msra.mxu0 %v13
  %23 = vmatprep.subr.mxu0 0.0
  %24 = vmatpush1.msra.mxu0 0.0
  %25 = vmatprep.subr.mxu0 0.0
  %26 = vmatpush1.msra.mxu0 0.0
  %27 = vmatprep.subr.mxu0 0.0
  %28 = vmatpush1.msra.mxu0 0.0
  %29 = vmatprep.subr.mxu0 0.0
  %30 = vmatpush1.msra.mxu0 0.0
  %31 = vmatprep.subr.mxu0 0.0
  %32 = vmatpush1.msra.mxu0 0.0
  %33 = vmatprep.subr.mxu0 0.0
  %34 = vmatpush1.msra.mxu0 0.0
  %35 = vmatprep.subr.mxu0 0.0
  %36 = vmatpush1.msra.mxu0 0.0
  %37 = vmatprep.subr.mxu0 0.0
  %38 = vmatpush1.msra.mxu0 0.0
  %39 = vmatprep.subr.mxu0 0.0
  %40 = vmatpush1.msra.mxu0 0.0
  %41 = vmatprep.subr.mxu0 0.0
  %42 = vmatpush1.msra.mxu0 0.0
  %43 = vmatprep.subr.mxu0 0.0
  %44 = vmatpush1.msra.mxu0 0.0
  %45 = vmatprep.subr.mxu0 0.0
  %46 = vmatpush1.msra.mxu0 0.0
  %47 = vmatprep.subr.mxu0 0.0
  %48 = vmatpush1.msra.mxu0 0.0
  %49 = vmatprep.subr.mxu0 0.0
  %50 = vmatpush1.msra.mxu0 0.0
  %51 = vmatprep.subr.mxu0 0.0
  %52 = vmatpush1.msra.mxu0 0.0
  %53 = vmatprep.subr.mxu0 0.0
  %54 = vmatpush1.msra.mxu0 0.0
  %55 = vmatprep.subr.mxu0 0.0
  %56 = vmatpush1.msra.mxu0 0.0
  %57 = vmatprep.subr.mxu0 0.0
  %58 = vmatpush1.msra.mxu0 0.0
  %59 = vmatprep.subr.mxu0 0.0
  %60 = vmatpush1.msra.mxu0 0.0
  %61 = vmatprep.subr.mxu0 0.0
  %62 = vmatpush1.msra.mxu0 0.0
  %63 = vmatprep.subr.mxu0 0.0
  %64 = vmatpush1.msra.mxu0 0.0
  %65 = vmatprep.subr.mxu0 0.0
  %66 = vmatpush1.msra.mxu0 0.0
  %67 = vmatprep.subr.mxu0 0.0
  %68 = vmatpush1.msra.mxu0 0.0
  %69 = vmatprep.subr.mxu0 0.0
  %70 = vmatpush1.msra.mxu0 0.0
  %71 = vmatprep.subr.mxu0 0.0
  %72 = vmatpush1.msra.mxu0 0.0
  %73 = vmatprep.subr.mxu0 0.0
  %74 = vmatpush1.msra.mxu0 0.0
  %75 = vmatprep.subr.mxu0 0.0
  %76 = vmatpush1.msra.mxu0 0.0
  %77 = vmatprep.subr.mxu0 0.0
  %78 = vmatpush1.msra.mxu0 0.0
  %79 = vmatprep.subr.mxu0 0.0
  %80 = vmatpush1.msra.mxu0 0.0
  %81 = vmatprep.subr.mxu0 0.0
  %82 = vmatpush1.msra.mxu0 0.0
  %83 = vmatprep.subr.mxu0 0.0
  %84 = vmatpush1.msra.mxu0 0.0
  %85 = vmatprep.mubr.f32.mxu0 0.0
  %86 = vmatmul.mubr.f32.gmra.mrb[0].mxu0 %v16
  %v87 = vpop.f32.mrb[0].mxu0
  %v88 = vadd.f32 0.0, %v87
  %v89 = vpop.f32.mrb[0].mxu0
  %90 = vmatprep.mubr.f32.mxu0 0.0
  %91 = vmatmul.mubr.f32.gmra.mrb[0].mxu0 %v19
  %v92 = vpop.f32.mrb[0].mxu0
  %v93 = vadd.f32 0.0, %v92
  %v94 = vpop.f32.mrb[0].mxu0
  %95 = vdwg.mxu0
  %96 = vst [vmem:[%s2] sm:$0xff] %v88
  %97 = vst [vmem:[%s2 + $0x8] sm:$0xff] %v93
  // Predicated region
  $region10: #{forward.13} parent=0 // pred_check
    _
  $region11: #{forward.13} parent=0 // pred_check_branch
    %99 = sbr.rel (0) target = $region13
  $region12: #{forward.13} parent=0 // pred_region
    _
  $region13: #{forward.13} parent=0 // pred_fallthru
    _
  // Predicated region
  $region14: #{forward.13} parent=0 // pred_check
    _
  $region15: #{forward.13} parent=0 // pred_check_branch
    %101 = sbr.rel (0) target = $region17
  $region16: #{forward.13} parent=0 // pred_region
    _
  $region17: #{forward.13} parent=0 // pred_fallthru
    _

// kernel: forward.12
$region0: #{forward.12}
  #allocation0 [shape = 'u32[]', space=smem, size = 0x4, offset = 0x4, fixed_abs, tag = 'smem constant byte address 0x4 - core index']
  #allocation1 [shape = 'u32[144,128]{1,0:T(1,128)}', space=vmem, size = 0x12000, scoped, tag = 'internal scratch']
  %s0 = inlined_call_operand.vmem [shape: f32[256,16], index: 0, kind: input, shape index: {}]
  %s1 = inlined_call_operand.vmem [shape: f32[256,16], index: 1, kind: input, shape index: {}]
  %s2 = inlined_call_operand.vmem [shape: f32[1,16], index: 2, kind: input, shape index: {}]
  %s3 = inlined_call_operand.vmem [shape: f32[16,9], index: 3, kind: input, shape index: {}]
  %s4 = inlined_call_operand.vmem [shape: f32[16,9], index: 4, kind: input, shape index: {}]
  %s5 = inlined_call_operand.vmem [shape: f32[9,4], index: 5, kind: input, shape index: {}]
  %s6 = inlined_call_operand.vmem [shape: f32[3], index: 6, kind: output, shape index: {}]
  %s7 = sld [smem:[#allocation0]]
  $region61: #{forward.12} parent=0
    _
  %s9 = ssub.s32 1, %s7
  %s10 = scalar_select 0, %s9, %s7
  $region1: #{forward.12} parent=0
    #allocation2 [shape = 'u8[512]{0}', space=smem, size = 0x200, scoped, tag = 'output window, operand 0, single buffered']
    #allocation3 [shape = 's32[2]{0}', space=sflag, size = 0x8, scoped, tag = 'scoped memory for forward.12']
    %11 = vsyncpa [#allocation3], 0
    loop: start=0, step=1, limit=4
    $region2: #{forward.12} parent=1 // loop_pre_header
      _
    $region3: #{forward.12} parent=1 // loop_header
      %s13 = sphi 0, %s17
      %p14 = scmp.ge.s32.totalorder %s13, 4
      %s23 = sphi 0, %s25
      %s26 = sphi 0, %s23
      %s27 = sphi 0, %s26
      %s43 = sphi 0, %s27
      %s49 = sphi 0, %s51
      %s52 = sphi 0, %s49
      %s53 = sphi 0, %s52
      %s69 = sphi 0, %s53
      %s73 = sphi 0, %s73
      %s75 = sphi 0, %s73
      %s76 = sphi 0, %s75
      %s90 = sphi 0, %s76
      %s94 = sphi 0, %s94
      %s96 = sphi 0, %s94
      %s97 = sphi 0, %s96
      %s111 = sphi 0, %s97
      %s115 = sphi 0, %s115
      %s117 = sphi 0, %s115
      %s118 = sphi 0, %s117
      %s132 = sphi 0, %s118
      %s136 = sphi 0, %s136
      %s138 = sphi 0, %s136
      %s139 = sphi 0, %s138
      %s153 = sphi 0, %s139
      %s157 = sphi 0, %s157
      %s159 = sphi 0, %s157
      %s160 = sphi 0, %s159
      %s174 = sphi 0, %s160
    $region4: #{forward.12} parent=1 // loop_header_branch
      %16 = sbr.rel (%p14) target = $region8
    $region5: #{forward.12} parent=1 // loop_body
      %s18 = ssub.s32 %s13, 1
      %s19 = ssub.s32 %s13, 2
      %s20 = sadd.s32 %s13, 1
      %s21 = ssub.s32 %s13, %s20
      %p22 = scmp.eq.s32.totalorder %s21, 0
      %s24 = sadd.s32 %s23, 1
      %s25 = scalar_select %p22, %s23, %s24
      %p28 = pneg %p22
      %p29 = scmp.eq.s32.totalorder %s13, 1
      %p30 = por %p28, %p29
      %p31 = scmp.ne.s32.totalorder %s23, %s26
      %p32 = scmp.eq.s32.totalorder %s13, 0
      %p33 = por %p31, %p32
      %p34 = scmp.ne.s32.totalorder %s23, %s26
      %p35 = scmp.eq.s32.totalorder %s18, 1
      %p36 = por %p34, %p35
      %p37 = scmp.ne.s32.totalorder %s26, %s27
      %p38 = scmp.eq.s32.totalorder %s18, 0
      %p39 = por %p37, %p38
      %p40 = scmp.ne.s32.totalorder %s26, %s27
      %p41 = scmp.eq.s32.totalorder %s19, 1
      %p42 = por %p40, %p41
      %p44 = scmp.ne.s32.totalorder %s27, %s43
      %p45 = scmp.eq.s32.totalorder %s19, 0
      %p46 = por %p44, %p45
      %s47 = ssub.s32 %s13, %s20
      %p48 = scmp.eq.s32.totalorder %s47, 0
      %s50 = sadd.s32 %s49, 1
      %s51 = scalar_select %p48, %s49, %s50
      %p54 = pneg %p48
      %p55 = scmp.eq.s32.totalorder %s13, 1
      %p56 = por %p54, %p55
      %p57 = scmp.ne.s32.totalorder %s49, %s52
      %p58 = scmp.eq.s32.totalorder %s13, 0
      %p59 = por %p57, %p58
      %p60 = scmp.ne.s32.totalorder %s49, %s52
      %p61 = scmp.eq.s32.totalorder %s18, 1
      %p62 = por %p60, %p61
      %p63 = scmp.ne.s32.totalorder %s52, %s53
      %p64 = scmp.eq.s32.totalorder %s18, 0
      %p65 = por %p63, %p64
      %p66 = scmp.ne.s32.totalorder %s52, %s53
      %p67 = scmp.eq.s32.totalorder %s19, 1
      %p68 = por %p66, %p67
      %p70 = scmp.ne.s32.totalorder %s53, %s69
      %p71 = scmp.eq.s32.totalorder %s19, 0
      %p72 = por %p70, %p71
      %s74 = sadd.s32 %s73, 1
      %p77 = scmp.eq.s32.totalorder %s13, 1
      %p78 = scmp.ne.s32.totalorder %s73, %s75
      %p79 = scmp.eq.s32.totalorder %s13, 0
      %p80 = por %p78, %p79
      %p81 = scmp.ne.s32.totalorder %s73, %s75
      %p82 = scmp.eq.s32.totalorder %s18, 1
      %p83 = por %p81, %p82
      %p84 = scmp.ne.s32.totalorder %s75, %s76
      %p85 = scmp.eq.s32.totalorder %s18, 0
      %p86 = por %p84, %p85
      %p87 = scmp.ne.s32.totalorder %s75, %s76
      %p88 = scmp.eq.s32.totalorder %s19, 1
      %p89 = por %p87, %p88
      %p91 = scmp.ne.s32.totalorder %s76, %s90
      %p92 = scmp.eq.s32.totalorder %s19, 0
      %p93 = por %p91, %p92
      %s95 = sadd.s32 %s94, 1
      %p98 = scmp.eq.s32.totalorder %s13, 1
      %p99 = scmp.ne.s32.totalorder %s94, %s96
      %p100 = scmp.eq.s32.totalorder %s13, 0
      %p101 = por %p99, %p100
      %p102 = scmp.ne.s32.totalorder %s94, %s96
      %p103 = scmp.eq.s32.totalorder %s18, 1
      %p104 = por %p102, %p103
      %p105 = scmp.ne.s32.totalorder %s96, %s97
      %p106 = scmp.eq.s32.totalorder %s18, 0
      %p107 = por %p105, %p106
      %p108 = scmp.ne.s32.totalorder %s96, %s97
      %p109 = scmp.eq.s32.totalorder %s19, 1
      %p110 = por %p108, %p109
      %p112 = scmp.ne.s32.totalorder %s97, %s111
      %p113 = scmp.eq.s32.totalorder %s19, 0
      %p114 = por %p112, %p113
      %s116 = sadd.s32 %s115, 1
      %p119 = scmp.eq.s32.totalorder %s13, 1
      %p120 = scmp.ne.s32.totalorder %s115, %s117
      %p121 = scmp.eq.s32.totalorder %s13, 0
      %p122 = por %p120, %p121
      %p123 = scmp.ne.s32.totalorder %s115, %s117
      %p124 = scmp.eq.s32.totalorder %s18, 1
      %p125 = por %p123, %p124
      %p126 = scmp.ne.s32.totalorder %s117, %s118
      %p127 = scmp.eq.s32.totalorder %s18, 0
      %p128 = por %p126, %p127
      %p129 = scmp.ne.s32.totalorder %s117, %s118
      %p130 = scmp.eq.s32.totalorder %s19, 1
      %p131 = por %p129, %p130
      %p133 = scmp.ne.s32.totalorder %s118, %s132
      %p134 = scmp.eq.s32.totalorder %s19, 0
      %p135 = por %p133, %p134
      %s137 = sadd.s32 %s136, 1
      %p140 = scmp.eq.s32.totalorder %s13, 1
      %p141 = scmp.ne.s32.totalorder %s136, %s138
      %p142 = scmp.eq.s32.totalorder %s13, 0
      %p143 = por %p141, %p142
      %p144 = scmp.ne.s32.totalorder %s136, %s138
      %p145 = scmp.eq.s32.totalorder %s18, 1
      %p146 = por %p144, %p145
      %p147 = scmp.ne.s32.totalorder %s138, %s139
      %p148 = scmp.eq.s32.totalorder %s18, 0
      %p149 = por %p147, %p148
      %p150 = scmp.ne.s32.totalorder %s138, %s139
      %p151 = scmp.eq.s32.totalorder %s19, 1
      %p152 = por %p150, %p151
      %p154 = scmp.ne.s32.totalorder %s139, %s153
      %p155 = scmp.eq.s32.totalorder %s19, 0
      %p156 = por %p154, %p155
      %s158 = sadd.s32 %s157, 1
      %p161 = scmp.eq.s32.totalorder %s13, 1
      %p162 = scmp.ne.s32.totalorder %s157, %s159
      %p163 = scmp.eq.s32.totalorder %s13, 0
      %p164 = por %p162, %p163
      %p165 = scmp.ne.s32.totalorder %s157, %s159
      %p166 = scmp.eq.s32.totalorder %s18, 1
      %p167 = por %p165, %p166
      %p168 = scmp.ne.s32.totalorder %s159, %s160
      %p169 = scmp.eq.s32.totalorder %s18, 0
      %p170 = por %p168, %p169
      %p171 = scmp.ne.s32.totalorder %s159, %s160
      %p172 = scmp.eq.s32.totalorder %s19, 1
      %p173 = por %p171, %p172
      %p175 = scmp.ne.s32.totalorder %s160, %s174
      %p176 = scmp.eq.s32.totalorder %s19, 0
      %p177 = por %p175, %p176
      %p178 = scmp.le.s32.totalorder 1, %s13
      %p179 = scmp.lt.s32.totalorder %s13, 3
      %p180 = pnand %p178, %p179
      %p181 = pneg %p180
      // Predicated region
      $region9: #{forward.12} parent=5 // pred_check
        _
      $region10: #{forward.12} parent=5 // pred_check_branch
        %183 = sbr.rel (%p180) target = $region12
      $region11: #{forward.12} parent=5 // pred_region
        %s184 = ssub.s32 %s13, 1
        // Predicated region
        $region13: #{forward.12} parent=11 // pred_check
          %p185 = pneg %p86
        $region14: #{forward.12} parent=11 // pred_check_branch
          %187 = sbr.rel (%p185) target = $region16
        $region15: #{forward.12} parent=11 // pred_region
          _
        $region16: #{forward.12} parent=11 // pred_fallthru
          _
        // Predicated region
        $region17: #{forward.12} parent=11 // pred_check
          %p188 = pneg %p107
        $region18: #{forward.12} parent=11 // pred_check_branch
          %190 = sbr.rel (%p188) target = $region20
        $region19: #{forward.12} parent=11 // pred_region
          _
        $region20: #{forward.12} parent=11 // pred_fallthru
          _
        // Predicated region
        $region21: #{forward.12} parent=11 // pred_check
          %p191 = pneg %p128
        $region22: #{forward.12} parent=11 // pred_check_branch
          %193 = sbr.rel (%p191) target = $region24
        $region23: #{forward.12} parent=11 // pred_region
          _
        $region24: #{forward.12} parent=11 // pred_fallthru
          _
        // Predicated region
        $region25: #{forward.12} parent=11 // pred_check
          %p194 = pneg %p149
        $region26: #{forward.12} parent=11 // pred_check_branch
          %196 = sbr.rel (%p194) target = $region28
        $region27: #{forward.12} parent=11 // pred_region
          _
        $region28: #{forward.12} parent=11 // pred_fallthru
          _
      $region12: #{forward.12} parent=5 // pred_fallthru
        _
      %p197 = scmp.lt.s32.totalorder %s13, 2
      // Predicated region
      $region29: #{forward.12} parent=5 // pred_check
        %p198 = pneg %p197
      $region30: #{forward.12} parent=5 // pred_check_branch
        %200 = sbr.rel (%p198) target = $region32
      $region31: #{forward.12} parent=5 // pred_region
        // Predicated region
        $region33: #{forward.12} parent=31 // pred_check
          %p201 = pneg %p33
        $region34: #{forward.12} parent=31 // pred_check_branch
          %203 = sbr.rel (%p201) target = $region36
        $region35: #{forward.12} parent=31 // pred_region
          %s204 = smul.u32 16, %s13
          %p205 = scmp.lt.s32.totalorder %s204, 31
          %s206 = scalar_select %p205, %s204, 31
          %s207 = smul.addr %s206, 8
          %s208 = scalar_lea.vmem %s0, %s207
          %s209 = smul.u32 16, %s13
        $region36: #{forward.12} parent=31 // pred_fallthru
          _
        // Predicated region
        $region37: #{forward.12} parent=31 // pred_check
          %p210 = pneg %p59
        $region38: #{forward.12} parent=31 // pred_check_branch
          %212 = sbr.rel (%p210) target = $region40
        $region39: #{forward.12} parent=31 // pred_region
          %s213 = smul.u32 16, %s13
          %p214 = scmp.lt.s32.totalorder %s213, 31
          %s215 = scalar_select %p214, %s213, 31
          %s216 = smul.addr %s215, 8
          %s217 = scalar_lea.vmem %s1, %s216
          %s218 = smul.u32 16, %s13
        $region40: #{forward.12} parent=31 // pred_fallthru
          _
      $region32: #{forward.12} parent=5 // pred_fallthru
        _
      %p219 = scmp.le.s32.totalorder 1, %s13
      %p220 = scmp.lt.s32.totalorder %s13, 3
      %p221 = pnand %p219, %p220
      %p222 = pneg %p221
      // Predicated region
      $region41: #{forward.12} parent=5 // pred_check
        _
      $region42: #{forward.12} parent=5 // pred_check_branch
        %224 = sbr.rel (%p221) target = $region44
      $region43: #{forward.12} parent=5 // pred_region
        %s225 = ssub.s32 %s13, 1
        %s226 = smul.u32 16, %s18
        %p227 = scmp.lt.s32.totalorder %s226, 31
        %s228 = scalar_select %p227, %s226, 31
        %s229 = smul.addr %s228, 8
        %s230 = scalar_lea.vmem %s0, %s229
        %p231 = pneg %p39
        %p232 = pneg %p36
        %s233 = smul.u32 16, %s18
        %p234 = scmp.lt.s32.totalorder %s233, 31
        %s235 = scalar_select %p234, %s233, 31
        %s236 = smul.addr %s235, 8
        %s237 = scalar_lea.vmem %s1, %s236
        %p238 = pneg %p65
        %p239 = pneg %p62
        %p240 = pneg %p86
        %p241 = pneg %p83
        %p242 = pneg %p107
        %p243 = pneg %p104
        %p244 = pneg %p128
        %p245 = pneg %p125
        %p246 = pneg %p149
        %p247 = pneg %p146
        %p248 = pneg %p170
        %p249 = pneg %p167
        %s250 = smul.u32 16, %s18
        %p251 = scmp.lt.s32.totalorder %s250, 31
        %s252 = scalar_select %p251, %s250, 31
        %s253 = smul.addr %s252, 8
        %s254 = scalar_lea.vmem %s0, %s253
        %s255 = smul.u32 16, %s18
        %s256 = smul.u32 16, %s18
        %p257 = scmp.lt.s32.totalorder %s256, 31
        %s258 = scalar_select %p257, %s256, 31
        %s259 = smul.addr %s258, 8
        %s260 = scalar_lea.vmem %s1, %s259
        %s261 = smul.u32 16, %s18
        %p262 = scmp.eq.s32.totalorder %s18, 0
        // Predicated region
        $region45: #{forward.12} parent=43 // pred_check
          %p263 = pneg %p262
        $region46: #{forward.12} parent=43 // pred_check_branch
          %265 = sbr.rel (%p263) target = $region48
        $region47: #{forward.12} parent=43 // pred_region
          %s266 = scalar_lea.smem [#allocation2], 0
          %267 = sst [smem:[%s266]] 0.0
          %s268 = scalar_lea.smem [#allocation2], 1
          %269 = sst [smem:[%s268]] 0.0
          %s270 = scalar_lea.smem [#allocation2], 2
          %271 = sst [smem:[%s270]] 0.0
        $region48: #{forward.12} parent=43 // pred_fallthru
          _
        %v272 = vld [vmem:[%s2] sm:$0x1]
        %v273 = vld [vmem:[%s254] sm:$0xff]
        %v274 = vld [vmem:[%s254 + $0x8] sm:$0xff]
        %v275 = vld [vmem:[%s254 + $0x10] sm:$0xff]
        %v276 = vld [vmem:[%s254 + $0x18] sm:$0xff]
        %v277 = vld [vmem:[%s254 + $0x20] sm:$0xff]
        %v278 = vld [vmem:[%s254 + $0x28] sm:$0xff]
        %v279 = vld [vmem:[%s254 + $0x30] sm:$0xff]
        %v280 = vld [vmem:[%s254 + $0x38] sm:$0xff]
        %v281 = vld [vmem:[%s254 + $0x40] sm:$0xff]
        %v282 = vld [vmem:[%s254 + $0x48] sm:$0xff]
        %v283 = vld [vmem:[%s254 + $0x50] sm:$0xff]
        %v284 = vld [vmem:[%s254 + $0x58] sm:$0xff]
        %v285 = vld [vmem:[%s254 + $0x60] sm:$0xff]
        %v286 = vld [vmem:[%s254 + $0x68] sm:$0xff]
        %v287 = vld [vmem:[%s254 + $0x70] sm:$0xff]
        %v288 = vld [vmem:[%s254 + $0x78] sm:$0xff]
        %v290 = vlaneseq
        %v291 = vshrl.u32 %v290, 7
        %v292 = vsub.s32 0, %v291
        %v293 = vrot.slane %v272, %v292
        %v295 = vmul.f32 %v273, %v293
        %v296 = vmul.f32 %v274, %v293
        %v297 = vmul.f32 %v275, %v293
        %v298 = vmul.f32 %v276, %v293
        %v299 = vmul.f32 %v277, %v293
        %v300 = vmul.f32 %v278, %v293
        %v301 = vmul.f32 %v279, %v293
        %v302 = vmul.f32 %v280, %v293
        %v303 = vmul.f32 %v281, %v293
        %v304 = vmul.f32 %v282, %v293
        %v305 = vmul.f32 %v283, %v293
        %v306 = vmul.f32 %v284, %v293
        %v307 = vmul.f32 %v285, %v293
        %v308 = vmul.f32 %v286, %v293
        %v309 = vmul.f32 %v287, %v293
        %v310 = vmul.f32 %v288, %v293
        %v311 = vld [vmem:[%s260] sm:$0xff]
        %v312 = vld [vmem:[%s260 + $0x8] sm:$0xff]
        %v313 = vld [vmem:[%s260 + $0x10] sm:$0xff]
        %v314 = vld [vmem:[%s260 + $0x18] sm:$0xff]
        %v315 = vld [vmem:[%s260 + $0x20] sm:$0xff]
        %v316 = vld [vmem:[%s260 + $0x28] sm:$0xff]
        %v317 = vld [vmem:[%s260 + $0x30] sm:$0xff]
        %v318 = vld [vmem:[%s260 + $0x38] sm:$0xff]
        %v319 = vld [vmem:[%s260 + $0x40] sm:$0xff]
        %v320 = vld [vmem:[%s260 + $0x48] sm:$0xff]
        %v321 = vld [vmem:[%s260 + $0x50] sm:$0xff]
        %v322 = vld [vmem:[%s260 + $0x58] sm:$0xff]
        %v323 = vld [vmem:[%s260 + $0x60] sm:$0xff]
        %v324 = vld [vmem:[%s260 + $0x68] sm:$0xff]
        %v325 = vld [vmem:[%s260 + $0x70] sm:$0xff]
        %v326 = vld [vmem:[%s260 + $0x78] sm:$0xff]
        %v327 = vmul.f32 %v311, %v293
        %v328 = vmul.f32 %v312, %v293
        %v329 = vmul.f32 %v313, %v293
        %v330 = vmul.f32 %v314, %v293
        %v331 = vmul.f32 %v315, %v293
        %v332 = vmul.f32 %v316, %v293
        %v333 = vmul.f32 %v317, %v293
        %v334 = vmul.f32 %v318, %v293
        %v335 = vmul.f32 %v319, %v293
        %v336 = vmul.f32 %v320, %v293
        %v337 = vmul.f32 %v321, %v293
        %v338 = vmul.f32 %v322, %v293
        %v339 = vmul.f32 %v323, %v293
        %v340 = vmul.f32 %v324, %v293
        %v341 = vmul.f32 %v325, %v293
        %v342 = vmul.f32 %v326, %v293
        %v343 = vld [vmem:[%s3] sm:$0xff]
        %v344 = vld [vmem:[%s3 + $0x8] sm:$0xff]
        %vm345 = vcmask 130048
        %v347 = vsel %vm345, %v295, 0
        %v350 = vsel %vm345, %v296, 0
        %v353 = vsel %vm345, %v297, 0
        %v356 = vsel %vm345, %v298, 0
        %v359 = vsel %vm345, %v299, 0
        %v362 = vsel %vm345, %v300, 0
        %v365 = vsel %vm345, %v301, 0
        %v368 = vsel %vm345, %v302, 0
        %v371 = vsel %vm345, %v303, 0
        %v374 = vsel %vm345, %v304, 0
        %v377 = vsel %vm345, %v305, 0
        %v380 = vsel %vm345, %v306, 0
        %v383 = vsel %vm345, %v307, 0
        %v386 = vsel %vm345, %v308, 0
        %v389 = vsel %vm345, %v309, 0
        %v392 = vsel %vm345, %v310, 0
        %394 = vmatprep.subr.mxu0 0.0
        %395 = vmatpush1.msra.mxu0 %v343
        %396 = vmatprep.subr.mxu0 0.0
        %397 = vmatpush1.msra.mxu0 %v344
        %398 = vmatprep.subr.mxu0 0.0
        %399 = vmatpush1.msra.mxu0 0.0
        %400 = vmatprep.subr.mxu0 0.0
        %401 = vmatpush1.msra.mxu0 0.0
        %402 = vmatprep.subr.mxu0 0.0
        %403 = vmatpush1.msra.mxu0 0.0
        %404 = vmatprep.subr.mxu0 0.0
        %405 = vmatpush1.msra.mxu0 0.0
        %406 = vmatprep.subr.mxu0 0.0
        %407 = vmatpush1.msra.mxu0 0.0
        %408 = vmatprep.subr.mxu0 0.0
        %409 = vmatpush1.msra.mxu0 0.0
        %410 = vmatprep.subr.mxu0 0.0
        %411 = vmatpush1.msra.mxu0 0.0
        %412 = vmatprep.subr.mxu0 0.0
        %413 = vmatpush1.msra.mxu0 0.0
        %414 = vmatprep.subr.mxu0 0.0
        %415 = vmatpush1.msra.mxu0 0.0
        %416 = vmatprep.subr.mxu0 0.0
        %417 = vmatpush1.msra.mxu0 0.0
        %418 = vmatprep.subr.mxu0 0.0
        %419 = vmatpush1.msra.mxu0 0.0
        %420 = vmatprep.subr.mxu0 0.0
        %421 = vmatpush1.msra.mxu0 0.0
        %422 = vmatprep.subr.mxu0 0.0
        %423 = vmatpush1.msra.mxu0 0.0
        %424 = vmatprep.subr.mxu0 0.0
        %425 = vmatpush1.msra.mxu0 0.0
        %426 = vmatprep.subr.mxu0 0.0
        %427 = vmatpush1.msra.mxu0 0.0
        %428 = vmatprep.subr.mxu0 0.0
        %429 = vmatpush1.msra.mxu0 0.0
        %430 = vmatprep.subr.mxu0 0.0
        %431 = vmatpush1.msra.mxu0 0.0
        %432 = vmatprep.subr.mxu0 0.0
        %433 = vmatpush1.msra.mxu0 0.0
        %434 = vmatprep.subr.mxu0 0.0
        %435 = vmatpush1.msra.mxu0 0.0
        %436 = vmatprep.subr.mxu0 0.0
        %437 = vmatpush1.msra.mxu0 0.0
        %438 = vmatprep.subr.mxu0 0.0
        %439 = vmatpush1.msra.mxu0 0.0
        %440 = vmatprep.subr.mxu0 0.0
        %441 = vmatpush1.msra.mxu0 0.0
        %442 = vmatprep.subr.mxu0 0.0
        %443 = vmatpush1.msra.mxu0 0.0
        %444 = vmatprep.subr.mxu0 0.0
        %445 = vmatpush1.msra.mxu0 0.0
        %446 = vmatprep.subr.mxu0 0.0
        %447 = vmatpush1.msra.mxu0 0.0
        %448 = vmatprep.subr.mxu0 0.0
        %449 = vmatpush1.msra.mxu0 0.0
        %450 = vmatprep.subr.mxu0 0.0
        %451 = vmatpush1.msra.mxu0 0.0
        %452 = vmatprep.subr.mxu0 0.0
        %453 = vmatpush1.msra.mxu0 0.0
        %454 = vmatprep.subr.mxu0 0.0
        %455 = vmatpush1.msra.mxu0 0.0
        %456 = vmatprep.subr.mxu0 0.0
        %457 = vmatpush1.msra.mxu0 0.0
        %458 = vmatprep.mubr.f32.mxu0 0.0
        %459 = vmatmul.mubr.f32.gmra.mrb[0].mxu0 %v347
        %v460 = vpop.f32.mrb[0].mxu0
        %v461 = vadd.f32 0.0, %v460
        %v462 = vpop.f32.mrb[0].mxu0
        %463 = vmatprep.mubr.f32.mxu0 0.0
        %464 = vmatmul.mubr.f32.gmra.mrb[0].mxu0 %v350
        %v465 = vpop.f32.mrb[0].mxu0
        %v466 = vadd.f32 0.0, %v465
        %v467 = vpop.f32.mrb[0].mxu0
        %468 = vmatprep.mubr.f32.mxu0 0.0
        %469 = vmatmul.mubr.f32.gmra.mrb[0].mxu0 %v353
        %v470 = vpop.f32.mrb[0].mxu0
        %v471 = vadd.f32 0.0, %v470
        %v472 = vpop.f32.mrb[0].mxu0
        %473 = vmatprep.mubr.f32.mxu0 0.0
        %474 = vmatmul.mubr.f32.gmra.mrb[0].mxu0 %v356
        %v475 = vpop.f32.mrb[0].mxu0
        %v476 = vadd.f32 0.0, %v475
        %v477 = vpop.f32.mrb[0].mxu0
        %478 = vmatprep.mubr.f32.mxu0 0.0
        %479 = vmatmul.mubr.f32.gmra.mrb[0].mxu0 %v359
        %v480 = vpop.f32.mrb[0].mxu0
        %v481 = vadd.f32 0.0, %v480
        %v482 = vpop.f32.mrb[0].mxu0
        %483 = vmatprep.mubr.f32.mxu0 0.0
        %484 = vmatmul.mubr.f32.gmra.mrb[0].mxu0 %v362
        %v485 = vpop.f32.mrb[0].mxu0
        %v486 = vadd.f32 0.0, %v485
        %v487 = vpop.f32.mrb[0].mxu0
        %488 = vmatprep.mubr.f32.mxu0 0.0
        %489 = vmatmul.mubr.f32.gmra.mrb[0].mxu0 %v365
        %v490 = vpop.f32.mrb[0].mxu0
        %v491 = vadd.f32 0.0, %v490
        %v492 = vpop.f32.mrb[0].mxu0
        %493 = vmatprep.mubr.f32.mxu0 0.0
        %494 = vmatmul.mubr.f32.gmra.mrb[0].mxu0 %v368
        %v495 = vpop.f32.mrb[0].mxu0
        %v496 = vadd.f32 0.0, %v495
        %v497 = vpop.f32.mrb[0].mxu0
        %498 = vmatprep.mubr.f32.mxu0 0.0
        %499 = vmatmul.mubr.f32.gmra.mrb[0].mxu0 %v371
        %v500 = vpop.f32.mrb[0].mxu0
        %v501 = vadd.f32 0.0, %v500
        %v502 = vpop.f32.mrb[0].mxu0
        %503 = vmatprep.mubr.f32.mxu0 0.0
        %504 = vmatmul.mubr.f32.gmra.mrb[0].mxu0 %v374
        %v505 = vpop.f32.mrb[0].mxu0
        %v506 = vadd.f32 0.0, %v505
        %v507 = vpop.f32.mrb[0].mxu0
        %508 = vmatprep.mubr.f32.mxu0 0.0
        %509 = vmatmul.mubr.f32.gmra.mrb[0].mxu0 %v377
        %v510 = vpop.f32.mrb[0].mxu0
        %v511 = vadd.f32 0.0, %v510
        %v512 = vpop.f32.mrb[0].mxu0
        %513 = vmatprep.mubr.f32.mxu0 0.0
        %514 = vmatmul.mubr.f32.gmra.mrb[0].mxu0 %v380
        %v515 = vpop.f32.mrb[0].mxu0
        %v516 = vadd.f32 0.0, %v515
        %v517 = vpop.f32.mrb[0].mxu0
        %518 = vmatprep.mubr.f32.mxu0 0.0
        %519 = vmatmul.mubr.f32.gmra.mrb[0].mxu0 %v383
        %v520 = vpop.f32.mrb[0].mxu0
        %v521 = vadd.f32 0.0, %v520
        %v522 = vpop.f32.mrb[0].mxu0
        %523 = vmatprep.mubr.f32.mxu0 0.0
        %524 = vmatmul.mubr.f32.gmra.mrb[0].mxu0 %v386
        %v525 = vpop.f32.mrb[0].mxu0
        %v526 = vadd.f32 0.0, %v525
        %v527 = vpop.f32.mrb[0].mxu0
        %528 = vmatprep.mubr.f32.mxu0 0.0
        %529 = vmatmul.mubr.f32.gmra.mrb[0].mxu0 %v389
        %v530 = vpop.f32.mrb[0].mxu0
        %v531 = vadd.f32 0.0, %v530
        %v532 = vpop.f32.mrb[0].mxu0
        %533 = vmatprep.mubr.f32.mxu0 0.0
        %534 = vmatmul.mubr.f32.gmra.mrb[0].mxu0 %v392
        %v535 = vpop.f32.mrb[0].mxu0
        %v536 = vadd.f32 0.0, %v535
        %v537 = vpop.f32.mrb[0].mxu0
        %538 = vdwg.mxu0
        %v539 = vld [vmem:[%s4] sm:$0xff]
        %v540 = vld [vmem:[%s4 + $0x8] sm:$0xff]
        %541 = vmatprep.subr.mxu0 0.0
        %542 = vmatpush1.msra.mxu0 %v539
        %543 = vmatprep.subr.mxu0 0.0
        %544 = vmatpush1.msra.mxu0 %v540
        %545 = vmatprep.subr.mxu0 0.0
        %546 = vmatpush1.msra.mxu0 0.0
        %547 = vmatprep.subr.mxu0 0.0
        %548 = vmatpush1.msra.mxu0 0.0
        %549 = vmatprep.subr.mxu0 0.0
        %550 = vmatpush1.msra.mxu0 0.0
        %551 = vmatprep.subr.mxu0 0.0
        %552 = vmatpush1.msra.mxu0 0.0
        %553 = vmatprep.subr.mxu0 0.0
        %554 = vmatpush1.msra.mxu0 0.0
        %555 = vmatprep.subr.mxu0 0.0
        %556 = vmatpush1.msra.mxu0 0.0
        %557 = vmatprep.subr.mxu0 0.0
        %558 = vmatpush1.msra.mxu0 0.0
        %559 = vmatprep.subr.mxu0 0.0
        %560 = vmatpush1.msra.mxu0 0.0
        %561 = vmatprep.subr.mxu0 0.0
        %562 = vmatpush1.msra.mxu0 0.0
        %563 = vmatprep.subr.mxu0 0.0
        %564 = vmatpush1.msra.mxu0 0.0
        %565 = vmatprep.subr.mxu0 0.0
        %566 = vmatpush1.msra.mxu0 0.0
        %567 = vmatprep.subr.mxu0 0.0
        %568 = vmatpush1.msra.mxu0 0.0
        %569 = vmatprep.subr.mxu0 0.0
        %570 = vmatpush1.msra.mxu0 0.0
        %571 = vmatprep.subr.mxu0 0.0
        %572 = vmatpush1.msra.mxu0 0.0
        %573 = vmatprep.subr.mxu0 0.0
        %574 = vmatpush1.msra.mxu0 0.0
        %575 = vmatprep.subr.mxu0 0.0
        %576 = vmatpush1.msra.mxu0 0.0
        %577 = vmatprep.subr.mxu0 0.0
        %578 = vmatpush1.msra.mxu0 0.0
        %579 = vmatprep.subr.mxu0 0.0
        %580 = vmatpush1.msra.mxu0 0.0
        %581 = vmatprep.subr.mxu0 0.0
        %582 = vmatpush1.msra.mxu0 0.0
        %583 = vmatprep.subr.mxu0 0.0
        %584 = vmatpush1.msra.mxu0 0.0
        %585 = vmatprep.subr.mxu0 0.0
        %586 = vmatpush1.msra.mxu0 0.0
        %587 = vmatprep.subr.mxu0 0.0
        %588 = vmatpush1.msra.mxu0 0.0
        %589 = vmatprep.subr.mxu0 0.0
        %590 = vmatpush1.msra.mxu0 0.0
        %591 = vmatprep.subr.mxu0 0.0
        %592 = vmatpush1.msra.mxu0 0.0
        %593 = vmatprep.subr.mxu0 0.0
        %594 = vmatpush1.msra.mxu0 0.0
        %595 = vmatprep.subr.mxu0 0.0
        %596 = vmatpush1.msra.mxu0 0.0
        %597 = vmatprep.subr.mxu0 0.0
        %598 = vmatpush1.msra.mxu0 0.0
        %599 = vmatprep.subr.mxu0 0.0
        %600 = vmatpush1.msra.mxu0 0.0
        %601 = vmatprep.subr.mxu0 0.0
        %602 = vmatpush1.msra.mxu0 0.0
        %603 = vmatprep.subr.mxu0 0.0
        %604 = vmatpush1.msra.mxu0 0.0
        %605 = vmatprep.mubr.f32.mxu0 0.0
        %606 = vmatmul.mubr.f32.gmra.mrb[0].mxu0 %v347
        %v607 = vpop.f32.mrb[0].mxu0
        %v608 = vadd.f32 0.0, %v607
        %v609 = vpop.f32.mrb[0].mxu0
        %610 = vmatprep.mubr.f32.mxu0 0.0
        %611 = vmatmul.mubr.f32.gmra.mrb[0].mxu0 %v350
        %v612 = vpop.f32.mrb[0].mxu0
        %v613 = vadd.f32 0.0, %v612
        %v614 = vpop.f32.mrb[0].mxu0
        %615 = vmatprep.mubr.f32.mxu0 0.0
        %616 = vmatmul.mubr.f32.gmra.mrb[0].mxu0 %v353
        %v617 = vpop.f32.mrb[0].mxu0
        %v618 = vadd.f32 0.0, %v617
        %v619 = vpop.f32.mrb[0].mxu0
        %620 = vmatprep.mubr.f32.mxu0 0.0
        %621 = vmatmul.mubr.f32.gmra.mrb[0].mxu0 %v356
        %v622 = vpop.f32.mrb[0].mxu0
        %v623 = vadd.f32 0.0, %v622
        %v624 = vpop.f32.mrb[0].mxu0
        %625 = vmatprep.mubr.f32.mxu0 0.0
        %626 = vmatmul.mubr.f32.gmra.mrb[0].mxu0 %v359
        %v627 = vpop.f32.mrb[0].mxu0
        %v628 = vadd.f32 0.0, %v627
        %v629 = vpop.f32.mrb[0].mxu0
        %630 = vmatprep.mubr.f32.mxu0 0.0
        %631 = vmatmul.mubr.f32.gmra.mrb[0].mxu0 %v362
        %v632 = vpop.f32.mrb[0].mxu0
        %v633 = vadd.f32 0.0, %v632
        %v634 = vpop.f32.mrb[0].mxu0
        %635 = vmatprep.mubr.f32.mxu0 0.0
        %636 = vmatmul.mubr.f32.gmra.mrb[0].mxu0 %v365
        %v637 = vpop.f32.mrb[0].mxu0
        %v638 = vadd.f32 0.0, %v637
        %v639 = vpop.f32.mrb[0].mxu0
        %640 = vmatprep.mubr.f32.mxu0 0.0
        %641 = vmatmul.mubr.f32.gmra.mrb[0].mxu0 %v368
        %v642 = vpop.f32.mrb[0].mxu0
        %v643 = vadd.f32 0.0, %v642
        %v644 = vpop.f32.mrb[0].mxu0
        %645 = vmatprep.mubr.f32.mxu0 0.0
        %646 = vmatmul.mubr.f32.gmra.mrb[0].mxu0 %v371
        %v647 = vpop.f32.mrb[0].mxu0
        %v648 = vadd.f32 0.0, %v647
        %v649 = vpop.f32.mrb[0].mxu0
        %650 = vmatprep.mubr.f32.mxu0 0.0
        %651 = vmatmul.mubr.f32.gmra.mrb[0].mxu0 %v374
        %v652 = vpop.f32.mrb[0].mxu0
        %v653 = vadd.f32 0.0, %v652
        %v654 = vpop.f32.mrb[0].mxu0
        %655 = vmatprep.mubr.f32.mxu0 0.0
        %656 = vmatmul.mubr.f32.gmra.mrb[0].mxu0 %v377
        %v657 = vpop.f32.mrb[0].mxu0
        %v658 = vadd.f32 0.0, %v657
        %v659 = vpop.f32.mrb[0].mxu0
        %660 = vmatprep.mubr.f32.mxu0 0.0
        %661 = vmatmul.mubr.f32.gmra.mrb[0].mxu0 %v380
        %v662 = vpop.f32.mrb[0].mxu0
        %v663 = vadd.f32 0.0, %v662
        %v664 = vpop.f32.mrb[0].mxu0
        %665 = vmatprep.mubr.f32.mxu0 0.0
        %666 = vmatmul.mubr.f32.gmra.mrb[0].mxu0 %v383
        %v667 = vpop.f32.mrb[0].mxu0
        %v668 = vadd.f32 0.0, %v667
        %v669 = vpop.f32.mrb[0].mxu0
        %670 = vmatprep.mubr.f32.mxu0 0.0
        %671 = vmatmul.mubr.f32.gmra.mrb[0].mxu0 %v386
        %v672 = vpop.f32.mrb[0].mxu0
        %v673 = vadd.f32 0.0, %v672
        %v674 = vpop.f32.mrb[0].mxu0
        %675 = vmatprep.mubr.f32.mxu0 0.0
        %676 = vmatmul.mubr.f32.gmra.mrb[0].mxu0 %v389
        %v677 = vpop.f32.mrb[0].mxu0
        %v678 = vadd.f32 0.0, %v677
        %v679 = vpop.f32.mrb[0].mxu0
        %680 = vmatprep.mubr.f32.mxu0 0.0
        %681 = vmatmul.mubr.f32.gmra.mrb[0].mxu0 %v392
        %v682 = vpop.f32.mrb[0].mxu0
        %v683 = vadd.f32 0.0, %v682
        %v684 = vpop.f32.mrb[0].mxu0
        %685 = vdwg.mxu0
        %v687 = vsel %vm345, %v327, 0
        %v690 = vsel %vm345, %v328, 0
        %v693 = vsel %vm345, %v329, 0
        %v696 = vsel %vm345, %v330, 0
        %v699 = vsel %vm345, %v331, 0
        %v702 = vsel %vm345, %v332, 0
        %v705 = vsel %vm345, %v333, 0
        %v708 = vsel %vm345, %v334, 0
        %v711 = vsel %vm345, %v335, 0
        %v714 = vsel %vm345, %v336, 0
        %v717 = vsel %vm345, %v337, 0
        %v720 = vsel %vm345, %v338, 0
        %v723 = vsel %vm345, %v339, 0
        %v726 = vsel %vm345, %v340, 0
        %v729 = vsel %vm345, %v341, 0
        %v732 = vsel %vm345, %v342, 0
        %734 = vmatprep.subr.mxu0 0.0
        %735 = vmatpush1.msra.mxu0 %v343
        %736 = vmatprep.subr.mxu0 0.0
        %737 = vmatpush1.msra.mxu0 %v344
        %738 = vmatprep.subr.mxu0 0.0
        %739 = vmatpush1.msra.mxu0 0.0
        %740 = vmatprep.subr.mxu0 0.0
        %741 = vmatpush1.msra.mxu0 0.0
        %742 = vmatprep.subr.mxu0 0.0
        %743 = vmatpush1.msra.mxu0 0.0
        %744 = vmatprep.subr.mxu0 0.0
        %745 = vmatpush1.msra.mxu0 0.0
        %746 = vmatprep.subr.mxu0 0.0
        %747 = vmatpush1.msra.mxu0 0.0
        %748 = vmatprep.subr.mxu0 0.0
        %749 = vmatpush1.msra.mxu0 0.0
        %750 = vmatprep.subr.mxu0 0.0
        %751 = vmatpush1.msra.mxu0 0.0
        %752 = vmatprep.subr.mxu0 0.0
        %753 = vmatpush1.msra.mxu0 0.0
        %754 = vmatprep.subr.mxu0 0.0
        %755 = vmatpush1.msra.mxu0 0.0
        %756 = vmatprep.subr.mxu0 0.0
        %757 = vmatpush1.msra.mxu0 0.0
        %758 = vmatprep.subr.mxu0 0.0
        %759 = vmatpush1.msra.mxu0 0.0
        %760 = vmatprep.subr.mxu0 0.0
        %761 = vmatpush1.msra.mxu0 0.0
        %762 = vmatprep.subr.mxu0 0.0
        %763 = vmatpush1.msra.mxu0 0.0
        %764 = vmatprep.subr.mxu0 0.0
        %765 = vmatpush1.msra.mxu0 0.0
        %766 = vmatprep.subr.mxu0 0.0
        %767 = vmatpush1.msra.mxu0 0.0
        %768 = vmatprep.subr.mxu0 0.0
        %769 = vmatpush1.msra.mxu0 0.0
        %770 = vmatprep.subr.mxu0 0.0
        %771 = vmatpush1.msra.mxu0 0.0
        %772 = vmatprep.subr.mxu0 0.0
        %773 = vmatpush1.msra.mxu0 0.0
        %774 = vmatprep.subr.mxu0 0.0
        %775 = vmatpush1.msra.mxu0 0.0
        %776 = vmatprep.subr.mxu0 0.0
        %777 = vmatpush1.msra.mxu0 0.0
        %778 = vmatprep.subr.mxu0 0.0
        %779 = vmatpush1.msra.mxu0 0.0
        %780 = vmatprep.subr.mxu0 0.0
        %781 = vmatpush1.msra.mxu0 0.0
        %782 = vmatprep.subr.mxu0 0.0
        %783 = vmatpush1.msra.mxu0 0.0
        %784 = vmatprep.subr.mxu0 0.0
        %785 = vmatpush1.msra.mxu0 0.0
        %786 = vmatprep.subr.mxu0 0.0
        %787 = vmatpush1.msra.mxu0 0.0
        %788 = vmatprep.subr.mxu0 0.0
        %789 = vmatpush1.msra.mxu0 0.0
        %790 = vmatprep.subr.mxu0 0.0
        %791 = vmatpush1.msra.mxu0 0.0
        %792 = vmatprep.subr.mxu0 0.0
        %793 = vmatpush1.msra.mxu0 0.0
        %794 = vmatprep.subr.mxu0 0.0
        %795 = vmatpush1.msra.mxu0 0.0
        %796 = vmatprep.subr.mxu0 0.0
        %797 = vmatpush1.msra.mxu0 0.0
        %798 = vmatprep.mubr.f32.mxu0 0.0
        %799 = vmatmul.mubr.f32.gmra.mrb[0].mxu0 %v687
        %v800 = vpop.f32.mrb[0].mxu0
        %v801 = vadd.f32 0.0, %v800
        %v802 = vpop.f32.mrb[0].mxu0
        %803 = vmatprep.mubr.f32.mxu0 0.0
        %804 = vmatmul.mubr.f32.gmra.mrb[0].mxu0 %v690
        %v805 = vpop.f32.mrb[0].mxu0
        %v806 = vadd.f32 0.0, %v805
        %v807 = vpop.f32.mrb[0].mxu0
        %808 = vmatprep.mubr.f32.mxu0 0.0
        %809 = vmatmul.mubr.f32.gmra.mrb[0].mxu0 %v693
        %v810 = vpop.f32.mrb[0].mxu0
        %v811 = vadd.f32 0.0, %v810
        %v812 = vpop.f32.mrb[0].mxu0
        %813 = vmatprep.mubr.f32.mxu0 0.0
        %814 = vmatmul.mubr.f32.gmra.mrb[0].mxu0 %v696
        %v815 = vpop.f32.mrb[0].mxu0
        %v816 = vadd.f32 0.0, %v815
        %v817 = vpop.f32.mrb[0].mxu0
        %818 = vmatprep.mubr.f32.mxu0 0.0
        %819 = vmatmul.mubr.f32.gmra.mrb[0].mxu0 %v699
        %v820 = vpop.f32.mrb[0].mxu0
        %v821 = vadd.f32 0.0, %v820
        %v822 = vpop.f32.mrb[0].mxu0
        %823 = vmatprep.mubr.f32.mxu0 0.0
        %824 = vmatmul.mubr.f32.gmra.mrb[0].mxu0 %v702
        %v825 = vpop.f32.mrb[0].mxu0
        %v826 = vadd.f32 0.0, %v825
        %v827 = vpop.f32.mrb[0].mxu0
        %828 = vmatprep.mubr.f32.mxu0 0.0
        %829 = vmatmul.mubr.f32.gmra.mrb[0].mxu0 %v705
        %v830 = vpop.f32.mrb[0].mxu0
        %v831 = vadd.f32 0.0, %v830
        %v832 = vpop.f32.mrb[0].mxu0
        %833 = vmatprep.mubr.f32.mxu0 0.0
        %834 = vmatmul.mubr.f32.gmra.mrb[0].mxu0 %v708
        %v835 = vpop.f32.mrb[0].mxu0
        %v836 = vadd.f32 0.0, %v835
        %v837 = vpop.f32.mrb[0].mxu0
        %838 = vmatprep.mubr.f32.mxu0 0.0
        %839 = vmatmul.mubr.f32.gmra.mrb[0].mxu0 %v711
        %v840 = vpop.f32.mrb[0].mxu0
        %v841 = vadd.f32 0.0, %v840
        %v842 = vpop.f32.mrb[0].mxu0
        %843 = vmatprep.mubr.f32.mxu0 0.0
        %844 = vmatmul.mubr.f32.gmra.mrb[0].mxu0 %v714
        %v845 = vpop.f32.mrb[0].mxu0
        %v846 = vadd.f32 0.0, %v845
        %v847 = vpop.f32.mrb[0].mxu0
        %848 = vmatprep.mubr.f32.mxu0 0.0
        %849 = vmatmul.mubr.f32.gmra.mrb[0].mxu0 %v717
        %v850 = vpop.f32.mrb[0].mxu0
        %v851 = vadd.f32 0.0, %v850
        %v852 = vpop.f32.mrb[0].mxu0
        %853 = vmatprep.mubr.f32.mxu0 0.0
        %854 = vmatmul.mubr.f32.gmra.mrb[0].mxu0 %v720
        %v855 = vpop.f32.mrb[0].mxu0
        %v856 = vadd.f32 0.0, %v855
        %v857 = vpop.f32.mrb[0].mxu0
        %858 = vmatprep.mubr.f32.mxu0 0.0
        %859 = vmatmul.mubr.f32.gmra.mrb[0].mxu0 %v723
        %v860 = vpop.f32.mrb[0].mxu0
        %v861 = vadd.f32 0.0, %v860
        %v862 = vpop.f32.mrb[0].mxu0
        %863 = vmatprep.mubr.f32.mxu0 0.0
        %864 = vmatmul.mubr.f32.gmra.mrb[0].mxu0 %v726
        %v865 = vpop.f32.mrb[0].mxu0
        %v866 = vadd.f32 0.0, %v865
        %v867 = vpop.f32.mrb[0].mxu0
        %868 = vmatprep.mubr.f32.mxu0 0.0
        %869 = vmatmul.mubr.f32.gmra.mrb[0].mxu0 %v729
        %v870 = vpop.f32.mrb[0].mxu0
        %v871 = vadd.f32 0.0, %v870
        %v872 = vpop.f32.mrb[0].mxu0
        %873 = vmatprep.mubr.f32.mxu0 0.0
        %874 = vmatmul.mubr.f32.gmra.mrb[0].mxu0 %v732
        %v875 = vpop.f32.mrb[0].mxu0
        %v876 = vadd.f32 0.0, %v875
        %v877 = vpop.f32.mrb[0].mxu0
        %878 = vdwg.mxu0
        %879 = vmatprep.subr.mxu0 0.0
        %880 = vmatpush1.msra.mxu0 %v539
        %881 = vmatprep.subr.mxu0 0.0
        %882 = vmatpush1.msra.mxu0 %v540
        %883 = vmatprep.subr.mxu0 0.0
        %884 = vmatpush1.msra.mxu0 0.0
        %885 = vmatprep.subr.mxu0 0.0
        %886 = vmatpush1.msra.mxu0 0.0
        %887 = vmatprep.subr.mxu0 0.0
        %888 = vmatpush1.msra.mxu0 0.0
        %889 = vmatprep.subr.mxu0 0.0
        %890 = vmatpush1.msra.mxu0 0.0
        %891 = vmatprep.subr.mxu0 0.0
        %892 = vmatpush1.msra.mxu0 0.0
        %893 = vmatprep.subr.mxu0 0.0
        %894 = vmatpush1.msra.mxu0 0.0
        %895 = vmatprep.subr.mxu0 0.0
        %896 = vmatpush1.msra.mxu0 0.0
        %897 = vmatprep.subr.mxu0 0.0
        %898 = vmatpush1.msra.mxu0 0.0
        %899 = vmatprep.subr.mxu0 0.0
        %900 = vmatpush1.msra.mxu0 0.0
        %901 = vmatprep.subr.mxu0 0.0
        %902 = vmatpush1.msra.mxu0 0.0
        %903 = vmatprep.subr.mxu0 0.0
        %904 = vmatpush1.msra.mxu0 0.0
        %905 = vmatprep.subr.mxu0 0.0
        %906 = vmatpush1.msra.mxu0 0.0
        %907 = vmatprep.subr.mxu0 0.0
        %908 = vmatpush1.msra.mxu0 0.0
        %909 = vmatprep.subr.mxu0 0.0
        %910 = vmatpush1.msra.mxu0 0.0
        %911 = vmatprep.subr.mxu0 0.0
        %912 = vmatpush1.msra.mxu0 0.0
        %913 = vmatprep.subr.mxu0 0.0
        %914 = vmatpush1.msra.mxu0 0.0
        %915 = vmatprep.subr.mxu0 0.0
        %916 = vmatpush1.msra.mxu0 0.0
        %917 = vmatprep.subr.mxu0 0.0
        %918 = vmatpush1.msra.mxu0 0.0
        %919 = vmatprep.subr.mxu0 0.0
        %920 = vmatpush1.msra.mxu0 0.0
        %921 = vmatprep.subr.mxu0 0.0
        %922 = vmatpush1.msra.mxu0 0.0
        %923 = vmatprep.subr.mxu0 0.0
        %924 = vmatpush1.msra.mxu0 0.0
        %925 = vmatprep.subr.mxu0 0.0
        %926 = vmatpush1.msra.mxu0 0.0
        %927 = vmatprep.subr.mxu0 0.0
        %928 = vmatpush1.msra.mxu0 0.0
        %929 = vmatprep.subr.mxu0 0.0
        %930 = vmatpush1.msra.mxu0 0.0
        %931 = vmatprep.subr.mxu0 0.0
        %932 = vmatpush1.msra.mxu0 0.0
        %933 = vmatprep.subr.mxu0 0.0
        %934 = vmatpush1.msra.mxu0 0.0
        %935 = vmatprep.subr.mxu0 0.0
        %936 = vmatpush1.msra.mxu0 0.0
        %937 = vmatprep.subr.mxu0 0.0
        %938 = vmatpush1.msra.mxu0 0.0
        %939 = vmatprep.subr.mxu0 0.0
        %940 = vmatpush1.msra.mxu0 0.0
        %941 = vmatprep.subr.mxu0 0.0
        %942 = vmatpush1.msra.mxu0 0.0
        %943 = vmatprep.mubr.f32.mxu0 0.0
        %944 = vmatmul.mubr.f32.gmra.mrb[0].mxu0 %v687
        %v945 = vpop.f32.mrb[0].mxu0
        %v946 = vadd.f32 0.0, %v945
        %v947 = vpop.f32.mrb[0].mxu0
        %948 = vmatprep.mubr.f32.mxu0 0.0
        %949 = vmatmul.mubr.f32.gmra.mrb[0].mxu0 %v690
        %v950 = vpop.f32.mrb[0].mxu0
        %v951 = vadd.f32 0.0, %v950
        %v952 = vpop.f32.mrb[0].mxu0
        %953 = vmatprep.mubr.f32.mxu0 0.0
        %954 = vmatmul.mubr.f32.gmra.mrb[0].mxu0 %v693
        %v955 = vpop.f32.mrb[0].mxu0
        %v956 = vadd.f32 0.0, %v955
        %v957 = vpop.f32.mrb[0].mxu0
        %958 = vmatprep.mubr.f32.mxu0 0.0
        %959 = vmatmul.mubr.f32.gmra.mrb[0].mxu0 %v696
        %v960 = vpop.f32.mrb[0].mxu0
        %v961 = vadd.f32 0.0, %v960
        %v962 = vpop.f32.mrb[0].mxu0
        %963 = vmatprep.mubr.f32.mxu0 0.0
        %964 = vmatmul.mubr.f32.gmra.mrb[0].mxu0 %v699
        %v965 = vpop.f32.mrb[0].mxu0
        %v966 = vadd.f32 0.0, %v965
        %v967 = vpop.f32.mrb[0].mxu0
        %968 = vmatprep.mubr.f32.mxu0 0.0
        %969 = vmatmul.mubr.f32.gmra.mrb[0].mxu0 %v702
        %v970 = vpop.f32.mrb[0].mxu0
        %v971 = vadd.f32 0.0, %v970
        %v972 = vpop.f32.mrb[0].mxu0
        %973 = vmatprep.mubr.f32.mxu0 0.0
        %974 = vmatmul.mubr.f32.gmra.mrb[0].mxu0 %v705
        %v975 = vpop.f32.mrb[0].mxu0
        %v976 = vadd.f32 0.0, %v975
        %v977 = vpop.f32.mrb[0].mxu0
        %978 = vmatprep.mubr.f32.mxu0 0.0
        %979 = vmatmul.mubr.f32.gmra.mrb[0].mxu0 %v708
        %v980 = vpop.f32.mrb[0].mxu0
        %v981 = vadd.f32 0.0, %v980
        %v982 = vpop.f32.mrb[0].mxu0
        %983 = vmatprep.mubr.f32.mxu0 0.0
        %984 = vmatmul.mubr.f32.gmra.mrb[0].mxu0 %v711
        %v985 = vpop.f32.mrb[0].mxu0
        %v986 = vadd.f32 0.0, %v985
        %v987 = vpop.f32.mrb[0].mxu0
        %988 = vmatprep.mubr.f32.mxu0 0.0
        %989 = vmatmul.mubr.f32.gmra.mrb[0].mxu0 %v714
        %v990 = vpop.f32.mrb[0].mxu0
        %v991 = vadd.f32 0.0, %v990
        %v992 = vpop.f32.mrb[0].mxu0
        %993 = vmatprep.mubr.f32.mxu0 0.0
        %994 = vmatmul.mubr.f32.gmra.mrb[0].mxu0 %v717
        %v995 = vpop.f32.mrb[0].mxu0
        %v996 = vadd.f32 0.0, %v995
        %v997 = vpop.f32.mrb[0].mxu0
        %998 = vmatprep.mubr.f32.mxu0 0.0
        %999 = vmatmul.mubr.f32.gmra.mrb[0].mxu0 %v720
        %v1000 = vpop.f32.mrb[0].mxu0
        %v1001 = vadd.f32 0.0, %v1000
        %v1002 = vpop.f32.mrb[0].mxu0
        %1003 = vmatprep.mubr.f32.mxu0 0.0
        %1004 = vmatmul.mubr.f32.gmra.mrb[0].mxu0 %v723
        %v1005 = vpop.f32.mrb[0].mxu0
        %v1006 = vadd.f32 0.0, %v1005
        %v1007 = vpop.f32.mrb[0].mxu0
        %1008 = vmatprep.mubr.f32.mxu0 0.0
        %1009 = vmatmul.mubr.f32.gmra.mrb[0].mxu0 %v726
        %v1010 = vpop.f32.mrb[0].mxu0
        %v1011 = vadd.f32 0.0, %v1010
        %v1012 = vpop.f32.mrb[0].mxu0
        %1013 = vmatprep.mubr.f32.mxu0 0.0
        %1014 = vmatmul.mubr.f32.gmra.mrb[0].mxu0 %v729
        %v1015 = vpop.f32.mrb[0].mxu0
        %v1016 = vadd.f32 0.0, %v1015
        %v1017 = vpop.f32.mrb[0].mxu0
        %1018 = vmatprep.mubr.f32.mxu0 0.0
        %1019 = vmatmul.mubr.f32.gmra.mrb[0].mxu0 %v732
        %v1020 = vpop.f32.mrb[0].mxu0
        %v1021 = vadd.f32 0.0, %v1020
        %v1022 = vpop.f32.mrb[0].mxu0
        %1023 = vdwg.mxu0
        %v1024 = vmul.f32 %v461, %v461
        %v1025 = vmul.f32 %v466, %v466
        %v1026 = vmul.f32 %v471, %v471
        %v1027 = vmul.f32 %v476, %v476
        %v1028 = vmul.f32 %v481, %v481
        %v1029 = vmul.f32 %v486, %v486
        %v1030 = vmul.f32 %v491, %v491
        %v1031 = vmul.f32 %v496, %v496
        %v1032 = vmul.f32 %v501, %v501
        %v1033 = vmul.f32 %v506, %v506
        %v1034 = vmul.f32 %v511, %v511
        %v1035 = vmul.f32 %v516, %v516
        %v1036 = vmul.f32 %v521, %v521
        %v1037 = vmul.f32 %v526, %v526
        %v1038 = vmul.f32 %v531, %v531
        %v1039 = vmul.f32 %v536, %v536
        %v1040 = vmul.f32 %v608, %v608
        %v1041 = vmul.f32 %v613, %v613
        %v1042 = vmul.f32 %v618, %v618
        %v1043 = vmul.f32 %v623, %v623
        %v1044 = vmul.f32 %v628, %v628
        %v1045 = vmul.f32 %v633, %v633
        %v1046 = vmul.f32 %v638, %v638
        %v1047 = vmul.f32 %v643, %v643
        %v1048 = vmul.f32 %v648, %v648
        %v1049 = vmul.f32 %v653, %v653
        %v1050 = vmul.f32 %v658, %v658
        %v1051 = vmul.f32 %v663, %v663
        %v1052 = vmul.f32 %v668, %v668
        %v1053 = vmul.f32 %v673, %v673
        %v1054 = vmul.f32 %v678, %v678
        %v1055 = vmul.f32 %v683, %v683
        %v1056 = vadd.f32 %v1024, %v1040
        %v1057 = vadd.f32 %v1025, %v1041
        %v1058 = vadd.f32 %v1026, %v1042
        %v1059 = vadd.f32 %v1027, %v1043
        %v1060 = vadd.f32 %v1028, %v1044
        %v1061 = vadd.f32 %v1029, %v1045
        %v1062 = vadd.f32 %v1030, %v1046
        %v1063 = vadd.f32 %v1031, %v1047
        %v1064 = vadd.f32 %v1032, %v1048
        %v1065 = vadd.f32 %v1033, %v1049
        %v1066 = vadd.f32 %v1034, %v1050
        %v1067 = vadd.f32 %v1035, %v1051
        %v1068 = vadd.f32 %v1036, %v1052
        %v1069 = vadd.f32 %v1037, %v1053
        %v1070 = vadd.f32 %v1038, %v1054
        %v1071 = vadd.f32 %v1039, %v1055
        %v1072 = vadd.f32 %v1056, 1e-12
        %v1073 = vadd.f32 %v1057, 1e-12
        %v1074 = vadd.f32 %v1058, 1e-12
        %v1075 = vadd.f32 %v1059, 1e-12
        %v1076 = vadd.f32 %v1060, 1e-12
        %v1077 = vadd.f32 %v1061, 1e-12
        %v1078 = vadd.f32 %v1062, 1e-12
        %v1079 = vadd.f32 %v1063, 1e-12
        %v1080 = vadd.f32 %v1064, 1e-12
        %v1081 = vadd.f32 %v1065, 1e-12
        %v1082 = vadd.f32 %v1066, 1e-12
        %v1083 = vadd.f32 %v1067, 1e-12
        %v1084 = vadd.f32 %v1068, 1e-12
        %v1085 = vadd.f32 %v1069, 1e-12
        %v1086 = vadd.f32 %v1070, 1e-12
        %v1087 = vadd.f32 %v1071, 1e-12
        %v1088 = vrsqrt.pop %v1072
        %v1089 = vmul.f32 %v1072, %v1088
        %vm1090 = vcmp.eq.f32.partialorder %v1072, inf
        %v1091 = vsel %vm1090, %v1072, %v1089
        %vm1092 = vcmp.eq.f32.partialorder %v1072, 0.0
        %v1093 = vand.u32 %v1072, 2147483648
        %v1094 = vsel %vm1092, %v1093, %v1091
        %v1095 = vrsqrt.pop %v1073
        %v1096 = vmul.f32 %v1073, %v1095
        %vm1097 = vcmp.eq.f32.partialorder %v1073, inf
        %v1098 = vsel %vm1097, %v1073, %v1096
        %vm1099 = vcmp.eq.f32.partialorder %v1073, 0.0
        %v1100 = vand.u32 %v1073, 2147483648
        %v1101 = vsel %vm1099, %v1100, %v1098
        %v1102 = vrsqrt.pop %v1074
        %v1103 = vmul.f32 %v1074, %v1102
        %vm1104 = vcmp.eq.f32.partialorder %v1074, inf
        %v1105 = vsel %vm1104, %v1074, %v1103
        %vm1106 = vcmp.eq.f32.partialorder %v1074, 0.0
        %v1107 = vand.u32 %v1074, 2147483648
        %v1108 = vsel %vm1106, %v1107, %v1105
        %v1109 = vrsqrt.pop %v1075
        %v1110 = vmul.f32 %v1075, %v1109
        %vm1111 = vcmp.eq.f32.partialorder %v1075, inf
        %v1112 = vsel %vm1111, %v1075, %v1110
        %vm1113 = vcmp.eq.f32.partialorder %v1075, 0.0
        %v1114 = vand.u32 %v1075, 2147483648
        %v1115 = vsel %vm1113, %v1114, %v1112
        %v1116 = vrsqrt.pop %v1076
        %v1117 = vmul.f32 %v1076, %v1116
        %vm1118 = vcmp.eq.f32.partialorder %v1076, inf
        %v1119 = vsel %vm1118, %v1076, %v1117
        %vm1120 = vcmp.eq.f32.partialorder %v1076, 0.0
        %v1121 = vand.u32 %v1076, 2147483648
        %v1122 = vsel %vm1120, %v1121, %v1119
        %v1123 = vrsqrt.pop %v1077
        %v1124 = vmul.f32 %v1077, %v1123
        %vm1125 = vcmp.eq.f32.partialorder %v1077, inf
        %v1126 = vsel %vm1125, %v1077, %v1124
        %vm1127 = vcmp.eq.f32.partialorder %v1077, 0.0
        %v1128 = vand.u32 %v1077, 2147483648
        %v1129 = vsel %vm1127, %v1128, %v1126
        %v1130 = vrsqrt.pop %v1078
        %v1131 = vmul.f32 %v1078, %v1130
        %vm1132 = vcmp.eq.f32.partialorder %v1078, inf
        %v1133 = vsel %vm1132, %v1078, %v1131
        %vm1134 = vcmp.eq.f32.partialorder %v1078, 0.0
        %v1135 = vand.u32 %v1078, 2147483648
        %v1136 = vsel %vm1134, %v1135, %v1133
        %v1137 = vrsqrt.pop %v1079
        %v1138 = vmul.f32 %v1079, %v1137
        %vm1139 = vcmp.eq.f32.partialorder %v1079, inf
        %v1140 = vsel %vm1139, %v1079, %v1138
        %vm1141 = vcmp.eq.f32.partialorder %v1079, 0.0
        %v1142 = vand.u32 %v1079, 2147483648
        %v1143 = vsel %vm1141, %v1142, %v1140
        %v1144 = vrsqrt.pop %v1080
        %v1145 = vmul.f32 %v1080, %v1144
        %vm1146 = vcmp.eq.f32.partialorder %v1080, inf
        %v1147 = vsel %vm1146, %v1080, %v1145
        %vm1148 = vcmp.eq.f32.partialorder %v1080, 0.0
        %v1149 = vand.u32 %v1080, 2147483648
        %v1150 = vsel %vm1148, %v1149, %v1147
        %v1151 = vrsqrt.pop %v1081
        %v1152 = vmul.f32 %v1081, %v1151
        %vm1153 = vcmp.eq.f32.partialorder %v1081, inf
        %v1154 = vsel %vm1153, %v1081, %v1152
        %vm1155 = vcmp.eq.f32.partialorder %v1081, 0.0
        %v1156 = vand.u32 %v1081, 2147483648
        %v1157 = vsel %vm1155, %v1156, %v1154
        %v1158 = vrsqrt.pop %v1082
        %v1159 = vmul.f32 %v1082, %v1158
        %vm1160 = vcmp.eq.f32.partialorder %v1082, inf
        %v1161 = vsel %vm1160, %v1082, %v1159
        %vm1162 = vcmp.eq.f32.partialorder %v1082, 0.0
        %v1163 = vand.u32 %v1082, 2147483648
        %v1164 = vsel %vm1162, %v1163, %v1161
        %v1165 = vrsqrt.pop %v1083
        %v1166 = vmul.f32 %v1083, %v1165
        %vm1167 = vcmp.eq.f32.partialorder %v1083, inf
        %v1168 = vsel %vm1167, %v1083, %v1166
        %vm1169 = vcmp.eq.f32.partialorder %v1083, 0.0
        %v1170 = vand.u32 %v1083, 2147483648
        %v1171 = vsel %vm1169, %v1170, %v1168
        %v1172 = vrsqrt.pop %v1084
        %v1173 = vmul.f32 %v1084, %v1172
        %vm1174 = vcmp.eq.f32.partialorder %v1084, inf
        %v1175 = vsel %vm1174, %v1084, %v1173
        %vm1176 = vcmp.eq.f32.partialorder %v1084, 0.0
        %v1177 = vand.u32 %v1084, 2147483648
        %v1178 = vsel %vm1176, %v1177, %v1175
        %v1179 = vrsqrt.pop %v1085
        %v1180 = vmul.f32 %v1085, %v1179
        %vm1181 = vcmp.eq.f32.partialorder %v1085, inf
        %v1182 = vsel %vm1181, %v1085, %v1180
        %vm1183 = vcmp.eq.f32.partialorder %v1085, 0.0
        %v1184 = vand.u32 %v1085, 2147483648
        %v1185 = vsel %vm1183, %v1184, %v1182
        %v1186 = vrsqrt.pop %v1086
        %v1187 = vmul.f32 %v1086, %v1186
        %vm1188 = vcmp.eq.f32.partialorder %v1086, inf
        %v1189 = vsel %vm1188, %v1086, %v1187
        %vm1190 = vcmp.eq.f32.partialorder %v1086, 0.0
        %v1191 = vand.u32 %v1086, 2147483648
        %v1192 = vsel %vm1190, %v1191, %v1189
        %v1193 = vrsqrt.pop %v1087
        %v1194 = vmul.f32 %v1087, %v1193
        %vm1195 = vcmp.eq.f32.partialorder %v1087, inf
        %v1196 = vsel %vm1195, %v1087, %v1194
        %vm1197 = vcmp.eq.f32.partialorder %v1087, 0.0
        %v1198 = vand.u32 %v1087, 2147483648
        %v1199 = vsel %vm1197, %v1198, %v1196
        %v1200 = vmul.f32 %v801, %v801
        %v1201 = vmul.f32 %v806, %v806
        %v1202 = vmul.f32 %v811, %v811
        %v1203 = vmul.f32 %v816, %v816
        %v1204 = vmul.f32 %v821, %v821
        %v1205 = vmul.f32 %v826, %v826
        %v1206 = vmul.f32 %v831, %v831
        %v1207 = vmul.f32 %v836, %v836
        %v1208 = vmul.f32 %v841, %v841
        %v1209 = vmul.f32 %v846, %v846
        %v1210 = vmul.f32 %v851, %v851
        %v1211 = vmul.f32 %v856, %v856
        %v1212 = vmul.f32 %v861, %v861
        %v1213 = vmul.f32 %v866, %v866
        %v1214 = vmul.f32 %v871, %v871
        %v1215 = vmul.f32 %v876, %v876
        %v1216 = vmul.f32 %v946, %v946
        %v1217 = vmul.f32 %v951, %v951
        %v1218 = vmul.f32 %v956, %v956
        %v1219 = vmul.f32 %v961, %v961
        %v1220 = vmul.f32 %v966, %v966
        %v1221 = vmul.f32 %v971, %v971
        %v1222 = vmul.f32 %v976, %v976
        %v1223 = vmul.f32 %v981, %v981
        %v1224 = vmul.f32 %v986, %v986
        %v1225 = vmul.f32 %v991, %v991
        %v1226 = vmul.f32 %v996, %v996
        %v1227 = vmul.f32 %v1001, %v1001
        %v1228 = vmul.f32 %v1006, %v1006
        %v1229 = vmul.f32 %v1011, %v1011
        %v1230 = vmul.f32 %v1016, %v1016
        %v1231 = vmul.f32 %v1021, %v1021
        %v1232 = vadd.f32 %v1200, %v1216
        %v1233 = vadd.f32 %v1201, %v1217
        %v1234 = vadd.f32 %v1202, %v1218
        %v1235 = vadd.f32 %v1203, %v1219
        %v1236 = vadd.f32 %v1204, %v1220
        %v1237 = vadd.f32 %v1205, %v1221
        %v1238 = vadd.f32 %v1206, %v1222
        %v1239 = vadd.f32 %v1207, %v1223
        %v1240 = vadd.f32 %v1208, %v1224
        %v1241 = vadd.f32 %v1209, %v1225
        %v1242 = vadd.f32 %v1210, %v1226
        %v1243 = vadd.f32 %v1211, %v1227
        %v1244 = vadd.f32 %v1212, %v1228
        %v1245 = vadd.f32 %v1213, %v1229
        %v1246 = vadd.f32 %v1214, %v1230
        %v1247 = vadd.f32 %v1215, %v1231
        %v1248 = vadd.f32 %v1232, 1e-12
        %v1249 = vadd.f32 %v1233, 1e-12
        %v1250 = vadd.f32 %v1234, 1e-12
        %v1251 = vadd.f32 %v1235, 1e-12
        %v1252 = vadd.f32 %v1236, 1e-12
        %v1253 = vadd.f32 %v1237, 1e-12
        %v1254 = vadd.f32 %v1238, 1e-12
        %v1255 = vadd.f32 %v1239, 1e-12
        %v1256 = vadd.f32 %v1240, 1e-12
        %v1257 = vadd.f32 %v1241, 1e-12
        %v1258 = vadd.f32 %v1242, 1e-12
        %v1259 = vadd.f32 %v1243, 1e-12
        %v1260 = vadd.f32 %v1244, 1e-12
        %v1261 = vadd.f32 %v1245, 1e-12
        %v1262 = vadd.f32 %v1246, 1e-12
        %v1263 = vadd.f32 %v1247, 1e-12
        %v1264 = vrsqrt.pop %v1248
        %v1265 = vmul.f32 %v1248, %v1264
        %vm1266 = vcmp.eq.f32.partialorder %v1248, inf
        %v1267 = vsel %vm1266, %v1248, %v1265
        %vm1268 = vcmp.eq.f32.partialorder %v1248, 0.0
        %v1269 = vand.u32 %v1248, 2147483648
        %v1270 = vsel %vm1268, %v1269, %v1267
        %v1271 = vrsqrt.pop %v1249
        %v1272 = vmul.f32 %v1249, %v1271
        %vm1273 = vcmp.eq.f32.partialorder %v1249, inf
        %v1274 = vsel %vm1273, %v1249, %v1272
        %vm1275 = vcmp.eq.f32.partialorder %v1249, 0.0
        %v1276 = vand.u32 %v1249, 2147483648
        %v1277 = vsel %vm1275, %v1276, %v1274
        %v1278 = vrsqrt.pop %v1250
        %v1279 = vmul.f32 %v1250, %v1278
        %vm1280 = vcmp.eq.f32.partialorder %v1250, inf
        %v1281 = vsel %vm1280, %v1250, %v1279
        %vm1282 = vcmp.eq.f32.partialorder %v1250, 0.0
        %v1283 = vand.u32 %v1250, 2147483648
        %v1284 = vsel %vm1282, %v1283, %v1281
        %v1285 = vrsqrt.pop %v1251
        %v1286 = vmul.f32 %v1251, %v1285
        %vm1287 = vcmp.eq.f32.partialorder %v1251, inf
        %v1288 = vsel %vm1287, %v1251, %v1286
        %vm1289 = vcmp.eq.f32.partialorder %v1251, 0.0
        %v1290 = vand.u32 %v1251, 2147483648
        %v1291 = vsel %vm1289, %v1290, %v1288
        %v1292 = vrsqrt.pop %v1252
        %v1293 = vmul.f32 %v1252, %v1292
        %vm1294 = vcmp.eq.f32.partialorder %v1252, inf
        %v1295 = vsel %vm1294, %v1252, %v1293
        %vm1296 = vcmp.eq.f32.partialorder %v1252, 0.0
        %v1297 = vand.u32 %v1252, 2147483648
        %v1298 = vsel %vm1296, %v1297, %v1295
        %v1299 = vrsqrt.pop %v1253
        %v1300 = vmul.f32 %v1253, %v1299
        %vm1301 = vcmp.eq.f32.partialorder %v1253, inf
        %v1302 = vsel %vm1301, %v1253, %v1300
        %vm1303 = vcmp.eq.f32.partialorder %v1253, 0.0
        %v1304 = vand.u32 %v1253, 2147483648
        %v1305 = vsel %vm1303, %v1304, %v1302
        %v1306 = vrsqrt.pop %v1254
        %v1307 = vmul.f32 %v1254, %v1306
        %vm1308 = vcmp.eq.f32.partialorder %v1254, inf
        %v1309 = vsel %vm1308, %v1254, %v1307
        %vm1310 = vcmp.eq.f32.partialorder %v1254, 0.0
        %v1311 = vand.u32 %v1254, 2147483648
        %v1312 = vsel %vm1310, %v1311, %v1309
        %v1313 = vrsqrt.pop %v1255
        %v1314 = vmul.f32 %v1255, %v1313
        %vm1315 = vcmp.eq.f32.partialorder %v1255, inf
        %v1316 = vsel %vm1315, %v1255, %v1314
        %vm1317 = vcmp.eq.f32.partialorder %v1255, 0.0
        %v1318 = vand.u32 %v1255, 2147483648
        %v1319 = vsel %vm1317, %v1318, %v1316
        %v1320 = vrsqrt.pop %v1256
        %v1321 = vmul.f32 %v1256, %v1320
        %vm1322 = vcmp.eq.f32.partialorder %v1256, inf
        %v1323 = vsel %vm1322, %v1256, %v1321
        %vm1324 = vcmp.eq.f32.partialorder %v1256, 0.0
        %v1325 = vand.u32 %v1256, 2147483648
        %v1326 = vsel %vm1324, %v1325, %v1323
        %v1327 = vrsqrt.pop %v1257
        %v1328 = vmul.f32 %v1257, %v1327
        %vm1329 = vcmp.eq.f32.partialorder %v1257, inf
        %v1330 = vsel %vm1329, %v1257, %v1328
        %vm1331 = vcmp.eq.f32.partialorder %v1257, 0.0
        %v1332 = vand.u32 %v1257, 2147483648
        %v1333 = vsel %vm1331, %v1332, %v1330
        %v1334 = vrsqrt.pop %v1258
        %v1335 = vmul.f32 %v1258, %v1334
        %vm1336 = vcmp.eq.f32.partialorder %v1258, inf
        %v1337 = vsel %vm1336, %v1258, %v1335
        %vm1338 = vcmp.eq.f32.partialorder %v1258, 0.0
        %v1339 = vand.u32 %v1258, 2147483648
        %v1340 = vsel %vm1338, %v1339, %v1337
        %v1341 = vrsqrt.pop %v1259
        %v1342 = vmul.f32 %v1259, %v1341
        %vm1343 = vcmp.eq.f32.partialorder %v1259, inf
        %v1344 = vsel %vm1343, %v1259, %v1342
        %vm1345 = vcmp.eq.f32.partialorder %v1259, 0.0
        %v1346 = vand.u32 %v1259, 2147483648
        %v1347 = vsel %vm1345, %v1346, %v1344
        %v1348 = vrsqrt.pop %v1260
        %v1349 = vmul.f32 %v1260, %v1348
        %vm1350 = vcmp.eq.f32.partialorder %v1260, inf
        %v1351 = vsel %vm1350, %v1260, %v1349
        %vm1352 = vcmp.eq.f32.partialorder %v1260, 0.0
        %v1353 = vand.u32 %v1260, 2147483648
        %v1354 = vsel %vm1352, %v1353, %v1351
        %v1355 = vrsqrt.pop %v1261
        %v1356 = vmul.f32 %v1261, %v1355
        %vm1357 = vcmp.eq.f32.partialorder %v1261, inf
        %v1358 = vsel %vm1357, %v1261, %v1356
        %vm1359 = vcmp.eq.f32.partialorder %v1261, 0.0
        %v1360 = vand.u32 %v1261, 2147483648
        %v1361 = vsel %vm1359, %v1360, %v1358
        %v1362 = vrsqrt.pop %v1262
        %v1363 = vmul.f32 %v1262, %v1362
        %vm1364 = vcmp.eq.f32.partialorder %v1262, inf
        %v1365 = vsel %vm1364, %v1262, %v1363
        %vm1366 = vcmp.eq.f32.partialorder %v1262, 0.0
        %v1367 = vand.u32 %v1262, 2147483648
        %v1368 = vsel %vm1366, %v1367, %v1365
        %v1369 = vrsqrt.pop %v1263
        %v1370 = vmul.f32 %v1263, %v1369
        %vm1371 = vcmp.eq.f32.partialorder %v1263, inf
        %v1372 = vsel %vm1371, %v1263, %v1370
        %vm1373 = vcmp.eq.f32.partialorder %v1263, 0.0
        %v1374 = vand.u32 %v1263, 2147483648
        %v1375 = vsel %vm1373, %v1374, %v1372
        %v1376 = vld [vmem:[%s5] sm:$0xff]
        %v1377 = vld [vmem:[%s5 + $0x8] sm:$0x1]
        %vm1378 = vcmask 72704
        %v1380 = vsel %vm1378, %v1094, 0
        %v1383 = vsel %vm1378, %v1101, 0
        %v1386 = vsel %vm1378, %v1108, 0
        %v1389 = vsel %vm1378, %v1115, 0
        %v1392 = vsel %vm1378, %v1122, 0
        %v1395 = vsel %vm1378, %v1129, 0
        %v1398 = vsel %vm1378, %v1136, 0
        %v1401 = vsel %vm1378, %v1143, 0
        %v1404 = vsel %vm1378, %v1150, 0
        %v1407 = vsel %vm1378, %v1157, 0
        %v1410 = vsel %vm1378, %v1164, 0
        %v1413 = vsel %vm1378, %v1171, 0
        %v1416 = vsel %vm1378, %v1178, 0
        %v1419 = vsel %vm1378, %v1185, 0
        %v1422 = vsel %vm1378, %v1192, 0
        %v1425 = vsel %vm1378, %v1199, 0
        %vm1427 = vcmask 1040384
        %v1429 = vsel %vm1427, %v1377, 0
        %1431 = vmatprep.subr.mxu0 0.0
        %1432 = vmatpush1.msra.mxu0 %v1376
        %1433 = vmatprep.subr.mxu0 0.0
        %1434 = vmatpush1.msra.mxu0 %v1429
        %1435 = vmatprep.subr.mxu0 0.0
        %1436 = vmatpush1.msra.mxu0 0.0
        %1437 = vmatprep.subr.mxu0 0.0
        %1438 = vmatpush1.msra.mxu0 0.0
        %1439 = vmatprep.subr.mxu0 0.0
        %1440 = vmatpush1.msra.mxu0 0.0
        %1441 = vmatprep.subr.mxu0 0.0
        %1442 = vmatpush1.msra.mxu0 0.0
        %1443 = vmatprep.subr.mxu0 0.0
        %1444 = vmatpush1.msra.mxu0 0.0
        %1445 = vmatprep.subr.mxu0 0.0
        %1446 = vmatpush1.msra.mxu0 0.0
        %1447 = vmatprep.subr.mxu0 0.0
        %1448 = vmatpush1.msra.mxu0 0.0
        %1449 = vmatprep.subr.mxu0 0.0
        %1450 = vmatpush1.msra.mxu0 0.0
        %1451 = vmatprep.subr.mxu0 0.0
        %1452 = vmatpush1.msra.mxu0 0.0
        %1453 = vmatprep.subr.mxu0 0.0
        %1454 = vmatpush1.msra.mxu0 0.0
        %1455 = vmatprep.subr.mxu0 0.0
        %1456 = vmatpush1.msra.mxu0 0.0
        %1457 = vmatprep.subr.mxu0 0.0
        %1458 = vmatpush1.msra.mxu0 0.0
        %1459 = vmatprep.subr.mxu0 0.0
        %1460 = vmatpush1.msra.mxu0 0.0
        %1461 = vmatprep.subr.mxu0 0.0
        %1462 = vmatpush1.msra.mxu0 0.0
        %1463 = vmatprep.subr.mxu0 0.0
        %1464 = vmatpush1.msra.mxu0 0.0
        %1465 = vmatprep.subr.mxu0 0.0
        %1466 = vmatpush1.msra.mxu0 0.0
        %1467 = vmatprep.subr.mxu0 0.0
        %1468 = vmatpush1.msra.mxu0 0.0
        %1469 = vmatprep.subr.mxu0 0.0
        %1470 = vmatpush1.msra.mxu0 0.0
        %1471 = vmatprep.subr.mxu0 0.0
        %1472 = vmatpush1.msra.mxu0 0.0
        %1473 = vmatprep.subr.mxu0 0.0
        %1474 = vmatpush1.msra.mxu0 0.0
        %1475 = vmatprep.subr.mxu0 0.0
        %1476 = vmatpush1.msra.mxu0 0.0
        %1477 = vmatprep.subr.mxu0 0.0
        %1478 = vmatpush1.msra.mxu0 0.0
        %1479 = vmatprep.subr.mxu0 0.0
        %1480 = vmatpush1.msra.mxu0 0.0
        %1481 = vmatprep.subr.mxu0 0.0
        %1482 = vmatpush1.msra.mxu0 0.0
        %1483 = vmatprep.subr.mxu0 0.0
        %1484 = vmatpush1.msra.mxu0 0.0
        %1485 = vmatprep.subr.mxu0 0.0
        %1486 = vmatpush1.msra.mxu0 0.0
        %1487 = vmatprep.subr.mxu0 0.0
        %1488 = vmatpush1.msra.mxu0 0.0
        %1489 = vmatprep.subr.mxu0 0.0
        %1490 = vmatpush1.msra.mxu0 0.0
        %1491 = vmatprep.subr.mxu0 0.0
        %1492 = vmatpush1.msra.mxu0 0.0
        %1493 = vmatprep.subr.mxu0 0.0
        %1494 = vmatpush1.msra.mxu0 0.0
        %1495 = vmatprep.mubr.f32.mxu0 0.0
        %1496 = vmatmul.mubr.f32.gmra.mrb[0].mxu0 %v1380
        %v1497 = vpop.f32.mrb[0].mxu0
        %v1498 = vadd.f32 0.0, %v1497
        %v1499 = vpop.f32.mrb[0].mxu0
        %1500 = vmatprep.mubr.f32.mxu0 0.0
        %1501 = vmatmul.mubr.f32.gmra.mrb[0].mxu0 %v1383
        %v1502 = vpop.f32.mrb[0].mxu0
        %v1503 = vadd.f32 0.0, %v1502
        %v1504 = vpop.f32.mrb[0].mxu0
        %1505 = vmatprep.mubr.f32.mxu0 0.0
        %1506 = vmatmul.mubr.f32.gmra.mrb[0].mxu0 %v1386
        %v1507 = vpop.f32.mrb[0].mxu0
        %v1508 = vadd.f32 0.0, %v1507
        %v1509 = vpop.f32.mrb[0].mxu0
        %1510 = vmatprep.mubr.f32.mxu0 0.0
        %1511 = vmatmul.mubr.f32.gmra.mrb[0].mxu0 %v1389
        %v1512 = vpop.f32.mrb[0].mxu0
        %v1513 = vadd.f32 0.0, %v1512
        %v1514 = vpop.f32.mrb[0].mxu0
        %1515 = vmatprep.mubr.f32.mxu0 0.0
        %1516 = vmatmul.mubr.f32.gmra.mrb[0].mxu0 %v1392
        %v1517 = vpop.f32.mrb[0].mxu0
        %v1518 = vadd.f32 0.0, %v1517
        %v1519 = vpop.f32.mrb[0].mxu0
        %1520 = vmatprep.mubr.f32.mxu0 0.0
        %1521 = vmatmul.mubr.f32.gmra.mrb[0].mxu0 %v1395
        %v1522 = vpop.f32.mrb[0].mxu0
        %v1523 = vadd.f32 0.0, %v1522
        %v1524 = vpop.f32.mrb[0].mxu0
        %1525 = vmatprep.mubr.f32.mxu0 0.0
        %1526 = vmatmul.mubr.f32.gmra.mrb[0].mxu0 %v1398
        %v1527 = vpop.f32.mrb[0].mxu0
        %v1528 = vadd.f32 0.0, %v1527
        %v1529 = vpop.f32.mrb[0].mxu0
        %1530 = vmatprep.mubr.f32.mxu0 0.0
        %1531 = vmatmul.mubr.f32.gmra.mrb[0].mxu0 %v1401
        %v1532 = vpop.f32.mrb[0].mxu0
        %v1533 = vadd.f32 0.0, %v1532
        %v1534 = vpop.f32.mrb[0].mxu0
        %1535 = vmatprep.mubr.f32.mxu0 0.0
        %1536 = vmatmul.mubr.f32.gmra.mrb[0].mxu0 %v1404
        %v1537 = vpop.f32.mrb[0].mxu0
        %v1538 = vadd.f32 0.0, %v1537
        %v1539 = vpop.f32.mrb[0].mxu0
        %1540 = vmatprep.mubr.f32.mxu0 0.0
        %1541 = vmatmul.mubr.f32.gmra.mrb[0].mxu0 %v1407
        %v1542 = vpop.f32.mrb[0].mxu0
        %v1543 = vadd.f32 0.0, %v1542
        %v1544 = vpop.f32.mrb[0].mxu0
        %1545 = vmatprep.mubr.f32.mxu0 0.0
        %1546 = vmatmul.mubr.f32.gmra.mrb[0].mxu0 %v1410
        %v1547 = vpop.f32.mrb[0].mxu0
        %v1548 = vadd.f32 0.0, %v1547
        %v1549 = vpop.f32.mrb[0].mxu0
        %1550 = vmatprep.mubr.f32.mxu0 0.0
        %1551 = vmatmul.mubr.f32.gmra.mrb[0].mxu0 %v1413
        %v1552 = vpop.f32.mrb[0].mxu0
        %v1553 = vadd.f32 0.0, %v1552
        %v1554 = vpop.f32.mrb[0].mxu0
        %1555 = vmatprep.mubr.f32.mxu0 0.0
        %1556 = vmatmul.mubr.f32.gmra.mrb[0].mxu0 %v1416
        %v1557 = vpop.f32.mrb[0].mxu0
        %v1558 = vadd.f32 0.0, %v1557
        %v1559 = vpop.f32.mrb[0].mxu0
        %1560 = vmatprep.mubr.f32.mxu0 0.0
        %1561 = vmatmul.mubr.f32.gmra.mrb[0].mxu0 %v1419
        %v1562 = vpop.f32.mrb[0].mxu0
        %v1563 = vadd.f32 0.0, %v1562
        %v1564 = vpop.f32.mrb[0].mxu0
        %1565 = vmatprep.mubr.f32.mxu0 0.0
        %1566 = vmatmul.mubr.f32.gmra.mrb[0].mxu0 %v1422
        %v1567 = vpop.f32.mrb[0].mxu0
        %v1568 = vadd.f32 0.0, %v1567
        %v1569 = vpop.f32.mrb[0].mxu0
        %1570 = vmatprep.mubr.f32.mxu0 0.0
        %1571 = vmatmul.mubr.f32.gmra.mrb[0].mxu0 %v1425
        %v1572 = vpop.f32.mrb[0].mxu0
        %v1573 = vadd.f32 0.0, %v1572
        %v1574 = vpop.f32.mrb[0].mxu0
        %1575 = vdwg.mxu0
        %v1577 = vsel %vm1378, %v1270, 0
        %v1580 = vsel %vm1378, %v1277, 0
        %v1583 = vsel %vm1378, %v1284, 0
        %v1586 = vsel %vm1378, %v1291, 0
        %v1589 = vsel %vm1378, %v1298, 0
        %v1592 = vsel %vm1378, %v1305, 0
        %v1595 = vsel %vm1378, %v1312, 0
        %v1598 = vsel %vm1378, %v1319, 0
        %v1601 = vsel %vm1378, %v1326, 0
        %v1604 = vsel %vm1378, %v1333, 0
        %v1607 = vsel %vm1378, %v1340, 0
        %v1610 = vsel %vm1378, %v1347, 0
        %v1613 = vsel %vm1378, %v1354, 0
        %v1616 = vsel %vm1378, %v1361, 0
        %v1619 = vsel %vm1378, %v1368, 0
        %v1622 = vsel %vm1378, %v1375, 0
        %1624 = vmatprep.subr.mxu0 0.0
        %1625 = vmatpush1.msra.mxu0 %v1376
        %1626 = vmatprep.subr.mxu0 0.0
        %1627 = vmatpush1.msra.mxu0 %v1429
        %1628 = vmatprep.subr.mxu0 0.0
        %1629 = vmatpush1.msra.mxu0 0.0
        %1630 = vmatprep.subr.mxu0 0.0
        %1631 = vmatpush1.msra.mxu0 0.0
        %1632 = vmatprep.subr.mxu0 0.0
        %1633 = vmatpush1.msra.mxu0 0.0
        %1634 = vmatprep.subr.mxu0 0.0
        %1635 = vmatpush1.msra.mxu0 0.0
        %1636 = vmatprep.subr.mxu0 0.0
        %1637 = vmatpush1.msra.mxu0 0.0
        %1638 = vmatprep.subr.mxu0 0.0
        %1639 = vmatpush1.msra.mxu0 0.0
        %1640 = vmatprep.subr.mxu0 0.0
        %1641 = vmatpush1.msra.mxu0 0.0
        %1642 = vmatprep.subr.mxu0 0.0
        %1643 = vmatpush1.msra.mxu0 0.0
        %1644 = vmatprep.subr.mxu0 0.0
        %1645 = vmatpush1.msra.mxu0 0.0
        %1646 = vmatprep.subr.mxu0 0.0
        %1647 = vmatpush1.msra.mxu0 0.0
        %1648 = vmatprep.subr.mxu0 0.0
        %1649 = vmatpush1.msra.mxu0 0.0
        %1650 = vmatprep.subr.mxu0 0.0
        %1651 = vmatpush1.msra.mxu0 0.0
        %1652 = vmatprep.subr.mxu0 0.0
        %1653 = vmatpush1.msra.mxu0 0.0
        %1654 = vmatprep.subr.mxu0 0.0
        %1655 = vmatpush1.msra.mxu0 0.0
        %1656 = vmatprep.subr.mxu0 0.0
        %1657 = vmatpush1.msra.mxu0 0.0
        %1658 = vmatprep.subr.mxu0 0.0
        %1659 = vmatpush1.msra.mxu0 0.0
        %1660 = vmatprep.subr.mxu0 0.0
        %1661 = vmatpush1.msra.mxu0 0.0
        %1662 = vmatprep.subr.mxu0 0.0
        %1663 = vmatpush1.msra.mxu0 0.0
        %1664 = vmatprep.subr.mxu0 0.0
        %1665 = vmatpush1.msra.mxu0 0.0
        %1666 = vmatprep.subr.mxu0 0.0
        %1667 = vmatpush1.msra.mxu0 0.0
        %1668 = vmatprep.subr.mxu0 0.0
        %1669 = vmatpush1.msra.mxu0 0.0
        %1670 = vmatprep.subr.mxu0 0.0
        %1671 = vmatpush1.msra.mxu0 0.0
        %1672 = vmatprep.subr.mxu0 0.0
        %1673 = vmatpush1.msra.mxu0 0.0
        %1674 = vmatprep.subr.mxu0 0.0
        %1675 = vmatpush1.msra.mxu0 0.0
        %1676 = vmatprep.subr.mxu0 0.0
        %1677 = vmatpush1.msra.mxu0 0.0
        %1678 = vmatprep.subr.mxu0 0.0
        %1679 = vmatpush1.msra.mxu0 0.0
        %1680 = vmatprep.subr.mxu0 0.0
        %1681 = vmatpush1.msra.mxu0 0.0
        %1682 = vmatprep.subr.mxu0 0.0
        %1683 = vmatpush1.msra.mxu0 0.0
        %1684 = vmatprep.subr.mxu0 0.0
        %1685 = vmatpush1.msra.mxu0 0.0
        %1686 = vmatprep.subr.mxu0 0.0
        %1687 = vmatpush1.msra.mxu0 0.0
        %1688 = vmatprep.mubr.f32.mxu0 0.0
        %1689 = vmatmul.mubr.f32.gmra.mrb[0].mxu0 %v1577
        %v1690 = vpop.f32.mrb[0].mxu0
        %v1691 = vadd.f32 0.0, %v1690
        %v1692 = vpop.f32.mrb[0].mxu0
        %1693 = vmatprep.mubr.f32.mxu0 0.0
        %1694 = vmatmul.mubr.f32.gmra.mrb[0].mxu0 %v1580
        %v1695 = vpop.f32.mrb[0].mxu0
        %v1696 = vadd.f32 0.0, %v1695
        %v1697 = vpop.f32.mrb[0].mxu0
        %1698 = vmatprep.mubr.f32.mxu0 0.0
        %1699 = vmatmul.mubr.f32.gmra.mrb[0].mxu0 %v1583
        %v1700 = vpop.f32.mrb[0].mxu0
        %v1701 = vadd.f32 0.0, %v1700
        %v1702 = vpop.f32.mrb[0].mxu0
        %1703 = vmatprep.mubr.f32.mxu0 0.0
        %1704 = vmatmul.mubr.f32.gmra.mrb[0].mxu0 %v1586
        %v1705 = vpop.f32.mrb[0].mxu0
        %v1706 = vadd.f32 0.0, %v1705
        %v1707 = vpop.f32.mrb[0].mxu0
        %1708 = vmatprep.mubr.f32.mxu0 0.0
        %1709 = vmatmul.mubr.f32.gmra.mrb[0].mxu0 %v1589
        %v1710 = vpop.f32.mrb[0].mxu0
        %v1711 = vadd.f32 0.0, %v1710
        %v1712 = vpop.f32.mrb[0].mxu0
        %1713 = vmatprep.mubr.f32.mxu0 0.0
        %1714 = vmatmul.mubr.f32.gmra.mrb[0].mxu0 %v1592
        %v1715 = vpop.f32.mrb[0].mxu0
        %v1716 = vadd.f32 0.0, %v1715
        %v1717 = vpop.f32.mrb[0].mxu0
        %1718 = vmatprep.mubr.f32.mxu0 0.0
        %1719 = vmatmul.mubr.f32.gmra.mrb[0].mxu0 %v1595
        %v1720 = vpop.f32.mrb[0].mxu0
        %v1721 = vadd.f32 0.0, %v1720
        %v1722 = vpop.f32.mrb[0].mxu0
        %1723 = vmatprep.mubr.f32.mxu0 0.0
        %1724 = vmatmul.mubr.f32.gmra.mrb[0].mxu0 %v1598
        %v1725 = vpop.f32.mrb[0].mxu0
        %v1726 = vadd.f32 0.0, %v1725
        %v1727 = vpop.f32.mrb[0].mxu0
        %1728 = vmatprep.mubr.f32.mxu0 0.0
        %1729 = vmatmul.mubr.f32.gmra.mrb[0].mxu0 %v1601
        %v1730 = vpop.f32.mrb[0].mxu0
        %v1731 = vadd.f32 0.0, %v1730
        %v1732 = vpop.f32.mrb[0].mxu0
        %1733 = vmatprep.mubr.f32.mxu0 0.0
        %1734 = vmatmul.mubr.f32.gmra.mrb[0].mxu0 %v1604
        %v1735 = vpop.f32.mrb[0].mxu0
        %v1736 = vadd.f32 0.0, %v1735
        %v1737 = vpop.f32.mrb[0].mxu0
        %1738 = vmatprep.mubr.f32.mxu0 0.0
        %1739 = vmatmul.mubr.f32.gmra.mrb[0].mxu0 %v1607
        %v1740 = vpop.f32.mrb[0].mxu0
        %v1741 = vadd.f32 0.0, %v1740
        %v1742 = vpop.f32.mrb[0].mxu0
        %1743 = vmatprep.mubr.f32.mxu0 0.0
        %1744 = vmatmul.mubr.f32.gmra.mrb[0].mxu0 %v1610
        %v1745 = vpop.f32.mrb[0].mxu0
        %v1746 = vadd.f32 0.0, %v1745
        %v1747 = vpop.f32.mrb[0].mxu0
        %1748 = vmatprep.mubr.f32.mxu0 0.0
        %1749 = vmatmul.mubr.f32.gmra.mrb[0].mxu0 %v1613
        %v1750 = vpop.f32.mrb[0].mxu0
        %v1751 = vadd.f32 0.0, %v1750
        %v1752 = vpop.f32.mrb[0].mxu0
        %1753 = vmatprep.mubr.f32.mxu0 0.0
        %1754 = vmatmul.mubr.f32.gmra.mrb[0].mxu0 %v1616
        %v1755 = vpop.f32.mrb[0].mxu0
        %v1756 = vadd.f32 0.0, %v1755
        %v1757 = vpop.f32.mrb[0].mxu0
        %1758 = vmatprep.mubr.f32.mxu0 0.0
        %1759 = vmatmul.mubr.f32.gmra.mrb[0].mxu0 %v1619
        %v1760 = vpop.f32.mrb[0].mxu0
        %v1761 = vadd.f32 0.0, %v1760
        %v1762 = vpop.f32.mrb[0].mxu0
        %1763 = vmatprep.mubr.f32.mxu0 0.0
        %1764 = vmatmul.mubr.f32.gmra.mrb[0].mxu0 %v1622
        %v1765 = vpop.f32.mrb[0].mxu0
        %v1766 = vadd.f32 0.0, %v1765
        %v1767 = vpop.f32.mrb[0].mxu0
        %1768 = vdwg.mxu0
        %v1769 = vlaneseq
        %v1770 = vshrl.u32 %v1769, 7
        %v1771 = vadd.s32 %v1770, 8
        %v1772 = vadd.s32 %v1770, 16
        %v1773 = vadd.s32 %v1770, 24
        %v1774 = vadd.s32 %v1770, 32
        %v1775 = vadd.s32 %v1770, 40
        %v1776 = vadd.s32 %v1770, 48
        %v1777 = vadd.s32 %v1770, 56
        %v1778 = vadd.s32 %v1770, 64
        %v1779 = vadd.s32 %v1770, 72
        %v1780 = vadd.s32 %v1770, 80
        %v1781 = vadd.s32 %v1770, 88
        %v1782 = vadd.s32 %v1770, 96
        %v1783 = vadd.s32 %v1770, 104
        %v1784 = vadd.s32 %v1770, 112
        %v1785 = vadd.s32 %v1770, 120
        %s1786 = smul.u32 %s18, 128
        %v1787 = vstv %s1786
        %v1788 = vadd.s32 %v1770, %v1787
        %v1789 = vadd.s32 %v1771, %v1787
        %v1790 = vadd.s32 %v1772, %v1787
        %v1791 = vadd.s32 %v1773, %v1787
        %v1792 = vadd.s32 %v1774, %v1787
        %v1793 = vadd.s32 %v1775, %v1787
        %v1794 = vadd.s32 %v1776, %v1787
        %v1795 = vadd.s32 %v1777, %v1787
        %v1796 = vadd.s32 %v1778, %v1787
        %v1797 = vadd.s32 %v1779, %v1787
        %v1798 = vadd.s32 %v1780, %v1787
        %v1799 = vadd.s32 %v1781, %v1787
        %v1800 = vadd.s32 %v1782, %v1787
        %v1801 = vadd.s32 %v1783, %v1787
        %v1802 = vadd.s32 %v1784, %v1787
        %v1803 = vadd.s32 %v1785, %v1787
        %vm1804 = vcmp.lt.s32.totalorder %v1788, 250
        %vm1805 = vcmp.lt.s32.totalorder %v1789, 250
        %vm1806 = vcmp.lt.s32.totalorder %v1790, 250
        %vm1807 = vcmp.lt.s32.totalorder %v1791, 250
        %vm1808 = vcmp.lt.s32.totalorder %v1792, 250
        %vm1809 = vcmp.lt.s32.totalorder %v1793, 250
        %vm1810 = vcmp.lt.s32.totalorder %v1794, 250
        %vm1811 = vcmp.lt.s32.totalorder %v1795, 250
        %vm1812 = vcmp.lt.s32.totalorder %v1796, 250
        %vm1813 = vcmp.lt.s32.totalorder %v1797, 250
        %vm1814 = vcmp.lt.s32.totalorder %v1798, 250
        %vm1815 = vcmp.lt.s32.totalorder %v1799, 250
        %vm1816 = vcmp.lt.s32.totalorder %v1800, 250
        %vm1817 = vcmp.lt.s32.totalorder %v1801, 250
        %vm1818 = vcmp.lt.s32.totalorder %v1802, 250
        %vm1819 = vcmp.lt.s32.totalorder %v1803, 250
        %v1820 = vsel %vm1804, 1, 0
        %v1821 = vsel %vm1805, 1, 0
        %v1822 = vsel %vm1806, 1, 0
        %v1823 = vsel %vm1807, 1, 0
        %v1824 = vsel %vm1808, 1, 0
        %v1825 = vsel %vm1809, 1, 0
        %v1826 = vsel %vm1810, 1, 0
        %v1827 = vsel %vm1811, 1, 0
        %v1828 = vsel %vm1812, 1, 0
        %v1829 = vsel %vm1813, 1, 0
        %v1830 = vsel %vm1814, 1, 0
        %v1831 = vsel %vm1815, 1, 0
        %v1832 = vsel %vm1816, 1, 0
        %v1833 = vsel %vm1817, 1, 0
        %v1834 = vsel %vm1818, 1, 0
        %v1835 = vsel %vm1819, 1, 0
        %v1836 = vcvt.s32.f32 %v1820
        %v1837 = vcvt.s32.f32 %v1821
        %v1838 = vcvt.s32.f32 %v1822
        %v1839 = vcvt.s32.f32 %v1823
        %v1840 = vcvt.s32.f32 %v1824
        %v1841 = vcvt.s32.f32 %v1825
        %v1842 = vcvt.s32.f32 %v1826
        %v1843 = vcvt.s32.f32 %v1827
        %v1844 = vcvt.s32.f32 %v1828
        %v1845 = vcvt.s32.f32 %v1829
        %v1846 = vcvt.s32.f32 %v1830
        %v1847 = vcvt.s32.f32 %v1831
        %v1848 = vcvt.s32.f32 %v1832
        %v1849 = vcvt.s32.f32 %v1833
        %v1850 = vcvt.s32.f32 %v1834
        %v1851 = vcvt.s32.f32 %v1835
        %v1852 = vmul.f32 %v1498, %v1836
        %v1853 = vmul.f32 %v1503, %v1837
        %v1854 = vmul.f32 %v1508, %v1838
        %v1855 = vmul.f32 %v1513, %v1839
        %v1856 = vmul.f32 %v1518, %v1840
        %v1857 = vmul.f32 %v1523, %v1841
        %v1858 = vmul.f32 %v1528, %v1842
        %v1859 = vmul.f32 %v1533, %v1843
        %v1860 = vmul.f32 %v1538, %v1844
        %v1861 = vmul.f32 %v1543, %v1845
        %v1862 = vmul.f32 %v1548, %v1846
        %v1863 = vmul.f32 %v1553, %v1847
        %v1864 = vmul.f32 %v1558, %v1848
        %v1865 = vmul.f32 %v1563, %v1849
        %v1866 = vmul.f32 %v1568, %v1850
        %v1867 = vmul.f32 %v1573, %v1851
        %v1868 = vmul.f32 %v1691, %v1836
        %v1869 = vmul.f32 %v1696, %v1837
        %v1870 = vmul.f32 %v1701, %v1838
        %v1871 = vmul.f32 %v1706, %v1839
        %v1872 = vmul.f32 %v1711, %v1840
        %v1873 = vmul.f32 %v1716, %v1841
        %v1874 = vmul.f32 %v1721, %v1842
        %v1875 = vmul.f32 %v1726, %v1843
        %v1876 = vmul.f32 %v1731, %v1844
        %v1877 = vmul.f32 %v1736, %v1845
        %v1878 = vmul.f32 %v1741, %v1846
        %v1879 = vmul.f32 %v1746, %v1847
        %v1880 = vmul.f32 %v1751, %v1848
        %v1881 = vmul.f32 %v1756, %v1849
        %v1882 = vmul.f32 %v1761, %v1850
        %v1883 = vmul.f32 %v1766, %v1851
        %v1884 = vsub.f32 %v1852, %v1868
        %v1885 = vsub.f32 %v1853, %v1869
        %v1886 = vsub.f32 %v1854, %v1870
        %v1887 = vsub.f32 %v1855, %v1871
        %v1888 = vsub.f32 %v1856, %v1872
        %v1889 = vsub.f32 %v1857, %v1873
        %v1890 = vsub.f32 %v1858, %v1874
        %v1891 = vsub.f32 %v1859, %v1875
        %v1892 = vsub.f32 %v1860, %v1876
        %v1893 = vsub.f32 %v1861, %v1877
        %v1894 = vsub.f32 %v1862, %v1878
        %v1895 = vsub.f32 %v1863, %v1879
        %v1896 = vsub.f32 %v1864, %v1880
        %v1897 = vsub.f32 %v1865, %v1881
        %v1898 = vsub.f32 %v1866, %v1882
        %v1899 = vsub.f32 %v1867, %v1883
        %s1900 = sld [smem:[#allocation2]]
        %v1901 = vmul.f32 %v1884, %v1884
        %v1902 = vmul.f32 %v1885, %v1885
        %v1903 = vmul.f32 %v1886, %v1886
        %v1904 = vmul.f32 %v1887, %v1887
        %v1905 = vmul.f32 %v1888, %v1888
        %v1906 = vmul.f32 %v1889, %v1889
        %v1907 = vmul.f32 %v1890, %v1890
        %v1908 = vmul.f32 %v1891, %v1891
        %v1909 = vmul.f32 %v1892, %v1892
        %v1910 = vmul.f32 %v1893, %v1893
        %v1911 = vmul.f32 %v1894, %v1894
        %v1912 = vmul.f32 %v1895, %v1895
        %v1913 = vmul.f32 %v1896, %v1896
        %v1914 = vmul.f32 %v1897, %v1897
        %v1915 = vmul.f32 %v1898, %v1898
        %v1916 = vmul.f32 %v1899, %v1899
        %vm1917 = vcmask 31744
        %v1918 = vsel %vm1917, %v1901, 0.0
        %v1919 = vsel %vm1917, %v1902, 0.0
        %v1920 = vadd.f32 %v1918, %v1919
        %v1921 = vsel %vm1917, %v1903, 0.0
        %v1922 = vadd.f32 %v1920, %v1921
        %v1923 = vsel %vm1917, %v1904, 0.0
        %v1924 = vadd.f32 %v1922, %v1923
        %v1925 = vsel %vm1917, %v1905, 0.0
        %v1926 = vadd.f32 %v1924, %v1925
        %v1927 = vsel %vm1917, %v1906, 0.0
        %v1928 = vadd.f32 %v1926, %v1927
        %v1929 = vsel %vm1917, %v1907, 0.0
        %v1930 = vadd.f32 %v1928, %v1929
        %v1931 = vsel %vm1917, %v1908, 0.0
        %v1932 = vadd.f32 %v1930, %v1931
        %v1933 = vsel %vm1917, %v1909, 0.0
        %v1934 = vadd.f32 %v1932, %v1933
        %v1935 = vsel %vm1917, %v1910, 0.0
        %v1936 = vadd.f32 %v1934, %v1935
        %v1937 = vsel %vm1917, %v1911, 0.0
        %v1938 = vadd.f32 %v1936, %v1937
        %v1939 = vsel %vm1917, %v1912, 0.0
        %v1940 = vadd.f32 %v1938, %v1939
        %v1941 = vsel %vm1917, %v1913, 0.0
        %v1942 = vadd.f32 %v1940, %v1941
        %v1943 = vsel %vm1917, %v1914, 0.0
        %v1944 = vadd.f32 %v1942, %v1943
        %v1945 = vsel %vm1917, %v1915, 0.0
        %v1946 = vadd.f32 %v1944, %v1945
        %v1947 = vsel %vm1917, %v1916, 0.0
        %v1948 = vadd.f32 %v1946, %v1947
        %1949 = vadd.xlane.f32.xlu0 %v1948
        %v1950 = vpop.xlane.xlu0 %1949
        %v1951 = vrot.slane %v1950, 4
        %v1952 = vadd.f32 %v1950, %v1951
        %v1953 = vrot.slane %v1952, 2
        %v1954 = vadd.f32 %v1952, %v1953
        %v1955 = vrot.slane %v1954, 1
        %v1956 = vadd.f32 %v1954, %v1955
        %s1957 = vtos %v1956
        %s1958 = sadd.f32 %s1900, %s1957
        %s1959 = scalar_lea.smem [#allocation2], 0
        %1960 = sst [smem:[%s1959]] %s1958
        %s1961 = sld [smem:[#allocation2 + $0x1]]
        %v1962 = vmul.f32 %v1852, %v1852
        %v1963 = vmul.f32 %v1853, %v1853
        %v1964 = vmul.f32 %v1854, %v1854
        %v1965 = vmul.f32 %v1855, %v1855
        %v1966 = vmul.f32 %v1856, %v1856
        %v1967 = vmul.f32 %v1857, %v1857
        %v1968 = vmul.f32 %v1858, %v1858
        %v1969 = vmul.f32 %v1859, %v1859
        %v1970 = vmul.f32 %v1860, %v1860
        %v1971 = vmul.f32 %v1861, %v1861
        %v1972 = vmul.f32 %v1862, %v1862
        %v1973 = vmul.f32 %v1863, %v1863
        %v1974 = vmul.f32 %v1864, %v1864
        %v1975 = vmul.f32 %v1865, %v1865
        %v1976 = vmul.f32 %v1866, %v1866
        %v1977 = vmul.f32 %v1867, %v1867
        %v1978 = vsel %vm1917, %v1962, 0.0
        %v1979 = vsel %vm1917, %v1963, 0.0
        %v1980 = vadd.f32 %v1978, %v1979
        %v1981 = vsel %vm1917, %v1964, 0.0
        %v1982 = vadd.f32 %v1980, %v1981
        %v1983 = vsel %vm1917, %v1965, 0.0
        %v1984 = vadd.f32 %v1982, %v1983
        %v1985 = vsel %vm1917, %v1966, 0.0
        %v1986 = vadd.f32 %v1984, %v1985
        %v1987 = vsel %vm1917, %v1967, 0.0
        %v1988 = vadd.f32 %v1986, %v1987
        %v1989 = vsel %vm1917, %v1968, 0.0
        %v1990 = vadd.f32 %v1988, %v1989
        %v1991 = vsel %vm1917, %v1969, 0.0
        %v1992 = vadd.f32 %v1990, %v1991
        %v1993 = vsel %vm1917, %v1970, 0.0
        %v1994 = vadd.f32 %v1992, %v1993
        %v1995 = vsel %vm1917, %v1971, 0.0
        %v1996 = vadd.f32 %v1994, %v1995
        %v1997 = vsel %vm1917, %v1972, 0.0
        %v1998 = vadd.f32 %v1996, %v1997
        %v1999 = vsel %vm1917, %v1973, 0.0
        %v2000 = vadd.f32 %v1998, %v1999
        %v2001 = vsel %vm1917, %v1974, 0.0
        %v2002 = vadd.f32 %v2000, %v2001
        %v2003 = vsel %vm1917, %v1975, 0.0
        %v2004 = vadd.f32 %v2002, %v2003
        %v2005 = vsel %vm1917, %v1976, 0.0
        %v2006 = vadd.f32 %v2004, %v2005
        %v2007 = vsel %vm1917, %v1977, 0.0
        %v2008 = vadd.f32 %v2006, %v2007
        %2009 = vadd.xlane.f32.xlu0 %v2008
        %v2010 = vpop.xlane.xlu0 %2009
        %v2011 = vrot.slane %v2010, 4
        %v2012 = vadd.f32 %v2010, %v2011
        %v2013 = vrot.slane %v2012, 2
        %v2014 = vadd.f32 %v2012, %v2013
        %v2015 = vrot.slane %v2014, 1
        %v2016 = vadd.f32 %v2014, %v2015
        %s2017 = vtos %v2016
        %s2018 = sadd.f32 %s1961, %s2017
        %s2019 = scalar_lea.smem [#allocation2], 1
        %2020 = sst [smem:[%s2019]] %s2018
        %s2021 = sld [smem:[#allocation2 + $0x2]]
        %v2022 = vadd.f32 %v1852, 1e-07
        %v2023 = vadd.f32 %v1853, 1e-07
        %v2024 = vadd.f32 %v1854, 1e-07
        %v2025 = vadd.f32 %v1855, 1e-07
        %v2026 = vadd.f32 %v1856, 1e-07
        %v2027 = vadd.f32 %v1857, 1e-07
        %v2028 = vadd.f32 %v1858, 1e-07
        %v2029 = vadd.f32 %v1859, 1e-07
        %v2030 = vadd.f32 %v1860, 1e-07
        %v2031 = vadd.f32 %v1861, 1e-07
        %v2032 = vadd.f32 %v1862, 1e-07
        %v2033 = vadd.f32 %v1863, 1e-07
        %v2034 = vadd.f32 %v1864, 1e-07
        %v2035 = vadd.f32 %v1865, 1e-07
        %v2036 = vadd.f32 %v1866, 1e-07
        %v2037 = vadd.f32 %v1867, 1e-07
        %v2038 = vlog2.pop %v2022
        %v2039 = vmul.f32 %v2038, 0.6931472
        %v2040 = vlog2.pop %v2023
        %v2041 = vmul.f32 %v2040, 0.6931472
        %v2042 = vlog2.pop %v2024
        %v2043 = vmul.f32 %v2042, 0.6931472
        %v2044 = vlog2.pop %v2025
        %v2045 = vmul.f32 %v2044, 0.6931472
        %v2046 = vlog2.pop %v2026
        %v2047 = vmul.f32 %v2046, 0.6931472
        %v2048 = vlog2.pop %v2027
        %v2049 = vmul.f32 %v2048, 0.6931472
        %v2050 = vlog2.pop %v2028
        %v2051 = vmul.f32 %v2050, 0.6931472
        %v2052 = vlog2.pop %v2029
        %v2053 = vmul.f32 %v2052, 0.6931472
        %v2054 = vlog2.pop %v2030
        %v2055 = vmul.f32 %v2054, 0.6931472
        %v2056 = vlog2.pop %v2031
        %v2057 = vmul.f32 %v2056, 0.6931472
        %v2058 = vlog2.pop %v2032
        %v2059 = vmul.f32 %v2058, 0.6931472
        %v2060 = vlog2.pop %v2033
        %v2061 = vmul.f32 %v2060, 0.6931472
        %v2062 = vlog2.pop %v2034
        %v2063 = vmul.f32 %v2062, 0.6931472
        %v2064 = vlog2.pop %v2035
        %v2065 = vmul.f32 %v2064, 0.6931472
        %v2066 = vlog2.pop %v2036
        %v2067 = vmul.f32 %v2066, 0.6931472
        %v2068 = vlog2.pop %v2037
        %v2069 = vmul.f32 %v2068, 0.6931472
        %v2070 = vadd.f32 %v1868, 1e-07
        %v2071 = vadd.f32 %v1869, 1e-07
        %v2072 = vadd.f32 %v1870, 1e-07
        %v2073 = vadd.f32 %v1871, 1e-07
        %v2074 = vadd.f32 %v1872, 1e-07
        %v2075 = vadd.f32 %v1873, 1e-07
        %v2076 = vadd.f32 %v1874, 1e-07
        %v2077 = vadd.f32 %v1875, 1e-07
        %v2078 = vadd.f32 %v1876, 1e-07
        %v2079 = vadd.f32 %v1877, 1e-07
        %v2080 = vadd.f32 %v1878, 1e-07
        %v2081 = vadd.f32 %v1879, 1e-07
        %v2082 = vadd.f32 %v1880, 1e-07
        %v2083 = vadd.f32 %v1881, 1e-07
        %v2084 = vadd.f32 %v1882, 1e-07
        %v2085 = vadd.f32 %v1883, 1e-07
        %v2086 = vlog2.pop %v2070
        %v2087 = vmul.f32 %v2086, 0.6931472
        %v2088 = vlog2.pop %v2071
        %v2089 = vmul.f32 %v2088, 0.6931472
        %v2090 = vlog2.pop %v2072
        %v2091 = vmul.f32 %v2090, 0.6931472
        %v2092 = vlog2.pop %v2073
        %v2093 = vmul.f32 %v2092, 0.6931472
        %v2094 = vlog2.pop %v2074
        %v2095 = vmul.f32 %v2094, 0.6931472
        %v2096 = vlog2.pop %v2075
        %v2097 = vmul.f32 %v2096, 0.6931472
        %v2098 = vlog2.pop %v2076
        %v2099 = vmul.f32 %v2098, 0.6931472
        %v2100 = vlog2.pop %v2077
        %v2101 = vmul.f32 %v2100, 0.6931472
        %v2102 = vlog2.pop %v2078
        %v2103 = vmul.f32 %v2102, 0.6931472
        %v2104 = vlog2.pop %v2079
        %v2105 = vmul.f32 %v2104, 0.6931472
        %v2106 = vlog2.pop %v2080
        %v2107 = vmul.f32 %v2106, 0.6931472
        %v2108 = vlog2.pop %v2081
        %v2109 = vmul.f32 %v2108, 0.6931472
        %v2110 = vlog2.pop %v2082
        %v2111 = vmul.f32 %v2110, 0.6931472
        %v2112 = vlog2.pop %v2083
        %v2113 = vmul.f32 %v2112, 0.6931472
        %v2114 = vlog2.pop %v2084
        %v2115 = vmul.f32 %v2114, 0.6931472
        %v2116 = vlog2.pop %v2085
        %v2117 = vmul.f32 %v2116, 0.6931472
        %v2118 = vsub.f32 %v2039, %v2087
        %v2119 = vsub.f32 %v2041, %v2089
        %v2120 = vsub.f32 %v2043, %v2091
        %v2121 = vsub.f32 %v2045, %v2093
        %v2122 = vsub.f32 %v2047, %v2095
        %v2123 = vsub.f32 %v2049, %v2097
        %v2124 = vsub.f32 %v2051, %v2099
        %v2125 = vsub.f32 %v2053, %v2101
        %v2126 = vsub.f32 %v2055, %v2103
        %v2127 = vsub.f32 %v2057, %v2105
        %v2128 = vsub.f32 %v2059, %v2107
        %v2129 = vsub.f32 %v2061, %v2109
        %v2130 = vsub.f32 %v2063, %v2111
        %v2131 = vsub.f32 %v2065, %v2113
        %v2132 = vsub.f32 %v2067, %v2115
        %v2133 = vsub.f32 %v2069, %v2117
        %v2134 = vand.u32 2147483647, %v2118
        %v2135 = vand.u32 2147483647, %v2119
        %v2136 = vand.u32 2147483647, %v2120
        %v2137 = vand.u32 2147483647, %v2121
        %v2138 = vand.u32 2147483647, %v2122
        %v2139 = vand.u32 2147483647, %v2123
        %v2140 = vand.u32 2147483647, %v2124
        %v2141 = vand.u32 2147483647, %v2125
        %v2142 = vand.u32 2147483647, %v2126
        %v2143 = vand.u32 2147483647, %v2127
        %v2144 = vand.u32 2147483647, %v2128
        %v2145 = vand.u32 2147483647, %v2129
        %v2146 = vand.u32 2147483647, %v2130
        %v2147 = vand.u32 2147483647, %v2131
        %v2148 = vand.u32 2147483647, %v2132
        %v2149 = vand.u32 2147483647, %v2133
        %v2150 = vsel %vm1917, %v2134, 0.0
        %v2151 = vsel %vm1917, %v2135, 0.0
        %v2152 = vadd.f32 %v2150, %v2151
        %v2153 = vsel %vm1917, %v2136, 0.0
        %v2154 = vadd.f32 %v2152, %v2153
        %v2155 = vsel %vm1917, %v2137, 0.0
        %v2156 = vadd.f32 %v2154, %v2155
        %v2157 = vsel %vm1917, %v2138, 0.0
        %v2158 = vadd.f32 %v2156, %v2157
        %v2159 = vsel %vm1917, %v2139, 0.0
        %v2160 = vadd.f32 %v2158, %v2159
        %v2161 = vsel %vm1917, %v2140, 0.0
        %v2162 = vadd.f32 %v2160, %v2161
        %v2163 = vsel %vm1917, %v2141, 0.0
        %v2164 = vadd.f32 %v2162, %v2163
        %v2165 = vsel %vm1917, %v2142, 0.0
        %v2166 = vadd.f32 %v2164, %v2165
        %v2167 = vsel %vm1917, %v2143, 0.0
        %v2168 = vadd.f32 %v2166, %v2167
        %v2169 = vsel %vm1917, %v2144, 0.0
        %v2170 = vadd.f32 %v2168, %v2169
        %v2171 = vsel %vm1917, %v2145, 0.0
        %v2172 = vadd.f32 %v2170, %v2171
        %v2173 = vsel %vm1917, %v2146, 0.0
        %v2174 = vadd.f32 %v2172, %v2173
        %v2175 = vsel %vm1917, %v2147, 0.0
        %v2176 = vadd.f32 %v2174, %v2175
        %v2177 = vsel %vm1917, %v2148, 0.0
        %v2178 = vadd.f32 %v2176, %v2177
        %v2179 = vsel %vm1917, %v2149, 0.0
        %v2180 = vadd.f32 %v2178, %v2179
        %2181 = vadd.xlane.f32.xlu0 %v2180
        %v2182 = vpop.xlane.xlu0 %2181
        %v2183 = vrot.slane %v2182, 4
        %v2184 = vadd.f32 %v2182, %v2183
        %v2185 = vrot.slane %v2184, 2
        %v2186 = vadd.f32 %v2184, %v2185
        %v2187 = vrot.slane %v2186, 1
        %v2188 = vadd.f32 %v2186, %v2187
        %s2189 = vtos %v2188
        %s2190 = sadd.f32 %s2021, %s2189
        %s2191 = scalar_lea.smem [#allocation2], 2
        %2192 = sst [smem:[%s2191]] %s2190
        // Predicated region
        $region49: #{forward.12} parent=43 // pred_check
          %p2193 = pneg %p167
        $region50: #{forward.12} parent=43 // pred_check_branch
          %2195 = sbr.rel (%p2193) target = $region52
        $region51: #{forward.12} parent=43 // pred_region
          %s2197 = ssub.s32 16, 16
          %2198 = vsyncadd [#allocation3], %s2197
          %s2200 = sshll.u32 %s6, 4
          %s2201 = int_to_ptr.vmem [resolvable:$true] %s2200
          %2203 = dma.smem_to_vmem [#allocation2], 16, %s2201, [#allocation3]
        $region52: #{forward.12} parent=43 // pred_fallthru
          _
        // Predicated region
        $region53: #{forward.12} parent=43 // pred_check
          %p2204 = pneg %p167
        $region54: #{forward.12} parent=43 // pred_check_branch
          %2206 = sbr.rel (%p2204) target = $region56
        $region55: #{forward.12} parent=43 // pred_region
          %2207 = dma.done [#allocation3], 16
        $region56: #{forward.12} parent=43 // pred_fallthru
          _
        %2208 = sfence
      $region44: #{forward.12} parent=5 // pred_fallthru
        _
      %p2209 = scmp.le.s32.totalorder 2, %s13
      // Predicated region
      $region57: #{forward.12} parent=5 // pred_check
        %p2210 = pneg %p2209
      $region58: #{forward.12} parent=5 // pred_check_branch
        %2212 = sbr.rel (%p2210) target = $region60
      $region59: #{forward.12} parent=5 // pred_region
        %s2213 = ssub.s32 %s13, 2
      $region60: #{forward.12} parent=5 // pred_fallthru
        _
    $region6: #{forward.12} parent=1 // loop_footer
      %s17 = sadd.s32 1, %s13
    $region7: #{forward.12} parent=1 // loop_footer_branch
      %12 = sbr.rel target = $region3
    $region8: #{forward.12} parent=1 // loop_exit
      _
    %2214 = vsyncpa [#allocation3], 1
    %s2215 = scalar_lea.sflag [#allocation3], 1
    %2216 = vsyncpa %s2215, 1

// kernel: forward.14
$region0: #{forward.14}
  #allocation0 [shape = 'u32[]', space=smem, size = 0x4, offset = 0x4, fixed_abs, tag = 'smem constant byte address 0x4 - core index']
  #allocation1 [shape = 'u32[144,128]{1,0:T(1,128)}', space=vmem, size = 0x12000, scoped, tag = 'internal scratch']
  %s0 = inlined_call_operand.vmem [shape: f32[16,64], index: 0, kind: input, shape index: {}]
  %s1 = inlined_call_operand.vmem [shape: f32[16,64], index: 1, kind: input, shape index: {}]
  %s2 = inlined_call_operand.hbm [shape: f32[1], index: 2, kind: output, shape index: {}]
  %s3 = sld [smem:[#allocation0]]
  $region18: #{forward.14} parent=0
    _
  %s5 = ssub.s32 1, %s3
  %s6 = scalar_select 0, %s5, %s3
  $region1: #{forward.14} parent=0
    #allocation2 [shape = 'u8[512]{0}', space=smem, size = 0x200, scoped, tag = 'output window, operand 0, single buffered']
    #allocation3 [shape = 's32[1]{0}', space=sflag, size = 0x4, scoped, tag = 'scoped memory for forward.14']
    %7 = vsyncpa [#allocation3], 0
    // Predicated region
    $region2: #{forward.14} parent=1 // pred_check
      _
    $region3: #{forward.14} parent=1 // pred_check_branch
      %9 = sbr.rel (0) target = $region5
    $region4: #{forward.14} parent=1 // pred_region
      _
    $region5: #{forward.14} parent=1 // pred_fallthru
      _
    // Predicated region
    $region6: #{forward.14} parent=1 // pred_check
      _
    $region7: #{forward.14} parent=1 // pred_check_branch
      %11 = sbr.rel (0) target = $region9
    $region8: #{forward.14} parent=1 // pred_region
      _
    $region9: #{forward.14} parent=1 // pred_fallthru
      _
    %v12 = vld [vmem:[%s0] sm:$0xff]
    %v13 = vld [vmem:[%s0 + $0x8] sm:$0xff]
    %v14 = vld [vmem:[%s1] sm:$0xff]
    %v15 = vld [vmem:[%s1 + $0x8] sm:$0xff]
    %v16 = vsub.f32 %v12, %v14
    %v17 = vsub.f32 %v13, %v15
    %v18 = vmul.f32 %v16, %v16
    %v19 = vmul.f32 %v17, %v17
    %vm20 = vcmask 523264
    %v21 = vsel %vm20, %v18, 0.0
    %v22 = vsel %vm20, %v19, 0.0
    %v23 = vadd.f32 %v21, %v22
    %24 = vadd.xlane.f32.xlu0 %v23
    %v25 = vpop.xlane.xlu0 %24
    %v26 = vrot.slane %v25, 4
    %v27 = vadd.f32 %v25, %v26
    %v28 = vrot.slane %v27, 2
    %v29 = vadd.f32 %v27, %v28
    %v30 = vrot.slane %v29, 1
    %v31 = vadd.f32 %v29, %v30
    %s32 = vtos %v31
    %s33 = scalar_lea.smem [#allocation2], 0
    %34 = sst [smem:[%s33]] %s32
    // Predicated region
    $region10: #{forward.14} parent=1 // pred_check
      _
    $region11: #{forward.14} parent=1 // pred_check_branch
      %36 = sbr.rel (0) target = $region13
    $region12: #{forward.14} parent=1 // pred_region
      %s38 = ssub.s32 16, 16
      %39 = vsyncadd [#allocation3], %s38
      %42 = dma.smem_to_hbm [#allocation2], 16, %s2, [#allocation3]
    $region13: #{forward.14} parent=1 // pred_fallthru
      _
    // Predicated region
    $region14: #{forward.14} parent=1 // pred_check
      _
    $region15: #{forward.14} parent=1 // pred_check_branch
      %44 = sbr.rel (0) target = $region17
    $region16: #{forward.14} parent=1 // pred_region
      %45 = dma.done [#allocation3], 16
    $region17: #{forward.14} parent=1 // pred_fallthru
      _
    %46 = sfence
    %47 = vsyncpa [#allocation3], 1

</llo_original>
